<compile_context>
chip_gen: v6e
topology: v6e:2x2x1
jax: 0.10.0
libtpu: 0.0.40
codegen_flags: <defaults>
</compile_context>

<pallas_src>
import numpy as np
import jax
import jax.numpy as jnp
from jax import lax
from jax.experimental import pallas as pl
from jax.experimental.pallas import tpu as pltpu


# =============================================================================
# Host-side (one-time) weight / layout preprocessing — outside the jitted forward.
# =============================================================================
def _pack_conv_np(k_hwio, W):
    """(3,3,C,C) HWIO kernel -> (3, W*C, W*C) block-banded matrices.

    BigW[kh][w_in*C + ci, w_out*C + co] = K[kh, w_in - w_out + 1, ci, co] (zero off-band),
    so y[h] = sum_kh x[h + kh - 1] @ BigW[kh] reproduces the SAME 3x3 conv in the packed
    lane-dense (H, W*C) layout; the W-boundary zero padding is implicit in the band.
    """
    k = np.asarray(k_hwio, np.float32)
    mats = []
    for kh in range(3):
        m = np.zeros((W * k.shape[-1], W * k.shape[-1]), np.float32)
        for kw in range(3):
            m += np.kron(np.eye(W, k=-(kw - 1), dtype=np.float32), k[kh, kw])
        mats.append(m)
    return np.stack(mats, axis=0)                                  # (3, WC, WC)


def _pack_chain(blocks, W, C):
    """Stack a residual chain's weights: (nb, 3, WC, WC) and packed bias (nb, 1, WC)."""
    ws = np.stack([_pack_conv_np(k, W) for (k, _) in blocks], axis=0)
    bs = np.stack([np.tile(np.asarray(b, np.float32), W)[None, :] for (_, b) in blocks],
                  axis=0)
    return {"w": jnp.asarray(ws), "b": jnp.asarray(bs)}


def _pool_mats(h_in, w_in, C):
    """2x2 stride-2 max pool as lane-dense selection matmuls on packed (H, W*C):
       rows : xh = max(PHe @ x, PHo @ x)        (h_in, w_in*C) -> (h_in/2, w_in*C)
       lanes: xp = max(xh @ SWe, xh @ SWo)      -> (h_in/2, (w_in/2)*C)
    """
    h_out, w_out = h_in // 2, w_in // 2
    r = np.arange(h_out)
    phe = np.zeros((h_out, h_in), np.float32); phe[r, 2 * r] = 1.0
    pho = np.zeros((h_out, h_in), np.float32); pho[r, 2 * r + 1] = 1.0
    swe = np.zeros((w_in * C, w_out * C), np.float32)
    swo = np.zeros((w_in * C, w_out * C), np.float32)
    for wo in range(w_out):
        for c in range(C):
            swe[(2 * wo) * C + c, wo * C + c] = 1.0
            swo[(2 * wo + 1) * C + c, wo * C + c] = 1.0
    return tuple(jnp.asarray(m) for m in (phe, pho, swe, swo))


def _up_mats(h, w, C):
    """Nearest-neighbour 2x upsample on packed (h, w*C): out = (UH @ low) @ UW."""
    uh = np.zeros((2 * h, h), np.float32)
    uh[np.arange(2 * h), np.arange(2 * h) // 2] = 1.0
    uw = np.zeros((w * C, 2 * w * C), np.float32)
    for wo in range(2 * w):
        for c in range(C):
            uw[(wo // 2) * C + c, wo * C + c] = 1.0
    return jnp.asarray(uh), jnp.asarray(uw)


def prepare_params(params, C, H, W, depth):
    """Pack all chains + pool/upsample selection matrices once (host side)."""
    packed = {"enc": [], "dec": [], "pool": [], "up": []}
    for i in range(depth):
        h_hi, w_hi, w_lo = H >> i, W >> i, W >> (i + 1)
        level = [_pack_chain(params["enc"][i][0], w_hi, C),
                 _pack_chain(params["enc"][i][1], w_lo, C)]
        if i == depth - 1:
            level.append(_pack_chain(params["enc"][i][2], w_lo, C))
        packed["enc"].append(level)
        packed["pool"].append(_pool_mats(h_hi, w_hi, C))
    for i in range(depth):
        h_lo, w_lo = H >> (depth - i), W >> (depth - i)
        packed["dec"].append(_pack_chain(params["dec"][i], w_lo, C))
        packed["up"].append(_up_mats(h_lo, w_lo, C))
    return packed


# =============================================================================
# Fused residual-chain kernel (optionally with maxpool prologue / upsample+add epilogue).
# Grid = (N, num_blocks): batch "parallel", block index "arbitrary"; the running
# activation lives in a VMEM scratch across the block axis.
# =============================================================================
def _make_chain_kernel(Hw, WCw, num_blocks, pool_in, up_out):

    def _res_step(x, w_ref, b_ref):
        # y = relu(conv3x3(x) + bias + x) on the packed (Hw, WCw) slab.
        d1 = jnp.dot(x, w_ref[0, 1], preferred_element_type=jnp.float32)
        d0 = jnp.dot(x, w_ref[0, 0], preferred_element_type=jnp.float32)
        d2 = jnp.dot(x, w_ref[0, 2], preferred_element_type=jnp.float32)
        if Hw % 8 == 0:
            # Row shifts on the XLU: roll +1 / -1 along sublanes, zero the wrapped row.
            rows = lax.broadcasted_iota(jnp.int32, (Hw, WCw), 0)
            r0 = jnp.where(rows == 0, 0.0, pltpu.roll(d0, 1, axis=0))
            r2 = jnp.where(rows == Hw - 1, 0.0, pltpu.roll(d2, Hw - 1, axis=0))
        else:
            # Sub-tile H (bottom of the pyramid): do the +/-1 row shift with tiny
            # iota-built shift matrices on the (idle) MXU instead of a sublane roll.
            rr = lax.broadcasted_iota(jnp.int32, (Hw, Hw), 0)
            cc = lax.broadcasted_iota(jnp.int32, (Hw, Hw), 1)
            sdn = (rr == cc + 1).astype(jnp.float32)      # (sdn @ d)[h] = d[h-1]
            sup = (cc == rr + 1).astype(jnp.float32)      # (sup @ d)[h] = d[h+1]
            r0 = jnp.dot(sdn, d0, preferred_element_type=jnp.float32)
            r2 = jnp.dot(sup, d2, preferred_element_type=jnp.float32)
        return jnp.maximum(d1 + r0 + r2 + b_ref[0] + x, 0.0)

    if pool_in:
        def kernel(x_ref, phe_ref, pho_ref, swe_ref, swo_ref, w_ref, b_ref,
                   o_ref, act_ref):
            blk = pl.program_id(1)

            @pl.when(blk == 0)
            def _():
                # Fused 2x2 max-pool prologue (lane-dense selection matmuls).
                xr = x_ref[0]                                       # (2Hw, 2WCw)
                xh = jnp.maximum(
                    jnp.dot(phe_ref[...], xr, preferred_element_type=jnp.float32),
                    jnp.dot(pho_ref[...], xr, preferred_element_type=jnp.float32))
                act_ref[...] = jnp.maximum(
                    jnp.dot(xh, swe_ref[...], preferred_element_type=jnp.float32),
                    jnp.dot(xh, swo_ref[...], preferred_element_type=jnp.float32))

            y = _res_step(act_ref[...], w_ref, b_ref)
            act_ref[...] = y

            @pl.when(blk == num_blocks - 1)
            def _():
                o_ref[0] = y
        return kernel

    if up_out:
        def kernel(x_ref, skip_ref, uh_ref, uw_ref, w_ref, b_ref, o_ref, act_ref):
            blk = pl.program_id(1)

            @pl.when(blk == 0)
            def _():
                act_ref[...] = x_ref[0]

            y = _res_step(act_ref[...], w_ref, b_ref)
            act_ref[...] = y

            @pl.when(blk == num_blocks - 1)
            def _():
                # Fused nearest-neighbour 2x upsample + skip-add epilogue.
                hi = jnp.dot(uh_ref[...], y, preferred_element_type=jnp.float32)
                hi = jnp.dot(hi, uw_ref[...], preferred_element_type=jnp.float32)
                o_ref[0] = hi + skip_ref[0]
        return kernel

    def kernel(x_ref, w_ref, b_ref, o_ref, act_ref):
        blk = pl.program_id(1)

        @pl.when(blk == 0)
        def _():
            act_ref[...] = x_ref[0]

        y = _res_step(act_ref[...], w_ref, b_ref)
        act_ref[...] = y

        @pl.when(blk == num_blocks - 1)
        def _():
            o_ref[0] = y
    return kernel


def _chain_call(x, chain, pool_mats=None, up=None):
    """Run one fused residual chain.  x: (N, Hin, WCin) packed activations."""
    N = x.shape[0]
    wts, bias = chain["w"], chain["b"]
    nb, _, WCw, _ = wts.shape
    pool_in = pool_mats is not None
    up_out = up is not None
    assert not (pool_in and up_out)
    Hw = x.shape[1] // 2 if pool_in else x.shape[1]
    assert x.shape[2] == (2 * WCw if pool_in else WCw)

    args = [x]
    in_specs = [pl.BlockSpec((1,) + tuple(x.shape[1:]), lambda n, b: (n, 0, 0))]
    if pool_in:
        for m in pool_mats:
            args.append(m)
            in_specs.append(pl.BlockSpec(tuple(m.shape), lambda n, b: (0, 0)))
        out_shape = (N, Hw, WCw)
    elif up_out:
        skip, uh, uw = up
        out_shape = tuple(skip.shape)
        args.append(skip)
        in_specs.append(pl.BlockSpec((1,) + tuple(skip.shape[1:]),
                                     lambda n, b: (n, 0, 0)))
        for m in (uh, uw):
            args.append(m)
            in_specs.append(pl.BlockSpec(tuple(m.shape), lambda n, b: (0, 0)))
    else:
        out_shape = (N, Hw, WCw)
    args += [wts, bias]
    in_specs += [pl.BlockSpec((1, 3, WCw, WCw), lambda n, b: (b, 0, 0, 0)),
                 pl.BlockSpec((1, 1, WCw), lambda n, b: (b, 0, 0))]
    out_spec = pl.BlockSpec((1,) + tuple(out_shape[1:]), lambda n, b: (n, 0, 0))

    flops = 2 * N * nb * 3 * Hw * WCw * WCw
    if pool_in:
        flops += 2 * N * (Hw * (2 * Hw) * (2 * WCw) * 2 + Hw * (2 * WCw) * WCw * 2)
    if up_out:
        flops += 2 * N * ((2 * Hw) * Hw * WCw + (2 * Hw) * WCw * (2 * WCw))
    bytes_accessed = 4 * (int(x.size) + int(np.prod(out_shape))
                          + N * int(wts.size) + N * int(bias.size))

    kernel = _make_chain_kernel(Hw, WCw, nb, pool_in, up_out)
    return pl.pallas_call(
        kernel,
        out_shape=jax.ShapeDtypeStruct(out_shape, jnp.float32),
        grid_spec=pltpu.PrefetchScalarGridSpec(
            num_scalar_prefetch=0,
            grid=(N, nb),
            in_specs=in_specs,
            out_specs=out_spec,
            scratch_shapes=[pltpu.VMEM((Hw, WCw), jnp.float32)],
        ),
        compiler_params=pltpu.CompilerParams(
            dimension_semantics=("parallel", "arbitrary")),
        cost_estimate=pl.CostEstimate(flops=int(flops), transcendentals=0,
                                      bytes_accessed=int(bytes_accessed)),
    )(*args)


# =============================================================================
# Hourglass forward (orchestration mirrors the PyTorch module exactly).
# Only free layout reshapes/transposes happen between pallas_calls.
# =============================================================================
def hourglass_forward(x_nchw, packed, depth):
    N, C, H, W = x_nchw.shape
    assert H % (2 ** depth) == 0 and W % (2 ** depth) == 0
    x = jnp.transpose(x_nchw, (0, 2, 3, 1)).astype(jnp.float32).reshape(N, H, W * C)

    # encoder
    skips = []
    for i in range(depth):
        skips.append(_chain_call(x, packed["enc"][i][0]))                     # branch 0
        x = _chain_call(x, packed["enc"][i][1], pool_mats=packed["pool"][i])  # pool + branch 1
        if i == depth - 1:
            skips.append(_chain_call(x, packed["enc"][i][2]))                 # bottom extra
    skips = skips[::-1]

    # decoder (each chain fuses the 2x upsample + skip add in its epilogue)
    y = skips[0]
    for i in range(depth):
        y = _chain_call(y, packed["dec"][i],
                        up=(skips[i + 1],) + tuple(packed["up"][i]))

    return jnp.transpose(y.reshape(N, H, W, C), (0, 3, 1, 2))


# =============================================================================
# Deterministic synthetic parameters (shapes follow Hourglass.__init__).
# =============================================================================
def _init_residual(key, C, num_blocks):
    blocks = []
    for _ in range(num_blocks):
        key, kw_key, kb_key = jax.random.split(key, 3)
        k = jax.random.normal(kw_key, (3, 3, C, C), jnp.float32) * (1.0 / (9 * C) ** 0.5)
        b = jax.random.normal(kb_key, (C,), jnp.float32) * 0.01
        blocks.append((k, b))
    return key, blocks


def init_params(key, C, depth, num_blocks):
    enc, dec = [], []
    for i in range(depth):
        level = []
        n_res = 3 if i == depth - 1 else 2
        for _ in range(n_res):
            key, blocks = _init_residual(key, C, num_blocks)
            level.append(blocks)
        enc.append(level)
    for _ in range(depth):
        key, blocks = _init_residual(key, C, num_blocks)
        dec.append(blocks)
    return {"enc": enc, "dec": dec}


# =============================================================================
# Pure-JAX reference (correctness check only).
# =============================================================================
def _ref_res_block(x, k_hwio, b):
    C = x.shape[-1]
    y = lax.conv_general_dilated(
        x, k_hwio, window_strides=(1, 1), padding="SAME",
        dimension_numbers=("NHWC", "HWIO", "NHWC"),
        precision=lax.Precision.HIGHEST)
    return jnp.maximum(y + b.reshape(1, 1, 1, C) + x, 0.0)


def _ref_run_residual(x, blocks):
    for (k, b) in blocks:
        x = _ref_res_block(x, k, b)
    return x


def hourglass_reference(x_nchw, params, depth):
    x = jnp.transpose(x_nchw, (0, 2, 3, 1)).astype(jnp.float32)
    skips = []
    for i in range(depth):
        skips.append(_ref_run_residual(x, params["enc"][i][0]))
        pooled = lax.reduce_window(x, -jnp.inf, lax.max,
                                   (1, 2, 2, 1), (1, 2, 2, 1), "VALID")
        x = _ref_run_residual(pooled, params["enc"][i][1])
        if i == depth - 1:
            skips.append(_ref_run_residual(x, params["enc"][i][2]))
    skips = skips[::-1]
    y = skips[0]
    for i in range(depth):
        low = _ref_run_residual(y, params["dec"][i])
        y = jnp.repeat(jnp.repeat(low, 2, axis=1), 2, axis=2) + skips[i + 1]
    return jnp.transpose(y, (0, 3, 1, 2))


if __name__ == "__main__":
    N, C, H, W = 2, 8, 16, 16          # packed lane dim W*C = 128 at full resolution
    depth, num_blocks = 2, 2           # num_blocks=2 exercises the fused chain axis

    key = jax.random.PRNGKey(0)
    kx, kp = jax.random.split(key)
    x = jax.random.normal(kx, (N, C, H, W), jnp.float32)      # NCHW, like PyTorch
    params = init_params(kp, C, depth, num_blocks)
    packed = prepare_params(params, C, H, W, depth)           # host-side, once

    fwd = jax.jit(hourglass_forward, static_argnums=(2,))
    out = jax.block_until_ready(fwd(x, packed, depth))
    assert out.shape == (N, C, H, W) and out.dtype == jnp.float32

    ref = jax.block_until_ready(hourglass_reference(x, params, depth))
    max_err = float(jnp.max(jnp.abs(out - ref)))
    assert max_err < 2e-2, f"mismatch vs reference: {max_err}"

    print("KERNEL_OK")
</pallas_src>

<mosaic_0001>
module attributes {stable_mosaic.version = 11 : i64} {
  func.func @kernel(%arg0: i32, %arg1: i32, %arg2: memref<1x16x128xf32, #tpu.memory_space<vmem>>, %arg3: memref<8x16xf32, #tpu.memory_space<vmem>>, %arg4: memref<8x16xf32, #tpu.memory_space<vmem>>, %arg5: memref<128x64xf32, #tpu.memory_space<vmem>>, %arg6: memref<128x64xf32, #tpu.memory_space<vmem>>, %arg7: memref<1x3x64x64xf32, #tpu.memory_space<vmem>>, %arg8: memref<1x1x64xf32, #tpu.memory_space<vmem>>, %arg9: memref<1x8x64xf32, #tpu.memory_space<vmem>>, %arg10: memref<8x64xf32, #tpu.memory_space<vmem>>) attributes {dimension_semantics = [#tpu.dimension_semantics<parallel>, #tpu.dimension_semantics<arbitrary>], iteration_bounds = array<i64: 2, 2>, scalar_prefetch = 0 : i64, scratch_operands = 1 : i64, tpu.core_type = #tpu.core_type<tc>, window_params = [{transform_indices = @transform_0, window_bounds = array<i64: 1, 16, 128>}, {pipeline_mode = #tpu.pipeline_mode<synchronous>, transform_indices = @transform_1, window_bounds = array<i64: 8, 16>}, {pipeline_mode = #tpu.pipeline_mode<synchronous>, transform_indices = @transform_2, window_bounds = array<i64: 8, 16>}, {pipeline_mode = #tpu.pipeline_mode<synchronous>, transform_indices = @transform_3, window_bounds = array<i64: 128, 64>}, {pipeline_mode = #tpu.pipeline_mode<synchronous>, transform_indices = @transform_4, window_bounds = array<i64: 128, 64>}, {transform_indices = @transform_5, window_bounds = array<i64: 1, 3, 64, 64>}, {transform_indices = @transform_6, window_bounds = array<i64: 1, 1, 64>}, {transform_indices = @transform_7, window_bounds = array<i64: 1, 8, 64>}]} {
    %c0_i32 = arith.constant 0 : i32
    %0 = arith.cmpi eq, %arg1, %c0_i32 : i32
    %1 = arith.extui %0 : i1 to i32
    %c0_i32_0 = arith.constant 0 : i32
    %2 = arith.cmpi ne, %1, %c0_i32_0 : i32
    scf.if %2 {
      %c0_26 = arith.constant 0 : index
      %c0_27 = arith.constant 0 : index
      %c0_28 = arith.constant 0 : index
      %37 = vector.load %arg2[%c0_26, %c0_27, %c0_28] : memref<1x16x128xf32, #tpu.memory_space<vmem>>, vector<1x16x128xf32>
      %38 = vector.shape_cast %37 : vector<1x16x128xf32> to vector<16x128xf32>
      %c0_29 = arith.constant 0 : index
      %c0_30 = arith.constant 0 : index
      %39 = vector.load %arg3[%c0_29, %c0_30] : memref<8x16xf32, #tpu.memory_space<vmem>>, vector<8x16xf32>
      %cst_31 = arith.constant dense<0.000000e+00> : vector<8x128xf32>
      %40 = tpu.matmul %39, %38, %cst_31 {dimension_numbers = #tpu.dot_dimension_numbers<[1], [0], [0], [1], [0, 0, 1, 1], [], []>} : vector<8x16xf32>, vector<16x128xf32>, vector<8x128xf32> -> vector<8x128xf32>
      %c0_32 = arith.constant 0 : index
      %c0_33 = arith.constant 0 : index
      %41 = vector.load %arg4[%c0_32, %c0_33] : memref<8x16xf32, #tpu.memory_space<vmem>>, vector<8x16xf32>
      %cst_34 = arith.constant dense<0.000000e+00> : vector<8x128xf32>
      %42 = tpu.matmul %41, %38, %cst_34 {dimension_numbers = #tpu.dot_dimension_numbers<[1], [0], [0], [1], [0, 0, 1, 1], [], []>} : vector<8x16xf32>, vector<16x128xf32>, vector<8x128xf32> -> vector<8x128xf32>
      %43 = arith.maximumf %40, %42 : vector<8x128xf32>
      %c0_35 = arith.constant 0 : index
      %c0_36 = arith.constant 0 : index
      %44 = vector.load %arg5[%c0_35, %c0_36] : memref<128x64xf32, #tpu.memory_space<vmem>>, vector<128x64xf32>
      %cst_37 = arith.constant dense<0.000000e+00> : vector<8x64xf32>
      %45 = tpu.matmul %43, %44, %cst_37 {dimension_numbers = #tpu.dot_dimension_numbers<[1], [0], [0], [1], [0, 0, 1, 1], [], []>} : vector<8x128xf32>, vector<128x64xf32>, vector<8x64xf32> -> vector<8x64xf32>
      %c0_38 = arith.constant 0 : index
      %c0_39 = arith.constant 0 : index
      %46 = vector.load %arg6[%c0_38, %c0_39] : memref<128x64xf32, #tpu.memory_space<vmem>>, vector<128x64xf32>
      %cst_40 = arith.constant dense<0.000000e+00> : vector<8x64xf32>
      %47 = tpu.matmul %43, %46, %cst_40 {dimension_numbers = #tpu.dot_dimension_numbers<[1], [0], [0], [1], [0, 0, 1, 1], [], []>} : vector<8x128xf32>, vector<128x64xf32>, vector<8x64xf32> -> vector<8x64xf32>
      %48 = arith.maximumf %45, %47 : vector<8x64xf32>
      %c0_41 = arith.constant 0 : index
      %c0_42 = arith.constant 0 : index
      %49 = vector.load %arg10[%c0_41, %c0_42] : memref<8x64xf32, #tpu.memory_space<vmem>>, vector<8x64xf32>
      tpu.vector_store %arg10[%c0_41, %c0_42], %48 {strides = array<i32>} : memref<8x64xf32, #tpu.memory_space<vmem>>, vector<8x64xf32>,
    } else {
    }
    %c0 = arith.constant 0 : index
    %c0_1 = arith.constant 0 : index
    %3 = vector.load %arg10[%c0, %c0_1] : memref<8x64xf32, #tpu.memory_space<vmem>>, vector<8x64xf32>
    %c0_2 = arith.constant 0 : index
    %c1 = arith.constant 1 : index
    %c0_3 = arith.constant 0 : index
    %c0_4 = arith.constant 0 : index
    %4 = vector.load %arg7[%c0_2, %c1, %c0_3, %c0_4] : memref<1x3x64x64xf32, #tpu.memory_space<vmem>>, vector<1x1x64x64xf32>
    %5 = vector.shape_cast %4 : vector<1x1x64x64xf32> to vector<64x64xf32>
    %cst = arith.constant dense<0.000000e+00> : vector<8x64xf32>
    %6 = tpu.matmul %3, %5, %cst {dimension_numbers = #tpu.dot_dimension_numbers<[1], [0], [0], [1], [0, 0, 1, 1], [], []>} : vector<8x64xf32>, vector<64x64xf32>, vector<8x64xf32> -> vector<8x64xf32>
    %c0_5 = arith.constant 0 : index
    %c0_6 = arith.constant 0 : index
    %c0_7 = arith.constant 0 : index
    %c0_8 = arith.constant 0 : index
    %7 = vector.load %arg7[%c0_5, %c0_6, %c0_7, %c0_8] : memref<1x3x64x64xf32, #tpu.memory_space<vmem>>, vector<1x1x64x64xf32>
    %8 = vector.shape_cast %7 : vector<1x1x64x64xf32> to vector<64x64xf32>
    %cst_9 = arith.constant dense<0.000000e+00> : vector<8x64xf32>
    %9 = tpu.matmul %3, %8, %cst_9 {dimension_numbers = #tpu.dot_dimension_numbers<[1], [0], [0], [1], [0, 0, 1, 1], [], []>} : vector<8x64xf32>, vector<64x64xf32>, vector<8x64xf32> -> vector<8x64xf32>
    %c0_10 = arith.constant 0 : index
    %c2 = arith.constant 2 : index
    %c0_11 = arith.constant 0 : index
    %c0_12 = arith.constant 0 : index
    %10 = vector.load %arg7[%c0_10, %c2, %c0_11, %c0_12] : memref<1x3x64x64xf32, #tpu.memory_space<vmem>>, vector<1x1x64x64xf32>
    %11 = vector.shape_cast %10 : vector<1x1x64x64xf32> to vector<64x64xf32>
    %cst_13 = arith.constant dense<0.000000e+00> : vector<8x64xf32>
    %12 = tpu.matmul %3, %11, %cst_13 {dimension_numbers = #tpu.dot_dimension_numbers<[1], [0], [0], [1], [0, 0, 1, 1], [], []>} : vector<8x64xf32>, vector<64x64xf32>, vector<8x64xf32> -> vector<8x64xf32>
    %13 = tpu.iota {dimensions = array<i32: 0>} : vector<8x64xi32>
    %c0_i32_14 = arith.constant 0 : i32
    %14 = vector.broadcast %c0_i32_14 : i32 to vector<8x64xi32>
    %15 = arith.cmpi eq, %13, %14 : vector<8x64xi32>
    %c1_i32 = arith.constant 1 : i32
    %16 = tpu.dynamic_rotate %9 by %c1_i32 dim 0 : vector<8x64xf32>, i32 -> vector<8x64xf32>
    %cst_15 = arith.constant 0.000000e+00 : f32
    %17 = vector.broadcast %cst_15 : f32 to vector<8x64xf32>
    %18 = arith.select %15, %17, %16 : vector<8x64xi1>, vector<8x64xf32>
    %c7_i32 = arith.constant 7 : i32
    %19 = vector.broadcast %c7_i32 : i32 to vector<8x64xi32>
    %20 = arith.cmpi eq, %13, %19 : vector<8x64xi32>
    %c7_i32_16 = arith.constant 7 : i32
    %21 = tpu.dynamic_rotate %12 by %c7_i32_16 dim 0 : vector<8x64xf32>, i32 -> vector<8x64xf32>
    %cst_17 = arith.constant 0.000000e+00 : f32
    %22 = vector.broadcast %cst_17 : f32 to vector<8x64xf32>
    %23 = arith.select %20, %22, %21 : vector<8x64xi1>, vector<8x64xf32>
    %24 = arith.addf %6, %18 : vector<8x64xf32>
    %25 = arith.addf %24, %23 : vector<8x64xf32>
    %c0_18 = arith.constant 0 : index
    %c0_19 = arith.constant 0 : index
    %c0_20 = arith.constant 0 : index
    %26 = vector.load %arg8[%c0_18, %c0_19, %c0_20] : memref<1x1x64xf32, #tpu.memory_space<vmem>>, vector<1x1x64xf32>
    %27 = vector.shape_cast %26 : vector<1x1x64xf32> to vector<1x64xf32>
    %28 = vector.broadcast %27 : vector<1x64xf32> to vector<8x64xf32>
    %29 = arith.addf %25, %28 : vector<8x64xf32>
    %30 = arith.addf %29, %3 : vector<8x64xf32>
    %cst_21 = arith.constant 0.000000e+00 : f32
    %31 = vector.broadcast %cst_21 : f32 to vector<8x64xf32>
    %32 = arith.maximumf %30, %31 : vector<8x64xf32>
    %c0_22 = arith.constant 0 : index
    %c0_23 = arith.constant 0 : index
    %33 = vector.load %arg10[%c0_22, %c0_23] : memref<8x64xf32, #tpu.memory_space<vmem>>, vector<8x64xf32>
    tpu.vector_store %arg10[%c0_22, %c0_23], %32 {strides = array<i32>} : memref<8x64xf32, #tpu.memory_space<vmem>>, vector<8x64xf32>,
    %c1_i32_24 = arith.constant 1 : i32
    %34 = arith.cmpi eq, %arg1, %c1_i32_24 : i32
    %35 = arith.extui %34 : i1 to i32
    %c0_i32_25 = arith.constant 0 : i32
    %36 = arith.cmpi ne, %35, %c0_i32_25 : i32
    scf.if %36 {
      %c0_26 = arith.constant 0 : index
      %c0_27 = arith.constant 0 : index
      %c0_28 = arith.constant 0 : index
      %37 = vector.load %arg9[%c0_26, %c0_27, %c0_28] : memref<1x8x64xf32, #tpu.memory_space<vmem>>, vector<1x8x64xf32>
      %38 = vector.shape_cast %37 : vector<1x8x64xf32> to vector<8x64xf32>
      %39 = vector.shape_cast %32 : vector<8x64xf32> to vector<1x8x64xf32>
      tpu.vector_store %arg9[%c0_26, %c0_27, %c0_28], %39 {strides = array<i32>} : memref<1x8x64xf32, #tpu.memory_space<vmem>>, vector<1x8x64xf32>,
    } else {
    }
    return
  }
  func.func @transform_0(%arg0: i32, %arg1: i32) -> (i32, i32, i32) {
    %c0_i32 = arith.constant 0 : i32
    %c0_i32_0 = arith.constant 0 : i32
    %c0_i32_1 = arith.constant 0 : i32
    return %arg0, %c0_i32, %c0_i32_0 : i32, i32, i32
  }
  func.func @transform_1(%arg0: i32, %arg1: i32) -> (i32, i32) {
    %c0_i32 = arith.constant 0 : i32
    %c0_i32_0 = arith.constant 0 : i32
    %c0_i32_1 = arith.constant 0 : i32
    return %c0_i32, %c0_i32_0 : i32, i32
  }
  func.func @transform_2(%arg0: i32, %arg1: i32) -> (i32, i32) {
    %c0_i32 = arith.constant 0 : i32
    %c0_i32_0 = arith.constant 0 : i32
    %c0_i32_1 = arith.constant 0 : i32
    return %c0_i32, %c0_i32_0 : i32, i32
  }
  func.func @transform_3(%arg0: i32, %arg1: i32) -> (i32, i32) {
    %c0_i32 = arith.constant 0 : i32
    %c0_i32_0 = arith.constant 0 : i32
    %c0_i32_1 = arith.constant 0 : i32
    return %c0_i32, %c0_i32_0 : i32, i32
  }
  func.func @transform_4(%arg0: i32, %arg1: i32) -> (i32, i32) {
    %c0_i32 = arith.constant 0 : i32
    %c0_i32_0 = arith.constant 0 : i32
    %c0_i32_1 = arith.constant 0 : i32
    return %c0_i32, %c0_i32_0 : i32, i32
  }
  func.func @transform_5(%arg0: i32, %arg1: i32) -> (i32, i32, i32, i32) {
    %c0_i32 = arith.constant 0 : i32
    %c0_i32_0 = arith.constant 0 : i32
    %c0_i32_1 = arith.constant 0 : i32
    %c0_i32_2 = arith.constant 0 : i32
    return %arg1, %c0_i32, %c0_i32_0, %c0_i32_1 : i32, i32, i32, i32
  }
  func.func @transform_6(%arg0: i32, %arg1: i32) -> (i32, i32, i32) {
    %c0_i32 = arith.constant 0 : i32
    %c0_i32_0 = arith.constant 0 : i32
    %c0_i32_1 = arith.constant 0 : i32
    return %arg1, %c0_i32, %c0_i32_0 : i32, i32, i32
  }
  func.func @transform_7(%arg0: i32, %arg1: i32) -> (i32, i32, i32) {
    %c0_i32 = arith.constant 0 : i32
    %c0_i32_0 = arith.constant 0 : i32
    %c0_i32_1 = arith.constant 0 : i32
    return %arg0, %c0_i32, %c0_i32_0 : i32, i32, i32
  }
}

module attributes {stable_mosaic.version = 11 : i64} {
  func.func @kernel(%arg0: i32, %arg1: i32, %arg2: memref<1x8x64xf32, #tpu.memory_space<vmem>>, %arg3: memref<1x3x64x64xf32, #tpu.memory_space<vmem>>, %arg4: memref<1x1x64xf32, #tpu.memory_space<vmem>>, %arg5: memref<1x8x64xf32, #tpu.memory_space<vmem>>, %arg6: memref<8x64xf32, #tpu.memory_space<vmem>>) attributes {dimension_semantics = [#tpu.dimension_semantics<parallel>, #tpu.dimension_semantics<arbitrary>], iteration_bounds = array<i64: 2, 2>, scalar_prefetch = 0 : i64, scratch_operands = 1 : i64, tpu.core_type = #tpu.core_type<tc>, window_params = [{transform_indices = @transform_0, window_bounds = array<i64: 1, 8, 64>}, {transform_indices = @transform_1, window_bounds = array<i64: 1, 3, 64, 64>}, {transform_indices = @transform_2, window_bounds = array<i64: 1, 1, 64>}, {transform_indices = @transform_3, window_bounds = array<i64: 1, 8, 64>}]} {
    %c0_i32 = arith.constant 0 : i32
    %0 = arith.cmpi eq, %arg1, %c0_i32 : i32
    %1 = arith.extui %0 : i1 to i32
    %c0_i32_0 = arith.constant 0 : i32
    %2 = arith.cmpi ne, %1, %c0_i32_0 : i32
    scf.if %2 {
      %c0_26 = arith.constant 0 : index
      %c0_27 = arith.constant 0 : index
      %c0_28 = arith.constant 0 : index
      %37 = vector.load %arg2[%c0_26, %c0_27, %c0_28] : memref<1x8x64xf32, #tpu.memory_space<vmem>>, vector<1x8x64xf32>
      %38 = vector.shape_cast %37 : vector<1x8x64xf32> to vector<8x64xf32>
      %c0_29 = arith.constant 0 : index
      %c0_30 = arith.constant 0 : index
      %39 = vector.load %arg6[%c0_29, %c0_30] : memref<8x64xf32, #tpu.memory_space<vmem>>, vector<8x64xf32>
      tpu.vector_store %arg6[%c0_29, %c0_30], %38 {strides = array<i32>} : memref<8x64xf32, #tpu.memory_space<vmem>>, vector<8x64xf32>,
    } else {
    }
    %c0 = arith.constant 0 : index
    %c0_1 = arith.constant 0 : index
    %3 = vector.load %arg6[%c0, %c0_1] : memref<8x64xf32, #tpu.memory_space<vmem>>, vector<8x64xf32>
    %c0_2 = arith.constant 0 : index
    %c1 = arith.constant 1 : index
    %c0_3 = arith.constant 0 : index
    %c0_4 = arith.constant 0 : index
    %4 = vector.load %arg3[%c0_2, %c1, %c0_3, %c0_4] : memref<1x3x64x64xf32, #tpu.memory_space<vmem>>, vector<1x1x64x64xf32>
    %5 = vector.shape_cast %4 : vector<1x1x64x64xf32> to vector<64x64xf32>
    %cst = arith.constant dense<0.000000e+00> : vector<8x64xf32>
    %6 = tpu.matmul %3, %5, %cst {dimension_numbers = #tpu.dot_dimension_numbers<[1], [0], [0], [1], [0, 0, 1, 1], [], []>} : vector<8x64xf32>, vector<64x64xf32>, vector<8x64xf32> -> vector<8x64xf32>
    %c0_5 = arith.constant 0 : index
    %c0_6 = arith.constant 0 : index
    %c0_7 = arith.constant 0 : index
    %c0_8 = arith.constant 0 : index
    %7 = vector.load %arg3[%c0_5, %c0_6, %c0_7, %c0_8] : memref<1x3x64x64xf32, #tpu.memory_space<vmem>>, vector<1x1x64x64xf32>
    %8 = vector.shape_cast %7 : vector<1x1x64x64xf32> to vector<64x64xf32>
    %cst_9 = arith.constant dense<0.000000e+00> : vector<8x64xf32>
    %9 = tpu.matmul %3, %8, %cst_9 {dimension_numbers = #tpu.dot_dimension_numbers<[1], [0], [0], [1], [0, 0, 1, 1], [], []>} : vector<8x64xf32>, vector<64x64xf32>, vector<8x64xf32> -> vector<8x64xf32>
    %c0_10 = arith.constant 0 : index
    %c2 = arith.constant 2 : index
    %c0_11 = arith.constant 0 : index
    %c0_12 = arith.constant 0 : index
    %10 = vector.load %arg3[%c0_10, %c2, %c0_11, %c0_12] : memref<1x3x64x64xf32, #tpu.memory_space<vmem>>, vector<1x1x64x64xf32>
    %11 = vector.shape_cast %10 : vector<1x1x64x64xf32> to vector<64x64xf32>
    %cst_13 = arith.constant dense<0.000000e+00> : vector<8x64xf32>
    %12 = tpu.matmul %3, %11, %cst_13 {dimension_numbers = #tpu.dot_dimension_numbers<[1], [0], [0], [1], [0, 0, 1, 1], [], []>} : vector<8x64xf32>, vector<64x64xf32>, vector<8x64xf32> -> vector<8x64xf32>
    %13 = tpu.iota {dimensions = array<i32: 0>} : vector<8x64xi32>
    %c0_i32_14 = arith.constant 0 : i32
    %14 = vector.broadcast %c0_i32_14 : i32 to vector<8x64xi32>
    %15 = arith.cmpi eq, %13, %14 : vector<8x64xi32>
    %c1_i32 = arith.constant 1 : i32
    %16 = tpu.dynamic_rotate %9 by %c1_i32 dim 0 : vector<8x64xf32>, i32 -> vector<8x64xf32>
    %cst_15 = arith.constant 0.000000e+00 : f32
    %17 = vector.broadcast %cst_15 : f32 to vector<8x64xf32>
    %18 = arith.select %15, %17, %16 : vector<8x64xi1>, vector<8x64xf32>
    %c7_i32 = arith.constant 7 : i32
    %19 = vector.broadcast %c7_i32 : i32 to vector<8x64xi32>
    %20 = arith.cmpi eq, %13, %19 : vector<8x64xi32>
    %c7_i32_16 = arith.constant 7 : i32
    %21 = tpu.dynamic_rotate %12 by %c7_i32_16 dim 0 : vector<8x64xf32>, i32 -> vector<8x64xf32>
    %cst_17 = arith.constant 0.000000e+00 : f32
    %22 = vector.broadcast %cst_17 : f32 to vector<8x64xf32>
    %23 = arith.select %20, %22, %21 : vector<8x64xi1>, vector<8x64xf32>
    %24 = arith.addf %6, %18 : vector<8x64xf32>
    %25 = arith.addf %24, %23 : vector<8x64xf32>
    %c0_18 = arith.constant 0 : index
    %c0_19 = arith.constant 0 : index
    %c0_20 = arith.constant 0 : index
    %26 = vector.load %arg4[%c0_18, %c0_19, %c0_20] : memref<1x1x64xf32, #tpu.memory_space<vmem>>, vector<1x1x64xf32>
    %27 = vector.shape_cast %26 : vector<1x1x64xf32> to vector<1x64xf32>
    %28 = vector.broadcast %27 : vector<1x64xf32> to vector<8x64xf32>
    %29 = arith.addf %25, %28 : vector<8x64xf32>
    %30 = arith.addf %29, %3 : vector<8x64xf32>
    %cst_21 = arith.constant 0.000000e+00 : f32
    %31 = vector.broadcast %cst_21 : f32 to vector<8x64xf32>
    %32 = arith.maximumf %30, %31 : vector<8x64xf32>
    %c0_22 = arith.constant 0 : index
    %c0_23 = arith.constant 0 : index
    %33 = vector.load %arg6[%c0_22, %c0_23] : memref<8x64xf32, #tpu.memory_space<vmem>>, vector<8x64xf32>
    tpu.vector_store %arg6[%c0_22, %c0_23], %32 {strides = array<i32>} : memref<8x64xf32, #tpu.memory_space<vmem>>, vector<8x64xf32>,
    %c1_i32_24 = arith.constant 1 : i32
    %34 = arith.cmpi eq, %arg1, %c1_i32_24 : i32
    %35 = arith.extui %34 : i1 to i32
    %c0_i32_25 = arith.constant 0 : i32
    %36 = arith.cmpi ne, %35, %c0_i32_25 : i32
    scf.if %36 {
      %c0_26 = arith.constant 0 : index
      %c0_27 = arith.constant 0 : index
      %c0_28 = arith.constant 0 : index
      %37 = vector.load %arg5[%c0_26, %c0_27, %c0_28] : memref<1x8x64xf32, #tpu.memory_space<vmem>>, vector<1x8x64xf32>
      %38 = vector.shape_cast %37 : vector<1x8x64xf32> to vector<8x64xf32>
      %39 = vector.shape_cast %32 : vector<8x64xf32> to vector<1x8x64xf32>
      tpu.vector_store %arg5[%c0_26, %c0_27, %c0_28], %39 {strides = array<i32>} : memref<1x8x64xf32, #tpu.memory_space<vmem>>, vector<1x8x64xf32>,
    } else {
    }
    return
  }
  func.func @transform_0(%arg0: i32, %arg1: i32) -> (i32, i32, i32) {
    %c0_i32 = arith.constant 0 : i32
    %c0_i32_0 = arith.constant 0 : i32
    %c0_i32_1 = arith.constant 0 : i32
    return %arg0, %c0_i32, %c0_i32_0 : i32, i32, i32
  }
  func.func @transform_1(%arg0: i32, %arg1: i32) -> (i32, i32, i32, i32) {
    %c0_i32 = arith.constant 0 : i32
    %c0_i32_0 = arith.constant 0 : i32
    %c0_i32_1 = arith.constant 0 : i32
    %c0_i32_2 = arith.constant 0 : i32
    return %arg1, %c0_i32, %c0_i32_0, %c0_i32_1 : i32, i32, i32, i32
  }
  func.func @transform_2(%arg0: i32, %arg1: i32) -> (i32, i32, i32) {
    %c0_i32 = arith.constant 0 : i32
    %c0_i32_0 = arith.constant 0 : i32
    %c0_i32_1 = arith.constant 0 : i32
    return %arg1, %c0_i32, %c0_i32_0 : i32, i32, i32
  }
  func.func @transform_3(%arg0: i32, %arg1: i32) -> (i32, i32, i32) {
    %c0_i32 = arith.constant 0 : i32
    %c0_i32_0 = arith.constant 0 : i32
    %c0_i32_1 = arith.constant 0 : i32
    return %arg0, %c0_i32, %c0_i32_0 : i32, i32, i32
  }
}

module attributes {stable_mosaic.version = 11 : i64} {
  func.func @kernel(%arg0: i32, %arg1: i32, %arg2: memref<1x4x32xf32, #tpu.memory_space<vmem>>, %arg3: memref<1x3x32x32xf32, #tpu.memory_space<vmem>>, %arg4: memref<1x1x32xf32, #tpu.memory_space<vmem>>, %arg5: memref<1x4x32xf32, #tpu.memory_space<vmem>>, %arg6: memref<4x32xf32, #tpu.memory_space<vmem>>) attributes {dimension_semantics = [#tpu.dimension_semantics<parallel>, #tpu.dimension_semantics<arbitrary>], iteration_bounds = array<i64: 2, 2>, scalar_prefetch = 0 : i64, scratch_operands = 1 : i64, tpu.core_type = #tpu.core_type<tc>, window_params = [{transform_indices = @transform_0, window_bounds = array<i64: 1, 4, 32>}, {transform_indices = @transform_1, window_bounds = array<i64: 1, 3, 32, 32>}, {transform_indices = @transform_2, window_bounds = array<i64: 1, 1, 32>}, {transform_indices = @transform_3, window_bounds = array<i64: 1, 4, 32>}]} {
    %c0_i32 = arith.constant 0 : i32
    %0 = arith.cmpi eq, %arg1, %c0_i32 : i32
    %1 = arith.extui %0 : i1 to i32
    %c0_i32_0 = arith.constant 0 : i32
    %2 = arith.cmpi ne, %1, %c0_i32_0 : i32
    scf.if %2 {
      %c0_25 = arith.constant 0 : index
      %c0_26 = arith.constant 0 : index
      %c0_27 = arith.constant 0 : index
      %40 = vector.load %arg2[%c0_25, %c0_26, %c0_27] : memref<1x4x32xf32, #tpu.memory_space<vmem>>, vector<1x4x32xf32>
      %41 = vector.shape_cast %40 : vector<1x4x32xf32> to vector<4x32xf32>
      %c0_28 = arith.constant 0 : index
      %c0_29 = arith.constant 0 : index
      %42 = vector.load %arg6[%c0_28, %c0_29] : memref<4x32xf32, #tpu.memory_space<vmem>>, vector<4x32xf32>
      tpu.vector_store %arg6[%c0_28, %c0_29], %41 {strides = array<i32>} : memref<4x32xf32, #tpu.memory_space<vmem>>, vector<4x32xf32>,
    } else {
    }
    %c0 = arith.constant 0 : index
    %c0_1 = arith.constant 0 : index
    %3 = vector.load %arg6[%c0, %c0_1] : memref<4x32xf32, #tpu.memory_space<vmem>>, vector<4x32xf32>
    %c0_2 = arith.constant 0 : index
    %c1 = arith.constant 1 : index
    %c0_3 = arith.constant 0 : index
    %c0_4 = arith.constant 0 : index
    %4 = vector.load %arg3[%c0_2, %c1, %c0_3, %c0_4] : memref<1x3x32x32xf32, #tpu.memory_space<vmem>>, vector<1x1x32x32xf32>
    %5 = vector.shape_cast %4 : vector<1x1x32x32xf32> to vector<32x32xf32>
    %cst = arith.constant dense<0.000000e+00> : vector<4x32xf32>
    %6 = tpu.matmul %3, %5, %cst {dimension_numbers = #tpu.dot_dimension_numbers<[1], [0], [0], [1], [0, 0, 1, 1], [], []>} : vector<4x32xf32>, vector<32x32xf32>, vector<4x32xf32> -> vector<4x32xf32>
    %c0_5 = arith.constant 0 : index
    %c0_6 = arith.constant 0 : index
    %c0_7 = arith.constant 0 : index
    %c0_8 = arith.constant 0 : index
    %7 = vector.load %arg3[%c0_5, %c0_6, %c0_7, %c0_8] : memref<1x3x32x32xf32, #tpu.memory_space<vmem>>, vector<1x1x32x32xf32>
    %8 = vector.shape_cast %7 : vector<1x1x32x32xf32> to vector<32x32xf32>
    %cst_9 = arith.constant dense<0.000000e+00> : vector<4x32xf32>
    %9 = tpu.matmul %3, %8, %cst_9 {dimension_numbers = #tpu.dot_dimension_numbers<[1], [0], [0], [1], [0, 0, 1, 1], [], []>} : vector<4x32xf32>, vector<32x32xf32>, vector<4x32xf32> -> vector<4x32xf32>
    %c0_10 = arith.constant 0 : index
    %c2 = arith.constant 2 : index
    %c0_11 = arith.constant 0 : index
    %c0_12 = arith.constant 0 : index
    %10 = vector.load %arg3[%c0_10, %c2, %c0_11, %c0_12] : memref<1x3x32x32xf32, #tpu.memory_space<vmem>>, vector<1x1x32x32xf32>
    %11 = vector.shape_cast %10 : vector<1x1x32x32xf32> to vector<32x32xf32>
    %cst_13 = arith.constant dense<0.000000e+00> : vector<4x32xf32>
    %12 = tpu.matmul %3, %11, %cst_13 {dimension_numbers = #tpu.dot_dimension_numbers<[1], [0], [0], [1], [0, 0, 1, 1], [], []>} : vector<4x32xf32>, vector<32x32xf32>, vector<4x32xf32> -> vector<4x32xf32>
    %13 = tpu.iota {dimensions = array<i32: 0>} : vector<4x4xi32>
    %14 = tpu.iota {dimensions = array<i32: 1>} : vector<4x4xi32>
    %c1_i32 = arith.constant 1 : i32
    %15 = vector.broadcast %c1_i32 : i32 to vector<4x4xi32>
    %16 = arith.addi %14, %15 : vector<4x4xi32>
    %17 = arith.cmpi eq, %13, %16 : vector<4x4xi32>
    %18 = arith.extui %17 : vector<4x4xi1> to vector<4x4xi32>
    %19 = arith.sitofp %18 : vector<4x4xi32> to vector<4x4xf32>
    %c1_i32_14 = arith.constant 1 : i32
    %20 = vector.broadcast %c1_i32_14 : i32 to vector<4x4xi32>
    %21 = arith.addi %13, %20 : vector<4x4xi32>
    %22 = arith.cmpi eq, %14, %21 : vector<4x4xi32>
    %23 = arith.extui %22 : vector<4x4xi1> to vector<4x4xi32>
    %24 = arith.sitofp %23 : vector<4x4xi32> to vector<4x4xf32>
    %cst_15 = arith.constant dense<0.000000e+00> : vector<4x32xf32>
    %25 = tpu.matmul %19, %9, %cst_15 {dimension_numbers = #tpu.dot_dimension_numbers<[1], [0], [0], [1], [0, 0, 1, 1], [], []>} : vector<4x4xf32>, vector<4x32xf32>, vector<4x32xf32> -> vector<4x32xf32>
    %cst_16 = arith.constant dense<0.000000e+00> : vector<4x32xf32>
    %26 = tpu.matmul %24, %12, %cst_16 {dimension_numbers = #tpu.dot_dimension_numbers<[1], [0], [0], [1], [0, 0, 1, 1], [], []>} : vector<4x4xf32>, vector<4x32xf32>, vector<4x32xf32> -> vector<4x32xf32>
    %27 = arith.addf %6, %25 : vector<4x32xf32>
    %28 = arith.addf %27, %26 : vector<4x32xf32>
    %c0_17 = arith.constant 0 : index
    %c0_18 = arith.constant 0 : index
    %c0_19 = arith.constant 0 : index
    %29 = vector.load %arg4[%c0_17, %c0_18, %c0_19] : memref<1x1x32xf32, #tpu.memory_space<vmem>>, vector<1x1x32xf32>
    %30 = vector.shape_cast %29 : vector<1x1x32xf32> to vector<1x32xf32>
    %31 = vector.broadcast %30 : vector<1x32xf32> to vector<4x32xf32>
    %32 = arith.addf %28, %31 : vector<4x32xf32>
    %33 = arith.addf %32, %3 : vector<4x32xf32>
    %cst_20 = arith.constant 0.000000e+00 : f32
    %34 = vector.broadcast %cst_20 : f32 to vector<4x32xf32>
    %35 = arith.maximumf %33, %34 : vector<4x32xf32>
    %c0_21 = arith.constant 0 : index
    %c0_22 = arith.constant 0 : index
    %36 = vector.load %arg6[%c0_21, %c0_22] : memref<4x32xf32, #tpu.memory_space<vmem>>, vector<4x32xf32>
    tpu.vector_store %arg6[%c0_21, %c0_22], %35 {strides = array<i32>} : memref<4x32xf32, #tpu.memory_space<vmem>>, vector<4x32xf32>,
    %c1_i32_23 = arith.constant 1 : i32
    %37 = arith.cmpi eq, %arg1, %c1_i32_23 : i32
    %38 = arith.extui %37 : i1 to i32
    %c0_i32_24 = arith.constant 0 : i32
    %39 = arith.cmpi ne, %38, %c0_i32_24 : i32
    scf.if %39 {
      %c0_25 = arith.constant 0 : index
      %c0_26 = arith.constant 0 : index
      %c0_27 = arith.constant 0 : index
      %40 = vector.load %arg5[%c0_25, %c0_26, %c0_27] : memref<1x4x32xf32, #tpu.memory_space<vmem>>, vector<1x4x32xf32>
      %41 = vector.shape_cast %40 : vector<1x4x32xf32> to vector<4x32xf32>
      %42 = vector.shape_cast %35 : vector<4x32xf32> to vector<1x4x32xf32>
      tpu.vector_store %arg5[%c0_25, %c0_26, %c0_27], %42 {strides = array<i32>} : memref<1x4x32xf32, #tpu.memory_space<vmem>>, vector<1x4x32xf32>,
    } else {
    }
    return
  }
  func.func @transform_0(%arg0: i32, %arg1: i32) -> (i32, i32, i32) {
    %c0_i32 = arith.constant 0 : i32
    %c0_i32_0 = arith.constant 0 : i32
    %c0_i32_1 = arith.constant 0 : i32
    return %arg0, %c0_i32, %c0_i32_0 : i32, i32, i32
  }
  func.func @transform_1(%arg0: i32, %arg1: i32) -> (i32, i32, i32, i32) {
    %c0_i32 = arith.constant 0 : i32
    %c0_i32_0 = arith.constant 0 : i32
    %c0_i32_1 = arith.constant 0 : i32
    %c0_i32_2 = arith.constant 0 : i32
    return %arg1, %c0_i32, %c0_i32_0, %c0_i32_1 : i32, i32, i32, i32
  }
  func.func @transform_2(%arg0: i32, %arg1: i32) -> (i32, i32, i32) {
    %c0_i32 = arith.constant 0 : i32
    %c0_i32_0 = arith.constant 0 : i32
    %c0_i32_1 = arith.constant 0 : i32
    return %arg1, %c0_i32, %c0_i32_0 : i32, i32, i32
  }
  func.func @transform_3(%arg0: i32, %arg1: i32) -> (i32, i32, i32) {
    %c0_i32 = arith.constant 0 : i32
    %c0_i32_0 = arith.constant 0 : i32
    %c0_i32_1 = arith.constant 0 : i32
    return %arg0, %c0_i32, %c0_i32_0 : i32, i32, i32
  }
}

module attributes {stable_mosaic.version = 11 : i64} {
  func.func @kernel(%arg0: i32, %arg1: i32, %arg2: memref<1x8x64xf32, #tpu.memory_space<vmem>>, %arg3: memref<4x8xf32, #tpu.memory_space<vmem>>, %arg4: memref<4x8xf32, #tpu.memory_space<vmem>>, %arg5: memref<64x32xf32, #tpu.memory_space<vmem>>, %arg6: memref<64x32xf32, #tpu.memory_space<vmem>>, %arg7: memref<1x3x32x32xf32, #tpu.memory_space<vmem>>, %arg8: memref<1x1x32xf32, #tpu.memory_space<vmem>>, %arg9: memref<1x4x32xf32, #tpu.memory_space<vmem>>, %arg10: memref<4x32xf32, #tpu.memory_space<vmem>>) attributes {dimension_semantics = [#tpu.dimension_semantics<parallel>, #tpu.dimension_semantics<arbitrary>], iteration_bounds = array<i64: 2, 2>, scalar_prefetch = 0 : i64, scratch_operands = 1 : i64, tpu.core_type = #tpu.core_type<tc>, window_params = [{transform_indices = @transform_0, window_bounds = array<i64: 1, 8, 64>}, {pipeline_mode = #tpu.pipeline_mode<synchronous>, transform_indices = @transform_1, window_bounds = array<i64: 4, 8>}, {pipeline_mode = #tpu.pipeline_mode<synchronous>, transform_indices = @transform_2, window_bounds = array<i64: 4, 8>}, {pipeline_mode = #tpu.pipeline_mode<synchronous>, transform_indices = @transform_3, window_bounds = array<i64: 64, 32>}, {pipeline_mode = #tpu.pipeline_mode<synchronous>, transform_indices = @transform_4, window_bounds = array<i64: 64, 32>}, {transform_indices = @transform_5, window_bounds = array<i64: 1, 3, 32, 32>}, {transform_indices = @transform_6, window_bounds = array<i64: 1, 1, 32>}, {transform_indices = @transform_7, window_bounds = array<i64: 1, 4, 32>}]} {
    %c0_i32 = arith.constant 0 : i32
    %0 = arith.cmpi eq, %arg1, %c0_i32 : i32
    %1 = arith.extui %0 : i1 to i32
    %c0_i32_0 = arith.constant 0 : i32
    %2 = arith.cmpi ne, %1, %c0_i32_0 : i32
    scf.if %2 {
      %c0_25 = arith.constant 0 : index
      %c0_26 = arith.constant 0 : index
      %c0_27 = arith.constant 0 : index
      %40 = vector.load %arg2[%c0_25, %c0_26, %c0_27] : memref<1x8x64xf32, #tpu.memory_space<vmem>>, vector<1x8x64xf32>
      %41 = vector.shape_cast %40 : vector<1x8x64xf32> to vector<8x64xf32>
      %c0_28 = arith.constant 0 : index
      %c0_29 = arith.constant 0 : index
      %42 = vector.load %arg3[%c0_28, %c0_29] : memref<4x8xf32, #tpu.memory_space<vmem>>, vector<4x8xf32>
      %cst_30 = arith.constant dense<0.000000e+00> : vector<4x64xf32>
      %43 = tpu.matmul %42, %41, %cst_30 {dimension_numbers = #tpu.dot_dimension_numbers<[1], [0], [0], [1], [0, 0, 1, 1], [], []>} : vector<4x8xf32>, vector<8x64xf32>, vector<4x64xf32> -> vector<4x64xf32>
      %c0_31 = arith.constant 0 : index
      %c0_32 = arith.constant 0 : index
      %44 = vector.load %arg4[%c0_31, %c0_32] : memref<4x8xf32, #tpu.memory_space<vmem>>, vector<4x8xf32>
      %cst_33 = arith.constant dense<0.000000e+00> : vector<4x64xf32>
      %45 = tpu.matmul %44, %41, %cst_33 {dimension_numbers = #tpu.dot_dimension_numbers<[1], [0], [0], [1], [0, 0, 1, 1], [], []>} : vector<4x8xf32>, vector<8x64xf32>, vector<4x64xf32> -> vector<4x64xf32>
      %46 = arith.maximumf %43, %45 : vector<4x64xf32>
      %c0_34 = arith.constant 0 : index
      %c0_35 = arith.constant 0 : index
      %47 = vector.load %arg5[%c0_34, %c0_35] : memref<64x32xf32, #tpu.memory_space<vmem>>, vector<64x32xf32>
      %cst_36 = arith.constant dense<0.000000e+00> : vector<4x32xf32>
      %48 = tpu.matmul %46, %47, %cst_36 {dimension_numbers = #tpu.dot_dimension_numbers<[1], [0], [0], [1], [0, 0, 1, 1], [], []>} : vector<4x64xf32>, vector<64x32xf32>, vector<4x32xf32> -> vector<4x32xf32>
      %c0_37 = arith.constant 0 : index
      %c0_38 = arith.constant 0 : index
      %49 = vector.load %arg6[%c0_37, %c0_38] : memref<64x32xf32, #tpu.memory_space<vmem>>, vector<64x32xf32>
      %cst_39 = arith.constant dense<0.000000e+00> : vector<4x32xf32>
      %50 = tpu.matmul %46, %49, %cst_39 {dimension_numbers = #tpu.dot_dimension_numbers<[1], [0], [0], [1], [0, 0, 1, 1], [], []>} : vector<4x64xf32>, vector<64x32xf32>, vector<4x32xf32> -> vector<4x32xf32>
      %51 = arith.maximumf %48, %50 : vector<4x32xf32>
      %c0_40 = arith.constant 0 : index
      %c0_41 = arith.constant 0 : index
      %52 = vector.load %arg10[%c0_40, %c0_41] : memref<4x32xf32, #tpu.memory_space<vmem>>, vector<4x32xf32>
      tpu.vector_store %arg10[%c0_40, %c0_41], %51 {strides = array<i32>} : memref<4x32xf32, #tpu.memory_space<vmem>>, vector<4x32xf32>,
    } else {
    }
    %c0 = arith.constant 0 : index
    %c0_1 = arith.constant 0 : index
    %3 = vector.load %arg10[%c0, %c0_1] : memref<4x32xf32, #tpu.memory_space<vmem>>, vector<4x32xf32>
    %c0_2 = arith.constant 0 : index
    %c1 = arith.constant 1 : index
    %c0_3 = arith.constant 0 : index
    %c0_4 = arith.constant 0 : index
    %4 = vector.load %arg7[%c0_2, %c1, %c0_3, %c0_4] : memref<1x3x32x32xf32, #tpu.memory_space<vmem>>, vector<1x1x32x32xf32>
    %5 = vector.shape_cast %4 : vector<1x1x32x32xf32> to vector<32x32xf32>
    %cst = arith.constant dense<0.000000e+00> : vector<4x32xf32>
    %6 = tpu.matmul %3, %5, %cst {dimension_numbers = #tpu.dot_dimension_numbers<[1], [0], [0], [1], [0, 0, 1, 1], [], []>} : vector<4x32xf32>, vector<32x32xf32>, vector<4x32xf32> -> vector<4x32xf32>
    %c0_5 = arith.constant 0 : index
    %c0_6 = arith.constant 0 : index
    %c0_7 = arith.constant 0 : index
    %c0_8 = arith.constant 0 : index
    %7 = vector.load %arg7[%c0_5, %c0_6, %c0_7, %c0_8] : memref<1x3x32x32xf32, #tpu.memory_space<vmem>>, vector<1x1x32x32xf32>
    %8 = vector.shape_cast %7 : vector<1x1x32x32xf32> to vector<32x32xf32>
    %cst_9 = arith.constant dense<0.000000e+00> : vector<4x32xf32>
    %9 = tpu.matmul %3, %8, %cst_9 {dimension_numbers = #tpu.dot_dimension_numbers<[1], [0], [0], [1], [0, 0, 1, 1], [], []>} : vector<4x32xf32>, vector<32x32xf32>, vector<4x32xf32> -> vector<4x32xf32>
    %c0_10 = arith.constant 0 : index
    %c2 = arith.constant 2 : index
    %c0_11 = arith.constant 0 : index
    %c0_12 = arith.constant 0 : index
    %10 = vector.load %arg7[%c0_10, %c2, %c0_11, %c0_12] : memref<1x3x32x32xf32, #tpu.memory_space<vmem>>, vector<1x1x32x32xf32>
    %11 = vector.shape_cast %10 : vector<1x1x32x32xf32> to vector<32x32xf32>
    %cst_13 = arith.constant dense<0.000000e+00> : vector<4x32xf32>
    %12 = tpu.matmul %3, %11, %cst_13 {dimension_numbers = #tpu.dot_dimension_numbers<[1], [0], [0], [1], [0, 0, 1, 1], [], []>} : vector<4x32xf32>, vector<32x32xf32>, vector<4x32xf32> -> vector<4x32xf32>
    %13 = tpu.iota {dimensions = array<i32: 0>} : vector<4x4xi32>
    %14 = tpu.iota {dimensions = array<i32: 1>} : vector<4x4xi32>
    %c1_i32 = arith.constant 1 : i32
    %15 = vector.broadcast %c1_i32 : i32 to vector<4x4xi32>
    %16 = arith.addi %14, %15 : vector<4x4xi32>
    %17 = arith.cmpi eq, %13, %16 : vector<4x4xi32>
    %18 = arith.extui %17 : vector<4x4xi1> to vector<4x4xi32>
    %19 = arith.sitofp %18 : vector<4x4xi32> to vector<4x4xf32>
    %c1_i32_14 = arith.constant 1 : i32
    %20 = vector.broadcast %c1_i32_14 : i32 to vector<4x4xi32>
    %21 = arith.addi %13, %20 : vector<4x4xi32>
    %22 = arith.cmpi eq, %14, %21 : vector<4x4xi32>
    %23 = arith.extui %22 : vector<4x4xi1> to vector<4x4xi32>
    %24 = arith.sitofp %23 : vector<4x4xi32> to vector<4x4xf32>
    %cst_15 = arith.constant dense<0.000000e+00> : vector<4x32xf32>
    %25 = tpu.matmul %19, %9, %cst_15 {dimension_numbers = #tpu.dot_dimension_numbers<[1], [0], [0], [1], [0, 0, 1, 1], [], []>} : vector<4x4xf32>, vector<4x32xf32>, vector<4x32xf32> -> vector<4x32xf32>
    %cst_16 = arith.constant dense<0.000000e+00> : vector<4x32xf32>
    %26 = tpu.matmul %24, %12, %cst_16 {dimension_numbers = #tpu.dot_dimension_numbers<[1], [0], [0], [1], [0, 0, 1, 1], [], []>} : vector<4x4xf32>, vector<4x32xf32>, vector<4x32xf32> -> vector<4x32xf32>
    %27 = arith.addf %6, %25 : vector<4x32xf32>
    %28 = arith.addf %27, %26 : vector<4x32xf32>
    %c0_17 = arith.constant 0 : index
    %c0_18 = arith.constant 0 : index
    %c0_19 = arith.constant 0 : index
    %29 = vector.load %arg8[%c0_17, %c0_18, %c0_19] : memref<1x1x32xf32, #tpu.memory_space<vmem>>, vector<1x1x32xf32>
    %30 = vector.shape_cast %29 : vector<1x1x32xf32> to vector<1x32xf32>
    %31 = vector.broadcast %30 : vector<1x32xf32> to vector<4x32xf32>
    %32 = arith.addf %28, %31 : vector<4x32xf32>
    %33 = arith.addf %32, %3 : vector<4x32xf32>
    %cst_20 = arith.constant 0.000000e+00 : f32
    %34 = vector.broadcast %cst_20 : f32 to vector<4x32xf32>
    %35 = arith.maximumf %33, %34 : vector<4x32xf32>
    %c0_21 = arith.constant 0 : index
    %c0_22 = arith.constant 0 : index
    %36 = vector.load %arg10[%c0_21, %c0_22] : memref<4x32xf32, #tpu.memory_space<vmem>>, vector<4x32xf32>
    tpu.vector_store %arg10[%c0_21, %c0_22], %35 {strides = array<i32>} : memref<4x32xf32, #tpu.memory_space<vmem>>, vector<4x32xf32>,
    %c1_i32_23 = arith.constant 1 : i32
    %37 = arith.cmpi eq, %arg1, %c1_i32_23 : i32
    %38 = arith.extui %37 : i1 to i32
    %c0_i32_24 = arith.constant 0 : i32
    %39 = arith.cmpi ne, %38, %c0_i32_24 : i32
    scf.if %39 {
      %c0_25 = arith.constant 0 : index
      %c0_26 = arith.constant 0 : index
      %c0_27 = arith.constant 0 : index
      %40 = vector.load %arg9[%c0_25, %c0_26, %c0_27] : memref<1x4x32xf32, #tpu.memory_space<vmem>>, vector<1x4x32xf32>
      %41 = vector.shape_cast %40 : vector<1x4x32xf32> to vector<4x32xf32>
      %42 = vector.shape_cast %35 : vector<4x32xf32> to vector<1x4x32xf32>
      tpu.vector_store %arg9[%c0_25, %c0_26, %c0_27], %42 {strides = array<i32>} : memref<1x4x32xf32, #tpu.memory_space<vmem>>, vector<1x4x32xf32>,
    } else {
    }
    return
  }
  func.func @transform_0(%arg0: i32, %arg1: i32) -> (i32, i32, i32) {
    %c0_i32 = arith.constant 0 : i32
    %c0_i32_0 = arith.constant 0 : i32
    %c0_i32_1 = arith.constant 0 : i32
    return %arg0, %c0_i32, %c0_i32_0 : i32, i32, i32
  }
  func.func @transform_1(%arg0: i32, %arg1: i32) -> (i32, i32) {
    %c0_i32 = arith.constant 0 : i32
    %c0_i32_0 = arith.constant 0 : i32
    %c0_i32_1 = arith.constant 0 : i32
    return %c0_i32, %c0_i32_0 : i32, i32
  }
  func.func @transform_2(%arg0: i32, %arg1: i32) -> (i32, i32) {
    %c0_i32 = arith.constant 0 : i32
    %c0_i32_0 = arith.constant 0 : i32
    %c0_i32_1 = arith.constant 0 : i32
    return %c0_i32, %c0_i32_0 : i32, i32
  }
  func.func @transform_3(%arg0: i32, %arg1: i32) -> (i32, i32) {
    %c0_i32 = arith.constant 0 : i32
    %c0_i32_0 = arith.constant 0 : i32
    %c0_i32_1 = arith.constant 0 : i32
    return %c0_i32, %c0_i32_0 : i32, i32
  }
  func.func @transform_4(%arg0: i32, %arg1: i32) -> (i32, i32) {
    %c0_i32 = arith.constant 0 : i32
    %c0_i32_0 = arith.constant 0 : i32
    %c0_i32_1 = arith.constant 0 : i32
    return %c0_i32, %c0_i32_0 : i32, i32
  }
  func.func @transform_5(%arg0: i32, %arg1: i32) -> (i32, i32, i32, i32) {
    %c0_i32 = arith.constant 0 : i32
    %c0_i32_0 = arith.constant 0 : i32
    %c0_i32_1 = arith.constant 0 : i32
    %c0_i32_2 = arith.constant 0 : i32
    return %arg1, %c0_i32, %c0_i32_0, %c0_i32_1 : i32, i32, i32, i32
  }
  func.func @transform_6(%arg0: i32, %arg1: i32) -> (i32, i32, i32) {
    %c0_i32 = arith.constant 0 : i32
    %c0_i32_0 = arith.constant 0 : i32
    %c0_i32_1 = arith.constant 0 : i32
    return %arg1, %c0_i32, %c0_i32_0 : i32, i32, i32
  }
  func.func @transform_7(%arg0: i32, %arg1: i32) -> (i32, i32, i32) {
    %c0_i32 = arith.constant 0 : i32
    %c0_i32_0 = arith.constant 0 : i32
    %c0_i32_1 = arith.constant 0 : i32
    return %arg0, %c0_i32, %c0_i32_0 : i32, i32, i32
  }
}

module attributes {stable_mosaic.version = 11 : i64} {
  func.func @kernel(%arg0: i32, %arg1: i32, %arg2: memref<1x4x32xf32, #tpu.memory_space<vmem>>, %arg3: memref<1x8x64xf32, #tpu.memory_space<vmem>>, %arg4: memref<8x4xf32, #tpu.memory_space<vmem>>, %arg5: memref<32x64xf32, #tpu.memory_space<vmem>>, %arg6: memref<1x3x32x32xf32, #tpu.memory_space<vmem>>, %arg7: memref<1x1x32xf32, #tpu.memory_space<vmem>>, %arg8: memref<1x8x64xf32, #tpu.memory_space<vmem>>, %arg9: memref<4x32xf32, #tpu.memory_space<vmem>>) attributes {dimension_semantics = [#tpu.dimension_semantics<parallel>, #tpu.dimension_semantics<arbitrary>], iteration_bounds = array<i64: 2, 2>, scalar_prefetch = 0 : i64, scratch_operands = 1 : i64, tpu.core_type = #tpu.core_type<tc>, window_params = [{transform_indices = @transform_0, window_bounds = array<i64: 1, 4, 32>}, {transform_indices = @transform_1, window_bounds = array<i64: 1, 8, 64>}, {pipeline_mode = #tpu.pipeline_mode<synchronous>, transform_indices = @transform_2, window_bounds = array<i64: 8, 4>}, {pipeline_mode = #tpu.pipeline_mode<synchronous>, transform_indices = @transform_3, window_bounds = array<i64: 32, 64>}, {transform_indices = @transform_4, window_bounds = array<i64: 1, 3, 32, 32>}, {transform_indices = @transform_5, window_bounds = array<i64: 1, 1, 32>}, {transform_indices = @transform_6, window_bounds = array<i64: 1, 8, 64>}]} {
    %c0_i32 = arith.constant 0 : i32
    %0 = arith.cmpi eq, %arg1, %c0_i32 : i32
    %1 = arith.extui %0 : i1 to i32
    %c0_i32_0 = arith.constant 0 : i32
    %2 = arith.cmpi ne, %1, %c0_i32_0 : i32
    scf.if %2 {
      %c0_25 = arith.constant 0 : index
      %c0_26 = arith.constant 0 : index
      %c0_27 = arith.constant 0 : index
      %40 = vector.load %arg2[%c0_25, %c0_26, %c0_27] : memref<1x4x32xf32, #tpu.memory_space<vmem>>, vector<1x4x32xf32>
      %41 = vector.shape_cast %40 : vector<1x4x32xf32> to vector<4x32xf32>
      %c0_28 = arith.constant 0 : index
      %c0_29 = arith.constant 0 : index
      %42 = vector.load %arg9[%c0_28, %c0_29] : memref<4x32xf32, #tpu.memory_space<vmem>>, vector<4x32xf32>
      tpu.vector_store %arg9[%c0_28, %c0_29], %41 {strides = array<i32>} : memref<4x32xf32, #tpu.memory_space<vmem>>, vector<4x32xf32>,
    } else {
    }
    %c0 = arith.constant 0 : index
    %c0_1 = arith.constant 0 : index
    %3 = vector.load %arg9[%c0, %c0_1] : memref<4x32xf32, #tpu.memory_space<vmem>>, vector<4x32xf32>
    %c0_2 = arith.constant 0 : index
    %c1 = arith.constant 1 : index
    %c0_3 = arith.constant 0 : index
    %c0_4 = arith.constant 0 : index
    %4 = vector.load %arg6[%c0_2, %c1, %c0_3, %c0_4] : memref<1x3x32x32xf32, #tpu.memory_space<vmem>>, vector<1x1x32x32xf32>
    %5 = vector.shape_cast %4 : vector<1x1x32x32xf32> to vector<32x32xf32>
    %cst = arith.constant dense<0.000000e+00> : vector<4x32xf32>
    %6 = tpu.matmul %3, %5, %cst {dimension_numbers = #tpu.dot_dimension_numbers<[1], [0], [0], [1], [0, 0, 1, 1], [], []>} : vector<4x32xf32>, vector<32x32xf32>, vector<4x32xf32> -> vector<4x32xf32>
    %c0_5 = arith.constant 0 : index
    %c0_6 = arith.constant 0 : index
    %c0_7 = arith.constant 0 : index
    %c0_8 = arith.constant 0 : index
    %7 = vector.load %arg6[%c0_5, %c0_6, %c0_7, %c0_8] : memref<1x3x32x32xf32, #tpu.memory_space<vmem>>, vector<1x1x32x32xf32>
    %8 = vector.shape_cast %7 : vector<1x1x32x32xf32> to vector<32x32xf32>
    %cst_9 = arith.constant dense<0.000000e+00> : vector<4x32xf32>
    %9 = tpu.matmul %3, %8, %cst_9 {dimension_numbers = #tpu.dot_dimension_numbers<[1], [0], [0], [1], [0, 0, 1, 1], [], []>} : vector<4x32xf32>, vector<32x32xf32>, vector<4x32xf32> -> vector<4x32xf32>
    %c0_10 = arith.constant 0 : index
    %c2 = arith.constant 2 : index
    %c0_11 = arith.constant 0 : index
    %c0_12 = arith.constant 0 : index
    %10 = vector.load %arg6[%c0_10, %c2, %c0_11, %c0_12] : memref<1x3x32x32xf32, #tpu.memory_space<vmem>>, vector<1x1x32x32xf32>
    %11 = vector.shape_cast %10 : vector<1x1x32x32xf32> to vector<32x32xf32>
    %cst_13 = arith.constant dense<0.000000e+00> : vector<4x32xf32>
    %12 = tpu.matmul %3, %11, %cst_13 {dimension_numbers = #tpu.dot_dimension_numbers<[1], [0], [0], [1], [0, 0, 1, 1], [], []>} : vector<4x32xf32>, vector<32x32xf32>, vector<4x32xf32> -> vector<4x32xf32>
    %13 = tpu.iota {dimensions = array<i32: 0>} : vector<4x4xi32>
    %14 = tpu.iota {dimensions = array<i32: 1>} : vector<4x4xi32>
    %c1_i32 = arith.constant 1 : i32
    %15 = vector.broadcast %c1_i32 : i32 to vector<4x4xi32>
    %16 = arith.addi %14, %15 : vector<4x4xi32>
    %17 = arith.cmpi eq, %13, %16 : vector<4x4xi32>
    %18 = arith.extui %17 : vector<4x4xi1> to vector<4x4xi32>
    %19 = arith.sitofp %18 : vector<4x4xi32> to vector<4x4xf32>
    %c1_i32_14 = arith.constant 1 : i32
    %20 = vector.broadcast %c1_i32_14 : i32 to vector<4x4xi32>
    %21 = arith.addi %13, %20 : vector<4x4xi32>
    %22 = arith.cmpi eq, %14, %21 : vector<4x4xi32>
    %23 = arith.extui %22 : vector<4x4xi1> to vector<4x4xi32>
    %24 = arith.sitofp %23 : vector<4x4xi32> to vector<4x4xf32>
    %cst_15 = arith.constant dense<0.000000e+00> : vector<4x32xf32>
    %25 = tpu.matmul %19, %9, %cst_15 {dimension_numbers = #tpu.dot_dimension_numbers<[1], [0], [0], [1], [0, 0, 1, 1], [], []>} : vector<4x4xf32>, vector<4x32xf32>, vector<4x32xf32> -> vector<4x32xf32>
    %cst_16 = arith.constant dense<0.000000e+00> : vector<4x32xf32>
    %26 = tpu.matmul %24, %12, %cst_16 {dimension_numbers = #tpu.dot_dimension_numbers<[1], [0], [0], [1], [0, 0, 1, 1], [], []>} : vector<4x4xf32>, vector<4x32xf32>, vector<4x32xf32> -> vector<4x32xf32>
    %27 = arith.addf %6, %25 : vector<4x32xf32>
    %28 = arith.addf %27, %26 : vector<4x32xf32>
    %c0_17 = arith.constant 0 : index
    %c0_18 = arith.constant 0 : index
    %c0_19 = arith.constant 0 : index
    %29 = vector.load %arg7[%c0_17, %c0_18, %c0_19] : memref<1x1x32xf32, #tpu.memory_space<vmem>>, vector<1x1x32xf32>
    %30 = vector.shape_cast %29 : vector<1x1x32xf32> to vector<1x32xf32>
    %31 = vector.broadcast %30 : vector<1x32xf32> to vector<4x32xf32>
    %32 = arith.addf %28, %31 : vector<4x32xf32>
    %33 = arith.addf %32, %3 : vector<4x32xf32>
    %cst_20 = arith.constant 0.000000e+00 : f32
    %34 = vector.broadcast %cst_20 : f32 to vector<4x32xf32>
    %35 = arith.maximumf %33, %34 : vector<4x32xf32>
    %c0_21 = arith.constant 0 : index
    %c0_22 = arith.constant 0 : index
    %36 = vector.load %arg9[%c0_21, %c0_22] : memref<4x32xf32, #tpu.memory_space<vmem>>, vector<4x32xf32>
    tpu.vector_store %arg9[%c0_21, %c0_22], %35 {strides = array<i32>} : memref<4x32xf32, #tpu.memory_space<vmem>>, vector<4x32xf32>,
    %c1_i32_23 = arith.constant 1 : i32
    %37 = arith.cmpi eq, %arg1, %c1_i32_23 : i32
    %38 = arith.extui %37 : i1 to i32
    %c0_i32_24 = arith.constant 0 : i32
    %39 = arith.cmpi ne, %38, %c0_i32_24 : i32
    scf.if %39 {
      %c0_25 = arith.constant 0 : index
      %c0_26 = arith.constant 0 : index
      %40 = vector.load %arg4[%c0_25, %c0_26] : memref<8x4xf32, #tpu.memory_space<vmem>>, vector<8x4xf32>
      %cst_27 = arith.constant dense<0.000000e+00> : vector<8x32xf32>
      %41 = tpu.matmul %40, %35, %cst_27 {dimension_numbers = #tpu.dot_dimension_numbers<[1], [0], [0], [1], [0, 0, 1, 1], [], []>} : vector<8x4xf32>, vector<4x32xf32>, vector<8x32xf32> -> vector<8x32xf32>
      %c0_28 = arith.constant 0 : index
      %c0_29 = arith.constant 0 : index
      %42 = vector.load %arg5[%c0_28, %c0_29] : memref<32x64xf32, #tpu.memory_space<vmem>>, vector<32x64xf32>
      %cst_30 = arith.constant dense<0.000000e+00> : vector<8x64xf32>
      %43 = tpu.matmul %41, %42, %cst_30 {dimension_numbers = #tpu.dot_dimension_numbers<[1], [0], [0], [1], [0, 0, 1, 1], [], []>} : vector<8x32xf32>, vector<32x64xf32>, vector<8x64xf32> -> vector<8x64xf32>
      %c0_31 = arith.constant 0 : index
      %c0_32 = arith.constant 0 : index
      %c0_33 = arith.constant 0 : index
      %44 = vector.load %arg3[%c0_31, %c0_32, %c0_33] : memref<1x8x64xf32, #tpu.memory_space<vmem>>, vector<1x8x64xf32>
      %45 = vector.shape_cast %44 : vector<1x8x64xf32> to vector<8x64xf32>
      %46 = arith.addf %43, %45 : vector<8x64xf32>
      %c0_34 = arith.constant 0 : index
      %c0_35 = arith.constant 0 : index
      %c0_36 = arith.constant 0 : index
      %47 = vector.load %arg8[%c0_34, %c0_35, %c0_36] : memref<1x8x64xf32, #tpu.memory_space<vmem>>, vector<1x8x64xf32>
      %48 = vector.shape_cast %47 : vector<1x8x64xf32> to vector<8x64xf32>
      %49 = vector.shape_cast %46 : vector<8x64xf32> to vector<1x8x64xf32>
      tpu.vector_store %arg8[%c0_34, %c0_35, %c0_36], %49 {strides = array<i32>} : memref<1x8x64xf32, #tpu.memory_space<vmem>>, vector<1x8x64xf32>,
    } else {
    }
    return
  }
  func.func @transform_0(%arg0: i32, %arg1: i32) -> (i32, i32, i32) {
    %c0_i32 = arith.constant 0 : i32
    %c0_i32_0 = arith.constant 0 : i32
    %c0_i32_1 = arith.constant 0 : i32
    return %arg0, %c0_i32, %c0_i32_0 : i32, i32, i32
  }
  func.func @transform_1(%arg0: i32, %arg1: i32) -> (i32, i32, i32) {
    %c0_i32 = arith.constant 0 : i32
    %c0_i32_0 = arith.constant 0 : i32
    %c0_i32_1 = arith.constant 0 : i32
    return %arg0, %c0_i32, %c0_i32_0 : i32, i32, i32
  }
  func.func @transform_2(%arg0: i32, %arg1: i32) -> (i32, i32) {
    %c0_i32 = arith.constant 0 : i32
    %c0_i32_0 = arith.constant 0 : i32
    %c0_i32_1 = arith.constant 0 : i32
    return %c0_i32, %c0_i32_0 : i32, i32
  }
  func.func @transform_3(%arg0: i32, %arg1: i32) -> (i32, i32) {
    %c0_i32 = arith.constant 0 : i32
    %c0_i32_0 = arith.constant 0 : i32
    %c0_i32_1 = arith.constant 0 : i32
    return %c0_i32, %c0_i32_0 : i32, i32
  }
  func.func @transform_4(%arg0: i32, %arg1: i32) -> (i32, i32, i32, i32) {
    %c0_i32 = arith.constant 0 : i32
    %c0_i32_0 = arith.constant 0 : i32
    %c0_i32_1 = arith.constant 0 : i32
    %c0_i32_2 = arith.constant 0 : i32
    return %arg1, %c0_i32, %c0_i32_0, %c0_i32_1 : i32, i32, i32, i32
  }
  func.func @transform_5(%arg0: i32, %arg1: i32) -> (i32, i32, i32) {
    %c0_i32 = arith.constant 0 : i32
    %c0_i32_0 = arith.constant 0 : i32
    %c0_i32_1 = arith.constant 0 : i32
    return %arg1, %c0_i32, %c0_i32_0 : i32, i32, i32
  }
  func.func @transform_6(%arg0: i32, %arg1: i32) -> (i32, i32, i32) {
    %c0_i32 = arith.constant 0 : i32
    %c0_i32_0 = arith.constant 0 : i32
    %c0_i32_1 = arith.constant 0 : i32
    return %arg0, %c0_i32, %c0_i32_0 : i32, i32, i32
  }
}

module attributes {stable_mosaic.version = 11 : i64} {
  func.func @kernel(%arg0: i32, %arg1: i32, %arg2: memref<1x16x128xf32, #tpu.memory_space<vmem>>, %arg3: memref<1x3x128x128xf32, #tpu.memory_space<vmem>>, %arg4: memref<1x1x128xf32, #tpu.memory_space<vmem>>, %arg5: memref<1x16x128xf32, #tpu.memory_space<vmem>>, %arg6: memref<16x128xf32, #tpu.memory_space<vmem>>) attributes {dimension_semantics = [#tpu.dimension_semantics<parallel>, #tpu.dimension_semantics<arbitrary>], iteration_bounds = array<i64: 2, 2>, scalar_prefetch = 0 : i64, scratch_operands = 1 : i64, tpu.core_type = #tpu.core_type<tc>, window_params = [{transform_indices = @transform_0, window_bounds = array<i64: 1, 16, 128>}, {transform_indices = @transform_1, window_bounds = array<i64: 1, 3, 128, 128>}, {transform_indices = @transform_2, window_bounds = array<i64: 1, 1, 128>}, {transform_indices = @transform_3, window_bounds = array<i64: 1, 16, 128>}]} {
    %c0_i32 = arith.constant 0 : i32
    %0 = arith.cmpi eq, %arg1, %c0_i32 : i32
    %1 = arith.extui %0 : i1 to i32
    %c0_i32_0 = arith.constant 0 : i32
    %2 = arith.cmpi ne, %1, %c0_i32_0 : i32
    scf.if %2 {
      %c0_26 = arith.constant 0 : index
      %c0_27 = arith.constant 0 : index
      %c0_28 = arith.constant 0 : index
      %37 = vector.load %arg2[%c0_26, %c0_27, %c0_28] : memref<1x16x128xf32, #tpu.memory_space<vmem>>, vector<1x16x128xf32>
      %38 = vector.shape_cast %37 : vector<1x16x128xf32> to vector<16x128xf32>
      %c0_29 = arith.constant 0 : index
      %c0_30 = arith.constant 0 : index
      %39 = vector.load %arg6[%c0_29, %c0_30] : memref<16x128xf32, #tpu.memory_space<vmem>>, vector<16x128xf32>
      tpu.vector_store %arg6[%c0_29, %c0_30], %38 {strides = array<i32>} : memref<16x128xf32, #tpu.memory_space<vmem>>, vector<16x128xf32>,
    } else {
    }
    %c0 = arith.constant 0 : index
    %c0_1 = arith.constant 0 : index
    %3 = vector.load %arg6[%c0, %c0_1] : memref<16x128xf32, #tpu.memory_space<vmem>>, vector<16x128xf32>
    %c0_2 = arith.constant 0 : index
    %c1 = arith.constant 1 : index
    %c0_3 = arith.constant 0 : index
    %c0_4 = arith.constant 0 : index
    %4 = vector.load %arg3[%c0_2, %c1, %c0_3, %c0_4] : memref<1x3x128x128xf32, #tpu.memory_space<vmem>>, vector<1x1x128x128xf32>
    %5 = vector.shape_cast %4 : vector<1x1x128x128xf32> to vector<128x128xf32>
    %cst = arith.constant dense<0.000000e+00> : vector<16x128xf32>
    %6 = tpu.matmul %3, %5, %cst {dimension_numbers = #tpu.dot_dimension_numbers<[1], [0], [0], [1], [0, 0, 1, 1], [], []>} : vector<16x128xf32>, vector<128x128xf32>, vector<16x128xf32> -> vector<16x128xf32>
    %c0_5 = arith.constant 0 : index
    %c0_6 = arith.constant 0 : index
    %c0_7 = arith.constant 0 : index
    %c0_8 = arith.constant 0 : index
    %7 = vector.load %arg3[%c0_5, %c0_6, %c0_7, %c0_8] : memref<1x3x128x128xf32, #tpu.memory_space<vmem>>, vector<1x1x128x128xf32>
    %8 = vector.shape_cast %7 : vector<1x1x128x128xf32> to vector<128x128xf32>
    %cst_9 = arith.constant dense<0.000000e+00> : vector<16x128xf32>
    %9 = tpu.matmul %3, %8, %cst_9 {dimension_numbers = #tpu.dot_dimension_numbers<[1], [0], [0], [1], [0, 0, 1, 1], [], []>} : vector<16x128xf32>, vector<128x128xf32>, vector<16x128xf32> -> vector<16x128xf32>
    %c0_10 = arith.constant 0 : index
    %c2 = arith.constant 2 : index
    %c0_11 = arith.constant 0 : index
    %c0_12 = arith.constant 0 : index
    %10 = vector.load %arg3[%c0_10, %c2, %c0_11, %c0_12] : memref<1x3x128x128xf32, #tpu.memory_space<vmem>>, vector<1x1x128x128xf32>
    %11 = vector.shape_cast %10 : vector<1x1x128x128xf32> to vector<128x128xf32>
    %cst_13 = arith.constant dense<0.000000e+00> : vector<16x128xf32>
    %12 = tpu.matmul %3, %11, %cst_13 {dimension_numbers = #tpu.dot_dimension_numbers<[1], [0], [0], [1], [0, 0, 1, 1], [], []>} : vector<16x128xf32>, vector<128x128xf32>, vector<16x128xf32> -> vector<16x128xf32>
    %13 = tpu.iota {dimensions = array<i32: 0>} : vector<16x128xi32>
    %c0_i32_14 = arith.constant 0 : i32
    %14 = vector.broadcast %c0_i32_14 : i32 to vector<16x128xi32>
    %15 = arith.cmpi eq, %13, %14 : vector<16x128xi32>
    %c1_i32 = arith.constant 1 : i32
    %16 = tpu.dynamic_rotate %9 by %c1_i32 dim 0 : vector<16x128xf32>, i32 -> vector<16x128xf32>
    %cst_15 = arith.constant 0.000000e+00 : f32
    %17 = vector.broadcast %cst_15 : f32 to vector<16x128xf32>
    %18 = arith.select %15, %17, %16 : vector<16x128xi1>, vector<16x128xf32>
    %c15_i32 = arith.constant 15 : i32
    %19 = vector.broadcast %c15_i32 : i32 to vector<16x128xi32>
    %20 = arith.cmpi eq, %13, %19 : vector<16x128xi32>
    %c15_i32_16 = arith.constant 15 : i32
    %21 = tpu.dynamic_rotate %12 by %c15_i32_16 dim 0 : vector<16x128xf32>, i32 -> vector<16x128xf32>
    %cst_17 = arith.constant 0.000000e+00 : f32
    %22 = vector.broadcast %cst_17 : f32 to vector<16x128xf32>
    %23 = arith.select %20, %22, %21 : vector<16x128xi1>, vector<16x128xf32>
    %24 = arith.addf %6, %18 : vector<16x128xf32>
    %25 = arith.addf %24, %23 : vector<16x128xf32>
    %c0_18 = arith.constant 0 : index
    %c0_19 = arith.constant 0 : index
    %c0_20 = arith.constant 0 : index
    %26 = vector.load %arg4[%c0_18, %c0_19, %c0_20] : memref<1x1x128xf32, #tpu.memory_space<vmem>>, vector<1x1x128xf32>
    %27 = vector.shape_cast %26 : vector<1x1x128xf32> to vector<1x128xf32>
    %28 = vector.broadcast %27 : vector<1x128xf32> to vector<16x128xf32>
    %29 = arith.addf %25, %28 : vector<16x128xf32>
    %30 = arith.addf %29, %3 : vector<16x128xf32>
    %cst_21 = arith.constant 0.000000e+00 : f32
    %31 = vector.broadcast %cst_21 : f32 to vector<16x128xf32>
    %32 = arith.maximumf %30, %31 : vector<16x128xf32>
    %c0_22 = arith.constant 0 : index
    %c0_23 = arith.constant 0 : index
    %33 = vector.load %arg6[%c0_22, %c0_23] : memref<16x128xf32, #tpu.memory_space<vmem>>, vector<16x128xf32>
    tpu.vector_store %arg6[%c0_22, %c0_23], %32 {strides = array<i32>} : memref<16x128xf32, #tpu.memory_space<vmem>>, vector<16x128xf32>,
    %c1_i32_24 = arith.constant 1 : i32
    %34 = arith.cmpi eq, %arg1, %c1_i32_24 : i32
    %35 = arith.extui %34 : i1 to i32
    %c0_i32_25 = arith.constant 0 : i32
    %36 = arith.cmpi ne, %35, %c0_i32_25 : i32
    scf.if %36 {
      %c0_26 = arith.constant 0 : index
      %c0_27 = arith.constant 0 : index
      %c0_28 = arith.constant 0 : index
      %37 = vector.load %arg5[%c0_26, %c0_27, %c0_28] : memref<1x16x128xf32, #tpu.memory_space<vmem>>, vector<1x16x128xf32>
      %38 = vector.shape_cast %37 : vector<1x16x128xf32> to vector<16x128xf32>
      %39 = vector.shape_cast %32 : vector<16x128xf32> to vector<1x16x128xf32>
      tpu.vector_store %arg5[%c0_26, %c0_27, %c0_28], %39 {strides = array<i32>} : memref<1x16x128xf32, #tpu.memory_space<vmem>>, vector<1x16x128xf32>,
    } else {
    }
    return
  }
  func.func @transform_0(%arg0: i32, %arg1: i32) -> (i32, i32, i32) {
    %c0_i32 = arith.constant 0 : i32
    %c0_i32_0 = arith.constant 0 : i32
    %c0_i32_1 = arith.constant 0 : i32
    return %arg0, %c0_i32, %c0_i32_0 : i32, i32, i32
  }
  func.func @transform_1(%arg0: i32, %arg1: i32) -> (i32, i32, i32, i32) {
    %c0_i32 = arith.constant 0 : i32
    %c0_i32_0 = arith.constant 0 : i32
    %c0_i32_1 = arith.constant 0 : i32
    %c0_i32_2 = arith.constant 0 : i32
    return %arg1, %c0_i32, %c0_i32_0, %c0_i32_1 : i32, i32, i32, i32
  }
  func.func @transform_2(%arg0: i32, %arg1: i32) -> (i32, i32, i32) {
    %c0_i32 = arith.constant 0 : i32
    %c0_i32_0 = arith.constant 0 : i32
    %c0_i32_1 = arith.constant 0 : i32
    return %arg1, %c0_i32, %c0_i32_0 : i32, i32, i32
  }
  func.func @transform_3(%arg0: i32, %arg1: i32) -> (i32, i32, i32) {
    %c0_i32 = arith.constant 0 : i32
    %c0_i32_0 = arith.constant 0 : i32
    %c0_i32_1 = arith.constant 0 : i32
    return %arg0, %c0_i32, %c0_i32_0 : i32, i32, i32
  }
}

module attributes {stable_mosaic.version = 11 : i64} {
  func.func @kernel(%arg0: i32, %arg1: i32, %arg2: memref<1x8x64xf32, #tpu.memory_space<vmem>>, %arg3: memref<1x16x128xf32, #tpu.memory_space<vmem>>, %arg4: memref<16x8xf32, #tpu.memory_space<vmem>>, %arg5: memref<64x128xf32, #tpu.memory_space<vmem>>, %arg6: memref<1x3x64x64xf32, #tpu.memory_space<vmem>>, %arg7: memref<1x1x64xf32, #tpu.memory_space<vmem>>, %arg8: memref<1x16x128xf32, #tpu.memory_space<vmem>>, %arg9: memref<8x64xf32, #tpu.memory_space<vmem>>) attributes {dimension_semantics = [#tpu.dimension_semantics<parallel>, #tpu.dimension_semantics<arbitrary>], iteration_bounds = array<i64: 2, 2>, scalar_prefetch = 0 : i64, scratch_operands = 1 : i64, tpu.core_type = #tpu.core_type<tc>, window_params = [{transform_indices = @transform_0, window_bounds = array<i64: 1, 8, 64>}, {transform_indices = @transform_1, window_bounds = array<i64: 1, 16, 128>}, {pipeline_mode = #tpu.pipeline_mode<synchronous>, transform_indices = @transform_2, window_bounds = array<i64: 16, 8>}, {pipeline_mode = #tpu.pipeline_mode<synchronous>, transform_indices = @transform_3, window_bounds = array<i64: 64, 128>}, {transform_indices = @transform_4, window_bounds = array<i64: 1, 3, 64, 64>}, {transform_indices = @transform_5, window_bounds = array<i64: 1, 1, 64>}, {transform_indices = @transform_6, window_bounds = array<i64: 1, 16, 128>}]} {
    %c0_i32 = arith.constant 0 : i32
    %0 = arith.cmpi eq, %arg1, %c0_i32 : i32
    %1 = arith.extui %0 : i1 to i32
    %c0_i32_0 = arith.constant 0 : i32
    %2 = arith.cmpi ne, %1, %c0_i32_0 : i32
    scf.if %2 {
      %c0_26 = arith.constant 0 : index
      %c0_27 = arith.constant 0 : index
      %c0_28 = arith.constant 0 : index
      %37 = vector.load %arg2[%c0_26, %c0_27, %c0_28] : memref<1x8x64xf32, #tpu.memory_space<vmem>>, vector<1x8x64xf32>
      %38 = vector.shape_cast %37 : vector<1x8x64xf32> to vector<8x64xf32>
      %c0_29 = arith.constant 0 : index
      %c0_30 = arith.constant 0 : index
      %39 = vector.load %arg9[%c0_29, %c0_30] : memref<8x64xf32, #tpu.memory_space<vmem>>, vector<8x64xf32>
      tpu.vector_store %arg9[%c0_29, %c0_30], %38 {strides = array<i32>} : memref<8x64xf32, #tpu.memory_space<vmem>>, vector<8x64xf32>,
    } else {
    }
    %c0 = arith.constant 0 : index
    %c0_1 = arith.constant 0 : index
    %3 = vector.load %arg9[%c0, %c0_1] : memref<8x64xf32, #tpu.memory_space<vmem>>, vector<8x64xf32>
    %c0_2 = arith.constant 0 : index
    %c1 = arith.constant 1 : index
    %c0_3 = arith.constant 0 : index
    %c0_4 = arith.constant 0 : index
    %4 = vector.load %arg6[%c0_2, %c1, %c0_3, %c0_4] : memref<1x3x64x64xf32, #tpu.memory_space<vmem>>, vector<1x1x64x64xf32>
    %5 = vector.shape_cast %4 : vector<1x1x64x64xf32> to vector<64x64xf32>
    %cst = arith.constant dense<0.000000e+00> : vector<8x64xf32>
    %6 = tpu.matmul %3, %5, %cst {dimension_numbers = #tpu.dot_dimension_numbers<[1], [0], [0], [1], [0, 0, 1, 1], [], []>} : vector<8x64xf32>, vector<64x64xf32>, vector<8x64xf32> -> vector<8x64xf32>
    %c0_5 = arith.constant 0 : index
    %c0_6 = arith.constant 0 : index
    %c0_7 = arith.constant 0 : index
    %c0_8 = arith.constant 0 : index
    %7 = vector.load %arg6[%c0_5, %c0_6, %c0_7, %c0_8] : memref<1x3x64x64xf32, #tpu.memory_space<vmem>>, vector<1x1x64x64xf32>
    %8 = vector.shape_cast %7 : vector<1x1x64x64xf32> to vector<64x64xf32>
    %cst_9 = arith.constant dense<0.000000e+00> : vector<8x64xf32>
    %9 = tpu.matmul %3, %8, %cst_9 {dimension_numbers = #tpu.dot_dimension_numbers<[1], [0], [0], [1], [0, 0, 1, 1], [], []>} : vector<8x64xf32>, vector<64x64xf32>, vector<8x64xf32> -> vector<8x64xf32>
    %c0_10 = arith.constant 0 : index
    %c2 = arith.constant 2 : index
    %c0_11 = arith.constant 0 : index
    %c0_12 = arith.constant 0 : index
    %10 = vector.load %arg6[%c0_10, %c2, %c0_11, %c0_12] : memref<1x3x64x64xf32, #tpu.memory_space<vmem>>, vector<1x1x64x64xf32>
    %11 = vector.shape_cast %10 : vector<1x1x64x64xf32> to vector<64x64xf32>
    %cst_13 = arith.constant dense<0.000000e+00> : vector<8x64xf32>
    %12 = tpu.matmul %3, %11, %cst_13 {dimension_numbers = #tpu.dot_dimension_numbers<[1], [0], [0], [1], [0, 0, 1, 1], [], []>} : vector<8x64xf32>, vector<64x64xf32>, vector<8x64xf32> -> vector<8x64xf32>
    %13 = tpu.iota {dimensions = array<i32: 0>} : vector<8x64xi32>
    %c0_i32_14 = arith.constant 0 : i32
    %14 = vector.broadcast %c0_i32_14 : i32 to vector<8x64xi32>
    %15 = arith.cmpi eq, %13, %14 : vector<8x64xi32>
    %c1_i32 = arith.constant 1 : i32
    %16 = tpu.dynamic_rotate %9 by %c1_i32 dim 0 : vector<8x64xf32>, i32 -> vector<8x64xf32>
    %cst_15 = arith.constant 0.000000e+00 : f32
    %17 = vector.broadcast %cst_15 : f32 to vector<8x64xf32>
    %18 = arith.select %15, %17, %16 : vector<8x64xi1>, vector<8x64xf32>
    %c7_i32 = arith.constant 7 : i32
    %19 = vector.broadcast %c7_i32 : i32 to vector<8x64xi32>
    %20 = arith.cmpi eq, %13, %19 : vector<8x64xi32>
    %c7_i32_16 = arith.constant 7 : i32
    %21 = tpu.dynamic_rotate %12 by %c7_i32_16 dim 0 : vector<8x64xf32>, i32 -> vector<8x64xf32>
    %cst_17 = arith.constant 0.000000e+00 : f32
    %22 = vector.broadcast %cst_17 : f32 to vector<8x64xf32>
    %23 = arith.select %20, %22, %21 : vector<8x64xi1>, vector<8x64xf32>
    %24 = arith.addf %6, %18 : vector<8x64xf32>
    %25 = arith.addf %24, %23 : vector<8x64xf32>
    %c0_18 = arith.constant 0 : index
    %c0_19 = arith.constant 0 : index
    %c0_20 = arith.constant 0 : index
    %26 = vector.load %arg7[%c0_18, %c0_19, %c0_20] : memref<1x1x64xf32, #tpu.memory_space<vmem>>, vector<1x1x64xf32>
    %27 = vector.shape_cast %26 : vector<1x1x64xf32> to vector<1x64xf32>
    %28 = vector.broadcast %27 : vector<1x64xf32> to vector<8x64xf32>
    %29 = arith.addf %25, %28 : vector<8x64xf32>
    %30 = arith.addf %29, %3 : vector<8x64xf32>
    %cst_21 = arith.constant 0.000000e+00 : f32
    %31 = vector.broadcast %cst_21 : f32 to vector<8x64xf32>
    %32 = arith.maximumf %30, %31 : vector<8x64xf32>
    %c0_22 = arith.constant 0 : index
    %c0_23 = arith.constant 0 : index
    %33 = vector.load %arg9[%c0_22, %c0_23] : memref<8x64xf32, #tpu.memory_space<vmem>>, vector<8x64xf32>
    tpu.vector_store %arg9[%c0_22, %c0_23], %32 {strides = array<i32>} : memref<8x64xf32, #tpu.memory_space<vmem>>, vector<8x64xf32>,
    %c1_i32_24 = arith.constant 1 : i32
    %34 = arith.cmpi eq, %arg1, %c1_i32_24 : i32
    %35 = arith.extui %34 : i1 to i32
    %c0_i32_25 = arith.constant 0 : i32
    %36 = arith.cmpi ne, %35, %c0_i32_25 : i32
    scf.if %36 {
      %c0_26 = arith.constant 0 : index
      %c0_27 = arith.constant 0 : index
      %37 = vector.load %arg4[%c0_26, %c0_27] : memref<16x8xf32, #tpu.memory_space<vmem>>, vector<16x8xf32>
      %cst_28 = arith.constant dense<0.000000e+00> : vector<16x64xf32>
      %38 = tpu.matmul %37, %32, %cst_28 {dimension_numbers = #tpu.dot_dimension_numbers<[1], [0], [0], [1], [0, 0, 1, 1], [], []>} : vector<16x8xf32>, vector<8x64xf32>, vector<16x64xf32> -> vector<16x64xf32>
      %c0_29 = arith.constant 0 : index
      %c0_30 = arith.constant 0 : index
      %39 = vector.load %arg5[%c0_29, %c0_30] : memref<64x128xf32, #tpu.memory_space<vmem>>, vector<64x128xf32>
      %cst_31 = arith.constant dense<0.000000e+00> : vector<16x128xf32>
      %40 = tpu.matmul %38, %39, %cst_31 {dimension_numbers = #tpu.dot_dimension_numbers<[1], [0], [0], [1], [0, 0, 1, 1], [], []>} : vector<16x64xf32>, vector<64x128xf32>, vector<16x128xf32> -> vector<16x128xf32>
      %c0_32 = arith.constant 0 : index
      %c0_33 = arith.constant 0 : index
      %c0_34 = arith.constant 0 : index
      %41 = vector.load %arg3[%c0_32, %c0_33, %c0_34] : memref<1x16x128xf32, #tpu.memory_space<vmem>>, vector<1x16x128xf32>
      %42 = vector.shape_cast %41 : vector<1x16x128xf32> to vector<16x128xf32>
      %43 = arith.addf %40, %42 : vector<16x128xf32>
      %c0_35 = arith.constant 0 : index
      %c0_36 = arith.constant 0 : index
      %c0_37 = arith.constant 0 : index
      %44 = vector.load %arg8[%c0_35, %c0_36, %c0_37] : memref<1x16x128xf32, #tpu.memory_space<vmem>>, vector<1x16x128xf32>
      %45 = vector.shape_cast %44 : vector<1x16x128xf32> to vector<16x128xf32>
      %46 = vector.shape_cast %43 : vector<16x128xf32> to vector<1x16x128xf32>
      tpu.vector_store %arg8[%c0_35, %c0_36, %c0_37], %46 {strides = array<i32>} : memref<1x16x128xf32, #tpu.memory_space<vmem>>, vector<1x16x128xf32>,
    } else {
    }
    return
  }
  func.func @transform_0(%arg0: i32, %arg1: i32) -> (i32, i32, i32) {
    %c0_i32 = arith.constant 0 : i32
    %c0_i32_0 = arith.constant 0 : i32
    %c0_i32_1 = arith.constant 0 : i32
    return %arg0, %c0_i32, %c0_i32_0 : i32, i32, i32
  }
  func.func @transform_1(%arg0: i32, %arg1: i32) -> (i32, i32, i32) {
    %c0_i32 = arith.constant 0 : i32
    %c0_i32_0 = arith.constant 0 : i32
    %c0_i32_1 = arith.constant 0 : i32
    return %arg0, %c0_i32, %c0_i32_0 : i32, i32, i32
  }
  func.func @transform_2(%arg0: i32, %arg1: i32) -> (i32, i32) {
    %c0_i32 = arith.constant 0 : i32
    %c0_i32_0 = arith.constant 0 : i32
    %c0_i32_1 = arith.constant 0 : i32
    return %c0_i32, %c0_i32_0 : i32, i32
  }
  func.func @transform_3(%arg0: i32, %arg1: i32) -> (i32, i32) {
    %c0_i32 = arith.constant 0 : i32
    %c0_i32_0 = arith.constant 0 : i32
    %c0_i32_1 = arith.constant 0 : i32
    return %c0_i32, %c0_i32_0 : i32, i32
  }
  func.func @transform_4(%arg0: i32, %arg1: i32) -> (i32, i32, i32, i32) {
    %c0_i32 = arith.constant 0 : i32
    %c0_i32_0 = arith.constant 0 : i32
    %c0_i32_1 = arith.constant 0 : i32
    %c0_i32_2 = arith.constant 0 : i32
    return %arg1, %c0_i32, %c0_i32_0, %c0_i32_1 : i32, i32, i32, i32
  }
  func.func @transform_5(%arg0: i32, %arg1: i32) -> (i32, i32, i32) {
    %c0_i32 = arith.constant 0 : i32
    %c0_i32_0 = arith.constant 0 : i32
    %c0_i32_1 = arith.constant 0 : i32
    return %arg1, %c0_i32, %c0_i32_0 : i32, i32, i32
  }
  func.func @transform_6(%arg0: i32, %arg1: i32) -> (i32, i32, i32) {
    %c0_i32 = arith.constant 0 : i32
    %c0_i32_0 = arith.constant 0 : i32
    %c0_i32_1 = arith.constant 0 : i32
    return %arg0, %c0_i32, %c0_i32_0 : i32, i32, i32
  }
}

</mosaic_0001>

<llo_original>
// kernel: hourglass_forward.9
$region0: #{hourglass_forward.9}
  #allocation0 [shape = 'u32[]', space=smem, size = 0x4, offset = 0x4, fixed_abs, tag = 'smem constant byte address 0x4 - core index']
  #allocation1 [shape = 'u32[144,128]{1,0:T(1,128)}', space=vmem, size = 0x12000, scoped, tag = 'internal scratch']
  #allocation2 [shape = 'f32[8,64]{1,0:T(8,128)}', space=vmem, size = 0x1000, scoped, tag = 'scratch operand']
  %s0 = inlined_call_operand.vmem [shape: f32[2,8,64], index: 0, kind: input, shape index: {}]
  %s1 = inlined_call_operand.vmem [shape: f32[2,3,64,64], index: 1, kind: input, shape index: {}]
  %s2 = inlined_call_operand.vmem [shape: f32[2,1,64], index: 2, kind: input, shape index: {}]
  %s3 = inlined_call_operand.vmem [shape: f32[2,8,64], index: 3, kind: output, shape index: {}]
  %s4 = sld [smem:[#allocation0]]
  $region53: #{hourglass_forward.9} parent=0
    _
  %s6 = ssub.s32 1, %s4
  %s7 = scalar_select 0, %s6, %s4
  loop: start=0, step=1, limit=6
  $region2: #{hourglass_forward.9} parent=0 // loop_pre_header
    _
  $region3: #{hourglass_forward.9} parent=0 // loop_header
    %s9 = sphi 0, %s13
    %p10 = scmp.ge.s32.totalorder %s9, 6
    %s16 = sphi 0, %s28
    %s17 = sphi 0, %s24
    %s18 = sphi 0, %s16
    %s19 = sphi 0, %s17
    %s20 = sphi 0, %s18
    %s21 = sphi 0, %s19
    %s31 = sphi 0, %s33
    %s34 = sphi 0, %s31
    %s35 = sphi 0, %s34
    %s51 = sphi 0, %s35
    %s57 = sphi 0, %s59
    %s60 = sphi 0, %s57
    %s61 = sphi 0, %s60
    %s77 = sphi 0, %s61
    %s83 = sphi 0, %s85
    %s86 = sphi 0, %s83
    %s87 = sphi 0, %s86
    %s103 = sphi 0, %s87
    %s109 = sphi 0, %s111
    %s112 = sphi 0, %s109
    %s113 = sphi 0, %s112
    %s129 = sphi 0, %s113
  $region4: #{hourglass_forward.9} parent=0 // loop_header_branch
    %12 = sbr.rel (%p10) target = $region8
  $region5: #{hourglass_forward.9} parent=0 // loop_body
    %s14 = ssub.s32 %s9, 1
    %s15 = ssub.s32 %s9, 2
    %s22 = sadd.s32 1, %s17
    %p23 = scmp.ge.s32.totalorder %s22, 2
    %s24 = scalar_select %p23, 0, %s22
    %s25 = sadd.s32 1, %s16
    %s26 = scalar_select %p23, %s25, %s16
    %p27 = scmp.ge.s32.totalorder %s26, 2
    %s28 = scalar_select %p27, 0, %s26
    %s29 = ssub.s32 %s16, %s28
    %p30 = scmp.eq.s32.totalorder %s29, 0
    %s32 = sadd.s32 %s31, 1
    %s33 = scalar_select %p30, %s31, %s32
    %p36 = pneg %p30
    %p37 = scmp.eq.s32.totalorder %s9, 3
    %p38 = por %p36, %p37
    %p39 = scmp.ne.s32.totalorder %s31, %s34
    %p40 = scmp.eq.s32.totalorder %s9, 0
    %p41 = por %p39, %p40
    %p42 = scmp.ne.s32.totalorder %s31, %s34
    %p43 = scmp.eq.s32.totalorder %s14, 3
    %p44 = por %p42, %p43
    %p45 = scmp.ne.s32.totalorder %s34, %s35
    %p46 = scmp.eq.s32.totalorder %s14, 0
    %p47 = por %p45, %p46
    %p48 = scmp.ne.s32.totalorder %s34, %s35
    %p49 = scmp.eq.s32.totalorder %s15, 3
    %p50 = por %p48, %p49
    %p52 = scmp.ne.s32.totalorder %s35, %s51
    %p53 = scmp.eq.s32.totalorder %s15, 0
    %p54 = por %p52, %p53
    %s55 = ssub.s32 %s17, %s24
    %p56 = scmp.eq.s32.totalorder %s55, 0
    %s58 = sadd.s32 %s57, 1
    %s59 = scalar_select %p56, %s57, %s58
    %p62 = pneg %p56
    %p63 = scmp.eq.s32.totalorder %s9, 3
    %p64 = por %p62, %p63
    %p65 = scmp.ne.s32.totalorder %s57, %s60
    %p66 = scmp.eq.s32.totalorder %s9, 0
    %p67 = por %p65, %p66
    %p68 = scmp.ne.s32.totalorder %s57, %s60
    %p69 = scmp.eq.s32.totalorder %s14, 3
    %p70 = por %p68, %p69
    %p71 = scmp.ne.s32.totalorder %s60, %s61
    %p72 = scmp.eq.s32.totalorder %s14, 0
    %p73 = por %p71, %p72
    %p74 = scmp.ne.s32.totalorder %s60, %s61
    %p75 = scmp.eq.s32.totalorder %s15, 3
    %p76 = por %p74, %p75
    %p78 = scmp.ne.s32.totalorder %s61, %s77
    %p79 = scmp.eq.s32.totalorder %s15, 0
    %p80 = por %p78, %p79
    %s81 = ssub.s32 %s17, %s24
    %p82 = scmp.eq.s32.totalorder %s81, 0
    %s84 = sadd.s32 %s83, 1
    %s85 = scalar_select %p82, %s83, %s84
    %p88 = pneg %p82
    %p89 = scmp.eq.s32.totalorder %s9, 3
    %p90 = por %p88, %p89
    %p91 = scmp.ne.s32.totalorder %s83, %s86
    %p92 = scmp.eq.s32.totalorder %s9, 0
    %p93 = por %p91, %p92
    %p94 = scmp.ne.s32.totalorder %s83, %s86
    %p95 = scmp.eq.s32.totalorder %s14, 3
    %p96 = por %p94, %p95
    %p97 = scmp.ne.s32.totalorder %s86, %s87
    %p98 = scmp.eq.s32.totalorder %s14, 0
    %p99 = por %p97, %p98
    %p100 = scmp.ne.s32.totalorder %s86, %s87
    %p101 = scmp.eq.s32.totalorder %s15, 3
    %p102 = por %p100, %p101
    %p104 = scmp.ne.s32.totalorder %s87, %s103
    %p105 = scmp.eq.s32.totalorder %s15, 0
    %p106 = por %p104, %p105
    %s107 = ssub.s32 %s16, %s28
    %p108 = scmp.eq.s32.totalorder %s107, 0
    %s110 = sadd.s32 %s109, 1
    %s111 = scalar_select %p108, %s109, %s110
    %p114 = pneg %p108
    %p115 = scmp.eq.s32.totalorder %s9, 3
    %p116 = por %p114, %p115
    %p117 = scmp.ne.s32.totalorder %s109, %s112
    %p118 = scmp.eq.s32.totalorder %s9, 0
    %p119 = por %p117, %p118
    %p120 = scmp.ne.s32.totalorder %s109, %s112
    %p121 = scmp.eq.s32.totalorder %s14, 3
    %p122 = por %p120, %p121
    %p123 = scmp.ne.s32.totalorder %s112, %s113
    %p124 = scmp.eq.s32.totalorder %s14, 0
    %p125 = por %p123, %p124
    %p126 = scmp.ne.s32.totalorder %s112, %s113
    %p127 = scmp.eq.s32.totalorder %s15, 3
    %p128 = por %p126, %p127
    %p130 = scmp.ne.s32.totalorder %s113, %s129
    %p131 = scmp.eq.s32.totalorder %s15, 0
    %p132 = por %p130, %p131
    %p133 = scmp.le.s32.totalorder 1, %s9
    %p134 = scmp.lt.s32.totalorder %s9, 5
    %p135 = pnand %p133, %p134
    %p136 = pneg %p135
    // Predicated region
    $region9: #{hourglass_forward.9} parent=5 // pred_check
      _
    $region10: #{hourglass_forward.9} parent=5 // pred_check_branch
      %138 = sbr.rel (%p135) target = $region12
    $region11: #{hourglass_forward.9} parent=5 // pred_region
      %s139 = ssub.s32 %s9, 1
    $region12: #{hourglass_forward.9} parent=5 // pred_fallthru
      _
    %p140 = scmp.lt.s32.totalorder %s9, 4
    // Predicated region
    $region13: #{hourglass_forward.9} parent=5 // pred_check
      %p141 = pneg %p140
    $region14: #{hourglass_forward.9} parent=5 // pred_check_branch
      %143 = sbr.rel (%p141) target = $region16
    $region15: #{hourglass_forward.9} parent=5 // pred_region
      // Predicated region
      $region17: #{hourglass_forward.9} parent=15 // pred_check
        %p144 = pneg %p41
      $region18: #{hourglass_forward.9} parent=15 // pred_check_branch
        %146 = sbr.rel (%p144) target = $region20
      $region19: #{hourglass_forward.9} parent=15 // pred_region
        %p147 = scmp.lt.s32.totalorder %s16, 1
        %s148 = scalar_select %p147, %s16, 1
        %s149 = smul.addr %s148, 8
        %s150 = scalar_lea.vmem %s0, %s149
      $region20: #{hourglass_forward.9} parent=15 // pred_fallthru
        _
      // Predicated region
      $region21: #{hourglass_forward.9} parent=15 // pred_check
        %p151 = pneg %p67
      $region22: #{hourglass_forward.9} parent=15 // pred_check_branch
        %153 = sbr.rel (%p151) target = $region24
      $region23: #{hourglass_forward.9} parent=15 // pred_region
        %p154 = scmp.lt.s32.totalorder %s17, 1
        %s155 = scalar_select %p154, %s17, 1
        %s156 = smul.addr %s155, 24
        %s157 = smul.addr %s156, 8
        %s158 = scalar_lea.vmem %s1, %s157
      $region24: #{hourglass_forward.9} parent=15 // pred_fallthru
        _
      // Predicated region
      $region25: #{hourglass_forward.9} parent=15 // pred_check
        %p159 = pneg %p93
      $region26: #{hourglass_forward.9} parent=15 // pred_check_branch
        %161 = sbr.rel (%p159) target = $region28
      $region27: #{hourglass_forward.9} parent=15 // pred_region
        %p162 = scmp.lt.s32.totalorder %s17, 1
        %s163 = scalar_select %p162, %s17, 1
        %s164 = scalar_lea.vmem %s2, %s163
      $region28: #{hourglass_forward.9} parent=15 // pred_fallthru
        _
    $region16: #{hourglass_forward.9} parent=5 // pred_fallthru
      _
    %p165 = scmp.le.s32.totalorder 1, %s9
    %p166 = scmp.lt.s32.totalorder %s9, 5
    %p167 = pnand %p165, %p166
    %p168 = pneg %p167
    // Predicated region
    $region29: #{hourglass_forward.9} parent=5 // pred_check
      _
    $region30: #{hourglass_forward.9} parent=5 // pred_check_branch
      %170 = sbr.rel (%p167) target = $region32
    $region31: #{hourglass_forward.9} parent=5 // pred_region
      %s171 = ssub.s32 %s9, 1
      %p172 = scmp.lt.s32.totalorder %s18, 1
      %s173 = scalar_select %p172, %s18, 1
      %s174 = smul.addr %s173, 8
      %s175 = scalar_lea.vmem %s0, %s174
      %p176 = pneg %p47
      %p177 = pneg %p44
      %p178 = scmp.lt.s32.totalorder %s19, 1
      %s179 = scalar_select %p178, %s19, 1
      %s180 = smul.addr %s179, 24
      %s181 = smul.addr %s180, 8
      %s182 = scalar_lea.vmem %s1, %s181
      %p183 = pneg %p73
      %p184 = pneg %p70
      %p185 = scmp.lt.s32.totalorder %s19, 1
      %s186 = scalar_select %p185, %s19, 1
      %s187 = scalar_lea.vmem %s2, %s186
      %p188 = pneg %p99
      %p189 = pneg %p96
      %p190 = pneg %p125
      %p191 = pneg %p122
      %p192 = scmp.lt.s32.totalorder %s18, 1
      %s193 = scalar_select %p192, %s18, 1
      %s194 = smul.addr %s193, 8
      %s195 = scalar_lea.vmem %s3, %s194
      %p196 = scmp.lt.s32.totalorder %s18, 1
      %s197 = scalar_select %p196, %s18, 1
      %s198 = smul.addr %s197, 8
      %s199 = scalar_lea.vmem %s0, %s198
      %p200 = scmp.lt.s32.totalorder %s19, 1
      %s201 = scalar_select %p200, %s19, 1
      %s202 = smul.addr %s201, 24
      %s203 = smul.addr %s202, 8
      %s204 = scalar_lea.vmem %s1, %s203
      %p205 = scmp.lt.s32.totalorder %s19, 1
      %s206 = scalar_select %p205, %s19, 1
      %s207 = scalar_lea.vmem %s2, %s206
      %p208 = scmp.lt.s32.totalorder %s18, 1
      %s209 = scalar_select %p208, %s18, 1
      %s210 = smul.addr %s209, 8
      %s211 = scalar_lea.vmem %s3, %s210
      %p212 = scmp.eq.s32.totalorder %s19, 0
      // Predicated region
      $region33: #{hourglass_forward.9} parent=31 // pred_check
        %p213 = pneg %p212
      $region34: #{hourglass_forward.9} parent=31 // pred_check_branch
        %215 = sbr.rel (%p213) target = $region36
      $region35: #{hourglass_forward.9} parent=31 // pred_region
        %v216 = vld [vmem:[%s199] sm:$0xff]
        %vm217 = vcmask 523264
        %218 = vst.msk [vmem:[#allocation2] sm:$0xff] %vm217, %v216
      $region36: #{hourglass_forward.9} parent=31 // pred_fallthru
        _
      %v219 = vld [vmem:[#allocation2] sm:$0xff]
      %s220 = scalar_lea.vmem %s204, 64
      %v221 = vld [vmem:[%s220] sm:$0xff]
      %v222 = vld [vmem:[%s220 + $0x8] sm:$0xff]
      %v223 = vld [vmem:[%s220 + $0x10] sm:$0xff]
      %v224 = vld [vmem:[%s220 + $0x18] sm:$0xff]
      %v225 = vld [vmem:[%s220 + $0x20] sm:$0xff]
      %v226 = vld [vmem:[%s220 + $0x28] sm:$0xff]
      %v227 = vld [vmem:[%s220 + $0x30] sm:$0xff]
      %v228 = vld [vmem:[%s220 + $0x38] sm:$0xff]
      %v229 = vld [vmem:[%s204] sm:$0xff]
      %v230 = vld [vmem:[%s204 + $0x8] sm:$0xff]
      %v231 = vld [vmem:[%s204 + $0x10] sm:$0xff]
      %v232 = vld [vmem:[%s204 + $0x18] sm:$0xff]
      %v233 = vld [vmem:[%s204 + $0x20] sm:$0xff]
      %v234 = vld [vmem:[%s204 + $0x28] sm:$0xff]
      %v235 = vld [vmem:[%s204 + $0x30] sm:$0xff]
      %v236 = vld [vmem:[%s204 + $0x38] sm:$0xff]
      %vm237 = vcmask 523264
      %v239 = vsel %vm237, %v219, 0
      %241 = vmatprep.subr.mxu0 0.0
      %242 = vmatpush1.msra.mxu0 0.0
      %243 = vmatprep.subr.mxu0 0.0
      %244 = vmatpush1.msra.mxu0 0.0
      %245 = vmatprep.subr.mxu0 0.0
      %246 = vmatpush1.msra.mxu0 0.0
      %247 = vmatprep.subr.mxu0 0.0
      %248 = vmatpush1.msra.mxu0 0.0
      %249 = vmatprep.subr.mxu0 0.0
      %250 = vmatpush1.msra.mxu0 0.0
      %251 = vmatprep.subr.mxu0 0.0
      %252 = vmatpush1.msra.mxu0 0.0
      %253 = vmatprep.subr.mxu0 0.0
      %254 = vmatpush1.msra.mxu0 0.0
      %255 = vmatprep.subr.mxu0 0.0
      %256 = vmatpush1.msra.mxu0 0.0
      %257 = vmatprep.subr.mxu0 0.0
      %258 = vmatpush1.msra.mxu0 %v236
      %259 = vmatprep.subr.mxu0 0.0
      %260 = vmatpush1.msra.mxu0 %v235
      %261 = vmatprep.subr.mxu0 0.0
      %262 = vmatpush1.msra.mxu0 %v234
      %263 = vmatprep.subr.mxu0 0.0
      %264 = vmatpush1.msra.mxu0 %v233
      %265 = vmatprep.subr.mxu0 0.0
      %266 = vmatpush1.msra.mxu0 %v232
      %267 = vmatprep.subr.mxu0 0.0
      %268 = vmatpush1.msra.mxu0 %v231
      %269 = vmatprep.subr.mxu0 0.0
      %270 = vmatpush1.msra.mxu0 %v230
      %271 = vmatprep.subr.mxu0 0.0
      %272 = vmatpush1.msra.mxu0 %v229
      %273 = vmatprep.subr.mxu0 0.0
      %274 = vmatpush2.msra.mxu0 0.0
      %275 = vmatprep.subr.mxu0 0.0
      %276 = vmatpush2.msra.mxu0 0.0
      %277 = vmatprep.subr.mxu0 0.0
      %278 = vmatpush2.msra.mxu0 0.0
      %279 = vmatprep.subr.mxu0 0.0
      %280 = vmatpush2.msra.mxu0 0.0
      %281 = vmatprep.subr.mxu0 0.0
      %282 = vmatpush2.msra.mxu0 0.0
      %283 = vmatprep.subr.mxu0 0.0
      %284 = vmatpush2.msra.mxu0 0.0
      %285 = vmatprep.subr.mxu0 0.0
      %286 = vmatpush2.msra.mxu0 0.0
      %287 = vmatprep.subr.mxu0 0.0
      %288 = vmatpush2.msra.mxu0 0.0
      %289 = vmatprep.subr.mxu0 0.0
      %290 = vmatpush2.msra.mxu0 0.0
      %291 = vmatprep.subr.mxu0 0.0
      %292 = vmatpush2.msra.mxu0 0.0
      %293 = vmatprep.subr.mxu0 0.0
      %294 = vmatpush2.msra.mxu0 0.0
      %295 = vmatprep.subr.mxu0 0.0
      %296 = vmatpush2.msra.mxu0 0.0
      %297 = vmatprep.subr.mxu0 0.0
      %298 = vmatpush2.msra.mxu0 0.0
      %299 = vmatprep.subr.mxu0 0.0
      %300 = vmatpush2.msra.mxu0 0.0
      %301 = vmatprep.subr.mxu0 0.0
      %302 = vmatpush2.msra.mxu0 0.0
      %303 = vmatprep.subr.mxu0 0.0
      %304 = vmatpush2.msra.mxu0 0.0
      %305 = vmatprep.mubr.f32.mxu0 0.0
      %306 = vmatmul.mubr.f32.gmra.mxu0 %v239
      %v307 = vpop.f32.mrf.mxu0
      %v308 = vadd.f32 0.0, %v307
      %v309 = vpop.f32.mrf.mxu0
      %310 = vdwg.mxu0
      %s311 = scalar_lea.vmem %s204, 128
      %v312 = vld [vmem:[%s311] sm:$0xff]
      %v313 = vld [vmem:[%s311 + $0x8] sm:$0xff]
      %v314 = vld [vmem:[%s311 + $0x10] sm:$0xff]
      %v315 = vld [vmem:[%s311 + $0x18] sm:$0xff]
      %v316 = vld [vmem:[%s311 + $0x20] sm:$0xff]
      %v317 = vld [vmem:[%s311 + $0x28] sm:$0xff]
      %v318 = vld [vmem:[%s311 + $0x30] sm:$0xff]
      %v319 = vld [vmem:[%s311 + $0x38] sm:$0xff]
      %320 = vmatprep.subr.mxu0 0.0
      %321 = vmatpush1.msra.mxu0 0.0
      %322 = vmatprep.subr.mxu0 0.0
      %323 = vmatpush1.msra.mxu0 0.0
      %324 = vmatprep.subr.mxu0 0.0
      %325 = vmatpush1.msra.mxu0 0.0
      %326 = vmatprep.subr.mxu0 0.0
      %327 = vmatpush1.msra.mxu0 0.0
      %328 = vmatprep.subr.mxu0 0.0
      %329 = vmatpush1.msra.mxu0 0.0
      %330 = vmatprep.subr.mxu0 0.0
      %331 = vmatpush1.msra.mxu0 0.0
      %332 = vmatprep.subr.mxu0 0.0
      %333 = vmatpush1.msra.mxu0 0.0
      %334 = vmatprep.subr.mxu0 0.0
      %335 = vmatpush1.msra.mxu0 0.0
      %336 = vmatprep.subr.mxu0 0.0
      %337 = vmatpush1.msra.mxu0 %v319
      %338 = vmatprep.subr.mxu0 0.0
      %339 = vmatpush1.msra.mxu0 %v318
      %340 = vmatprep.subr.mxu0 0.0
      %341 = vmatpush1.msra.mxu0 %v317
      %342 = vmatprep.subr.mxu0 0.0
      %343 = vmatpush1.msra.mxu0 %v316
      %344 = vmatprep.subr.mxu0 0.0
      %345 = vmatpush1.msra.mxu0 %v315
      %346 = vmatprep.subr.mxu0 0.0
      %347 = vmatpush1.msra.mxu0 %v314
      %348 = vmatprep.subr.mxu0 0.0
      %349 = vmatpush1.msra.mxu0 %v313
      %350 = vmatprep.subr.mxu0 0.0
      %351 = vmatpush1.msra.mxu0 %v312
      %352 = vmatprep.subr.mxu0 0.0
      %353 = vmatpush2.msra.mxu0 0.0
      %354 = vmatprep.subr.mxu0 0.0
      %355 = vmatpush2.msra.mxu0 0.0
      %356 = vmatprep.subr.mxu0 0.0
      %357 = vmatpush2.msra.mxu0 0.0
      %358 = vmatprep.subr.mxu0 0.0
      %359 = vmatpush2.msra.mxu0 0.0
      %360 = vmatprep.subr.mxu0 0.0
      %361 = vmatpush2.msra.mxu0 0.0
      %362 = vmatprep.subr.mxu0 0.0
      %363 = vmatpush2.msra.mxu0 0.0
      %364 = vmatprep.subr.mxu0 0.0
      %365 = vmatpush2.msra.mxu0 0.0
      %366 = vmatprep.subr.mxu0 0.0
      %367 = vmatpush2.msra.mxu0 0.0
      %368 = vmatprep.subr.mxu0 0.0
      %369 = vmatpush2.msra.mxu0 0.0
      %370 = vmatprep.subr.mxu0 0.0
      %371 = vmatpush2.msra.mxu0 0.0
      %372 = vmatprep.subr.mxu0 0.0
      %373 = vmatpush2.msra.mxu0 0.0
      %374 = vmatprep.subr.mxu0 0.0
      %375 = vmatpush2.msra.mxu0 0.0
      %376 = vmatprep.subr.mxu0 0.0
      %377 = vmatpush2.msra.mxu0 0.0
      %378 = vmatprep.subr.mxu0 0.0
      %379 = vmatpush2.msra.mxu0 0.0
      %380 = vmatprep.subr.mxu0 0.0
      %381 = vmatpush2.msra.mxu0 0.0
      %382 = vmatprep.subr.mxu0 0.0
      %383 = vmatpush2.msra.mxu0 0.0
      %384 = vmatprep.mubr.f32.mxu0 0.0
      %385 = vmatmul.mubr.f32.gmra.mxu0 %v239
      %v386 = vpop.f32.mrf.mxu0
      %v387 = vadd.f32 0.0, %v386
      %v388 = vpop.f32.mrf.mxu0
      %389 = vdwg.mxu0
      %v390 = vlaneseq
      %v391 = vshrl.u32 %v390, 7
      %vm392 = vcmp.eq.s32.totalorder %v391, 0
      %v393 = vrot.slane %v308, 7
      %v394 = vsel %vm392, 0.0, %v393
      %vm395 = vcmp.eq.s32.totalorder %v391, 7
      %v396 = vrot.slane %v387, 1
      %v397 = vsel %vm395, 0.0, %v396
      %398 = vmatprep.subr.mxu0 0.0
      %399 = vmatpush1.msra.mxu0 0.0
      %400 = vmatprep.subr.mxu0 0.0
      %401 = vmatpush1.msra.mxu0 0.0
      %402 = vmatprep.subr.mxu0 0.0
      %403 = vmatpush1.msra.mxu0 0.0
      %404 = vmatprep.subr.mxu0 0.0
      %405 = vmatpush1.msra.mxu0 0.0
      %406 = vmatprep.subr.mxu0 0.0
      %407 = vmatpush1.msra.mxu0 0.0
      %408 = vmatprep.subr.mxu0 0.0
      %409 = vmatpush1.msra.mxu0 0.0
      %410 = vmatprep.subr.mxu0 0.0
      %411 = vmatpush1.msra.mxu0 0.0
      %412 = vmatprep.subr.mxu0 0.0
      %413 = vmatpush1.msra.mxu0 0.0
      %414 = vmatprep.subr.mxu0 0.0
      %415 = vmatpush1.msra.mxu0 %v228
      %416 = vmatprep.subr.mxu0 0.0
      %417 = vmatpush1.msra.mxu0 %v227
      %418 = vmatprep.subr.mxu0 0.0
      %419 = vmatpush1.msra.mxu0 %v226
      %420 = vmatprep.subr.mxu0 0.0
      %421 = vmatpush1.msra.mxu0 %v225
      %422 = vmatprep.subr.mxu0 0.0
      %423 = vmatpush1.msra.mxu0 %v224
      %424 = vmatprep.subr.mxu0 0.0
      %425 = vmatpush1.msra.mxu0 %v223
      %426 = vmatprep.subr.mxu0 0.0
      %427 = vmatpush1.msra.mxu0 %v222
      %428 = vmatprep.subr.mxu0 0.0
      %429 = vmatpush1.msra.mxu0 %v221
      %430 = vmatprep.subr.mxu0 0.0
      %431 = vmatpush2.msra.mxu0 0.0
      %432 = vmatprep.subr.mxu0 0.0
      %433 = vmatpush2.msra.mxu0 0.0
      %434 = vmatprep.subr.mxu0 0.0
      %435 = vmatpush2.msra.mxu0 0.0
      %436 = vmatprep.subr.mxu0 0.0
      %437 = vmatpush2.msra.mxu0 0.0
      %438 = vmatprep.subr.mxu0 0.0
      %439 = vmatpush2.msra.mxu0 0.0
      %440 = vmatprep.subr.mxu0 0.0
      %441 = vmatpush2.msra.mxu0 0.0
      %442 = vmatprep.subr.mxu0 0.0
      %443 = vmatpush2.msra.mxu0 0.0
      %444 = vmatprep.subr.mxu0 0.0
      %445 = vmatpush2.msra.mxu0 0.0
      %446 = vmatprep.subr.mxu0 0.0
      %447 = vmatpush2.msra.mxu0 0.0
      %448 = vmatprep.subr.mxu0 0.0
      %449 = vmatpush2.msra.mxu0 0.0
      %450 = vmatprep.subr.mxu0 0.0
      %451 = vmatpush2.msra.mxu0 0.0
      %452 = vmatprep.subr.mxu0 0.0
      %453 = vmatpush2.msra.mxu0 0.0
      %454 = vmatprep.subr.mxu0 0.0
      %455 = vmatpush2.msra.mxu0 0.0
      %456 = vmatprep.subr.mxu0 0.0
      %457 = vmatpush2.msra.mxu0 0.0
      %458 = vmatprep.subr.mxu0 0.0
      %459 = vmatpush2.msra.mxu0 0.0
      %460 = vmatprep.subr.mxu0 0.0
      %461 = vmatpush2.msra.mxu0 0.0
      %462 = vmatprep.mubr.f32.mxu0 0.0
      %463 = vmatmul.mubr.f32.gmra.mxu0 %v239
      %v464 = vpop.f32.mrf.mxu0
      %v465 = vadd.f32 %v394, %v464
      %v466 = vpop.f32.mrf.mxu0
      %467 = vdwg.mxu0
      %v468 = vadd.f32 %v465, %v397
      %v469 = vld [vmem:[%s207] sm:$0x1]
      %v471 = vlaneseq
      %v472 = vshrl.u32 %v471, 7
      %v473 = vsub.s32 0, %v472
      %v474 = vrot.slane %v469, %v473
      %v476 = vadd.f32 %v468, %v474
      %v477 = vadd.f32 %v476, %v219
      %v478 = vmax.f32 %v477, 0.0
      %479 = vst.msk [vmem:[#allocation2] sm:$0xff] %vm237, %v478
      %p480 = scmp.eq.s32.totalorder %s19, 1
      // Predicated region
      $region37: #{hourglass_forward.9} parent=31 // pred_check
        %p481 = pneg %p480
      $region38: #{hourglass_forward.9} parent=31 // pred_check_branch
        %483 = sbr.rel (%p481) target = $region40
      $region39: #{hourglass_forward.9} parent=31 // pred_region
        %484 = vst.msk [vmem:[%s211] sm:$0xff] %vm237, %v478
      $region40: #{hourglass_forward.9} parent=31 // pred_fallthru
        _
      %p485 = scmp.lt.s32.totalorder %s18, 1
      %s486 = scalar_select %p485, %s18, 1
      %s487 = smul.addr %s486, 8
      %s488 = scalar_lea.vmem %s3, %s487
      // Predicated region
      $region41: #{hourglass_forward.9} parent=31 // pred_check
        %p489 = pneg %p122
      $region42: #{hourglass_forward.9} parent=31 // pred_check_branch
        %491 = sbr.rel (%p489) target = $region44
      $region43: #{hourglass_forward.9} parent=31 // pred_region
        _
      $region44: #{hourglass_forward.9} parent=31 // pred_fallthru
        _
    $region32: #{hourglass_forward.9} parent=5 // pred_fallthru
      _
    %p492 = scmp.le.s32.totalorder 2, %s9
    // Predicated region
    $region45: #{hourglass_forward.9} parent=5 // pred_check
      %p493 = pneg %p492
    $region46: #{hourglass_forward.9} parent=5 // pred_check_branch
      %495 = sbr.rel (%p493) target = $region48
    $region47: #{hourglass_forward.9} parent=5 // pred_region
      %s496 = ssub.s32 %s9, 2
      // Predicated region
      $region49: #{hourglass_forward.9} parent=47 // pred_check
        %p497 = pneg %p128
      $region50: #{hourglass_forward.9} parent=47 // pred_check_branch
        %499 = sbr.rel (%p497) target = $region52
      $region51: #{hourglass_forward.9} parent=47 // pred_region
        %p500 = scmp.lt.s32.totalorder %s20, 1
        %s501 = scalar_select %p500, %s20, 1
        %s502 = smul.addr %s501, 8
        %s503 = scalar_lea.vmem %s3, %s502
      $region52: #{hourglass_forward.9} parent=47 // pred_fallthru
        _
    $region48: #{hourglass_forward.9} parent=5 // pred_fallthru
      _
  $region6: #{hourglass_forward.9} parent=0 // loop_footer
    %s13 = sadd.s32 1, %s9
  $region7: #{hourglass_forward.9} parent=0 // loop_footer_branch
    %8 = sbr.rel target = $region3
  $region8: #{hourglass_forward.9} parent=0 // loop_exit
    _

// kernel: hourglass_forward.11
$region0: #{hourglass_forward.11}
  #allocation0 [shape = 'u32[]', space=smem, size = 0x4, offset = 0x4, fixed_abs, tag = 'smem constant byte address 0x4 - core index']
  #allocation1 [shape = 'u32[144,128]{1,0:T(1,128)}', space=vmem, size = 0x12000, scoped, tag = 'internal scratch']
  #allocation2 [shape = 'f32[4,32]{1,0:T(4,128)}', space=vmem, size = 0x800, scoped, tag = 'scratch operand']
  %s0 = inlined_call_operand.vmem [shape: f32[2,4,32], index: 0, kind: input, shape index: {}]
  %s1 = inlined_call_operand.vmem [shape: f32[2,3,32,32], index: 1, kind: input, shape index: {}]
  %s2 = inlined_call_operand.vmem [shape: f32[2,1,32], index: 2, kind: input, shape index: {}]
  %s3 = inlined_call_operand.vmem [shape: f32[2,4,32], index: 3, kind: output, shape index: {}]
  %s4 = sld [smem:[#allocation0]]
  $region53: #{hourglass_forward.11} parent=0
    _
  %s6 = ssub.s32 1, %s4
  %s7 = scalar_select 0, %s6, %s4
  loop: start=0, step=1, limit=6
  $region2: #{hourglass_forward.11} parent=0 // loop_pre_header
    _
  $region3: #{hourglass_forward.11} parent=0 // loop_header
    %s9 = sphi 0, %s13
    %p10 = scmp.ge.s32.totalorder %s9, 6
    %s16 = sphi 0, %s28
    %s17 = sphi 0, %s24
    %s18 = sphi 0, %s16
    %s19 = sphi 0, %s17
    %s20 = sphi 0, %s18
    %s21 = sphi 0, %s19
    %s31 = sphi 0, %s33
    %s34 = sphi 0, %s31
    %s35 = sphi 0, %s34
    %s51 = sphi 0, %s35
    %s57 = sphi 0, %s59
    %s60 = sphi 0, %s57
    %s61 = sphi 0, %s60
    %s77 = sphi 0, %s61
    %s83 = sphi 0, %s85
    %s86 = sphi 0, %s83
    %s87 = sphi 0, %s86
    %s103 = sphi 0, %s87
    %s109 = sphi 0, %s111
    %s112 = sphi 0, %s109
    %s113 = sphi 0, %s112
    %s129 = sphi 0, %s113
  $region4: #{hourglass_forward.11} parent=0 // loop_header_branch
    %12 = sbr.rel (%p10) target = $region8
  $region5: #{hourglass_forward.11} parent=0 // loop_body
    %s14 = ssub.s32 %s9, 1
    %s15 = ssub.s32 %s9, 2
    %s22 = sadd.s32 1, %s17
    %p23 = scmp.ge.s32.totalorder %s22, 2
    %s24 = scalar_select %p23, 0, %s22
    %s25 = sadd.s32 1, %s16
    %s26 = scalar_select %p23, %s25, %s16
    %p27 = scmp.ge.s32.totalorder %s26, 2
    %s28 = scalar_select %p27, 0, %s26
    %s29 = ssub.s32 %s16, %s28
    %p30 = scmp.eq.s32.totalorder %s29, 0
    %s32 = sadd.s32 %s31, 1
    %s33 = scalar_select %p30, %s31, %s32
    %p36 = pneg %p30
    %p37 = scmp.eq.s32.totalorder %s9, 3
    %p38 = por %p36, %p37
    %p39 = scmp.ne.s32.totalorder %s31, %s34
    %p40 = scmp.eq.s32.totalorder %s9, 0
    %p41 = por %p39, %p40
    %p42 = scmp.ne.s32.totalorder %s31, %s34
    %p43 = scmp.eq.s32.totalorder %s14, 3
    %p44 = por %p42, %p43
    %p45 = scmp.ne.s32.totalorder %s34, %s35
    %p46 = scmp.eq.s32.totalorder %s14, 0
    %p47 = por %p45, %p46
    %p48 = scmp.ne.s32.totalorder %s34, %s35
    %p49 = scmp.eq.s32.totalorder %s15, 3
    %p50 = por %p48, %p49
    %p52 = scmp.ne.s32.totalorder %s35, %s51
    %p53 = scmp.eq.s32.totalorder %s15, 0
    %p54 = por %p52, %p53
    %s55 = ssub.s32 %s17, %s24
    %p56 = scmp.eq.s32.totalorder %s55, 0
    %s58 = sadd.s32 %s57, 1
    %s59 = scalar_select %p56, %s57, %s58
    %p62 = pneg %p56
    %p63 = scmp.eq.s32.totalorder %s9, 3
    %p64 = por %p62, %p63
    %p65 = scmp.ne.s32.totalorder %s57, %s60
    %p66 = scmp.eq.s32.totalorder %s9, 0
    %p67 = por %p65, %p66
    %p68 = scmp.ne.s32.totalorder %s57, %s60
    %p69 = scmp.eq.s32.totalorder %s14, 3
    %p70 = por %p68, %p69
    %p71 = scmp.ne.s32.totalorder %s60, %s61
    %p72 = scmp.eq.s32.totalorder %s14, 0
    %p73 = por %p71, %p72
    %p74 = scmp.ne.s32.totalorder %s60, %s61
    %p75 = scmp.eq.s32.totalorder %s15, 3
    %p76 = por %p74, %p75
    %p78 = scmp.ne.s32.totalorder %s61, %s77
    %p79 = scmp.eq.s32.totalorder %s15, 0
    %p80 = por %p78, %p79
    %s81 = ssub.s32 %s17, %s24
    %p82 = scmp.eq.s32.totalorder %s81, 0
    %s84 = sadd.s32 %s83, 1
    %s85 = scalar_select %p82, %s83, %s84
    %p88 = pneg %p82
    %p89 = scmp.eq.s32.totalorder %s9, 3
    %p90 = por %p88, %p89
    %p91 = scmp.ne.s32.totalorder %s83, %s86
    %p92 = scmp.eq.s32.totalorder %s9, 0
    %p93 = por %p91, %p92
    %p94 = scmp.ne.s32.totalorder %s83, %s86
    %p95 = scmp.eq.s32.totalorder %s14, 3
    %p96 = por %p94, %p95
    %p97 = scmp.ne.s32.totalorder %s86, %s87
    %p98 = scmp.eq.s32.totalorder %s14, 0
    %p99 = por %p97, %p98
    %p100 = scmp.ne.s32.totalorder %s86, %s87
    %p101 = scmp.eq.s32.totalorder %s15, 3
    %p102 = por %p100, %p101
    %p104 = scmp.ne.s32.totalorder %s87, %s103
    %p105 = scmp.eq.s32.totalorder %s15, 0
    %p106 = por %p104, %p105
    %s107 = ssub.s32 %s16, %s28
    %p108 = scmp.eq.s32.totalorder %s107, 0
    %s110 = sadd.s32 %s109, 1
    %s111 = scalar_select %p108, %s109, %s110
    %p114 = pneg %p108
    %p115 = scmp.eq.s32.totalorder %s9, 3
    %p116 = por %p114, %p115
    %p117 = scmp.ne.s32.totalorder %s109, %s112
    %p118 = scmp.eq.s32.totalorder %s9, 0
    %p119 = por %p117, %p118
    %p120 = scmp.ne.s32.totalorder %s109, %s112
    %p121 = scmp.eq.s32.totalorder %s14, 3
    %p122 = por %p120, %p121
    %p123 = scmp.ne.s32.totalorder %s112, %s113
    %p124 = scmp.eq.s32.totalorder %s14, 0
    %p125 = por %p123, %p124
    %p126 = scmp.ne.s32.totalorder %s112, %s113
    %p127 = scmp.eq.s32.totalorder %s15, 3
    %p128 = por %p126, %p127
    %p130 = scmp.ne.s32.totalorder %s113, %s129
    %p131 = scmp.eq.s32.totalorder %s15, 0
    %p132 = por %p130, %p131
    %p133 = scmp.le.s32.totalorder 1, %s9
    %p134 = scmp.lt.s32.totalorder %s9, 5
    %p135 = pnand %p133, %p134
    %p136 = pneg %p135
    // Predicated region
    $region9: #{hourglass_forward.11} parent=5 // pred_check
      _
    $region10: #{hourglass_forward.11} parent=5 // pred_check_branch
      %138 = sbr.rel (%p135) target = $region12
    $region11: #{hourglass_forward.11} parent=5 // pred_region
      %s139 = ssub.s32 %s9, 1
    $region12: #{hourglass_forward.11} parent=5 // pred_fallthru
      _
    %p140 = scmp.lt.s32.totalorder %s9, 4
    // Predicated region
    $region13: #{hourglass_forward.11} parent=5 // pred_check
      %p141 = pneg %p140
    $region14: #{hourglass_forward.11} parent=5 // pred_check_branch
      %143 = sbr.rel (%p141) target = $region16
    $region15: #{hourglass_forward.11} parent=5 // pred_region
      // Predicated region
      $region17: #{hourglass_forward.11} parent=15 // pred_check
        %p144 = pneg %p41
      $region18: #{hourglass_forward.11} parent=15 // pred_check_branch
        %146 = sbr.rel (%p144) target = $region20
      $region19: #{hourglass_forward.11} parent=15 // pred_region
        %p147 = scmp.lt.s32.totalorder %s16, 1
        %s148 = scalar_select %p147, %s16, 1
        %s149 = smul.addr %s148, 4
        %s150 = scalar_lea.vmem %s0, %s149
      $region20: #{hourglass_forward.11} parent=15 // pred_fallthru
        _
      // Predicated region
      $region21: #{hourglass_forward.11} parent=15 // pred_check
        %p151 = pneg %p67
      $region22: #{hourglass_forward.11} parent=15 // pred_check_branch
        %153 = sbr.rel (%p151) target = $region24
      $region23: #{hourglass_forward.11} parent=15 // pred_region
        %p154 = scmp.lt.s32.totalorder %s17, 1
        %s155 = scalar_select %p154, %s17, 1
        %s156 = smul.addr %s155, 12
        %s157 = smul.addr %s156, 8
        %s158 = scalar_lea.vmem %s1, %s157
      $region24: #{hourglass_forward.11} parent=15 // pred_fallthru
        _
      // Predicated region
      $region25: #{hourglass_forward.11} parent=15 // pred_check
        %p159 = pneg %p93
      $region26: #{hourglass_forward.11} parent=15 // pred_check_branch
        %161 = sbr.rel (%p159) target = $region28
      $region27: #{hourglass_forward.11} parent=15 // pred_region
        %p162 = scmp.lt.s32.totalorder %s17, 1
        %s163 = scalar_select %p162, %s17, 1
        %s164 = scalar_lea.vmem %s2, %s163
      $region28: #{hourglass_forward.11} parent=15 // pred_fallthru
        _
    $region16: #{hourglass_forward.11} parent=5 // pred_fallthru
      _
    %p165 = scmp.le.s32.totalorder 1, %s9
    %p166 = scmp.lt.s32.totalorder %s9, 5
    %p167 = pnand %p165, %p166
    %p168 = pneg %p167
    // Predicated region
    $region29: #{hourglass_forward.11} parent=5 // pred_check
      _
    $region30: #{hourglass_forward.11} parent=5 // pred_check_branch
      %170 = sbr.rel (%p167) target = $region32
    $region31: #{hourglass_forward.11} parent=5 // pred_region
      %s171 = ssub.s32 %s9, 1
      %p172 = scmp.lt.s32.totalorder %s18, 1
      %s173 = scalar_select %p172, %s18, 1
      %s174 = smul.addr %s173, 4
      %s175 = scalar_lea.vmem %s0, %s174
      %p176 = pneg %p47
      %p177 = pneg %p44
      %p178 = scmp.lt.s32.totalorder %s19, 1
      %s179 = scalar_select %p178, %s19, 1
      %s180 = smul.addr %s179, 12
      %s181 = smul.addr %s180, 8
      %s182 = scalar_lea.vmem %s1, %s181
      %p183 = pneg %p73
      %p184 = pneg %p70
      %p185 = scmp.lt.s32.totalorder %s19, 1
      %s186 = scalar_select %p185, %s19, 1
      %s187 = scalar_lea.vmem %s2, %s186
      %p188 = pneg %p99
      %p189 = pneg %p96
      %p190 = pneg %p125
      %p191 = pneg %p122
      %p192 = scmp.lt.s32.totalorder %s18, 1
      %s193 = scalar_select %p192, %s18, 1
      %s194 = smul.addr %s193, 4
      %s195 = scalar_lea.vmem %s3, %s194
      %p196 = scmp.lt.s32.totalorder %s18, 1
      %s197 = scalar_select %p196, %s18, 1
      %s198 = smul.addr %s197, 4
      %s199 = scalar_lea.vmem %s0, %s198
      %p200 = scmp.lt.s32.totalorder %s19, 1
      %s201 = scalar_select %p200, %s19, 1
      %s202 = smul.addr %s201, 12
      %s203 = smul.addr %s202, 8
      %s204 = scalar_lea.vmem %s1, %s203
      %p205 = scmp.lt.s32.totalorder %s19, 1
      %s206 = scalar_select %p205, %s19, 1
      %s207 = scalar_lea.vmem %s2, %s206
      %p208 = scmp.lt.s32.totalorder %s18, 1
      %s209 = scalar_select %p208, %s18, 1
      %s210 = smul.addr %s209, 4
      %s211 = scalar_lea.vmem %s3, %s210
      %p212 = scmp.eq.s32.totalorder %s19, 0
      // Predicated region
      $region33: #{hourglass_forward.11} parent=31 // pred_check
        %p213 = pneg %p212
      $region34: #{hourglass_forward.11} parent=31 // pred_check_branch
        %215 = sbr.rel (%p213) target = $region36
      $region35: #{hourglass_forward.11} parent=31 // pred_region
        %v216 = vld [vmem:[%s199] sm:$0xf]
        %vm217 = vcmask 257024
        %218 = vst.msk [vmem:[#allocation2] sm:$0xf] %vm217, %v216
      $region36: #{hourglass_forward.11} parent=31 // pred_fallthru
        _
      %v219 = vld [vmem:[#allocation2] sm:$0xf]
      %s220 = scalar_lea.vmem %s204, 32
      %v221 = vld [vmem:[%s220] sm:$0xff]
      %v222 = vld [vmem:[%s220 + $0x8] sm:$0xff]
      %v223 = vld [vmem:[%s220 + $0x10] sm:$0xff]
      %v224 = vld [vmem:[%s220 + $0x18] sm:$0xff]
      %v225 = vld [vmem:[%s204] sm:$0xff]
      %v226 = vld [vmem:[%s204 + $0x8] sm:$0xff]
      %v227 = vld [vmem:[%s204 + $0x10] sm:$0xff]
      %v228 = vld [vmem:[%s204 + $0x18] sm:$0xff]
      %vm229 = vcmask 261120
      %v231 = vsel %vm229, %v219, 0
      %233 = vmatprep.subr.mxu0 0.0
      %234 = vmatpush1.msra.mxu0 0.0
      %235 = vmatprep.subr.mxu0 0.0
      %236 = vmatpush1.msra.mxu0 0.0
      %237 = vmatprep.subr.mxu0 0.0
      %238 = vmatpush1.msra.mxu0 0.0
      %239 = vmatprep.subr.mxu0 0.0
      %240 = vmatpush1.msra.mxu0 0.0
      %241 = vmatprep.subr.mxu0 0.0
      %242 = vmatpush1.msra.mxu0 0.0
      %243 = vmatprep.subr.mxu0 0.0
      %244 = vmatpush1.msra.mxu0 0.0
      %245 = vmatprep.subr.mxu0 0.0
      %246 = vmatpush1.msra.mxu0 0.0
      %247 = vmatprep.subr.mxu0 0.0
      %248 = vmatpush1.msra.mxu0 0.0
      %249 = vmatprep.subr.mxu0 0.0
      %250 = vmatpush1.msra.mxu0 0.0
      %251 = vmatprep.subr.mxu0 0.0
      %252 = vmatpush1.msra.mxu0 0.0
      %253 = vmatprep.subr.mxu0 0.0
      %254 = vmatpush1.msra.mxu0 0.0
      %255 = vmatprep.subr.mxu0 0.0
      %256 = vmatpush1.msra.mxu0 0.0
      %257 = vmatprep.subr.mxu0 0.0
      %258 = vmatpush1.msra.mxu0 %v228
      %259 = vmatprep.subr.mxu0 0.0
      %260 = vmatpush1.msra.mxu0 %v227
      %261 = vmatprep.subr.mxu0 0.0
      %262 = vmatpush1.msra.mxu0 %v226
      %263 = vmatprep.subr.mxu0 0.0
      %264 = vmatpush1.msra.mxu0 %v225
      %265 = vmatprep.subr.mxu0 0.0
      %266 = vmatpush2.msra.mxu0 0.0
      %267 = vmatprep.subr.mxu0 0.0
      %268 = vmatpush2.msra.mxu0 0.0
      %269 = vmatprep.subr.mxu0 0.0
      %270 = vmatpush2.msra.mxu0 0.0
      %271 = vmatprep.subr.mxu0 0.0
      %272 = vmatpush2.msra.mxu0 0.0
      %273 = vmatprep.subr.mxu0 0.0
      %274 = vmatpush2.msra.mxu0 0.0
      %275 = vmatprep.subr.mxu0 0.0
      %276 = vmatpush2.msra.mxu0 0.0
      %277 = vmatprep.subr.mxu0 0.0
      %278 = vmatpush2.msra.mxu0 0.0
      %279 = vmatprep.subr.mxu0 0.0
      %280 = vmatpush2.msra.mxu0 0.0
      %281 = vmatprep.subr.mxu0 0.0
      %282 = vmatpush2.msra.mxu0 0.0
      %283 = vmatprep.subr.mxu0 0.0
      %284 = vmatpush2.msra.mxu0 0.0
      %285 = vmatprep.subr.mxu0 0.0
      %286 = vmatpush2.msra.mxu0 0.0
      %287 = vmatprep.subr.mxu0 0.0
      %288 = vmatpush2.msra.mxu0 0.0
      %289 = vmatprep.subr.mxu0 0.0
      %290 = vmatpush2.msra.mxu0 0.0
      %291 = vmatprep.subr.mxu0 0.0
      %292 = vmatpush2.msra.mxu0 0.0
      %293 = vmatprep.subr.mxu0 0.0
      %294 = vmatpush2.msra.mxu0 0.0
      %295 = vmatprep.subr.mxu0 0.0
      %296 = vmatpush2.msra.mxu0 0.0
      %297 = vmatprep.mubr.f32.mxu0 0.0
      %298 = vmatmul.mubr.f32.gmra.mxu0 %v231
      %v299 = vpop.f32.mrf.mxu0
      %v300 = vadd.f32 0.0, %v299
      %v301 = vpop.f32.mrf.mxu0
      %302 = vdwg.mxu0
      %s303 = scalar_lea.vmem %s204, 64
      %v304 = vld [vmem:[%s303] sm:$0xff]
      %v305 = vld [vmem:[%s303 + $0x8] sm:$0xff]
      %v306 = vld [vmem:[%s303 + $0x10] sm:$0xff]
      %v307 = vld [vmem:[%s303 + $0x18] sm:$0xff]
      %308 = vmatprep.subr.mxu0 0.0
      %309 = vmatpush1.msra.mxu0 0.0
      %310 = vmatprep.subr.mxu0 0.0
      %311 = vmatpush1.msra.mxu0 0.0
      %312 = vmatprep.subr.mxu0 0.0
      %313 = vmatpush1.msra.mxu0 0.0
      %314 = vmatprep.subr.mxu0 0.0
      %315 = vmatpush1.msra.mxu0 0.0
      %316 = vmatprep.subr.mxu0 0.0
      %317 = vmatpush1.msra.mxu0 0.0
      %318 = vmatprep.subr.mxu0 0.0
      %319 = vmatpush1.msra.mxu0 0.0
      %320 = vmatprep.subr.mxu0 0.0
      %321 = vmatpush1.msra.mxu0 0.0
      %322 = vmatprep.subr.mxu0 0.0
      %323 = vmatpush1.msra.mxu0 0.0
      %324 = vmatprep.subr.mxu0 0.0
      %325 = vmatpush1.msra.mxu0 0.0
      %326 = vmatprep.subr.mxu0 0.0
      %327 = vmatpush1.msra.mxu0 0.0
      %328 = vmatprep.subr.mxu0 0.0
      %329 = vmatpush1.msra.mxu0 0.0
      %330 = vmatprep.subr.mxu0 0.0
      %331 = vmatpush1.msra.mxu0 0.0
      %332 = vmatprep.subr.mxu0 0.0
      %333 = vmatpush1.msra.mxu0 %v307
      %334 = vmatprep.subr.mxu0 0.0
      %335 = vmatpush1.msra.mxu0 %v306
      %336 = vmatprep.subr.mxu0 0.0
      %337 = vmatpush1.msra.mxu0 %v305
      %338 = vmatprep.subr.mxu0 0.0
      %339 = vmatpush1.msra.mxu0 %v304
      %340 = vmatprep.subr.mxu0 0.0
      %341 = vmatpush2.msra.mxu0 0.0
      %342 = vmatprep.subr.mxu0 0.0
      %343 = vmatpush2.msra.mxu0 0.0
      %344 = vmatprep.subr.mxu0 0.0
      %345 = vmatpush2.msra.mxu0 0.0
      %346 = vmatprep.subr.mxu0 0.0
      %347 = vmatpush2.msra.mxu0 0.0
      %348 = vmatprep.subr.mxu0 0.0
      %349 = vmatpush2.msra.mxu0 0.0
      %350 = vmatprep.subr.mxu0 0.0
      %351 = vmatpush2.msra.mxu0 0.0
      %352 = vmatprep.subr.mxu0 0.0
      %353 = vmatpush2.msra.mxu0 0.0
      %354 = vmatprep.subr.mxu0 0.0
      %355 = vmatpush2.msra.mxu0 0.0
      %356 = vmatprep.subr.mxu0 0.0
      %357 = vmatpush2.msra.mxu0 0.0
      %358 = vmatprep.subr.mxu0 0.0
      %359 = vmatpush2.msra.mxu0 0.0
      %360 = vmatprep.subr.mxu0 0.0
      %361 = vmatpush2.msra.mxu0 0.0
      %362 = vmatprep.subr.mxu0 0.0
      %363 = vmatpush2.msra.mxu0 0.0
      %364 = vmatprep.subr.mxu0 0.0
      %365 = vmatpush2.msra.mxu0 0.0
      %366 = vmatprep.subr.mxu0 0.0
      %367 = vmatpush2.msra.mxu0 0.0
      %368 = vmatprep.subr.mxu0 0.0
      %369 = vmatpush2.msra.mxu0 0.0
      %370 = vmatprep.subr.mxu0 0.0
      %371 = vmatpush2.msra.mxu0 0.0
      %372 = vmatprep.mubr.f32.mxu0 0.0
      %373 = vmatmul.mubr.f32.gmra.mxu0 %v231
      %v374 = vpop.f32.mrf.mxu0
      %v375 = vadd.f32 0.0, %v374
      %v376 = vpop.f32.mrf.mxu0
      %377 = vdwg.mxu0
      %v378 = vlaneseq
      %v379 = vshrl.u32 %v378, 7
      %v380 = vlaneseq
      %v381 = vand.u32 %v380, 127
      %v382 = vadd.s32 %v381, 1
      %vm383 = vcmp.eq.s32.totalorder %v379, %v382
      %v384 = vsel %vm383, 1, 0
      %v385 = vcvt.s32.f32 %v384
      %v386 = vadd.s32 %v379, 1
      %vm387 = vcmp.eq.s32.totalorder %v381, %v386
      %v388 = vsel %vm387, 1, 0
      %v389 = vcvt.s32.f32 %v388
      %vm390 = vcmask 31744
      %v392 = vsel %vm390, %v385, 0
      %vm394 = vcmask 1043456
      %v396 = vsel %vm394, %v300, 0
      %398 = vmatprep.subr.mxu0 0.0
      %399 = vmatpush1.msra.mxu0 0.0
      %400 = vmatprep.subr.mxu0 0.0
      %401 = vmatpush1.msra.mxu0 0.0
      %402 = vmatprep.subr.mxu0 0.0
      %403 = vmatpush1.msra.mxu0 0.0
      %404 = vmatprep.subr.mxu0 0.0
      %405 = vmatpush1.msra.mxu0 0.0
      %406 = vmatprep.subr.mxu0 0.0
      %407 = vmatpush1.msra.mxu0 0.0
      %408 = vmatprep.subr.mxu0 0.0
      %409 = vmatpush1.msra.mxu0 0.0
      %410 = vmatprep.subr.mxu0 0.0
      %411 = vmatpush1.msra.mxu0 0.0
      %412 = vmatprep.subr.mxu0 0.0
      %413 = vmatpush1.msra.mxu0 0.0
      %414 = vmatprep.subr.mxu0 0.0
      %415 = vmatpush1.msra.mxu0 0.0
      %416 = vmatprep.subr.mxu0 0.0
      %417 = vmatpush1.msra.mxu0 0.0
      %418 = vmatprep.subr.mxu0 0.0
      %419 = vmatpush1.msra.mxu0 0.0
      %420 = vmatprep.subr.mxu0 0.0
      %421 = vmatpush1.msra.mxu0 0.0
      %422 = vmatprep.subr.mxu0 0.0
      %423 = vmatpush1.msra.mxu0 0.0
      %424 = vmatprep.subr.mxu0 0.0
      %425 = vmatpush1.msra.mxu0 0.0
      %426 = vmatprep.subr.mxu0 0.0
      %427 = vmatpush1.msra.mxu0 0.0
      %428 = vmatprep.subr.mxu0 0.0
      %429 = vmatpush1.msra.mxu0 %v396
      %430 = vmatprep.subr.mxu0 0.0
      %431 = vmatpush2.msra.mxu0 0.0
      %432 = vmatprep.subr.mxu0 0.0
      %433 = vmatpush2.msra.mxu0 0.0
      %434 = vmatprep.subr.mxu0 0.0
      %435 = vmatpush2.msra.mxu0 0.0
      %436 = vmatprep.subr.mxu0 0.0
      %437 = vmatpush2.msra.mxu0 0.0
      %438 = vmatprep.subr.mxu0 0.0
      %439 = vmatpush2.msra.mxu0 0.0
      %440 = vmatprep.subr.mxu0 0.0
      %441 = vmatpush2.msra.mxu0 0.0
      %442 = vmatprep.subr.mxu0 0.0
      %443 = vmatpush2.msra.mxu0 0.0
      %444 = vmatprep.subr.mxu0 0.0
      %445 = vmatpush2.msra.mxu0 0.0
      %446 = vmatprep.subr.mxu0 0.0
      %447 = vmatpush2.msra.mxu0 0.0
      %448 = vmatprep.subr.mxu0 0.0
      %449 = vmatpush2.msra.mxu0 0.0
      %450 = vmatprep.subr.mxu0 0.0
      %451 = vmatpush2.msra.mxu0 0.0
      %452 = vmatprep.subr.mxu0 0.0
      %453 = vmatpush2.msra.mxu0 0.0
      %454 = vmatprep.subr.mxu0 0.0
      %455 = vmatpush2.msra.mxu0 0.0
      %456 = vmatprep.subr.mxu0 0.0
      %457 = vmatpush2.msra.mxu0 0.0
      %458 = vmatprep.subr.mxu0 0.0
      %459 = vmatpush2.msra.mxu0 0.0
      %460 = vmatprep.subr.mxu0 0.0
      %461 = vmatpush2.msra.mxu0 0.0
      %462 = vmatprep.mubr.f32.mxu0 0.0
      %463 = vmatmul.mubr.f32.gmra.mxu0 %v392
      %v464 = vpop.f32.mrf.mxu0
      %v465 = vadd.f32 0.0, %v464
      %v466 = vpop.f32.mrf.mxu0
      %467 = vdwg.mxu0
      %v469 = vsel %vm390, %v389, 0
      %v472 = vsel %vm394, %v375, 0
      %474 = vmatprep.subr.mxu0 0.0
      %475 = vmatpush1.msra.mxu0 0.0
      %476 = vmatprep.subr.mxu0 0.0
      %477 = vmatpush1.msra.mxu0 0.0
      %478 = vmatprep.subr.mxu0 0.0
      %479 = vmatpush1.msra.mxu0 0.0
      %480 = vmatprep.subr.mxu0 0.0
      %481 = vmatpush1.msra.mxu0 0.0
      %482 = vmatprep.subr.mxu0 0.0
      %483 = vmatpush1.msra.mxu0 0.0
      %484 = vmatprep.subr.mxu0 0.0
      %485 = vmatpush1.msra.mxu0 0.0
      %486 = vmatprep.subr.mxu0 0.0
      %487 = vmatpush1.msra.mxu0 0.0
      %488 = vmatprep.subr.mxu0 0.0
      %489 = vmatpush1.msra.mxu0 0.0
      %490 = vmatprep.subr.mxu0 0.0
      %491 = vmatpush1.msra.mxu0 0.0
      %492 = vmatprep.subr.mxu0 0.0
      %493 = vmatpush1.msra.mxu0 0.0
      %494 = vmatprep.subr.mxu0 0.0
      %495 = vmatpush1.msra.mxu0 0.0
      %496 = vmatprep.subr.mxu0 0.0
      %497 = vmatpush1.msra.mxu0 0.0
      %498 = vmatprep.subr.mxu0 0.0
      %499 = vmatpush1.msra.mxu0 0.0
      %500 = vmatprep.subr.mxu0 0.0
      %501 = vmatpush1.msra.mxu0 0.0
      %502 = vmatprep.subr.mxu0 0.0
      %503 = vmatpush1.msra.mxu0 0.0
      %504 = vmatprep.subr.mxu0 0.0
      %505 = vmatpush1.msra.mxu0 %v472
      %506 = vmatprep.subr.mxu0 0.0
      %507 = vmatpush2.msra.mxu0 0.0
      %508 = vmatprep.subr.mxu0 0.0
      %509 = vmatpush2.msra.mxu0 0.0
      %510 = vmatprep.subr.mxu0 0.0
      %511 = vmatpush2.msra.mxu0 0.0
      %512 = vmatprep.subr.mxu0 0.0
      %513 = vmatpush2.msra.mxu0 0.0
      %514 = vmatprep.subr.mxu0 0.0
      %515 = vmatpush2.msra.mxu0 0.0
      %516 = vmatprep.subr.mxu0 0.0
      %517 = vmatpush2.msra.mxu0 0.0
      %518 = vmatprep.subr.mxu0 0.0
      %519 = vmatpush2.msra.mxu0 0.0
      %520 = vmatprep.subr.mxu0 0.0
      %521 = vmatpush2.msra.mxu0 0.0
      %522 = vmatprep.subr.mxu0 0.0
      %523 = vmatpush2.msra.mxu0 0.0
      %524 = vmatprep.subr.mxu0 0.0
      %525 = vmatpush2.msra.mxu0 0.0
      %526 = vmatprep.subr.mxu0 0.0
      %527 = vmatpush2.msra.mxu0 0.0
      %528 = vmatprep.subr.mxu0 0.0
      %529 = vmatpush2.msra.mxu0 0.0
      %530 = vmatprep.subr.mxu0 0.0
      %531 = vmatpush2.msra.mxu0 0.0
      %532 = vmatprep.subr.mxu0 0.0
      %533 = vmatpush2.msra.mxu0 0.0
      %534 = vmatprep.subr.mxu0 0.0
      %535 = vmatpush2.msra.mxu0 0.0
      %536 = vmatprep.subr.mxu0 0.0
      %537 = vmatpush2.msra.mxu0 0.0
      %538 = vmatprep.mubr.f32.mxu0 0.0
      %539 = vmatmul.mubr.f32.gmra.mxu0 %v469
      %v540 = vpop.f32.mrf.mxu0
      %v541 = vadd.f32 0.0, %v540
      %v542 = vpop.f32.mrf.mxu0
      %543 = vdwg.mxu0
      %544 = vmatprep.subr.mxu0 0.0
      %545 = vmatpush1.msra.mxu0 0.0
      %546 = vmatprep.subr.mxu0 0.0
      %547 = vmatpush1.msra.mxu0 0.0
      %548 = vmatprep.subr.mxu0 0.0
      %549 = vmatpush1.msra.mxu0 0.0
      %550 = vmatprep.subr.mxu0 0.0
      %551 = vmatpush1.msra.mxu0 0.0
      %552 = vmatprep.subr.mxu0 0.0
      %553 = vmatpush1.msra.mxu0 0.0
      %554 = vmatprep.subr.mxu0 0.0
      %555 = vmatpush1.msra.mxu0 0.0
      %556 = vmatprep.subr.mxu0 0.0
      %557 = vmatpush1.msra.mxu0 0.0
      %558 = vmatprep.subr.mxu0 0.0
      %559 = vmatpush1.msra.mxu0 0.0
      %560 = vmatprep.subr.mxu0 0.0
      %561 = vmatpush1.msra.mxu0 0.0
      %562 = vmatprep.subr.mxu0 0.0
      %563 = vmatpush1.msra.mxu0 0.0
      %564 = vmatprep.subr.mxu0 0.0
      %565 = vmatpush1.msra.mxu0 0.0
      %566 = vmatprep.subr.mxu0 0.0
      %567 = vmatpush1.msra.mxu0 0.0
      %568 = vmatprep.subr.mxu0 0.0
      %569 = vmatpush1.msra.mxu0 %v224
      %570 = vmatprep.subr.mxu0 0.0
      %571 = vmatpush1.msra.mxu0 %v223
      %572 = vmatprep.subr.mxu0 0.0
      %573 = vmatpush1.msra.mxu0 %v222
      %574 = vmatprep.subr.mxu0 0.0
      %575 = vmatpush1.msra.mxu0 %v221
      %576 = vmatprep.subr.mxu0 0.0
      %577 = vmatpush2.msra.mxu0 0.0
      %578 = vmatprep.subr.mxu0 0.0
      %579 = vmatpush2.msra.mxu0 0.0
      %580 = vmatprep.subr.mxu0 0.0
      %581 = vmatpush2.msra.mxu0 0.0
      %582 = vmatprep.subr.mxu0 0.0
      %583 = vmatpush2.msra.mxu0 0.0
      %584 = vmatprep.subr.mxu0 0.0
      %585 = vmatpush2.msra.mxu0 0.0
      %586 = vmatprep.subr.mxu0 0.0
      %587 = vmatpush2.msra.mxu0 0.0
      %588 = vmatprep.subr.mxu0 0.0
      %589 = vmatpush2.msra.mxu0 0.0
      %590 = vmatprep.subr.mxu0 0.0
      %591 = vmatpush2.msra.mxu0 0.0
      %592 = vmatprep.subr.mxu0 0.0
      %593 = vmatpush2.msra.mxu0 0.0
      %594 = vmatprep.subr.mxu0 0.0
      %595 = vmatpush2.msra.mxu0 0.0
      %596 = vmatprep.subr.mxu0 0.0
      %597 = vmatpush2.msra.mxu0 0.0
      %598 = vmatprep.subr.mxu0 0.0
      %599 = vmatpush2.msra.mxu0 0.0
      %600 = vmatprep.subr.mxu0 0.0
      %601 = vmatpush2.msra.mxu0 0.0
      %602 = vmatprep.subr.mxu0 0.0
      %603 = vmatpush2.msra.mxu0 0.0
      %604 = vmatprep.subr.mxu0 0.0
      %605 = vmatpush2.msra.mxu0 0.0
      %606 = vmatprep.subr.mxu0 0.0
      %607 = vmatpush2.msra.mxu0 0.0
      %608 = vmatprep.mubr.f32.mxu0 0.0
      %609 = vmatmul.mubr.f32.gmra.mxu0 %v231
      %v610 = vpop.f32.mrf.mxu0
      %v611 = vadd.f32 %v465, %v610
      %v612 = vpop.f32.mrf.mxu0
      %613 = vdwg.mxu0
      %v614 = vadd.f32 %v611, %v541
      %v615 = vld [vmem:[%s207] sm:$0x1]
      %v617 = vlaneseq
      %v618 = vshrl.u32 %v617, 7
      %v619 = vsub.s32 0, %v618
      %v620 = vrot.slane %v615, %v619
      %v622 = vadd.f32 %v614, %v620
      %v623 = vadd.f32 %v622, %v219
      %v624 = vmax.f32 %v623, 0.0
      %vm625 = vcmask 257024
      %626 = vst.msk [vmem:[#allocation2] sm:$0xf] %vm625, %v624
      %p627 = scmp.eq.s32.totalorder %s19, 1
      // Predicated region
      $region37: #{hourglass_forward.11} parent=31 // pred_check
        %p628 = pneg %p627
      $region38: #{hourglass_forward.11} parent=31 // pred_check_branch
        %630 = sbr.rel (%p628) target = $region40
      $region39: #{hourglass_forward.11} parent=31 // pred_region
        %631 = vst.msk [vmem:[%s211] sm:$0xf] %vm625, %v624
      $region40: #{hourglass_forward.11} parent=31 // pred_fallthru
        _
      %p632 = scmp.lt.s32.totalorder %s18, 1
      %s633 = scalar_select %p632, %s18, 1
      %s634 = smul.addr %s633, 4
      %s635 = scalar_lea.vmem %s3, %s634
      // Predicated region
      $region41: #{hourglass_forward.11} parent=31 // pred_check
        %p636 = pneg %p122
      $region42: #{hourglass_forward.11} parent=31 // pred_check_branch
        %638 = sbr.rel (%p636) target = $region44
      $region43: #{hourglass_forward.11} parent=31 // pred_region
        _
      $region44: #{hourglass_forward.11} parent=31 // pred_fallthru
        _
    $region32: #{hourglass_forward.11} parent=5 // pred_fallthru
      _
    %p639 = scmp.le.s32.totalorder 2, %s9
    // Predicated region
    $region45: #{hourglass_forward.11} parent=5 // pred_check
      %p640 = pneg %p639
    $region46: #{hourglass_forward.11} parent=5 // pred_check_branch
      %642 = sbr.rel (%p640) target = $region48
    $region47: #{hourglass_forward.11} parent=5 // pred_region
      %s643 = ssub.s32 %s9, 2
      // Predicated region
      $region49: #{hourglass_forward.11} parent=47 // pred_check
        %p644 = pneg %p128
      $region50: #{hourglass_forward.11} parent=47 // pred_check_branch
        %646 = sbr.rel (%p644) target = $region52
      $region51: #{hourglass_forward.11} parent=47 // pred_region
        %p647 = scmp.lt.s32.totalorder %s20, 1
        %s648 = scalar_select %p647, %s20, 1
        %s649 = smul.addr %s648, 4
        %s650 = scalar_lea.vmem %s3, %s649
      $region52: #{hourglass_forward.11} parent=47 // pred_fallthru
        _
    $region48: #{hourglass_forward.11} parent=5 // pred_fallthru
      _
  $region6: #{hourglass_forward.11} parent=0 // loop_footer
    %s13 = sadd.s32 1, %s9
  $region7: #{hourglass_forward.11} parent=0 // loop_footer_branch
    %8 = sbr.rel target = $region3
  $region8: #{hourglass_forward.11} parent=0 // loop_exit
    _

// kernel: hourglass_forward.8
$region0: #{hourglass_forward.8}
  #allocation0 [shape = 'u32[]', space=smem, size = 0x4, offset = 0x4, fixed_abs, tag = 'smem constant byte address 0x4 - core index']
  #allocation1 [shape = 'u32[144,128]{1,0:T(1,128)}', space=vmem, size = 0x12000, scoped, tag = 'internal scratch']
  #allocation2 [shape = 'f32[8,64]{1,0:T(8,128)}', space=vmem, size = 0x1000, scoped, tag = 'scratch operand']
  %s0 = inlined_call_operand.vmem [shape: f32[2,16,128], index: 0, kind: input, shape index: {}]
  %s1 = inlined_call_operand.vmem [shape: f32[8,16], index: 1, kind: input, shape index: {}]
  %s2 = inlined_call_operand.vmem [shape: f32[8,16], index: 2, kind: input, shape index: {}]
  %s3 = inlined_call_operand.vmem [shape: f32[128,64], index: 3, kind: input, shape index: {}]
  %s4 = inlined_call_operand.vmem [shape: f32[128,64], index: 4, kind: input, shape index: {}]
  %s5 = inlined_call_operand.vmem [shape: f32[2,3,64,64], index: 5, kind: input, shape index: {}]
  %s6 = inlined_call_operand.vmem [shape: f32[2,1,64], index: 6, kind: input, shape index: {}]
  %s7 = inlined_call_operand.vmem [shape: f32[2,8,64], index: 7, kind: output, shape index: {}]
  %s8 = sld [smem:[#allocation0]]
  $region69: #{hourglass_forward.8} parent=0
    _
  %s10 = ssub.s32 1, %s8
  %s11 = scalar_select 0, %s10, %s8
  loop: start=0, step=1, limit=6
  $region2: #{hourglass_forward.8} parent=0 // loop_pre_header
    _
  $region3: #{hourglass_forward.8} parent=0 // loop_header
    %s13 = sphi 0, %s17
    %p14 = scmp.ge.s32.totalorder %s13, 6
    %s20 = sphi 0, %s32
    %s21 = sphi 0, %s28
    %s22 = sphi 0, %s20
    %s23 = sphi 0, %s21
    %s24 = sphi 0, %s22
    %s25 = sphi 0, %s23
    %s35 = sphi 0, %s37
    %s38 = sphi 0, %s35
    %s39 = sphi 0, %s38
    %s55 = sphi 0, %s39
    %s59 = sphi 0, %s59
    %s61 = sphi 0, %s59
    %s62 = sphi 0, %s61
    %s76 = sphi 0, %s62
    %s80 = sphi 0, %s80
    %s82 = sphi 0, %s80
    %s83 = sphi 0, %s82
    %s97 = sphi 0, %s83
    %s101 = sphi 0, %s101
    %s103 = sphi 0, %s101
    %s104 = sphi 0, %s103
    %s118 = sphi 0, %s104
    %s122 = sphi 0, %s122
    %s124 = sphi 0, %s122
    %s125 = sphi 0, %s124
    %s139 = sphi 0, %s125
    %s145 = sphi 0, %s147
    %s148 = sphi 0, %s145
    %s149 = sphi 0, %s148
    %s165 = sphi 0, %s149
    %s171 = sphi 0, %s173
    %s174 = sphi 0, %s171
    %s175 = sphi 0, %s174
    %s191 = sphi 0, %s175
    %s197 = sphi 0, %s199
    %s200 = sphi 0, %s197
    %s201 = sphi 0, %s200
    %s217 = sphi 0, %s201
  $region4: #{hourglass_forward.8} parent=0 // loop_header_branch
    %16 = sbr.rel (%p14) target = $region8
  $region5: #{hourglass_forward.8} parent=0 // loop_body
    %s18 = ssub.s32 %s13, 1
    %s19 = ssub.s32 %s13, 2
    %s26 = sadd.s32 1, %s21
    %p27 = scmp.ge.s32.totalorder %s26, 2
    %s28 = scalar_select %p27, 0, %s26
    %s29 = sadd.s32 1, %s20
    %s30 = scalar_select %p27, %s29, %s20
    %p31 = scmp.ge.s32.totalorder %s30, 2
    %s32 = scalar_select %p31, 0, %s30
    %s33 = ssub.s32 %s20, %s32
    %p34 = scmp.eq.s32.totalorder %s33, 0
    %s36 = sadd.s32 %s35, 1
    %s37 = scalar_select %p34, %s35, %s36
    %p40 = pneg %p34
    %p41 = scmp.eq.s32.totalorder %s13, 3
    %p42 = por %p40, %p41
    %p43 = scmp.ne.s32.totalorder %s35, %s38
    %p44 = scmp.eq.s32.totalorder %s13, 0
    %p45 = por %p43, %p44
    %p46 = scmp.ne.s32.totalorder %s35, %s38
    %p47 = scmp.eq.s32.totalorder %s18, 3
    %p48 = por %p46, %p47
    %p49 = scmp.ne.s32.totalorder %s38, %s39
    %p50 = scmp.eq.s32.totalorder %s18, 0
    %p51 = por %p49, %p50
    %p52 = scmp.ne.s32.totalorder %s38, %s39
    %p53 = scmp.eq.s32.totalorder %s19, 3
    %p54 = por %p52, %p53
    %p56 = scmp.ne.s32.totalorder %s39, %s55
    %p57 = scmp.eq.s32.totalorder %s19, 0
    %p58 = por %p56, %p57
    %s60 = sadd.s32 %s59, 1
    %p63 = scmp.eq.s32.totalorder %s13, 3
    %p64 = scmp.ne.s32.totalorder %s59, %s61
    %p65 = scmp.eq.s32.totalorder %s13, 0
    %p66 = por %p64, %p65
    %p67 = scmp.ne.s32.totalorder %s59, %s61
    %p68 = scmp.eq.s32.totalorder %s18, 3
    %p69 = por %p67, %p68
    %p70 = scmp.ne.s32.totalorder %s61, %s62
    %p71 = scmp.eq.s32.totalorder %s18, 0
    %p72 = por %p70, %p71
    %p73 = scmp.ne.s32.totalorder %s61, %s62
    %p74 = scmp.eq.s32.totalorder %s19, 3
    %p75 = por %p73, %p74
    %p77 = scmp.ne.s32.totalorder %s62, %s76
    %p78 = scmp.eq.s32.totalorder %s19, 0
    %p79 = por %p77, %p78
    %s81 = sadd.s32 %s80, 1
    %p84 = scmp.eq.s32.totalorder %s13, 3
    %p85 = scmp.ne.s32.totalorder %s80, %s82
    %p86 = scmp.eq.s32.totalorder %s13, 0
    %p87 = por %p85, %p86
    %p88 = scmp.ne.s32.totalorder %s80, %s82
    %p89 = scmp.eq.s32.totalorder %s18, 3
    %p90 = por %p88, %p89
    %p91 = scmp.ne.s32.totalorder %s82, %s83
    %p92 = scmp.eq.s32.totalorder %s18, 0
    %p93 = por %p91, %p92
    %p94 = scmp.ne.s32.totalorder %s82, %s83
    %p95 = scmp.eq.s32.totalorder %s19, 3
    %p96 = por %p94, %p95
    %p98 = scmp.ne.s32.totalorder %s83, %s97
    %p99 = scmp.eq.s32.totalorder %s19, 0
    %p100 = por %p98, %p99
    %s102 = sadd.s32 %s101, 1
    %p105 = scmp.eq.s32.totalorder %s13, 3
    %p106 = scmp.ne.s32.totalorder %s101, %s103
    %p107 = scmp.eq.s32.totalorder %s13, 0
    %p108 = por %p106, %p107
    %p109 = scmp.ne.s32.totalorder %s101, %s103
    %p110 = scmp.eq.s32.totalorder %s18, 3
    %p111 = por %p109, %p110
    %p112 = scmp.ne.s32.totalorder %s103, %s104
    %p113 = scmp.eq.s32.totalorder %s18, 0
    %p114 = por %p112, %p113
    %p115 = scmp.ne.s32.totalorder %s103, %s104
    %p116 = scmp.eq.s32.totalorder %s19, 3
    %p117 = por %p115, %p116
    %p119 = scmp.ne.s32.totalorder %s104, %s118
    %p120 = scmp.eq.s32.totalorder %s19, 0
    %p121 = por %p119, %p120
    %s123 = sadd.s32 %s122, 1
    %p126 = scmp.eq.s32.totalorder %s13, 3
    %p127 = scmp.ne.s32.totalorder %s122, %s124
    %p128 = scmp.eq.s32.totalorder %s13, 0
    %p129 = por %p127, %p128
    %p130 = scmp.ne.s32.totalorder %s122, %s124
    %p131 = scmp.eq.s32.totalorder %s18, 3
    %p132 = por %p130, %p131
    %p133 = scmp.ne.s32.totalorder %s124, %s125
    %p134 = scmp.eq.s32.totalorder %s18, 0
    %p135 = por %p133, %p134
    %p136 = scmp.ne.s32.totalorder %s124, %s125
    %p137 = scmp.eq.s32.totalorder %s19, 3
    %p138 = por %p136, %p137
    %p140 = scmp.ne.s32.totalorder %s125, %s139
    %p141 = scmp.eq.s32.totalorder %s19, 0
    %p142 = por %p140, %p141
    %s143 = ssub.s32 %s21, %s28
    %p144 = scmp.eq.s32.totalorder %s143, 0
    %s146 = sadd.s32 %s145, 1
    %s147 = scalar_select %p144, %s145, %s146
    %p150 = pneg %p144
    %p151 = scmp.eq.s32.totalorder %s13, 3
    %p152 = por %p150, %p151
    %p153 = scmp.ne.s32.totalorder %s145, %s148
    %p154 = scmp.eq.s32.totalorder %s13, 0
    %p155 = por %p153, %p154
    %p156 = scmp.ne.s32.totalorder %s145, %s148
    %p157 = scmp.eq.s32.totalorder %s18, 3
    %p158 = por %p156, %p157
    %p159 = scmp.ne.s32.totalorder %s148, %s149
    %p160 = scmp.eq.s32.totalorder %s18, 0
    %p161 = por %p159, %p160
    %p162 = scmp.ne.s32.totalorder %s148, %s149
    %p163 = scmp.eq.s32.totalorder %s19, 3
    %p164 = por %p162, %p163
    %p166 = scmp.ne.s32.totalorder %s149, %s165
    %p167 = scmp.eq.s32.totalorder %s19, 0
    %p168 = por %p166, %p167
    %s169 = ssub.s32 %s21, %s28
    %p170 = scmp.eq.s32.totalorder %s169, 0
    %s172 = sadd.s32 %s171, 1
    %s173 = scalar_select %p170, %s171, %s172
    %p176 = pneg %p170
    %p177 = scmp.eq.s32.totalorder %s13, 3
    %p178 = por %p176, %p177
    %p179 = scmp.ne.s32.totalorder %s171, %s174
    %p180 = scmp.eq.s32.totalorder %s13, 0
    %p181 = por %p179, %p180
    %p182 = scmp.ne.s32.totalorder %s171, %s174
    %p183 = scmp.eq.s32.totalorder %s18, 3
    %p184 = por %p182, %p183
    %p185 = scmp.ne.s32.totalorder %s174, %s175
    %p186 = scmp.eq.s32.totalorder %s18, 0
    %p187 = por %p185, %p186
    %p188 = scmp.ne.s32.totalorder %s174, %s175
    %p189 = scmp.eq.s32.totalorder %s19, 3
    %p190 = por %p188, %p189
    %p192 = scmp.ne.s32.totalorder %s175, %s191
    %p193 = scmp.eq.s32.totalorder %s19, 0
    %p194 = por %p192, %p193
    %s195 = ssub.s32 %s20, %s32
    %p196 = scmp.eq.s32.totalorder %s195, 0
    %s198 = sadd.s32 %s197, 1
    %s199 = scalar_select %p196, %s197, %s198
    %p202 = pneg %p196
    %p203 = scmp.eq.s32.totalorder %s13, 3
    %p204 = por %p202, %p203
    %p205 = scmp.ne.s32.totalorder %s197, %s200
    %p206 = scmp.eq.s32.totalorder %s13, 0
    %p207 = por %p205, %p206
    %p208 = scmp.ne.s32.totalorder %s197, %s200
    %p209 = scmp.eq.s32.totalorder %s18, 3
    %p210 = por %p208, %p209
    %p211 = scmp.ne.s32.totalorder %s200, %s201
    %p212 = scmp.eq.s32.totalorder %s18, 0
    %p213 = por %p211, %p212
    %p214 = scmp.ne.s32.totalorder %s200, %s201
    %p215 = scmp.eq.s32.totalorder %s19, 3
    %p216 = por %p214, %p215
    %p218 = scmp.ne.s32.totalorder %s201, %s217
    %p219 = scmp.eq.s32.totalorder %s19, 0
    %p220 = por %p218, %p219
    %p221 = scmp.le.s32.totalorder 1, %s13
    %p222 = scmp.lt.s32.totalorder %s13, 5
    %p223 = pnand %p221, %p222
    %p224 = pneg %p223
    // Predicated region
    $region9: #{hourglass_forward.8} parent=5 // pred_check
      _
    $region10: #{hourglass_forward.8} parent=5 // pred_check_branch
      %226 = sbr.rel (%p223) target = $region12
    $region11: #{hourglass_forward.8} parent=5 // pred_region
      %s227 = ssub.s32 %s13, 1
      // Predicated region
      $region13: #{hourglass_forward.8} parent=11 // pred_check
        %p228 = pneg %p72
      $region14: #{hourglass_forward.8} parent=11 // pred_check_branch
        %230 = sbr.rel (%p228) target = $region16
      $region15: #{hourglass_forward.8} parent=11 // pred_region
        _
      $region16: #{hourglass_forward.8} parent=11 // pred_fallthru
        _
      // Predicated region
      $region17: #{hourglass_forward.8} parent=11 // pred_check
        %p231 = pneg %p93
      $region18: #{hourglass_forward.8} parent=11 // pred_check_branch
        %233 = sbr.rel (%p231) target = $region20
      $region19: #{hourglass_forward.8} parent=11 // pred_region
        _
      $region20: #{hourglass_forward.8} parent=11 // pred_fallthru
        _
      // Predicated region
      $region21: #{hourglass_forward.8} parent=11 // pred_check
        %p234 = pneg %p114
      $region22: #{hourglass_forward.8} parent=11 // pred_check_branch
        %236 = sbr.rel (%p234) target = $region24
      $region23: #{hourglass_forward.8} parent=11 // pred_region
        _
      $region24: #{hourglass_forward.8} parent=11 // pred_fallthru
        _
      // Predicated region
      $region25: #{hourglass_forward.8} parent=11 // pred_check
        %p237 = pneg %p135
      $region26: #{hourglass_forward.8} parent=11 // pred_check_branch
        %239 = sbr.rel (%p237) target = $region28
      $region27: #{hourglass_forward.8} parent=11 // pred_region
        _
      $region28: #{hourglass_forward.8} parent=11 // pred_fallthru
        _
    $region12: #{hourglass_forward.8} parent=5 // pred_fallthru
      _
    %p240 = scmp.lt.s32.totalorder %s13, 4
    // Predicated region
    $region29: #{hourglass_forward.8} parent=5 // pred_check
      %p241 = pneg %p240
    $region30: #{hourglass_forward.8} parent=5 // pred_check_branch
      %243 = sbr.rel (%p241) target = $region32
    $region31: #{hourglass_forward.8} parent=5 // pred_region
      // Predicated region
      $region33: #{hourglass_forward.8} parent=31 // pred_check
        %p244 = pneg %p45
      $region34: #{hourglass_forward.8} parent=31 // pred_check_branch
        %246 = sbr.rel (%p244) target = $region36
      $region35: #{hourglass_forward.8} parent=31 // pred_region
        %p247 = scmp.lt.s32.totalorder %s20, 1
        %s248 = scalar_select %p247, %s20, 1
        %s249 = smul.addr %s248, 2
        %s250 = smul.addr %s249, 8
        %s251 = scalar_lea.vmem %s0, %s250
      $region36: #{hourglass_forward.8} parent=31 // pred_fallthru
        _
      // Predicated region
      $region37: #{hourglass_forward.8} parent=31 // pred_check
        %p252 = pneg %p155
      $region38: #{hourglass_forward.8} parent=31 // pred_check_branch
        %254 = sbr.rel (%p252) target = $region40
      $region39: #{hourglass_forward.8} parent=31 // pred_region
        %p255 = scmp.lt.s32.totalorder %s21, 1
        %s256 = scalar_select %p255, %s21, 1
        %s257 = smul.addr %s256, 24
        %s258 = smul.addr %s257, 8
        %s259 = scalar_lea.vmem %s5, %s258
      $region40: #{hourglass_forward.8} parent=31 // pred_fallthru
        _
      // Predicated region
      $region41: #{hourglass_forward.8} parent=31 // pred_check
        %p260 = pneg %p181
      $region42: #{hourglass_forward.8} parent=31 // pred_check_branch
        %262 = sbr.rel (%p260) target = $region44
      $region43: #{hourglass_forward.8} parent=31 // pred_region
        %p263 = scmp.lt.s32.totalorder %s21, 1
        %s264 = scalar_select %p263, %s21, 1
        %s265 = scalar_lea.vmem %s6, %s264
      $region44: #{hourglass_forward.8} parent=31 // pred_fallthru
        _
    $region32: #{hourglass_forward.8} parent=5 // pred_fallthru
      _
    %p266 = scmp.le.s32.totalorder 1, %s13
    %p267 = scmp.lt.s32.totalorder %s13, 5
    %p268 = pnand %p266, %p267
    %p269 = pneg %p268
    // Predicated region
    $region45: #{hourglass_forward.8} parent=5 // pred_check
      _
    $region46: #{hourglass_forward.8} parent=5 // pred_check_branch
      %271 = sbr.rel (%p268) target = $region48
    $region47: #{hourglass_forward.8} parent=5 // pred_region
      %s272 = ssub.s32 %s13, 1
      %p273 = scmp.lt.s32.totalorder %s22, 1
      %s274 = scalar_select %p273, %s22, 1
      %s275 = smul.addr %s274, 2
      %s276 = smul.addr %s275, 8
      %s277 = scalar_lea.vmem %s0, %s276
      %p278 = pneg %p51
      %p279 = pneg %p48
      %p280 = pneg %p72
      %p281 = pneg %p69
      %p282 = pneg %p93
      %p283 = pneg %p90
      %p284 = pneg %p114
      %p285 = pneg %p111
      %p286 = pneg %p135
      %p287 = pneg %p132
      %p288 = scmp.lt.s32.totalorder %s23, 1
      %s289 = scalar_select %p288, %s23, 1
      %s290 = smul.addr %s289, 24
      %s291 = smul.addr %s290, 8
      %s292 = scalar_lea.vmem %s5, %s291
      %p293 = pneg %p161
      %p294 = pneg %p158
      %p295 = scmp.lt.s32.totalorder %s23, 1
      %s296 = scalar_select %p295, %s23, 1
      %s297 = scalar_lea.vmem %s6, %s296
      %p298 = pneg %p187
      %p299 = pneg %p184
      %p300 = pneg %p213
      %p301 = pneg %p210
      %p302 = scmp.lt.s32.totalorder %s22, 1
      %s303 = scalar_select %p302, %s22, 1
      %s304 = smul.addr %s303, 8
      %s305 = scalar_lea.vmem %s7, %s304
      %p306 = scmp.lt.s32.totalorder %s22, 1
      %s307 = scalar_select %p306, %s22, 1
      %s308 = smul.addr %s307, 2
      %s309 = smul.addr %s308, 8
      %s310 = scalar_lea.vmem %s0, %s309
      %p311 = scmp.lt.s32.totalorder %s23, 1
      %s312 = scalar_select %p311, %s23, 1
      %s313 = smul.addr %s312, 24
      %s314 = smul.addr %s313, 8
      %s315 = scalar_lea.vmem %s5, %s314
      %p316 = scmp.lt.s32.totalorder %s23, 1
      %s317 = scalar_select %p316, %s23, 1
      %s318 = scalar_lea.vmem %s6, %s317
      %p319 = scmp.lt.s32.totalorder %s22, 1
      %s320 = scalar_select %p319, %s22, 1
      %s321 = smul.addr %s320, 8
      %s322 = scalar_lea.vmem %s7, %s321
      %p323 = scmp.eq.s32.totalorder %s23, 0
      // Predicated region
      $region49: #{hourglass_forward.8} parent=47 // pred_check
        %p324 = pneg %p323
      $region50: #{hourglass_forward.8} parent=47 // pred_check_branch
        %326 = sbr.rel (%p324) target = $region52
      $region51: #{hourglass_forward.8} parent=47 // pred_region
        %v327 = vld [vmem:[%s310] sm:$0xff]
        %v328 = vld [vmem:[%s310 + $0x8] sm:$0xff]
        %v329 = vld [vmem:[%s1] sm:$0xff]
        %vm330 = vcmask 130048
        %v332 = vsel %vm330, %v329, 0
        %334 = vmatprep.subr.mxu0 0.0
        %335 = vmatpush1.msra.mxu0 0.0
        %336 = vmatprep.subr.mxu0 0.0
        %337 = vmatpush1.msra.mxu0 0.0
        %338 = vmatprep.subr.mxu0 0.0
        %339 = vmatpush1.msra.mxu0 0.0
        %340 = vmatprep.subr.mxu0 0.0
        %341 = vmatpush1.msra.mxu0 0.0
        %342 = vmatprep.subr.mxu0 0.0
        %343 = vmatpush1.msra.mxu0 0.0
        %344 = vmatprep.subr.mxu0 0.0
        %345 = vmatpush1.msra.mxu0 0.0
        %346 = vmatprep.subr.mxu0 0.0
        %347 = vmatpush1.msra.mxu0 0.0
        %348 = vmatprep.subr.mxu0 0.0
        %349 = vmatpush1.msra.mxu0 0.0
        %350 = vmatprep.subr.mxu0 0.0
        %351 = vmatpush1.msra.mxu0 0.0
        %352 = vmatprep.subr.mxu0 0.0
        %353 = vmatpush1.msra.mxu0 0.0
        %354 = vmatprep.subr.mxu0 0.0
        %355 = vmatpush1.msra.mxu0 0.0
        %356 = vmatprep.subr.mxu0 0.0
        %357 = vmatpush1.msra.mxu0 0.0
        %358 = vmatprep.subr.mxu0 0.0
        %359 = vmatpush1.msra.mxu0 0.0
        %360 = vmatprep.subr.mxu0 0.0
        %361 = vmatpush1.msra.mxu0 0.0
        %362 = vmatprep.subr.mxu0 0.0
        %363 = vmatpush1.msra.mxu0 %v328
        %364 = vmatprep.subr.mxu0 0.0
        %365 = vmatpush1.msra.mxu0 %v327
        %366 = vmatprep.subr.mxu0 0.0
        %367 = vmatpush2.msra.mxu0 0.0
        %368 = vmatprep.subr.mxu0 0.0
        %369 = vmatpush2.msra.mxu0 0.0
        %370 = vmatprep.subr.mxu0 0.0
        %371 = vmatpush2.msra.mxu0 0.0
        %372 = vmatprep.subr.mxu0 0.0
        %373 = vmatpush2.msra.mxu0 0.0
        %374 = vmatprep.subr.mxu0 0.0
        %375 = vmatpush2.msra.mxu0 0.0
        %376 = vmatprep.subr.mxu0 0.0
        %377 = vmatpush2.msra.mxu0 0.0
        %378 = vmatprep.subr.mxu0 0.0
        %379 = vmatpush2.msra.mxu0 0.0
        %380 = vmatprep.subr.mxu0 0.0
        %381 = vmatpush2.msra.mxu0 0.0
        %382 = vmatprep.subr.mxu0 0.0
        %383 = vmatpush2.msra.mxu0 0.0
        %384 = vmatprep.subr.mxu0 0.0
        %385 = vmatpush2.msra.mxu0 0.0
        %386 = vmatprep.subr.mxu0 0.0
        %387 = vmatpush2.msra.mxu0 0.0
        %388 = vmatprep.subr.mxu0 0.0
        %389 = vmatpush2.msra.mxu0 0.0
        %390 = vmatprep.subr.mxu0 0.0
        %391 = vmatpush2.msra.mxu0 0.0
        %392 = vmatprep.subr.mxu0 0.0
        %393 = vmatpush2.msra.mxu0 0.0
        %394 = vmatprep.subr.mxu0 0.0
        %395 = vmatpush2.msra.mxu0 0.0
        %396 = vmatprep.subr.mxu0 0.0
        %397 = vmatpush2.msra.mxu0 0.0
        %398 = vmatprep.mubr.f32.mxu0 0.0
        %399 = vmatmul.mubr.f32.gmra.mxu0 %v332
        %v400 = vpop.f32.mrf.mxu0
        %v401 = vadd.f32 0.0, %v400
        %v402 = vpop.f32.mrf.mxu0
        %403 = vdwg.mxu0
        %v404 = vld [vmem:[%s2] sm:$0xff]
        %v406 = vsel %vm330, %v404, 0
        %408 = vmatprep.subr.mxu0 0.0
        %409 = vmatpush1.msra.mxu0 0.0
        %410 = vmatprep.subr.mxu0 0.0
        %411 = vmatpush1.msra.mxu0 0.0
        %412 = vmatprep.subr.mxu0 0.0
        %413 = vmatpush1.msra.mxu0 0.0
        %414 = vmatprep.subr.mxu0 0.0
        %415 = vmatpush1.msra.mxu0 0.0
        %416 = vmatprep.subr.mxu0 0.0
        %417 = vmatpush1.msra.mxu0 0.0
        %418 = vmatprep.subr.mxu0 0.0
        %419 = vmatpush1.msra.mxu0 0.0
        %420 = vmatprep.subr.mxu0 0.0
        %421 = vmatpush1.msra.mxu0 0.0
        %422 = vmatprep.subr.mxu0 0.0
        %423 = vmatpush1.msra.mxu0 0.0
        %424 = vmatprep.subr.mxu0 0.0
        %425 = vmatpush1.msra.mxu0 0.0
        %426 = vmatprep.subr.mxu0 0.0
        %427 = vmatpush1.msra.mxu0 0.0
        %428 = vmatprep.subr.mxu0 0.0
        %429 = vmatpush1.msra.mxu0 0.0
        %430 = vmatprep.subr.mxu0 0.0
        %431 = vmatpush1.msra.mxu0 0.0
        %432 = vmatprep.subr.mxu0 0.0
        %433 = vmatpush1.msra.mxu0 0.0
        %434 = vmatprep.subr.mxu0 0.0
        %435 = vmatpush1.msra.mxu0 0.0
        %436 = vmatprep.subr.mxu0 0.0
        %437 = vmatpush1.msra.mxu0 %v328
        %438 = vmatprep.subr.mxu0 0.0
        %439 = vmatpush1.msra.mxu0 %v327
        %440 = vmatprep.subr.mxu0 0.0
        %441 = vmatpush2.msra.mxu0 0.0
        %442 = vmatprep.subr.mxu0 0.0
        %443 = vmatpush2.msra.mxu0 0.0
        %444 = vmatprep.subr.mxu0 0.0
        %445 = vmatpush2.msra.mxu0 0.0
        %446 = vmatprep.subr.mxu0 0.0
        %447 = vmatpush2.msra.mxu0 0.0
        %448 = vmatprep.subr.mxu0 0.0
        %449 = vmatpush2.msra.mxu0 0.0
        %450 = vmatprep.subr.mxu0 0.0
        %451 = vmatpush2.msra.mxu0 0.0
        %452 = vmatprep.subr.mxu0 0.0
        %453 = vmatpush2.msra.mxu0 0.0
        %454 = vmatprep.subr.mxu0 0.0
        %455 = vmatpush2.msra.mxu0 0.0
        %456 = vmatprep.subr.mxu0 0.0
        %457 = vmatpush2.msra.mxu0 0.0
        %458 = vmatprep.subr.mxu0 0.0
        %459 = vmatpush2.msra.mxu0 0.0
        %460 = vmatprep.subr.mxu0 0.0
        %461 = vmatpush2.msra.mxu0 0.0
        %462 = vmatprep.subr.mxu0 0.0
        %463 = vmatpush2.msra.mxu0 0.0
        %464 = vmatprep.subr.mxu0 0.0
        %465 = vmatpush2.msra.mxu0 0.0
        %466 = vmatprep.subr.mxu0 0.0
        %467 = vmatpush2.msra.mxu0 0.0
        %468 = vmatprep.subr.mxu0 0.0
        %469 = vmatpush2.msra.mxu0 0.0
        %470 = vmatprep.subr.mxu0 0.0
        %471 = vmatpush2.msra.mxu0 0.0
        %472 = vmatprep.mubr.f32.mxu0 0.0
        %473 = vmatmul.mubr.f32.gmra.mxu0 %v406
        %v474 = vpop.f32.mrf.mxu0
        %v475 = vadd.f32 0.0, %v474
        %v476 = vpop.f32.mrf.mxu0
        %477 = vdwg.mxu0
        %v478 = vmax.f32 %v401, %v475
        %v479 = vld [vmem:[%s3] sm:$0xff]
        %v480 = vld [vmem:[%s3 + $0x8] sm:$0xff]
        %v481 = vld [vmem:[%s3 + $0x10] sm:$0xff]
        %v482 = vld [vmem:[%s3 + $0x18] sm:$0xff]
        %v483 = vld [vmem:[%s3 + $0x20] sm:$0xff]
        %v484 = vld [vmem:[%s3 + $0x28] sm:$0xff]
        %v485 = vld [vmem:[%s3 + $0x30] sm:$0xff]
        %v486 = vld [vmem:[%s3 + $0x38] sm:$0xff]
        %v487 = vld [vmem:[%s3 + $0x40] sm:$0xff]
        %v488 = vld [vmem:[%s3 + $0x48] sm:$0xff]
        %v489 = vld [vmem:[%s3 + $0x50] sm:$0xff]
        %v490 = vld [vmem:[%s3 + $0x58] sm:$0xff]
        %v491 = vld [vmem:[%s3 + $0x60] sm:$0xff]
        %v492 = vld [vmem:[%s3 + $0x68] sm:$0xff]
        %v493 = vld [vmem:[%s3 + $0x70] sm:$0xff]
        %v494 = vld [vmem:[%s3 + $0x78] sm:$0xff]
        %495 = vmatprep.subr.mxu0 0.0
        %496 = vmatpush1.msra.mxu0 %v494
        %497 = vmatprep.subr.mxu0 0.0
        %498 = vmatpush1.msra.mxu0 %v493
        %499 = vmatprep.subr.mxu0 0.0
        %500 = vmatpush1.msra.mxu0 %v492
        %501 = vmatprep.subr.mxu0 0.0
        %502 = vmatpush1.msra.mxu0 %v491
        %503 = vmatprep.subr.mxu0 0.0
        %504 = vmatpush1.msra.mxu0 %v490
        %505 = vmatprep.subr.mxu0 0.0
        %506 = vmatpush1.msra.mxu0 %v489
        %507 = vmatprep.subr.mxu0 0.0
        %508 = vmatpush1.msra.mxu0 %v488
        %509 = vmatprep.subr.mxu0 0.0
        %510 = vmatpush1.msra.mxu0 %v487
        %511 = vmatprep.subr.mxu0 0.0
        %512 = vmatpush1.msra.mxu0 %v486
        %513 = vmatprep.subr.mxu0 0.0
        %514 = vmatpush1.msra.mxu0 %v485
        %515 = vmatprep.subr.mxu0 0.0
        %516 = vmatpush1.msra.mxu0 %v484
        %517 = vmatprep.subr.mxu0 0.0
        %518 = vmatpush1.msra.mxu0 %v483
        %519 = vmatprep.subr.mxu0 0.0
        %520 = vmatpush1.msra.mxu0 %v482
        %521 = vmatprep.subr.mxu0 0.0
        %522 = vmatpush1.msra.mxu0 %v481
        %523 = vmatprep.subr.mxu0 0.0
        %524 = vmatpush1.msra.mxu0 %v480
        %525 = vmatprep.subr.mxu0 0.0
        %526 = vmatpush1.msra.mxu0 %v479
        %527 = vmatprep.subr.mxu0 0.0
        %528 = vmatpush2.msra.mxu0 0.0
        %529 = vmatprep.subr.mxu0 0.0
        %530 = vmatpush2.msra.mxu0 0.0
        %531 = vmatprep.subr.mxu0 0.0
        %532 = vmatpush2.msra.mxu0 0.0
        %533 = vmatprep.subr.mxu0 0.0
        %534 = vmatpush2.msra.mxu0 0.0
        %535 = vmatprep.subr.mxu0 0.0
        %536 = vmatpush2.msra.mxu0 0.0
        %537 = vmatprep.subr.mxu0 0.0
        %538 = vmatpush2.msra.mxu0 0.0
        %539 = vmatprep.subr.mxu0 0.0
        %540 = vmatpush2.msra.mxu0 0.0
        %541 = vmatprep.subr.mxu0 0.0
        %542 = vmatpush2.msra.mxu0 0.0
        %543 = vmatprep.subr.mxu0 0.0
        %544 = vmatpush2.msra.mxu0 0.0
        %545 = vmatprep.subr.mxu0 0.0
        %546 = vmatpush2.msra.mxu0 0.0
        %547 = vmatprep.subr.mxu0 0.0
        %548 = vmatpush2.msra.mxu0 0.0
        %549 = vmatprep.subr.mxu0 0.0
        %550 = vmatpush2.msra.mxu0 0.0
        %551 = vmatprep.subr.mxu0 0.0
        %552 = vmatpush2.msra.mxu0 0.0
        %553 = vmatprep.subr.mxu0 0.0
        %554 = vmatpush2.msra.mxu0 0.0
        %555 = vmatprep.subr.mxu0 0.0
        %556 = vmatpush2.msra.mxu0 0.0
        %557 = vmatprep.subr.mxu0 0.0
        %558 = vmatpush2.msra.mxu0 0.0
        %559 = vmatprep.mubr.f32.mxu0 0.0
        %560 = vmatmul.mubr.f32.gmra.mxu0 %v478
        %v561 = vpop.f32.mrf.mxu0
        %v562 = vadd.f32 0.0, %v561
        %v563 = vpop.f32.mrf.mxu0
        %564 = vdwg.mxu0
        %v565 = vld [vmem:[%s4] sm:$0xff]
        %v566 = vld [vmem:[%s4 + $0x8] sm:$0xff]
        %v567 = vld [vmem:[%s4 + $0x10] sm:$0xff]
        %v568 = vld [vmem:[%s4 + $0x18] sm:$0xff]
        %v569 = vld [vmem:[%s4 + $0x20] sm:$0xff]
        %v570 = vld [vmem:[%s4 + $0x28] sm:$0xff]
        %v571 = vld [vmem:[%s4 + $0x30] sm:$0xff]
        %v572 = vld [vmem:[%s4 + $0x38] sm:$0xff]
        %v573 = vld [vmem:[%s4 + $0x40] sm:$0xff]
        %v574 = vld [vmem:[%s4 + $0x48] sm:$0xff]
        %v575 = vld [vmem:[%s4 + $0x50] sm:$0xff]
        %v576 = vld [vmem:[%s4 + $0x58] sm:$0xff]
        %v577 = vld [vmem:[%s4 + $0x60] sm:$0xff]
        %v578 = vld [vmem:[%s4 + $0x68] sm:$0xff]
        %v579 = vld [vmem:[%s4 + $0x70] sm:$0xff]
        %v580 = vld [vmem:[%s4 + $0x78] sm:$0xff]
        %581 = vmatprep.subr.mxu0 0.0
        %582 = vmatpush1.msra.mxu0 %v580
        %583 = vmatprep.subr.mxu0 0.0
        %584 = vmatpush1.msra.mxu0 %v579
        %585 = vmatprep.subr.mxu0 0.0
        %586 = vmatpush1.msra.mxu0 %v578
        %587 = vmatprep.subr.mxu0 0.0
        %588 = vmatpush1.msra.mxu0 %v577
        %589 = vmatprep.subr.mxu0 0.0
        %590 = vmatpush1.msra.mxu0 %v576
        %591 = vmatprep.subr.mxu0 0.0
        %592 = vmatpush1.msra.mxu0 %v575
        %593 = vmatprep.subr.mxu0 0.0
        %594 = vmatpush1.msra.mxu0 %v574
        %595 = vmatprep.subr.mxu0 0.0
        %596 = vmatpush1.msra.mxu0 %v573
        %597 = vmatprep.subr.mxu0 0.0
        %598 = vmatpush1.msra.mxu0 %v572
        %599 = vmatprep.subr.mxu0 0.0
        %600 = vmatpush1.msra.mxu0 %v571
        %601 = vmatprep.subr.mxu0 0.0
        %602 = vmatpush1.msra.mxu0 %v570
        %603 = vmatprep.subr.mxu0 0.0
        %604 = vmatpush1.msra.mxu0 %v569
        %605 = vmatprep.subr.mxu0 0.0
        %606 = vmatpush1.msra.mxu0 %v568
        %607 = vmatprep.subr.mxu0 0.0
        %608 = vmatpush1.msra.mxu0 %v567
        %609 = vmatprep.subr.mxu0 0.0
        %610 = vmatpush1.msra.mxu0 %v566
        %611 = vmatprep.subr.mxu0 0.0
        %612 = vmatpush1.msra.mxu0 %v565
        %613 = vmatprep.subr.mxu0 0.0
        %614 = vmatpush2.msra.mxu0 0.0
        %615 = vmatprep.subr.mxu0 0.0
        %616 = vmatpush2.msra.mxu0 0.0
        %617 = vmatprep.subr.mxu0 0.0
        %618 = vmatpush2.msra.mxu0 0.0
        %619 = vmatprep.subr.mxu0 0.0
        %620 = vmatpush2.msra.mxu0 0.0
        %621 = vmatprep.subr.mxu0 0.0
        %622 = vmatpush2.msra.mxu0 0.0
        %623 = vmatprep.subr.mxu0 0.0
        %624 = vmatpush2.msra.mxu0 0.0
        %625 = vmatprep.subr.mxu0 0.0
        %626 = vmatpush2.msra.mxu0 0.0
        %627 = vmatprep.subr.mxu0 0.0
        %628 = vmatpush2.msra.mxu0 0.0
        %629 = vmatprep.subr.mxu0 0.0
        %630 = vmatpush2.msra.mxu0 0.0
        %631 = vmatprep.subr.mxu0 0.0
        %632 = vmatpush2.msra.mxu0 0.0
        %633 = vmatprep.subr.mxu0 0.0
        %634 = vmatpush2.msra.mxu0 0.0
        %635 = vmatprep.subr.mxu0 0.0
        %636 = vmatpush2.msra.mxu0 0.0
        %637 = vmatprep.subr.mxu0 0.0
        %638 = vmatpush2.msra.mxu0 0.0
        %639 = vmatprep.subr.mxu0 0.0
        %640 = vmatpush2.msra.mxu0 0.0
        %641 = vmatprep.subr.mxu0 0.0
        %642 = vmatpush2.msra.mxu0 0.0
        %643 = vmatprep.subr.mxu0 0.0
        %644 = vmatpush2.msra.mxu0 0.0
        %645 = vmatprep.mubr.f32.mxu0 0.0
        %646 = vmatmul.mubr.f32.gmra.mxu0 %v478
        %v647 = vpop.f32.mrf.mxu0
        %v648 = vadd.f32 0.0, %v647
        %v649 = vpop.f32.mrf.mxu0
        %650 = vdwg.mxu0
        %v651 = vmax.f32 %v562, %v648
        %vm652 = vcmask 523264
        %653 = vst.msk [vmem:[#allocation2] sm:$0xff] %vm652, %v651
      $region52: #{hourglass_forward.8} parent=47 // pred_fallthru
        _
      %v654 = vld [vmem:[#allocation2] sm:$0xff]
      %s655 = scalar_lea.vmem %s315, 64
      %v656 = vld [vmem:[%s655] sm:$0xff]
      %v657 = vld [vmem:[%s655 + $0x8] sm:$0xff]
      %v658 = vld [vmem:[%s655 + $0x10] sm:$0xff]
      %v659 = vld [vmem:[%s655 + $0x18] sm:$0xff]
      %v660 = vld [vmem:[%s655 + $0x20] sm:$0xff]
      %v661 = vld [vmem:[%s655 + $0x28] sm:$0xff]
      %v662 = vld [vmem:[%s655 + $0x30] sm:$0xff]
      %v663 = vld [vmem:[%s655 + $0x38] sm:$0xff]
      %v664 = vld [vmem:[%s315] sm:$0xff]
      %v665 = vld [vmem:[%s315 + $0x8] sm:$0xff]
      %v666 = vld [vmem:[%s315 + $0x10] sm:$0xff]
      %v667 = vld [vmem:[%s315 + $0x18] sm:$0xff]
      %v668 = vld [vmem:[%s315 + $0x20] sm:$0xff]
      %v669 = vld [vmem:[%s315 + $0x28] sm:$0xff]
      %v670 = vld [vmem:[%s315 + $0x30] sm:$0xff]
      %v671 = vld [vmem:[%s315 + $0x38] sm:$0xff]
      %vm672 = vcmask 523264
      %v674 = vsel %vm672, %v654, 0
      %676 = vmatprep.subr.mxu0 0.0
      %677 = vmatpush1.msra.mxu0 0.0
      %678 = vmatprep.subr.mxu0 0.0
      %679 = vmatpush1.msra.mxu0 0.0
      %680 = vmatprep.subr.mxu0 0.0
      %681 = vmatpush1.msra.mxu0 0.0
      %682 = vmatprep.subr.mxu0 0.0
      %683 = vmatpush1.msra.mxu0 0.0
      %684 = vmatprep.subr.mxu0 0.0
      %685 = vmatpush1.msra.mxu0 0.0
      %686 = vmatprep.subr.mxu0 0.0
      %687 = vmatpush1.msra.mxu0 0.0
      %688 = vmatprep.subr.mxu0 0.0
      %689 = vmatpush1.msra.mxu0 0.0
      %690 = vmatprep.subr.mxu0 0.0
      %691 = vmatpush1.msra.mxu0 0.0
      %692 = vmatprep.subr.mxu0 0.0
      %693 = vmatpush1.msra.mxu0 %v671
      %694 = vmatprep.subr.mxu0 0.0
      %695 = vmatpush1.msra.mxu0 %v670
      %696 = vmatprep.subr.mxu0 0.0
      %697 = vmatpush1.msra.mxu0 %v669
      %698 = vmatprep.subr.mxu0 0.0
      %699 = vmatpush1.msra.mxu0 %v668
      %700 = vmatprep.subr.mxu0 0.0
      %701 = vmatpush1.msra.mxu0 %v667
      %702 = vmatprep.subr.mxu0 0.0
      %703 = vmatpush1.msra.mxu0 %v666
      %704 = vmatprep.subr.mxu0 0.0
      %705 = vmatpush1.msra.mxu0 %v665
      %706 = vmatprep.subr.mxu0 0.0
      %707 = vmatpush1.msra.mxu0 %v664
      %708 = vmatprep.subr.mxu0 0.0
      %709 = vmatpush2.msra.mxu0 0.0
      %710 = vmatprep.subr.mxu0 0.0
      %711 = vmatpush2.msra.mxu0 0.0
      %712 = vmatprep.subr.mxu0 0.0
      %713 = vmatpush2.msra.mxu0 0.0
      %714 = vmatprep.subr.mxu0 0.0
      %715 = vmatpush2.msra.mxu0 0.0
      %716 = vmatprep.subr.mxu0 0.0
      %717 = vmatpush2.msra.mxu0 0.0
      %718 = vmatprep.subr.mxu0 0.0
      %719 = vmatpush2.msra.mxu0 0.0
      %720 = vmatprep.subr.mxu0 0.0
      %721 = vmatpush2.msra.mxu0 0.0
      %722 = vmatprep.subr.mxu0 0.0
      %723 = vmatpush2.msra.mxu0 0.0
      %724 = vmatprep.subr.mxu0 0.0
      %725 = vmatpush2.msra.mxu0 0.0
      %726 = vmatprep.subr.mxu0 0.0
      %727 = vmatpush2.msra.mxu0 0.0
      %728 = vmatprep.subr.mxu0 0.0
      %729 = vmatpush2.msra.mxu0 0.0
      %730 = vmatprep.subr.mxu0 0.0
      %731 = vmatpush2.msra.mxu0 0.0
      %732 = vmatprep.subr.mxu0 0.0
      %733 = vmatpush2.msra.mxu0 0.0
      %734 = vmatprep.subr.mxu0 0.0
      %735 = vmatpush2.msra.mxu0 0.0
      %736 = vmatprep.subr.mxu0 0.0
      %737 = vmatpush2.msra.mxu0 0.0
      %738 = vmatprep.subr.mxu0 0.0
      %739 = vmatpush2.msra.mxu0 0.0
      %740 = vmatprep.mubr.f32.mxu0 0.0
      %741 = vmatmul.mubr.f32.gmra.mxu0 %v674
      %v742 = vpop.f32.mrf.mxu0
      %v743 = vadd.f32 0.0, %v742
      %v744 = vpop.f32.mrf.mxu0
      %745 = vdwg.mxu0
      %s746 = scalar_lea.vmem %s315, 128
      %v747 = vld [vmem:[%s746] sm:$0xff]
      %v748 = vld [vmem:[%s746 + $0x8] sm:$0xff]
      %v749 = vld [vmem:[%s746 + $0x10] sm:$0xff]
      %v750 = vld [vmem:[%s746 + $0x18] sm:$0xff]
      %v751 = vld [vmem:[%s746 + $0x20] sm:$0xff]
      %v752 = vld [vmem:[%s746 + $0x28] sm:$0xff]
      %v753 = vld [vmem:[%s746 + $0x30] sm:$0xff]
      %v754 = vld [vmem:[%s746 + $0x38] sm:$0xff]
      %755 = vmatprep.subr.mxu0 0.0
      %756 = vmatpush1.msra.mxu0 0.0
      %757 = vmatprep.subr.mxu0 0.0
      %758 = vmatpush1.msra.mxu0 0.0
      %759 = vmatprep.subr.mxu0 0.0
      %760 = vmatpush1.msra.mxu0 0.0
      %761 = vmatprep.subr.mxu0 0.0
      %762 = vmatpush1.msra.mxu0 0.0
      %763 = vmatprep.subr.mxu0 0.0
      %764 = vmatpush1.msra.mxu0 0.0
      %765 = vmatprep.subr.mxu0 0.0
      %766 = vmatpush1.msra.mxu0 0.0
      %767 = vmatprep.subr.mxu0 0.0
      %768 = vmatpush1.msra.mxu0 0.0
      %769 = vmatprep.subr.mxu0 0.0
      %770 = vmatpush1.msra.mxu0 0.0
      %771 = vmatprep.subr.mxu0 0.0
      %772 = vmatpush1.msra.mxu0 %v754
      %773 = vmatprep.subr.mxu0 0.0
      %774 = vmatpush1.msra.mxu0 %v753
      %775 = vmatprep.subr.mxu0 0.0
      %776 = vmatpush1.msra.mxu0 %v752
      %777 = vmatprep.subr.mxu0 0.0
      %778 = vmatpush1.msra.mxu0 %v751
      %779 = vmatprep.subr.mxu0 0.0
      %780 = vmatpush1.msra.mxu0 %v750
      %781 = vmatprep.subr.mxu0 0.0
      %782 = vmatpush1.msra.mxu0 %v749
      %783 = vmatprep.subr.mxu0 0.0
      %784 = vmatpush1.msra.mxu0 %v748
      %785 = vmatprep.subr.mxu0 0.0
      %786 = vmatpush1.msra.mxu0 %v747
      %787 = vmatprep.subr.mxu0 0.0
      %788 = vmatpush2.msra.mxu0 0.0
      %789 = vmatprep.subr.mxu0 0.0
      %790 = vmatpush2.msra.mxu0 0.0
      %791 = vmatprep.subr.mxu0 0.0
      %792 = vmatpush2.msra.mxu0 0.0
      %793 = vmatprep.subr.mxu0 0.0
      %794 = vmatpush2.msra.mxu0 0.0
      %795 = vmatprep.subr.mxu0 0.0
      %796 = vmatpush2.msra.mxu0 0.0
      %797 = vmatprep.subr.mxu0 0.0
      %798 = vmatpush2.msra.mxu0 0.0
      %799 = vmatprep.subr.mxu0 0.0
      %800 = vmatpush2.msra.mxu0 0.0
      %801 = vmatprep.subr.mxu0 0.0
      %802 = vmatpush2.msra.mxu0 0.0
      %803 = vmatprep.subr.mxu0 0.0
      %804 = vmatpush2.msra.mxu0 0.0
      %805 = vmatprep.subr.mxu0 0.0
      %806 = vmatpush2.msra.mxu0 0.0
      %807 = vmatprep.subr.mxu0 0.0
      %808 = vmatpush2.msra.mxu0 0.0
      %809 = vmatprep.subr.mxu0 0.0
      %810 = vmatpush2.msra.mxu0 0.0
      %811 = vmatprep.subr.mxu0 0.0
      %812 = vmatpush2.msra.mxu0 0.0
      %813 = vmatprep.subr.mxu0 0.0
      %814 = vmatpush2.msra.mxu0 0.0
      %815 = vmatprep.subr.mxu0 0.0
      %816 = vmatpush2.msra.mxu0 0.0
      %817 = vmatprep.subr.mxu0 0.0
      %818 = vmatpush2.msra.mxu0 0.0
      %819 = vmatprep.mubr.f32.mxu0 0.0
      %820 = vmatmul.mubr.f32.gmra.mxu0 %v674
      %v821 = vpop.f32.mrf.mxu0
      %v822 = vadd.f32 0.0, %v821
      %v823 = vpop.f32.mrf.mxu0
      %824 = vdwg.mxu0
      %v825 = vlaneseq
      %v826 = vshrl.u32 %v825, 7
      %vm827 = vcmp.eq.s32.totalorder %v826, 0
      %v828 = vrot.slane %v743, 7
      %v829 = vsel %vm827, 0.0, %v828
      %vm830 = vcmp.eq.s32.totalorder %v826, 7
      %v831 = vrot.slane %v822, 1
      %v832 = vsel %vm830, 0.0, %v831
      %833 = vmatprep.subr.mxu0 0.0
      %834 = vmatpush1.msra.mxu0 0.0
      %835 = vmatprep.subr.mxu0 0.0
      %836 = vmatpush1.msra.mxu0 0.0
      %837 = vmatprep.subr.mxu0 0.0
      %838 = vmatpush1.msra.mxu0 0.0
      %839 = vmatprep.subr.mxu0 0.0
      %840 = vmatpush1.msra.mxu0 0.0
      %841 = vmatprep.subr.mxu0 0.0
      %842 = vmatpush1.msra.mxu0 0.0
      %843 = vmatprep.subr.mxu0 0.0
      %844 = vmatpush1.msra.mxu0 0.0
      %845 = vmatprep.subr.mxu0 0.0
      %846 = vmatpush1.msra.mxu0 0.0
      %847 = vmatprep.subr.mxu0 0.0
      %848 = vmatpush1.msra.mxu0 0.0
      %849 = vmatprep.subr.mxu0 0.0
      %850 = vmatpush1.msra.mxu0 %v663
      %851 = vmatprep.subr.mxu0 0.0
      %852 = vmatpush1.msra.mxu0 %v662
      %853 = vmatprep.subr.mxu0 0.0
      %854 = vmatpush1.msra.mxu0 %v661
      %855 = vmatprep.subr.mxu0 0.0
      %856 = vmatpush1.msra.mxu0 %v660
      %857 = vmatprep.subr.mxu0 0.0
      %858 = vmatpush1.msra.mxu0 %v659
      %859 = vmatprep.subr.mxu0 0.0
      %860 = vmatpush1.msra.mxu0 %v658
      %861 = vmatprep.subr.mxu0 0.0
      %862 = vmatpush1.msra.mxu0 %v657
      %863 = vmatprep.subr.mxu0 0.0
      %864 = vmatpush1.msra.mxu0 %v656
      %865 = vmatprep.subr.mxu0 0.0
      %866 = vmatpush2.msra.mxu0 0.0
      %867 = vmatprep.subr.mxu0 0.0
      %868 = vmatpush2.msra.mxu0 0.0
      %869 = vmatprep.subr.mxu0 0.0
      %870 = vmatpush2.msra.mxu0 0.0
      %871 = vmatprep.subr.mxu0 0.0
      %872 = vmatpush2.msra.mxu0 0.0
      %873 = vmatprep.subr.mxu0 0.0
      %874 = vmatpush2.msra.mxu0 0.0
      %875 = vmatprep.subr.mxu0 0.0
      %876 = vmatpush2.msra.mxu0 0.0
      %877 = vmatprep.subr.mxu0 0.0
      %878 = vmatpush2.msra.mxu0 0.0
      %879 = vmatprep.subr.mxu0 0.0
      %880 = vmatpush2.msra.mxu0 0.0
      %881 = vmatprep.subr.mxu0 0.0
      %882 = vmatpush2.msra.mxu0 0.0
      %883 = vmatprep.subr.mxu0 0.0
      %884 = vmatpush2.msra.mxu0 0.0
      %885 = vmatprep.subr.mxu0 0.0
      %886 = vmatpush2.msra.mxu0 0.0
      %887 = vmatprep.subr.mxu0 0.0
      %888 = vmatpush2.msra.mxu0 0.0
      %889 = vmatprep.subr.mxu0 0.0
      %890 = vmatpush2.msra.mxu0 0.0
      %891 = vmatprep.subr.mxu0 0.0
      %892 = vmatpush2.msra.mxu0 0.0
      %893 = vmatprep.subr.mxu0 0.0
      %894 = vmatpush2.msra.mxu0 0.0
      %895 = vmatprep.subr.mxu0 0.0
      %896 = vmatpush2.msra.mxu0 0.0
      %897 = vmatprep.mubr.f32.mxu0 0.0
      %898 = vmatmul.mubr.f32.gmra.mxu0 %v674
      %v899 = vpop.f32.mrf.mxu0
      %v900 = vadd.f32 %v829, %v899
      %v901 = vpop.f32.mrf.mxu0
      %902 = vdwg.mxu0
      %v903 = vadd.f32 %v900, %v832
      %v904 = vld [vmem:[%s318] sm:$0x1]
      %v906 = vlaneseq
      %v907 = vshrl.u32 %v906, 7
      %v908 = vsub.s32 0, %v907
      %v909 = vrot.slane %v904, %v908
      %v911 = vadd.f32 %v903, %v909
      %v912 = vadd.f32 %v911, %v654
      %v913 = vmax.f32 %v912, 0.0
      %914 = vst.msk [vmem:[#allocation2] sm:$0xff] %vm672, %v913
      %p915 = scmp.eq.s32.totalorder %s23, 1
      // Predicated region
      $region53: #{hourglass_forward.8} parent=47 // pred_check
        %p916 = pneg %p915
      $region54: #{hourglass_forward.8} parent=47 // pred_check_branch
        %918 = sbr.rel (%p916) target = $region56
      $region55: #{hourglass_forward.8} parent=47 // pred_region
        %919 = vst.msk [vmem:[%s322] sm:$0xff] %vm672, %v913
      $region56: #{hourglass_forward.8} parent=47 // pred_fallthru
        _
      %p920 = scmp.lt.s32.totalorder %s22, 1
      %s921 = scalar_select %p920, %s22, 1
      %s922 = smul.addr %s921, 8
      %s923 = scalar_lea.vmem %s7, %s922
      // Predicated region
      $region57: #{hourglass_forward.8} parent=47 // pred_check
        %p924 = pneg %p210
      $region58: #{hourglass_forward.8} parent=47 // pred_check_branch
        %926 = sbr.rel (%p924) target = $region60
      $region59: #{hourglass_forward.8} parent=47 // pred_region
        _
      $region60: #{hourglass_forward.8} parent=47 // pred_fallthru
        _
    $region48: #{hourglass_forward.8} parent=5 // pred_fallthru
      _
    %p927 = scmp.le.s32.totalorder 2, %s13
    // Predicated region
    $region61: #{hourglass_forward.8} parent=5 // pred_check
      %p928 = pneg %p927
    $region62: #{hourglass_forward.8} parent=5 // pred_check_branch
      %930 = sbr.rel (%p928) target = $region64
    $region63: #{hourglass_forward.8} parent=5 // pred_region
      %s931 = ssub.s32 %s13, 2
      // Predicated region
      $region65: #{hourglass_forward.8} parent=63 // pred_check
        %p932 = pneg %p216
      $region66: #{hourglass_forward.8} parent=63 // pred_check_branch
        %934 = sbr.rel (%p932) target = $region68
      $region67: #{hourglass_forward.8} parent=63 // pred_region
        %p935 = scmp.lt.s32.totalorder %s24, 1
        %s936 = scalar_select %p935, %s24, 1
        %s937 = smul.addr %s936, 8
        %s938 = scalar_lea.vmem %s7, %s937
      $region68: #{hourglass_forward.8} parent=63 // pred_fallthru
        _
    $region64: #{hourglass_forward.8} parent=5 // pred_fallthru
      _
  $region6: #{hourglass_forward.8} parent=0 // loop_footer
    %s17 = sadd.s32 1, %s13
  $region7: #{hourglass_forward.8} parent=0 // loop_footer_branch
    %12 = sbr.rel target = $region3
  $region8: #{hourglass_forward.8} parent=0 // loop_exit
    _

// kernel: hourglass_forward.10
$region0: #{hourglass_forward.10}
  #allocation0 [shape = 'u32[]', space=smem, size = 0x4, offset = 0x4, fixed_abs, tag = 'smem constant byte address 0x4 - core index']
  #allocation1 [shape = 'u32[144,128]{1,0:T(1,128)}', space=vmem, size = 0x12000, scoped, tag = 'internal scratch']
  #allocation2 [shape = 'f32[4,32]{1,0:T(4,128)}', space=vmem, size = 0x800, scoped, tag = 'scratch operand']
  %s0 = inlined_call_operand.vmem [shape: f32[2,8,64], index: 0, kind: input, shape index: {}]
  %s1 = inlined_call_operand.vmem [shape: f32[4,8], index: 1, kind: input, shape index: {}]
  %s2 = inlined_call_operand.vmem [shape: f32[4,8], index: 2, kind: input, shape index: {}]
  %s3 = inlined_call_operand.vmem [shape: f32[64,32], index: 3, kind: input, shape index: {}]
  %s4 = inlined_call_operand.vmem [shape: f32[64,32], index: 4, kind: input, shape index: {}]
  %s5 = inlined_call_operand.vmem [shape: f32[2,3,32,32], index: 5, kind: input, shape index: {}]
  %s6 = inlined_call_operand.vmem [shape: f32[2,1,32], index: 6, kind: input, shape index: {}]
  %s7 = inlined_call_operand.vmem [shape: f32[2,4,32], index: 7, kind: output, shape index: {}]
  %s8 = sld [smem:[#allocation0]]
  $region69: #{hourglass_forward.10} parent=0
    _
  %s10 = ssub.s32 1, %s8
  %s11 = scalar_select 0, %s10, %s8
  loop: start=0, step=1, limit=6
  $region2: #{hourglass_forward.10} parent=0 // loop_pre_header
    _
  $region3: #{hourglass_forward.10} parent=0 // loop_header
    %s13 = sphi 0, %s17
    %p14 = scmp.ge.s32.totalorder %s13, 6
    %s20 = sphi 0, %s32
    %s21 = sphi 0, %s28
    %s22 = sphi 0, %s20
    %s23 = sphi 0, %s21
    %s24 = sphi 0, %s22
    %s25 = sphi 0, %s23
    %s35 = sphi 0, %s37
    %s38 = sphi 0, %s35
    %s39 = sphi 0, %s38
    %s55 = sphi 0, %s39
    %s59 = sphi 0, %s59
    %s61 = sphi 0, %s59
    %s62 = sphi 0, %s61
    %s76 = sphi 0, %s62
    %s80 = sphi 0, %s80
    %s82 = sphi 0, %s80
    %s83 = sphi 0, %s82
    %s97 = sphi 0, %s83
    %s101 = sphi 0, %s101
    %s103 = sphi 0, %s101
    %s104 = sphi 0, %s103
    %s118 = sphi 0, %s104
    %s122 = sphi 0, %s122
    %s124 = sphi 0, %s122
    %s125 = sphi 0, %s124
    %s139 = sphi 0, %s125
    %s145 = sphi 0, %s147
    %s148 = sphi 0, %s145
    %s149 = sphi 0, %s148
    %s165 = sphi 0, %s149
    %s171 = sphi 0, %s173
    %s174 = sphi 0, %s171
    %s175 = sphi 0, %s174
    %s191 = sphi 0, %s175
    %s197 = sphi 0, %s199
    %s200 = sphi 0, %s197
    %s201 = sphi 0, %s200
    %s217 = sphi 0, %s201
  $region4: #{hourglass_forward.10} parent=0 // loop_header_branch
    %16 = sbr.rel (%p14) target = $region8
  $region5: #{hourglass_forward.10} parent=0 // loop_body
    %s18 = ssub.s32 %s13, 1
    %s19 = ssub.s32 %s13, 2
    %s26 = sadd.s32 1, %s21
    %p27 = scmp.ge.s32.totalorder %s26, 2
    %s28 = scalar_select %p27, 0, %s26
    %s29 = sadd.s32 1, %s20
    %s30 = scalar_select %p27, %s29, %s20
    %p31 = scmp.ge.s32.totalorder %s30, 2
    %s32 = scalar_select %p31, 0, %s30
    %s33 = ssub.s32 %s20, %s32
    %p34 = scmp.eq.s32.totalorder %s33, 0
    %s36 = sadd.s32 %s35, 1
    %s37 = scalar_select %p34, %s35, %s36
    %p40 = pneg %p34
    %p41 = scmp.eq.s32.totalorder %s13, 3
    %p42 = por %p40, %p41
    %p43 = scmp.ne.s32.totalorder %s35, %s38
    %p44 = scmp.eq.s32.totalorder %s13, 0
    %p45 = por %p43, %p44
    %p46 = scmp.ne.s32.totalorder %s35, %s38
    %p47 = scmp.eq.s32.totalorder %s18, 3
    %p48 = por %p46, %p47
    %p49 = scmp.ne.s32.totalorder %s38, %s39
    %p50 = scmp.eq.s32.totalorder %s18, 0
    %p51 = por %p49, %p50
    %p52 = scmp.ne.s32.totalorder %s38, %s39
    %p53 = scmp.eq.s32.totalorder %s19, 3
    %p54 = por %p52, %p53
    %p56 = scmp.ne.s32.totalorder %s39, %s55
    %p57 = scmp.eq.s32.totalorder %s19, 0
    %p58 = por %p56, %p57
    %s60 = sadd.s32 %s59, 1
    %p63 = scmp.eq.s32.totalorder %s13, 3
    %p64 = scmp.ne.s32.totalorder %s59, %s61
    %p65 = scmp.eq.s32.totalorder %s13, 0
    %p66 = por %p64, %p65
    %p67 = scmp.ne.s32.totalorder %s59, %s61
    %p68 = scmp.eq.s32.totalorder %s18, 3
    %p69 = por %p67, %p68
    %p70 = scmp.ne.s32.totalorder %s61, %s62
    %p71 = scmp.eq.s32.totalorder %s18, 0
    %p72 = por %p70, %p71
    %p73 = scmp.ne.s32.totalorder %s61, %s62
    %p74 = scmp.eq.s32.totalorder %s19, 3
    %p75 = por %p73, %p74
    %p77 = scmp.ne.s32.totalorder %s62, %s76
    %p78 = scmp.eq.s32.totalorder %s19, 0
    %p79 = por %p77, %p78
    %s81 = sadd.s32 %s80, 1
    %p84 = scmp.eq.s32.totalorder %s13, 3
    %p85 = scmp.ne.s32.totalorder %s80, %s82
    %p86 = scmp.eq.s32.totalorder %s13, 0
    %p87 = por %p85, %p86
    %p88 = scmp.ne.s32.totalorder %s80, %s82
    %p89 = scmp.eq.s32.totalorder %s18, 3
    %p90 = por %p88, %p89
    %p91 = scmp.ne.s32.totalorder %s82, %s83
    %p92 = scmp.eq.s32.totalorder %s18, 0
    %p93 = por %p91, %p92
    %p94 = scmp.ne.s32.totalorder %s82, %s83
    %p95 = scmp.eq.s32.totalorder %s19, 3
    %p96 = por %p94, %p95
    %p98 = scmp.ne.s32.totalorder %s83, %s97
    %p99 = scmp.eq.s32.totalorder %s19, 0
    %p100 = por %p98, %p99
    %s102 = sadd.s32 %s101, 1
    %p105 = scmp.eq.s32.totalorder %s13, 3
    %p106 = scmp.ne.s32.totalorder %s101, %s103
    %p107 = scmp.eq.s32.totalorder %s13, 0
    %p108 = por %p106, %p107
    %p109 = scmp.ne.s32.totalorder %s101, %s103
    %p110 = scmp.eq.s32.totalorder %s18, 3
    %p111 = por %p109, %p110
    %p112 = scmp.ne.s32.totalorder %s103, %s104
    %p113 = scmp.eq.s32.totalorder %s18, 0
    %p114 = por %p112, %p113
    %p115 = scmp.ne.s32.totalorder %s103, %s104
    %p116 = scmp.eq.s32.totalorder %s19, 3
    %p117 = por %p115, %p116
    %p119 = scmp.ne.s32.totalorder %s104, %s118
    %p120 = scmp.eq.s32.totalorder %s19, 0
    %p121 = por %p119, %p120
    %s123 = sadd.s32 %s122, 1
    %p126 = scmp.eq.s32.totalorder %s13, 3
    %p127 = scmp.ne.s32.totalorder %s122, %s124
    %p128 = scmp.eq.s32.totalorder %s13, 0
    %p129 = por %p127, %p128
    %p130 = scmp.ne.s32.totalorder %s122, %s124
    %p131 = scmp.eq.s32.totalorder %s18, 3
    %p132 = por %p130, %p131
    %p133 = scmp.ne.s32.totalorder %s124, %s125
    %p134 = scmp.eq.s32.totalorder %s18, 0
    %p135 = por %p133, %p134
    %p136 = scmp.ne.s32.totalorder %s124, %s125
    %p137 = scmp.eq.s32.totalorder %s19, 3
    %p138 = por %p136, %p137
    %p140 = scmp.ne.s32.totalorder %s125, %s139
    %p141 = scmp.eq.s32.totalorder %s19, 0
    %p142 = por %p140, %p141
    %s143 = ssub.s32 %s21, %s28
    %p144 = scmp.eq.s32.totalorder %s143, 0
    %s146 = sadd.s32 %s145, 1
    %s147 = scalar_select %p144, %s145, %s146
    %p150 = pneg %p144
    %p151 = scmp.eq.s32.totalorder %s13, 3
    %p152 = por %p150, %p151
    %p153 = scmp.ne.s32.totalorder %s145, %s148
    %p154 = scmp.eq.s32.totalorder %s13, 0
    %p155 = por %p153, %p154
    %p156 = scmp.ne.s32.totalorder %s145, %s148
    %p157 = scmp.eq.s32.totalorder %s18, 3
    %p158 = por %p156, %p157
    %p159 = scmp.ne.s32.totalorder %s148, %s149
    %p160 = scmp.eq.s32.totalorder %s18, 0
    %p161 = por %p159, %p160
    %p162 = scmp.ne.s32.totalorder %s148, %s149
    %p163 = scmp.eq.s32.totalorder %s19, 3
    %p164 = por %p162, %p163
    %p166 = scmp.ne.s32.totalorder %s149, %s165
    %p167 = scmp.eq.s32.totalorder %s19, 0
    %p168 = por %p166, %p167
    %s169 = ssub.s32 %s21, %s28
    %p170 = scmp.eq.s32.totalorder %s169, 0
    %s172 = sadd.s32 %s171, 1
    %s173 = scalar_select %p170, %s171, %s172
    %p176 = pneg %p170
    %p177 = scmp.eq.s32.totalorder %s13, 3
    %p178 = por %p176, %p177
    %p179 = scmp.ne.s32.totalorder %s171, %s174
    %p180 = scmp.eq.s32.totalorder %s13, 0
    %p181 = por %p179, %p180
    %p182 = scmp.ne.s32.totalorder %s171, %s174
    %p183 = scmp.eq.s32.totalorder %s18, 3
    %p184 = por %p182, %p183
    %p185 = scmp.ne.s32.totalorder %s174, %s175
    %p186 = scmp.eq.s32.totalorder %s18, 0
    %p187 = por %p185, %p186
    %p188 = scmp.ne.s32.totalorder %s174, %s175
    %p189 = scmp.eq.s32.totalorder %s19, 3
    %p190 = por %p188, %p189
    %p192 = scmp.ne.s32.totalorder %s175, %s191
    %p193 = scmp.eq.s32.totalorder %s19, 0
    %p194 = por %p192, %p193
    %s195 = ssub.s32 %s20, %s32
    %p196 = scmp.eq.s32.totalorder %s195, 0
    %s198 = sadd.s32 %s197, 1
    %s199 = scalar_select %p196, %s197, %s198
    %p202 = pneg %p196
    %p203 = scmp.eq.s32.totalorder %s13, 3
    %p204 = por %p202, %p203
    %p205 = scmp.ne.s32.totalorder %s197, %s200
    %p206 = scmp.eq.s32.totalorder %s13, 0
    %p207 = por %p205, %p206
    %p208 = scmp.ne.s32.totalorder %s197, %s200
    %p209 = scmp.eq.s32.totalorder %s18, 3
    %p210 = por %p208, %p209
    %p211 = scmp.ne.s32.totalorder %s200, %s201
    %p212 = scmp.eq.s32.totalorder %s18, 0
    %p213 = por %p211, %p212
    %p214 = scmp.ne.s32.totalorder %s200, %s201
    %p215 = scmp.eq.s32.totalorder %s19, 3
    %p216 = por %p214, %p215
    %p218 = scmp.ne.s32.totalorder %s201, %s217
    %p219 = scmp.eq.s32.totalorder %s19, 0
    %p220 = por %p218, %p219
    %p221 = scmp.le.s32.totalorder 1, %s13
    %p222 = scmp.lt.s32.totalorder %s13, 5
    %p223 = pnand %p221, %p222
    %p224 = pneg %p223
    // Predicated region
    $region9: #{hourglass_forward.10} parent=5 // pred_check
      _
    $region10: #{hourglass_forward.10} parent=5 // pred_check_branch
      %226 = sbr.rel (%p223) target = $region12
    $region11: #{hourglass_forward.10} parent=5 // pred_region
      %s227 = ssub.s32 %s13, 1
      // Predicated region
      $region13: #{hourglass_forward.10} parent=11 // pred_check
        %p228 = pneg %p72
      $region14: #{hourglass_forward.10} parent=11 // pred_check_branch
        %230 = sbr.rel (%p228) target = $region16
      $region15: #{hourglass_forward.10} parent=11 // pred_region
        _
      $region16: #{hourglass_forward.10} parent=11 // pred_fallthru
        _
      // Predicated region
      $region17: #{hourglass_forward.10} parent=11 // pred_check
        %p231 = pneg %p93
      $region18: #{hourglass_forward.10} parent=11 // pred_check_branch
        %233 = sbr.rel (%p231) target = $region20
      $region19: #{hourglass_forward.10} parent=11 // pred_region
        _
      $region20: #{hourglass_forward.10} parent=11 // pred_fallthru
        _
      // Predicated region
      $region21: #{hourglass_forward.10} parent=11 // pred_check
        %p234 = pneg %p114
      $region22: #{hourglass_forward.10} parent=11 // pred_check_branch
        %236 = sbr.rel (%p234) target = $region24
      $region23: #{hourglass_forward.10} parent=11 // pred_region
        _
      $region24: #{hourglass_forward.10} parent=11 // pred_fallthru
        _
      // Predicated region
      $region25: #{hourglass_forward.10} parent=11 // pred_check
        %p237 = pneg %p135
      $region26: #{hourglass_forward.10} parent=11 // pred_check_branch
        %239 = sbr.rel (%p237) target = $region28
      $region27: #{hourglass_forward.10} parent=11 // pred_region
        _
      $region28: #{hourglass_forward.10} parent=11 // pred_fallthru
        _
    $region12: #{hourglass_forward.10} parent=5 // pred_fallthru
      _
    %p240 = scmp.lt.s32.totalorder %s13, 4
    // Predicated region
    $region29: #{hourglass_forward.10} parent=5 // pred_check
      %p241 = pneg %p240
    $region30: #{hourglass_forward.10} parent=5 // pred_check_branch
      %243 = sbr.rel (%p241) target = $region32
    $region31: #{hourglass_forward.10} parent=5 // pred_region
      // Predicated region
      $region33: #{hourglass_forward.10} parent=31 // pred_check
        %p244 = pneg %p45
      $region34: #{hourglass_forward.10} parent=31 // pred_check_branch
        %246 = sbr.rel (%p244) target = $region36
      $region35: #{hourglass_forward.10} parent=31 // pred_region
        %p247 = scmp.lt.s32.totalorder %s20, 1
        %s248 = scalar_select %p247, %s20, 1
        %s249 = smul.addr %s248, 8
        %s250 = scalar_lea.vmem %s0, %s249
      $region36: #{hourglass_forward.10} parent=31 // pred_fallthru
        _
      // Predicated region
      $region37: #{hourglass_forward.10} parent=31 // pred_check
        %p251 = pneg %p155
      $region38: #{hourglass_forward.10} parent=31 // pred_check_branch
        %253 = sbr.rel (%p251) target = $region40
      $region39: #{hourglass_forward.10} parent=31 // pred_region
        %p254 = scmp.lt.s32.totalorder %s21, 1
        %s255 = scalar_select %p254, %s21, 1
        %s256 = smul.addr %s255, 12
        %s257 = smul.addr %s256, 8
        %s258 = scalar_lea.vmem %s5, %s257
      $region40: #{hourglass_forward.10} parent=31 // pred_fallthru
        _
      // Predicated region
      $region41: #{hourglass_forward.10} parent=31 // pred_check
        %p259 = pneg %p181
      $region42: #{hourglass_forward.10} parent=31 // pred_check_branch
        %261 = sbr.rel (%p259) target = $region44
      $region43: #{hourglass_forward.10} parent=31 // pred_region
        %p262 = scmp.lt.s32.totalorder %s21, 1
        %s263 = scalar_select %p262, %s21, 1
        %s264 = scalar_lea.vmem %s6, %s263
      $region44: #{hourglass_forward.10} parent=31 // pred_fallthru
        _
    $region32: #{hourglass_forward.10} parent=5 // pred_fallthru
      _
    %p265 = scmp.le.s32.totalorder 1, %s13
    %p266 = scmp.lt.s32.totalorder %s13, 5
    %p267 = pnand %p265, %p266
    %p268 = pneg %p267
    // Predicated region
    $region45: #{hourglass_forward.10} parent=5 // pred_check
      _
    $region46: #{hourglass_forward.10} parent=5 // pred_check_branch
      %270 = sbr.rel (%p267) target = $region48
    $region47: #{hourglass_forward.10} parent=5 // pred_region
      %s271 = ssub.s32 %s13, 1
      %p272 = scmp.lt.s32.totalorder %s22, 1
      %s273 = scalar_select %p272, %s22, 1
      %s274 = smul.addr %s273, 8
      %s275 = scalar_lea.vmem %s0, %s274
      %p276 = pneg %p51
      %p277 = pneg %p48
      %p278 = pneg %p72
      %p279 = pneg %p69
      %p280 = pneg %p93
      %p281 = pneg %p90
      %p282 = pneg %p114
      %p283 = pneg %p111
      %p284 = pneg %p135
      %p285 = pneg %p132
      %p286 = scmp.lt.s32.totalorder %s23, 1
      %s287 = scalar_select %p286, %s23, 1
      %s288 = smul.addr %s287, 12
      %s289 = smul.addr %s288, 8
      %s290 = scalar_lea.vmem %s5, %s289
      %p291 = pneg %p161
      %p292 = pneg %p158
      %p293 = scmp.lt.s32.totalorder %s23, 1
      %s294 = scalar_select %p293, %s23, 1
      %s295 = scalar_lea.vmem %s6, %s294
      %p296 = pneg %p187
      %p297 = pneg %p184
      %p298 = pneg %p213
      %p299 = pneg %p210
      %p300 = scmp.lt.s32.totalorder %s22, 1
      %s301 = scalar_select %p300, %s22, 1
      %s302 = smul.addr %s301, 4
      %s303 = scalar_lea.vmem %s7, %s302
      %p304 = scmp.lt.s32.totalorder %s22, 1
      %s305 = scalar_select %p304, %s22, 1
      %s306 = smul.addr %s305, 8
      %s307 = scalar_lea.vmem %s0, %s306
      %p308 = scmp.lt.s32.totalorder %s23, 1
      %s309 = scalar_select %p308, %s23, 1
      %s310 = smul.addr %s309, 12
      %s311 = smul.addr %s310, 8
      %s312 = scalar_lea.vmem %s5, %s311
      %p313 = scmp.lt.s32.totalorder %s23, 1
      %s314 = scalar_select %p313, %s23, 1
      %s315 = scalar_lea.vmem %s6, %s314
      %p316 = scmp.lt.s32.totalorder %s22, 1
      %s317 = scalar_select %p316, %s22, 1
      %s318 = smul.addr %s317, 4
      %s319 = scalar_lea.vmem %s7, %s318
      %p320 = scmp.eq.s32.totalorder %s23, 0
      // Predicated region
      $region49: #{hourglass_forward.10} parent=47 // pred_check
        %p321 = pneg %p320
      $region50: #{hourglass_forward.10} parent=47 // pred_check_branch
        %323 = sbr.rel (%p321) target = $region52
      $region51: #{hourglass_forward.10} parent=47 // pred_region
        %v324 = vld [vmem:[%s307] sm:$0xff]
        %v325 = vld [vmem:[%s1] sm:$0xf]
        %vm326 = vcmask 64512
        %v328 = vsel %vm326, %v325, 0
        %330 = vmatprep.subr.mxu0 0.0
        %331 = vmatpush1.msra.mxu0 0.0
        %332 = vmatprep.subr.mxu0 0.0
        %333 = vmatpush1.msra.mxu0 0.0
        %334 = vmatprep.subr.mxu0 0.0
        %335 = vmatpush1.msra.mxu0 0.0
        %336 = vmatprep.subr.mxu0 0.0
        %337 = vmatpush1.msra.mxu0 0.0
        %338 = vmatprep.subr.mxu0 0.0
        %339 = vmatpush1.msra.mxu0 0.0
        %340 = vmatprep.subr.mxu0 0.0
        %341 = vmatpush1.msra.mxu0 0.0
        %342 = vmatprep.subr.mxu0 0.0
        %343 = vmatpush1.msra.mxu0 0.0
        %344 = vmatprep.subr.mxu0 0.0
        %345 = vmatpush1.msra.mxu0 0.0
        %346 = vmatprep.subr.mxu0 0.0
        %347 = vmatpush1.msra.mxu0 0.0
        %348 = vmatprep.subr.mxu0 0.0
        %349 = vmatpush1.msra.mxu0 0.0
        %350 = vmatprep.subr.mxu0 0.0
        %351 = vmatpush1.msra.mxu0 0.0
        %352 = vmatprep.subr.mxu0 0.0
        %353 = vmatpush1.msra.mxu0 0.0
        %354 = vmatprep.subr.mxu0 0.0
        %355 = vmatpush1.msra.mxu0 0.0
        %356 = vmatprep.subr.mxu0 0.0
        %357 = vmatpush1.msra.mxu0 0.0
        %358 = vmatprep.subr.mxu0 0.0
        %359 = vmatpush1.msra.mxu0 0.0
        %360 = vmatprep.subr.mxu0 0.0
        %361 = vmatpush1.msra.mxu0 %v324
        %362 = vmatprep.subr.mxu0 0.0
        %363 = vmatpush2.msra.mxu0 0.0
        %364 = vmatprep.subr.mxu0 0.0
        %365 = vmatpush2.msra.mxu0 0.0
        %366 = vmatprep.subr.mxu0 0.0
        %367 = vmatpush2.msra.mxu0 0.0
        %368 = vmatprep.subr.mxu0 0.0
        %369 = vmatpush2.msra.mxu0 0.0
        %370 = vmatprep.subr.mxu0 0.0
        %371 = vmatpush2.msra.mxu0 0.0
        %372 = vmatprep.subr.mxu0 0.0
        %373 = vmatpush2.msra.mxu0 0.0
        %374 = vmatprep.subr.mxu0 0.0
        %375 = vmatpush2.msra.mxu0 0.0
        %376 = vmatprep.subr.mxu0 0.0
        %377 = vmatpush2.msra.mxu0 0.0
        %378 = vmatprep.subr.mxu0 0.0
        %379 = vmatpush2.msra.mxu0 0.0
        %380 = vmatprep.subr.mxu0 0.0
        %381 = vmatpush2.msra.mxu0 0.0
        %382 = vmatprep.subr.mxu0 0.0
        %383 = vmatpush2.msra.mxu0 0.0
        %384 = vmatprep.subr.mxu0 0.0
        %385 = vmatpush2.msra.mxu0 0.0
        %386 = vmatprep.subr.mxu0 0.0
        %387 = vmatpush2.msra.mxu0 0.0
        %388 = vmatprep.subr.mxu0 0.0
        %389 = vmatpush2.msra.mxu0 0.0
        %390 = vmatprep.subr.mxu0 0.0
        %391 = vmatpush2.msra.mxu0 0.0
        %392 = vmatprep.subr.mxu0 0.0
        %393 = vmatpush2.msra.mxu0 0.0
        %394 = vmatprep.mubr.f32.mxu0 0.0
        %395 = vmatmul.mubr.f32.gmra.mxu0 %v328
        %v396 = vpop.f32.mrf.mxu0
        %v397 = vadd.f32 0.0, %v396
        %v398 = vpop.f32.mrf.mxu0
        %399 = vdwg.mxu0
        %v400 = vld [vmem:[%s2] sm:$0xf]
        %v402 = vsel %vm326, %v400, 0
        %404 = vmatprep.subr.mxu0 0.0
        %405 = vmatpush1.msra.mxu0 0.0
        %406 = vmatprep.subr.mxu0 0.0
        %407 = vmatpush1.msra.mxu0 0.0
        %408 = vmatprep.subr.mxu0 0.0
        %409 = vmatpush1.msra.mxu0 0.0
        %410 = vmatprep.subr.mxu0 0.0
        %411 = vmatpush1.msra.mxu0 0.0
        %412 = vmatprep.subr.mxu0 0.0
        %413 = vmatpush1.msra.mxu0 0.0
        %414 = vmatprep.subr.mxu0 0.0
        %415 = vmatpush1.msra.mxu0 0.0
        %416 = vmatprep.subr.mxu0 0.0
        %417 = vmatpush1.msra.mxu0 0.0
        %418 = vmatprep.subr.mxu0 0.0
        %419 = vmatpush1.msra.mxu0 0.0
        %420 = vmatprep.subr.mxu0 0.0
        %421 = vmatpush1.msra.mxu0 0.0
        %422 = vmatprep.subr.mxu0 0.0
        %423 = vmatpush1.msra.mxu0 0.0
        %424 = vmatprep.subr.mxu0 0.0
        %425 = vmatpush1.msra.mxu0 0.0
        %426 = vmatprep.subr.mxu0 0.0
        %427 = vmatpush1.msra.mxu0 0.0
        %428 = vmatprep.subr.mxu0 0.0
        %429 = vmatpush1.msra.mxu0 0.0
        %430 = vmatprep.subr.mxu0 0.0
        %431 = vmatpush1.msra.mxu0 0.0
        %432 = vmatprep.subr.mxu0 0.0
        %433 = vmatpush1.msra.mxu0 0.0
        %434 = vmatprep.subr.mxu0 0.0
        %435 = vmatpush1.msra.mxu0 %v324
        %436 = vmatprep.subr.mxu0 0.0
        %437 = vmatpush2.msra.mxu0 0.0
        %438 = vmatprep.subr.mxu0 0.0
        %439 = vmatpush2.msra.mxu0 0.0
        %440 = vmatprep.subr.mxu0 0.0
        %441 = vmatpush2.msra.mxu0 0.0
        %442 = vmatprep.subr.mxu0 0.0
        %443 = vmatpush2.msra.mxu0 0.0
        %444 = vmatprep.subr.mxu0 0.0
        %445 = vmatpush2.msra.mxu0 0.0
        %446 = vmatprep.subr.mxu0 0.0
        %447 = vmatpush2.msra.mxu0 0.0
        %448 = vmatprep.subr.mxu0 0.0
        %449 = vmatpush2.msra.mxu0 0.0
        %450 = vmatprep.subr.mxu0 0.0
        %451 = vmatpush2.msra.mxu0 0.0
        %452 = vmatprep.subr.mxu0 0.0
        %453 = vmatpush2.msra.mxu0 0.0
        %454 = vmatprep.subr.mxu0 0.0
        %455 = vmatpush2.msra.mxu0 0.0
        %456 = vmatprep.subr.mxu0 0.0
        %457 = vmatpush2.msra.mxu0 0.0
        %458 = vmatprep.subr.mxu0 0.0
        %459 = vmatpush2.msra.mxu0 0.0
        %460 = vmatprep.subr.mxu0 0.0
        %461 = vmatpush2.msra.mxu0 0.0
        %462 = vmatprep.subr.mxu0 0.0
        %463 = vmatpush2.msra.mxu0 0.0
        %464 = vmatprep.subr.mxu0 0.0
        %465 = vmatpush2.msra.mxu0 0.0
        %466 = vmatprep.subr.mxu0 0.0
        %467 = vmatpush2.msra.mxu0 0.0
        %468 = vmatprep.mubr.f32.mxu0 0.0
        %469 = vmatmul.mubr.f32.gmra.mxu0 %v402
        %v470 = vpop.f32.mrf.mxu0
        %v471 = vadd.f32 0.0, %v470
        %v472 = vpop.f32.mrf.mxu0
        %473 = vdwg.mxu0
        %v474 = vmax.f32 %v397, %v471
        %v475 = vld [vmem:[%s3] sm:$0xff]
        %v476 = vld [vmem:[%s3 + $0x8] sm:$0xff]
        %v477 = vld [vmem:[%s3 + $0x10] sm:$0xff]
        %v478 = vld [vmem:[%s3 + $0x18] sm:$0xff]
        %v479 = vld [vmem:[%s3 + $0x20] sm:$0xff]
        %v480 = vld [vmem:[%s3 + $0x28] sm:$0xff]
        %v481 = vld [vmem:[%s3 + $0x30] sm:$0xff]
        %v482 = vld [vmem:[%s3 + $0x38] sm:$0xff]
        %vm483 = vcmask 523264
        %v485 = vsel %vm483, %v474, 0
        %487 = vmatprep.subr.mxu0 0.0
        %488 = vmatpush1.msra.mxu0 0.0
        %489 = vmatprep.subr.mxu0 0.0
        %490 = vmatpush1.msra.mxu0 0.0
        %491 = vmatprep.subr.mxu0 0.0
        %492 = vmatpush1.msra.mxu0 0.0
        %493 = vmatprep.subr.mxu0 0.0
        %494 = vmatpush1.msra.mxu0 0.0
        %495 = vmatprep.subr.mxu0 0.0
        %496 = vmatpush1.msra.mxu0 0.0
        %497 = vmatprep.subr.mxu0 0.0
        %498 = vmatpush1.msra.mxu0 0.0
        %499 = vmatprep.subr.mxu0 0.0
        %500 = vmatpush1.msra.mxu0 0.0
        %501 = vmatprep.subr.mxu0 0.0
        %502 = vmatpush1.msra.mxu0 0.0
        %503 = vmatprep.subr.mxu0 0.0
        %504 = vmatpush1.msra.mxu0 %v482
        %505 = vmatprep.subr.mxu0 0.0
        %506 = vmatpush1.msra.mxu0 %v481
        %507 = vmatprep.subr.mxu0 0.0
        %508 = vmatpush1.msra.mxu0 %v480
        %509 = vmatprep.subr.mxu0 0.0
        %510 = vmatpush1.msra.mxu0 %v479
        %511 = vmatprep.subr.mxu0 0.0
        %512 = vmatpush1.msra.mxu0 %v478
        %513 = vmatprep.subr.mxu0 0.0
        %514 = vmatpush1.msra.mxu0 %v477
        %515 = vmatprep.subr.mxu0 0.0
        %516 = vmatpush1.msra.mxu0 %v476
        %517 = vmatprep.subr.mxu0 0.0
        %518 = vmatpush1.msra.mxu0 %v475
        %519 = vmatprep.subr.mxu0 0.0
        %520 = vmatpush2.msra.mxu0 0.0
        %521 = vmatprep.subr.mxu0 0.0
        %522 = vmatpush2.msra.mxu0 0.0
        %523 = vmatprep.subr.mxu0 0.0
        %524 = vmatpush2.msra.mxu0 0.0
        %525 = vmatprep.subr.mxu0 0.0
        %526 = vmatpush2.msra.mxu0 0.0
        %527 = vmatprep.subr.mxu0 0.0
        %528 = vmatpush2.msra.mxu0 0.0
        %529 = vmatprep.subr.mxu0 0.0
        %530 = vmatpush2.msra.mxu0 0.0
        %531 = vmatprep.subr.mxu0 0.0
        %532 = vmatpush2.msra.mxu0 0.0
        %533 = vmatprep.subr.mxu0 0.0
        %534 = vmatpush2.msra.mxu0 0.0
        %535 = vmatprep.subr.mxu0 0.0
        %536 = vmatpush2.msra.mxu0 0.0
        %537 = vmatprep.subr.mxu0 0.0
        %538 = vmatpush2.msra.mxu0 0.0
        %539 = vmatprep.subr.mxu0 0.0
        %540 = vmatpush2.msra.mxu0 0.0
        %541 = vmatprep.subr.mxu0 0.0
        %542 = vmatpush2.msra.mxu0 0.0
        %543 = vmatprep.subr.mxu0 0.0
        %544 = vmatpush2.msra.mxu0 0.0
        %545 = vmatprep.subr.mxu0 0.0
        %546 = vmatpush2.msra.mxu0 0.0
        %547 = vmatprep.subr.mxu0 0.0
        %548 = vmatpush2.msra.mxu0 0.0
        %549 = vmatprep.subr.mxu0 0.0
        %550 = vmatpush2.msra.mxu0 0.0
        %551 = vmatprep.mubr.f32.mxu0 0.0
        %552 = vmatmul.mubr.f32.gmra.mxu0 %v485
        %v553 = vpop.f32.mrf.mxu0
        %v554 = vadd.f32 0.0, %v553
        %v555 = vpop.f32.mrf.mxu0
        %556 = vdwg.mxu0
        %v557 = vld [vmem:[%s4] sm:$0xff]
        %v558 = vld [vmem:[%s4 + $0x8] sm:$0xff]
        %v559 = vld [vmem:[%s4 + $0x10] sm:$0xff]
        %v560 = vld [vmem:[%s4 + $0x18] sm:$0xff]
        %v561 = vld [vmem:[%s4 + $0x20] sm:$0xff]
        %v562 = vld [vmem:[%s4 + $0x28] sm:$0xff]
        %v563 = vld [vmem:[%s4 + $0x30] sm:$0xff]
        %v564 = vld [vmem:[%s4 + $0x38] sm:$0xff]
        %565 = vmatprep.subr.mxu0 0.0
        %566 = vmatpush1.msra.mxu0 0.0
        %567 = vmatprep.subr.mxu0 0.0
        %568 = vmatpush1.msra.mxu0 0.0
        %569 = vmatprep.subr.mxu0 0.0
        %570 = vmatpush1.msra.mxu0 0.0
        %571 = vmatprep.subr.mxu0 0.0
        %572 = vmatpush1.msra.mxu0 0.0
        %573 = vmatprep.subr.mxu0 0.0
        %574 = vmatpush1.msra.mxu0 0.0
        %575 = vmatprep.subr.mxu0 0.0
        %576 = vmatpush1.msra.mxu0 0.0
        %577 = vmatprep.subr.mxu0 0.0
        %578 = vmatpush1.msra.mxu0 0.0
        %579 = vmatprep.subr.mxu0 0.0
        %580 = vmatpush1.msra.mxu0 0.0
        %581 = vmatprep.subr.mxu0 0.0
        %582 = vmatpush1.msra.mxu0 %v564
        %583 = vmatprep.subr.mxu0 0.0
        %584 = vmatpush1.msra.mxu0 %v563
        %585 = vmatprep.subr.mxu0 0.0
        %586 = vmatpush1.msra.mxu0 %v562
        %587 = vmatprep.subr.mxu0 0.0
        %588 = vmatpush1.msra.mxu0 %v561
        %589 = vmatprep.subr.mxu0 0.0
        %590 = vmatpush1.msra.mxu0 %v560
        %591 = vmatprep.subr.mxu0 0.0
        %592 = vmatpush1.msra.mxu0 %v559
        %593 = vmatprep.subr.mxu0 0.0
        %594 = vmatpush1.msra.mxu0 %v558
        %595 = vmatprep.subr.mxu0 0.0
        %596 = vmatpush1.msra.mxu0 %v557
        %597 = vmatprep.subr.mxu0 0.0
        %598 = vmatpush2.msra.mxu0 0.0
        %599 = vmatprep.subr.mxu0 0.0
        %600 = vmatpush2.msra.mxu0 0.0
        %601 = vmatprep.subr.mxu0 0.0
        %602 = vmatpush2.msra.mxu0 0.0
        %603 = vmatprep.subr.mxu0 0.0
        %604 = vmatpush2.msra.mxu0 0.0
        %605 = vmatprep.subr.mxu0 0.0
        %606 = vmatpush2.msra.mxu0 0.0
        %607 = vmatprep.subr.mxu0 0.0
        %608 = vmatpush2.msra.mxu0 0.0
        %609 = vmatprep.subr.mxu0 0.0
        %610 = vmatpush2.msra.mxu0 0.0
        %611 = vmatprep.subr.mxu0 0.0
        %612 = vmatpush2.msra.mxu0 0.0
        %613 = vmatprep.subr.mxu0 0.0
        %614 = vmatpush2.msra.mxu0 0.0
        %615 = vmatprep.subr.mxu0 0.0
        %616 = vmatpush2.msra.mxu0 0.0
        %617 = vmatprep.subr.mxu0 0.0
        %618 = vmatpush2.msra.mxu0 0.0
        %619 = vmatprep.subr.mxu0 0.0
        %620 = vmatpush2.msra.mxu0 0.0
        %621 = vmatprep.subr.mxu0 0.0
        %622 = vmatpush2.msra.mxu0 0.0
        %623 = vmatprep.subr.mxu0 0.0
        %624 = vmatpush2.msra.mxu0 0.0
        %625 = vmatprep.subr.mxu0 0.0
        %626 = vmatpush2.msra.mxu0 0.0
        %627 = vmatprep.subr.mxu0 0.0
        %628 = vmatpush2.msra.mxu0 0.0
        %629 = vmatprep.mubr.f32.mxu0 0.0
        %630 = vmatmul.mubr.f32.gmra.mxu0 %v485
        %v631 = vpop.f32.mrf.mxu0
        %v632 = vadd.f32 0.0, %v631
        %v633 = vpop.f32.mrf.mxu0
        %634 = vdwg.mxu0
        %v635 = vmax.f32 %v554, %v632
        %vm636 = vcmask 257024
        %637 = vst.msk [vmem:[#allocation2] sm:$0xf] %vm636, %v635
      $region52: #{hourglass_forward.10} parent=47 // pred_fallthru
        _
      %v638 = vld [vmem:[#allocation2] sm:$0xf]
      %s639 = scalar_lea.vmem %s312, 32
      %v640 = vld [vmem:[%s639] sm:$0xff]
      %v641 = vld [vmem:[%s639 + $0x8] sm:$0xff]
      %v642 = vld [vmem:[%s639 + $0x10] sm:$0xff]
      %v643 = vld [vmem:[%s639 + $0x18] sm:$0xff]
      %v644 = vld [vmem:[%s312] sm:$0xff]
      %v645 = vld [vmem:[%s312 + $0x8] sm:$0xff]
      %v646 = vld [vmem:[%s312 + $0x10] sm:$0xff]
      %v647 = vld [vmem:[%s312 + $0x18] sm:$0xff]
      %vm648 = vcmask 261120
      %v650 = vsel %vm648, %v638, 0
      %652 = vmatprep.subr.mxu0 0.0
      %653 = vmatpush1.msra.mxu0 0.0
      %654 = vmatprep.subr.mxu0 0.0
      %655 = vmatpush1.msra.mxu0 0.0
      %656 = vmatprep.subr.mxu0 0.0
      %657 = vmatpush1.msra.mxu0 0.0
      %658 = vmatprep.subr.mxu0 0.0
      %659 = vmatpush1.msra.mxu0 0.0
      %660 = vmatprep.subr.mxu0 0.0
      %661 = vmatpush1.msra.mxu0 0.0
      %662 = vmatprep.subr.mxu0 0.0
      %663 = vmatpush1.msra.mxu0 0.0
      %664 = vmatprep.subr.mxu0 0.0
      %665 = vmatpush1.msra.mxu0 0.0
      %666 = vmatprep.subr.mxu0 0.0
      %667 = vmatpush1.msra.mxu0 0.0
      %668 = vmatprep.subr.mxu0 0.0
      %669 = vmatpush1.msra.mxu0 0.0
      %670 = vmatprep.subr.mxu0 0.0
      %671 = vmatpush1.msra.mxu0 0.0
      %672 = vmatprep.subr.mxu0 0.0
      %673 = vmatpush1.msra.mxu0 0.0
      %674 = vmatprep.subr.mxu0 0.0
      %675 = vmatpush1.msra.mxu0 0.0
      %676 = vmatprep.subr.mxu0 0.0
      %677 = vmatpush1.msra.mxu0 %v647
      %678 = vmatprep.subr.mxu0 0.0
      %679 = vmatpush1.msra.mxu0 %v646
      %680 = vmatprep.subr.mxu0 0.0
      %681 = vmatpush1.msra.mxu0 %v645
      %682 = vmatprep.subr.mxu0 0.0
      %683 = vmatpush1.msra.mxu0 %v644
      %684 = vmatprep.subr.mxu0 0.0
      %685 = vmatpush2.msra.mxu0 0.0
      %686 = vmatprep.subr.mxu0 0.0
      %687 = vmatpush2.msra.mxu0 0.0
      %688 = vmatprep.subr.mxu0 0.0
      %689 = vmatpush2.msra.mxu0 0.0
      %690 = vmatprep.subr.mxu0 0.0
      %691 = vmatpush2.msra.mxu0 0.0
      %692 = vmatprep.subr.mxu0 0.0
      %693 = vmatpush2.msra.mxu0 0.0
      %694 = vmatprep.subr.mxu0 0.0
      %695 = vmatpush2.msra.mxu0 0.0
      %696 = vmatprep.subr.mxu0 0.0
      %697 = vmatpush2.msra.mxu0 0.0
      %698 = vmatprep.subr.mxu0 0.0
      %699 = vmatpush2.msra.mxu0 0.0
      %700 = vmatprep.subr.mxu0 0.0
      %701 = vmatpush2.msra.mxu0 0.0
      %702 = vmatprep.subr.mxu0 0.0
      %703 = vmatpush2.msra.mxu0 0.0
      %704 = vmatprep.subr.mxu0 0.0
      %705 = vmatpush2.msra.mxu0 0.0
      %706 = vmatprep.subr.mxu0 0.0
      %707 = vmatpush2.msra.mxu0 0.0
      %708 = vmatprep.subr.mxu0 0.0
      %709 = vmatpush2.msra.mxu0 0.0
      %710 = vmatprep.subr.mxu0 0.0
      %711 = vmatpush2.msra.mxu0 0.0
      %712 = vmatprep.subr.mxu0 0.0
      %713 = vmatpush2.msra.mxu0 0.0
      %714 = vmatprep.subr.mxu0 0.0
      %715 = vmatpush2.msra.mxu0 0.0
      %716 = vmatprep.mubr.f32.mxu0 0.0
      %717 = vmatmul.mubr.f32.gmra.mxu0 %v650
      %v718 = vpop.f32.mrf.mxu0
      %v719 = vadd.f32 0.0, %v718
      %v720 = vpop.f32.mrf.mxu0
      %721 = vdwg.mxu0
      %s722 = scalar_lea.vmem %s312, 64
      %v723 = vld [vmem:[%s722] sm:$0xff]
      %v724 = vld [vmem:[%s722 + $0x8] sm:$0xff]
      %v725 = vld [vmem:[%s722 + $0x10] sm:$0xff]
      %v726 = vld [vmem:[%s722 + $0x18] sm:$0xff]
      %727 = vmatprep.subr.mxu0 0.0
      %728 = vmatpush1.msra.mxu0 0.0
      %729 = vmatprep.subr.mxu0 0.0
      %730 = vmatpush1.msra.mxu0 0.0
      %731 = vmatprep.subr.mxu0 0.0
      %732 = vmatpush1.msra.mxu0 0.0
      %733 = vmatprep.subr.mxu0 0.0
      %734 = vmatpush1.msra.mxu0 0.0
      %735 = vmatprep.subr.mxu0 0.0
      %736 = vmatpush1.msra.mxu0 0.0
      %737 = vmatprep.subr.mxu0 0.0
      %738 = vmatpush1.msra.mxu0 0.0
      %739 = vmatprep.subr.mxu0 0.0
      %740 = vmatpush1.msra.mxu0 0.0
      %741 = vmatprep.subr.mxu0 0.0
      %742 = vmatpush1.msra.mxu0 0.0
      %743 = vmatprep.subr.mxu0 0.0
      %744 = vmatpush1.msra.mxu0 0.0
      %745 = vmatprep.subr.mxu0 0.0
      %746 = vmatpush1.msra.mxu0 0.0
      %747 = vmatprep.subr.mxu0 0.0
      %748 = vmatpush1.msra.mxu0 0.0
      %749 = vmatprep.subr.mxu0 0.0
      %750 = vmatpush1.msra.mxu0 0.0
      %751 = vmatprep.subr.mxu0 0.0
      %752 = vmatpush1.msra.mxu0 %v726
      %753 = vmatprep.subr.mxu0 0.0
      %754 = vmatpush1.msra.mxu0 %v725
      %755 = vmatprep.subr.mxu0 0.0
      %756 = vmatpush1.msra.mxu0 %v724
      %757 = vmatprep.subr.mxu0 0.0
      %758 = vmatpush1.msra.mxu0 %v723
      %759 = vmatprep.subr.mxu0 0.0
      %760 = vmatpush2.msra.mxu0 0.0
      %761 = vmatprep.subr.mxu0 0.0
      %762 = vmatpush2.msra.mxu0 0.0
      %763 = vmatprep.subr.mxu0 0.0
      %764 = vmatpush2.msra.mxu0 0.0
      %765 = vmatprep.subr.mxu0 0.0
      %766 = vmatpush2.msra.mxu0 0.0
      %767 = vmatprep.subr.mxu0 0.0
      %768 = vmatpush2.msra.mxu0 0.0
      %769 = vmatprep.subr.mxu0 0.0
      %770 = vmatpush2.msra.mxu0 0.0
      %771 = vmatprep.subr.mxu0 0.0
      %772 = vmatpush2.msra.mxu0 0.0
      %773 = vmatprep.subr.mxu0 0.0
      %774 = vmatpush2.msra.mxu0 0.0
      %775 = vmatprep.subr.mxu0 0.0
      %776 = vmatpush2.msra.mxu0 0.0
      %777 = vmatprep.subr.mxu0 0.0
      %778 = vmatpush2.msra.mxu0 0.0
      %779 = vmatprep.subr.mxu0 0.0
      %780 = vmatpush2.msra.mxu0 0.0
      %781 = vmatprep.subr.mxu0 0.0
      %782 = vmatpush2.msra.mxu0 0.0
      %783 = vmatprep.subr.mxu0 0.0
      %784 = vmatpush2.msra.mxu0 0.0
      %785 = vmatprep.subr.mxu0 0.0
      %786 = vmatpush2.msra.mxu0 0.0
      %787 = vmatprep.subr.mxu0 0.0
      %788 = vmatpush2.msra.mxu0 0.0
      %789 = vmatprep.subr.mxu0 0.0
      %790 = vmatpush2.msra.mxu0 0.0
      %791 = vmatprep.mubr.f32.mxu0 0.0
      %792 = vmatmul.mubr.f32.gmra.mxu0 %v650
      %v793 = vpop.f32.mrf.mxu0
      %v794 = vadd.f32 0.0, %v793
      %v795 = vpop.f32.mrf.mxu0
      %796 = vdwg.mxu0
      %v797 = vlaneseq
      %v798 = vshrl.u32 %v797, 7
      %v799 = vlaneseq
      %v800 = vand.u32 %v799, 127
      %v801 = vadd.s32 %v800, 1
      %vm802 = vcmp.eq.s32.totalorder %v798, %v801
      %v803 = vsel %vm802, 1, 0
      %v804 = vcvt.s32.f32 %v803
      %v805 = vadd.s32 %v798, 1
      %vm806 = vcmp.eq.s32.totalorder %v800, %v805
      %v807 = vsel %vm806, 1, 0
      %v808 = vcvt.s32.f32 %v807
      %vm809 = vcmask 31744
      %v811 = vsel %vm809, %v804, 0
      %vm813 = vcmask 1043456
      %v815 = vsel %vm813, %v719, 0
      %817 = vmatprep.subr.mxu0 0.0
      %818 = vmatpush1.msra.mxu0 0.0
      %819 = vmatprep.subr.mxu0 0.0
      %820 = vmatpush1.msra.mxu0 0.0
      %821 = vmatprep.subr.mxu0 0.0
      %822 = vmatpush1.msra.mxu0 0.0
      %823 = vmatprep.subr.mxu0 0.0
      %824 = vmatpush1.msra.mxu0 0.0
      %825 = vmatprep.subr.mxu0 0.0
      %826 = vmatpush1.msra.mxu0 0.0
      %827 = vmatprep.subr.mxu0 0.0
      %828 = vmatpush1.msra.mxu0 0.0
      %829 = vmatprep.subr.mxu0 0.0
      %830 = vmatpush1.msra.mxu0 0.0
      %831 = vmatprep.subr.mxu0 0.0
      %832 = vmatpush1.msra.mxu0 0.0
      %833 = vmatprep.subr.mxu0 0.0
      %834 = vmatpush1.msra.mxu0 0.0
      %835 = vmatprep.subr.mxu0 0.0
      %836 = vmatpush1.msra.mxu0 0.0
      %837 = vmatprep.subr.mxu0 0.0
      %838 = vmatpush1.msra.mxu0 0.0
      %839 = vmatprep.subr.mxu0 0.0
      %840 = vmatpush1.msra.mxu0 0.0
      %841 = vmatprep.subr.mxu0 0.0
      %842 = vmatpush1.msra.mxu0 0.0
      %843 = vmatprep.subr.mxu0 0.0
      %844 = vmatpush1.msra.mxu0 0.0
      %845 = vmatprep.subr.mxu0 0.0
      %846 = vmatpush1.msra.mxu0 0.0
      %847 = vmatprep.subr.mxu0 0.0
      %848 = vmatpush1.msra.mxu0 %v815
      %849 = vmatprep.subr.mxu0 0.0
      %850 = vmatpush2.msra.mxu0 0.0
      %851 = vmatprep.subr.mxu0 0.0
      %852 = vmatpush2.msra.mxu0 0.0
      %853 = vmatprep.subr.mxu0 0.0
      %854 = vmatpush2.msra.mxu0 0.0
      %855 = vmatprep.subr.mxu0 0.0
      %856 = vmatpush2.msra.mxu0 0.0
      %857 = vmatprep.subr.mxu0 0.0
      %858 = vmatpush2.msra.mxu0 0.0
      %859 = vmatprep.subr.mxu0 0.0
      %860 = vmatpush2.msra.mxu0 0.0
      %861 = vmatprep.subr.mxu0 0.0
      %862 = vmatpush2.msra.mxu0 0.0
      %863 = vmatprep.subr.mxu0 0.0
      %864 = vmatpush2.msra.mxu0 0.0
      %865 = vmatprep.subr.mxu0 0.0
      %866 = vmatpush2.msra.mxu0 0.0
      %867 = vmatprep.subr.mxu0 0.0
      %868 = vmatpush2.msra.mxu0 0.0
      %869 = vmatprep.subr.mxu0 0.0
      %870 = vmatpush2.msra.mxu0 0.0
      %871 = vmatprep.subr.mxu0 0.0
      %872 = vmatpush2.msra.mxu0 0.0
      %873 = vmatprep.subr.mxu0 0.0
      %874 = vmatpush2.msra.mxu0 0.0
      %875 = vmatprep.subr.mxu0 0.0
      %876 = vmatpush2.msra.mxu0 0.0
      %877 = vmatprep.subr.mxu0 0.0
      %878 = vmatpush2.msra.mxu0 0.0
      %879 = vmatprep.subr.mxu0 0.0
      %880 = vmatpush2.msra.mxu0 0.0
      %881 = vmatprep.mubr.f32.mxu0 0.0
      %882 = vmatmul.mubr.f32.gmra.mxu0 %v811
      %v883 = vpop.f32.mrf.mxu0
      %v884 = vadd.f32 0.0, %v883
      %v885 = vpop.f32.mrf.mxu0
      %886 = vdwg.mxu0
      %v888 = vsel %vm809, %v808, 0
      %v891 = vsel %vm813, %v794, 0
      %893 = vmatprep.subr.mxu0 0.0
      %894 = vmatpush1.msra.mxu0 0.0
      %895 = vmatprep.subr.mxu0 0.0
      %896 = vmatpush1.msra.mxu0 0.0
      %897 = vmatprep.subr.mxu0 0.0
      %898 = vmatpush1.msra.mxu0 0.0
      %899 = vmatprep.subr.mxu0 0.0
      %900 = vmatpush1.msra.mxu0 0.0
      %901 = vmatprep.subr.mxu0 0.0
      %902 = vmatpush1.msra.mxu0 0.0
      %903 = vmatprep.subr.mxu0 0.0
      %904 = vmatpush1.msra.mxu0 0.0
      %905 = vmatprep.subr.mxu0 0.0
      %906 = vmatpush1.msra.mxu0 0.0
      %907 = vmatprep.subr.mxu0 0.0
      %908 = vmatpush1.msra.mxu0 0.0
      %909 = vmatprep.subr.mxu0 0.0
      %910 = vmatpush1.msra.mxu0 0.0
      %911 = vmatprep.subr.mxu0 0.0
      %912 = vmatpush1.msra.mxu0 0.0
      %913 = vmatprep.subr.mxu0 0.0
      %914 = vmatpush1.msra.mxu0 0.0
      %915 = vmatprep.subr.mxu0 0.0
      %916 = vmatpush1.msra.mxu0 0.0
      %917 = vmatprep.subr.mxu0 0.0
      %918 = vmatpush1.msra.mxu0 0.0
      %919 = vmatprep.subr.mxu0 0.0
      %920 = vmatpush1.msra.mxu0 0.0
      %921 = vmatprep.subr.mxu0 0.0
      %922 = vmatpush1.msra.mxu0 0.0
      %923 = vmatprep.subr.mxu0 0.0
      %924 = vmatpush1.msra.mxu0 %v891
      %925 = vmatprep.subr.mxu0 0.0
      %926 = vmatpush2.msra.mxu0 0.0
      %927 = vmatprep.subr.mxu0 0.0
      %928 = vmatpush2.msra.mxu0 0.0
      %929 = vmatprep.subr.mxu0 0.0
      %930 = vmatpush2.msra.mxu0 0.0
      %931 = vmatprep.subr.mxu0 0.0
      %932 = vmatpush2.msra.mxu0 0.0
      %933 = vmatprep.subr.mxu0 0.0
      %934 = vmatpush2.msra.mxu0 0.0
      %935 = vmatprep.subr.mxu0 0.0
      %936 = vmatpush2.msra.mxu0 0.0
      %937 = vmatprep.subr.mxu0 0.0
      %938 = vmatpush2.msra.mxu0 0.0
      %939 = vmatprep.subr.mxu0 0.0
      %940 = vmatpush2.msra.mxu0 0.0
      %941 = vmatprep.subr.mxu0 0.0
      %942 = vmatpush2.msra.mxu0 0.0
      %943 = vmatprep.subr.mxu0 0.0
      %944 = vmatpush2.msra.mxu0 0.0
      %945 = vmatprep.subr.mxu0 0.0
      %946 = vmatpush2.msra.mxu0 0.0
      %947 = vmatprep.subr.mxu0 0.0
      %948 = vmatpush2.msra.mxu0 0.0
      %949 = vmatprep.subr.mxu0 0.0
      %950 = vmatpush2.msra.mxu0 0.0
      %951 = vmatprep.subr.mxu0 0.0
      %952 = vmatpush2.msra.mxu0 0.0
      %953 = vmatprep.subr.mxu0 0.0
      %954 = vmatpush2.msra.mxu0 0.0
      %955 = vmatprep.subr.mxu0 0.0
      %956 = vmatpush2.msra.mxu0 0.0
      %957 = vmatprep.mubr.f32.mxu0 0.0
      %958 = vmatmul.mubr.f32.gmra.mxu0 %v888
      %v959 = vpop.f32.mrf.mxu0
      %v960 = vadd.f32 0.0, %v959
      %v961 = vpop.f32.mrf.mxu0
      %962 = vdwg.mxu0
      %963 = vmatprep.subr.mxu0 0.0
      %964 = vmatpush1.msra.mxu0 0.0
      %965 = vmatprep.subr.mxu0 0.0
      %966 = vmatpush1.msra.mxu0 0.0
      %967 = vmatprep.subr.mxu0 0.0
      %968 = vmatpush1.msra.mxu0 0.0
      %969 = vmatprep.subr.mxu0 0.0
      %970 = vmatpush1.msra.mxu0 0.0
      %971 = vmatprep.subr.mxu0 0.0
      %972 = vmatpush1.msra.mxu0 0.0
      %973 = vmatprep.subr.mxu0 0.0
      %974 = vmatpush1.msra.mxu0 0.0
      %975 = vmatprep.subr.mxu0 0.0
      %976 = vmatpush1.msra.mxu0 0.0
      %977 = vmatprep.subr.mxu0 0.0
      %978 = vmatpush1.msra.mxu0 0.0
      %979 = vmatprep.subr.mxu0 0.0
      %980 = vmatpush1.msra.mxu0 0.0
      %981 = vmatprep.subr.mxu0 0.0
      %982 = vmatpush1.msra.mxu0 0.0
      %983 = vmatprep.subr.mxu0 0.0
      %984 = vmatpush1.msra.mxu0 0.0
      %985 = vmatprep.subr.mxu0 0.0
      %986 = vmatpush1.msra.mxu0 0.0
      %987 = vmatprep.subr.mxu0 0.0
      %988 = vmatpush1.msra.mxu0 %v643
      %989 = vmatprep.subr.mxu0 0.0
      %990 = vmatpush1.msra.mxu0 %v642
      %991 = vmatprep.subr.mxu0 0.0
      %992 = vmatpush1.msra.mxu0 %v641
      %993 = vmatprep.subr.mxu0 0.0
      %994 = vmatpush1.msra.mxu0 %v640
      %995 = vmatprep.subr.mxu0 0.0
      %996 = vmatpush2.msra.mxu0 0.0
      %997 = vmatprep.subr.mxu0 0.0
      %998 = vmatpush2.msra.mxu0 0.0
      %999 = vmatprep.subr.mxu0 0.0
      %1000 = vmatpush2.msra.mxu0 0.0
      %1001 = vmatprep.subr.mxu0 0.0
      %1002 = vmatpush2.msra.mxu0 0.0
      %1003 = vmatprep.subr.mxu0 0.0
      %1004 = vmatpush2.msra.mxu0 0.0
      %1005 = vmatprep.subr.mxu0 0.0
      %1006 = vmatpush2.msra.mxu0 0.0
      %1007 = vmatprep.subr.mxu0 0.0
      %1008 = vmatpush2.msra.mxu0 0.0
      %1009 = vmatprep.subr.mxu0 0.0
      %1010 = vmatpush2.msra.mxu0 0.0
      %1011 = vmatprep.subr.mxu0 0.0
      %1012 = vmatpush2.msra.mxu0 0.0
      %1013 = vmatprep.subr.mxu0 0.0
      %1014 = vmatpush2.msra.mxu0 0.0
      %1015 = vmatprep.subr.mxu0 0.0
      %1016 = vmatpush2.msra.mxu0 0.0
      %1017 = vmatprep.subr.mxu0 0.0
      %1018 = vmatpush2.msra.mxu0 0.0
      %1019 = vmatprep.subr.mxu0 0.0
      %1020 = vmatpush2.msra.mxu0 0.0
      %1021 = vmatprep.subr.mxu0 0.0
      %1022 = vmatpush2.msra.mxu0 0.0
      %1023 = vmatprep.subr.mxu0 0.0
      %1024 = vmatpush2.msra.mxu0 0.0
      %1025 = vmatprep.subr.mxu0 0.0
      %1026 = vmatpush2.msra.mxu0 0.0
      %1027 = vmatprep.mubr.f32.mxu0 0.0
      %1028 = vmatmul.mubr.f32.gmra.mxu0 %v650
      %v1029 = vpop.f32.mrf.mxu0
      %v1030 = vadd.f32 %v884, %v1029
      %v1031 = vpop.f32.mrf.mxu0
      %1032 = vdwg.mxu0
      %v1033 = vadd.f32 %v1030, %v960
      %v1034 = vld [vmem:[%s315] sm:$0x1]
      %v1036 = vlaneseq
      %v1037 = vshrl.u32 %v1036, 7
      %v1038 = vsub.s32 0, %v1037
      %v1039 = vrot.slane %v1034, %v1038
      %v1041 = vadd.f32 %v1033, %v1039
      %v1042 = vadd.f32 %v1041, %v638
      %v1043 = vmax.f32 %v1042, 0.0
      %vm1044 = vcmask 257024
      %1045 = vst.msk [vmem:[#allocation2] sm:$0xf] %vm1044, %v1043
      %p1046 = scmp.eq.s32.totalorder %s23, 1
      // Predicated region
      $region53: #{hourglass_forward.10} parent=47 // pred_check
        %p1047 = pneg %p1046
      $region54: #{hourglass_forward.10} parent=47 // pred_check_branch
        %1049 = sbr.rel (%p1047) target = $region56
      $region55: #{hourglass_forward.10} parent=47 // pred_region
        %1050 = vst.msk [vmem:[%s319] sm:$0xf] %vm1044, %v1043
      $region56: #{hourglass_forward.10} parent=47 // pred_fallthru
        _
      %p1051 = scmp.lt.s32.totalorder %s22, 1
      %s1052 = scalar_select %p1051, %s22, 1
      %s1053 = smul.addr %s1052, 4
      %s1054 = scalar_lea.vmem %s7, %s1053
      // Predicated region
      $region57: #{hourglass_forward.10} parent=47 // pred_check
        %p1055 = pneg %p210
      $region58: #{hourglass_forward.10} parent=47 // pred_check_branch
        %1057 = sbr.rel (%p1055) target = $region60
      $region59: #{hourglass_forward.10} parent=47 // pred_region
        _
      $region60: #{hourglass_forward.10} parent=47 // pred_fallthru
        _
    $region48: #{hourglass_forward.10} parent=5 // pred_fallthru
      _
    %p1058 = scmp.le.s32.totalorder 2, %s13
    // Predicated region
    $region61: #{hourglass_forward.10} parent=5 // pred_check
      %p1059 = pneg %p1058
    $region62: #{hourglass_forward.10} parent=5 // pred_check_branch
      %1061 = sbr.rel (%p1059) target = $region64
    $region63: #{hourglass_forward.10} parent=5 // pred_region
      %s1062 = ssub.s32 %s13, 2
      // Predicated region
      $region65: #{hourglass_forward.10} parent=63 // pred_check
        %p1063 = pneg %p216
      $region66: #{hourglass_forward.10} parent=63 // pred_check_branch
        %1065 = sbr.rel (%p1063) target = $region68
      $region67: #{hourglass_forward.10} parent=63 // pred_region
        %p1066 = scmp.lt.s32.totalorder %s24, 1
        %s1067 = scalar_select %p1066, %s24, 1
        %s1068 = smul.addr %s1067, 4
        %s1069 = scalar_lea.vmem %s7, %s1068
      $region68: #{hourglass_forward.10} parent=63 // pred_fallthru
        _
    $region64: #{hourglass_forward.10} parent=5 // pred_fallthru
      _
  $region6: #{hourglass_forward.10} parent=0 // loop_footer
    %s17 = sadd.s32 1, %s13
  $region7: #{hourglass_forward.10} parent=0 // loop_footer_branch
    %12 = sbr.rel target = $region3
  $region8: #{hourglass_forward.10} parent=0 // loop_exit
    _

// kernel: hourglass_forward.7
$region0: #{hourglass_forward.7}
  #allocation0 [shape = 'u32[]', space=smem, size = 0x4, offset = 0x4, fixed_abs, tag = 'smem constant byte address 0x4 - core index']
  #allocation1 [shape = 'u32[144,128]{1,0:T(1,128)}', space=vmem, size = 0x12000, scoped, tag = 'internal scratch']
  #allocation2 [shape = 'f32[16,128]{1,0:T(8,128)}', space=vmem, size = 0x2000, scoped, tag = 'scratch operand']
  %s0 = inlined_call_operand.vmem [shape: f32[2,16,128], index: 0, kind: input, shape index: {}]
  %s1 = inlined_call_operand.vmem [shape: f32[2,3,128,128], index: 1, kind: input, shape index: {}]
  %s2 = inlined_call_operand.vmem [shape: f32[2,1,128], index: 2, kind: input, shape index: {}]
  %s3 = inlined_call_operand.vmem [shape: f32[2,16,128], index: 3, kind: output, shape index: {}]
  %s4 = sld [smem:[#allocation0]]
  $region53: #{hourglass_forward.7} parent=0
    _
  %s6 = ssub.s32 1, %s4
  %s7 = scalar_select 0, %s6, %s4
  loop: start=0, step=1, limit=6
  $region2: #{hourglass_forward.7} parent=0 // loop_pre_header
    _
  $region3: #{hourglass_forward.7} parent=0 // loop_header
    %s9 = sphi 0, %s13
    %p10 = scmp.ge.s32.totalorder %s9, 6
    %s16 = sphi 0, %s28
    %s17 = sphi 0, %s24
    %s18 = sphi 0, %s16
    %s19 = sphi 0, %s17
    %s20 = sphi 0, %s18
    %s21 = sphi 0, %s19
    %s31 = sphi 0, %s33
    %s34 = sphi 0, %s31
    %s35 = sphi 0, %s34
    %s51 = sphi 0, %s35
    %s57 = sphi 0, %s59
    %s60 = sphi 0, %s57
    %s61 = sphi 0, %s60
    %s77 = sphi 0, %s61
    %s83 = sphi 0, %s85
    %s86 = sphi 0, %s83
    %s87 = sphi 0, %s86
    %s103 = sphi 0, %s87
    %s109 = sphi 0, %s111
    %s112 = sphi 0, %s109
    %s113 = sphi 0, %s112
    %s129 = sphi 0, %s113
  $region4: #{hourglass_forward.7} parent=0 // loop_header_branch
    %12 = sbr.rel (%p10) target = $region8
  $region5: #{hourglass_forward.7} parent=0 // loop_body
    %s14 = ssub.s32 %s9, 1
    %s15 = ssub.s32 %s9, 2
    %s22 = sadd.s32 1, %s17
    %p23 = scmp.ge.s32.totalorder %s22, 2
    %s24 = scalar_select %p23, 0, %s22
    %s25 = sadd.s32 1, %s16
    %s26 = scalar_select %p23, %s25, %s16
    %p27 = scmp.ge.s32.totalorder %s26, 2
    %s28 = scalar_select %p27, 0, %s26
    %s29 = ssub.s32 %s16, %s28
    %p30 = scmp.eq.s32.totalorder %s29, 0
    %s32 = sadd.s32 %s31, 1
    %s33 = scalar_select %p30, %s31, %s32
    %p36 = pneg %p30
    %p37 = scmp.eq.s32.totalorder %s9, 3
    %p38 = por %p36, %p37
    %p39 = scmp.ne.s32.totalorder %s31, %s34
    %p40 = scmp.eq.s32.totalorder %s9, 0
    %p41 = por %p39, %p40
    %p42 = scmp.ne.s32.totalorder %s31, %s34
    %p43 = scmp.eq.s32.totalorder %s14, 3
    %p44 = por %p42, %p43
    %p45 = scmp.ne.s32.totalorder %s34, %s35
    %p46 = scmp.eq.s32.totalorder %s14, 0
    %p47 = por %p45, %p46
    %p48 = scmp.ne.s32.totalorder %s34, %s35
    %p49 = scmp.eq.s32.totalorder %s15, 3
    %p50 = por %p48, %p49
    %p52 = scmp.ne.s32.totalorder %s35, %s51
    %p53 = scmp.eq.s32.totalorder %s15, 0
    %p54 = por %p52, %p53
    %s55 = ssub.s32 %s17, %s24
    %p56 = scmp.eq.s32.totalorder %s55, 0
    %s58 = sadd.s32 %s57, 1
    %s59 = scalar_select %p56, %s57, %s58
    %p62 = pneg %p56
    %p63 = scmp.eq.s32.totalorder %s9, 3
    %p64 = por %p62, %p63
    %p65 = scmp.ne.s32.totalorder %s57, %s60
    %p66 = scmp.eq.s32.totalorder %s9, 0
    %p67 = por %p65, %p66
    %p68 = scmp.ne.s32.totalorder %s57, %s60
    %p69 = scmp.eq.s32.totalorder %s14, 3
    %p70 = por %p68, %p69
    %p71 = scmp.ne.s32.totalorder %s60, %s61
    %p72 = scmp.eq.s32.totalorder %s14, 0
    %p73 = por %p71, %p72
    %p74 = scmp.ne.s32.totalorder %s60, %s61
    %p75 = scmp.eq.s32.totalorder %s15, 3
    %p76 = por %p74, %p75
    %p78 = scmp.ne.s32.totalorder %s61, %s77
    %p79 = scmp.eq.s32.totalorder %s15, 0
    %p80 = por %p78, %p79
    %s81 = ssub.s32 %s17, %s24
    %p82 = scmp.eq.s32.totalorder %s81, 0
    %s84 = sadd.s32 %s83, 1
    %s85 = scalar_select %p82, %s83, %s84
    %p88 = pneg %p82
    %p89 = scmp.eq.s32.totalorder %s9, 3
    %p90 = por %p88, %p89
    %p91 = scmp.ne.s32.totalorder %s83, %s86
    %p92 = scmp.eq.s32.totalorder %s9, 0
    %p93 = por %p91, %p92
    %p94 = scmp.ne.s32.totalorder %s83, %s86
    %p95 = scmp.eq.s32.totalorder %s14, 3
    %p96 = por %p94, %p95
    %p97 = scmp.ne.s32.totalorder %s86, %s87
    %p98 = scmp.eq.s32.totalorder %s14, 0
    %p99 = por %p97, %p98
    %p100 = scmp.ne.s32.totalorder %s86, %s87
    %p101 = scmp.eq.s32.totalorder %s15, 3
    %p102 = por %p100, %p101
    %p104 = scmp.ne.s32.totalorder %s87, %s103
    %p105 = scmp.eq.s32.totalorder %s15, 0
    %p106 = por %p104, %p105
    %s107 = ssub.s32 %s16, %s28
    %p108 = scmp.eq.s32.totalorder %s107, 0
    %s110 = sadd.s32 %s109, 1
    %s111 = scalar_select %p108, %s109, %s110
    %p114 = pneg %p108
    %p115 = scmp.eq.s32.totalorder %s9, 3
    %p116 = por %p114, %p115
    %p117 = scmp.ne.s32.totalorder %s109, %s112
    %p118 = scmp.eq.s32.totalorder %s9, 0
    %p119 = por %p117, %p118
    %p120 = scmp.ne.s32.totalorder %s109, %s112
    %p121 = scmp.eq.s32.totalorder %s14, 3
    %p122 = por %p120, %p121
    %p123 = scmp.ne.s32.totalorder %s112, %s113
    %p124 = scmp.eq.s32.totalorder %s14, 0
    %p125 = por %p123, %p124
    %p126 = scmp.ne.s32.totalorder %s112, %s113
    %p127 = scmp.eq.s32.totalorder %s15, 3
    %p128 = por %p126, %p127
    %p130 = scmp.ne.s32.totalorder %s113, %s129
    %p131 = scmp.eq.s32.totalorder %s15, 0
    %p132 = por %p130, %p131
    %p133 = scmp.le.s32.totalorder 1, %s9
    %p134 = scmp.lt.s32.totalorder %s9, 5
    %p135 = pnand %p133, %p134
    %p136 = pneg %p135
    // Predicated region
    $region9: #{hourglass_forward.7} parent=5 // pred_check
      _
    $region10: #{hourglass_forward.7} parent=5 // pred_check_branch
      %138 = sbr.rel (%p135) target = $region12
    $region11: #{hourglass_forward.7} parent=5 // pred_region
      %s139 = ssub.s32 %s9, 1
    $region12: #{hourglass_forward.7} parent=5 // pred_fallthru
      _
    %p140 = scmp.lt.s32.totalorder %s9, 4
    // Predicated region
    $region13: #{hourglass_forward.7} parent=5 // pred_check
      %p141 = pneg %p140
    $region14: #{hourglass_forward.7} parent=5 // pred_check_branch
      %143 = sbr.rel (%p141) target = $region16
    $region15: #{hourglass_forward.7} parent=5 // pred_region
      // Predicated region
      $region17: #{hourglass_forward.7} parent=15 // pred_check
        %p144 = pneg %p41
      $region18: #{hourglass_forward.7} parent=15 // pred_check_branch
        %146 = sbr.rel (%p144) target = $region20
      $region19: #{hourglass_forward.7} parent=15 // pred_region
        %p147 = scmp.lt.s32.totalorder %s16, 1
        %s148 = scalar_select %p147, %s16, 1
        %s149 = smul.addr %s148, 2
        %s150 = smul.addr %s149, 8
        %s151 = scalar_lea.vmem %s0, %s150
      $region20: #{hourglass_forward.7} parent=15 // pred_fallthru
        _
      // Predicated region
      $region21: #{hourglass_forward.7} parent=15 // pred_check
        %p152 = pneg %p67
      $region22: #{hourglass_forward.7} parent=15 // pred_check_branch
        %154 = sbr.rel (%p152) target = $region24
      $region23: #{hourglass_forward.7} parent=15 // pred_region
        %p155 = scmp.lt.s32.totalorder %s17, 1
        %s156 = scalar_select %p155, %s17, 1
        %s157 = smul.addr %s156, 48
        %s158 = smul.addr %s157, 8
        %s159 = scalar_lea.vmem %s1, %s158
      $region24: #{hourglass_forward.7} parent=15 // pred_fallthru
        _
      // Predicated region
      $region25: #{hourglass_forward.7} parent=15 // pred_check
        %p160 = pneg %p93
      $region26: #{hourglass_forward.7} parent=15 // pred_check_branch
        %162 = sbr.rel (%p160) target = $region28
      $region27: #{hourglass_forward.7} parent=15 // pred_region
        %p163 = scmp.lt.s32.totalorder %s17, 1
        %s164 = scalar_select %p163, %s17, 1
        %s165 = scalar_lea.vmem %s2, %s164
      $region28: #{hourglass_forward.7} parent=15 // pred_fallthru
        _
    $region16: #{hourglass_forward.7} parent=5 // pred_fallthru
      _
    %p166 = scmp.le.s32.totalorder 1, %s9
    %p167 = scmp.lt.s32.totalorder %s9, 5
    %p168 = pnand %p166, %p167
    %p169 = pneg %p168
    // Predicated region
    $region29: #{hourglass_forward.7} parent=5 // pred_check
      _
    $region30: #{hourglass_forward.7} parent=5 // pred_check_branch
      %171 = sbr.rel (%p168) target = $region32
    $region31: #{hourglass_forward.7} parent=5 // pred_region
      %s172 = ssub.s32 %s9, 1
      %p173 = scmp.lt.s32.totalorder %s18, 1
      %s174 = scalar_select %p173, %s18, 1
      %s175 = smul.addr %s174, 2
      %s176 = smul.addr %s175, 8
      %s177 = scalar_lea.vmem %s0, %s176
      %p178 = pneg %p47
      %p179 = pneg %p44
      %p180 = scmp.lt.s32.totalorder %s19, 1
      %s181 = scalar_select %p180, %s19, 1
      %s182 = smul.addr %s181, 48
      %s183 = smul.addr %s182, 8
      %s184 = scalar_lea.vmem %s1, %s183
      %p185 = pneg %p73
      %p186 = pneg %p70
      %p187 = scmp.lt.s32.totalorder %s19, 1
      %s188 = scalar_select %p187, %s19, 1
      %s189 = scalar_lea.vmem %s2, %s188
      %p190 = pneg %p99
      %p191 = pneg %p96
      %p192 = pneg %p125
      %p193 = pneg %p122
      %p194 = scmp.lt.s32.totalorder %s18, 1
      %s195 = scalar_select %p194, %s18, 1
      %s196 = smul.addr %s195, 2
      %s197 = smul.addr %s196, 8
      %s198 = scalar_lea.vmem %s3, %s197
      %p199 = scmp.lt.s32.totalorder %s18, 1
      %s200 = scalar_select %p199, %s18, 1
      %s201 = smul.addr %s200, 2
      %s202 = smul.addr %s201, 8
      %s203 = scalar_lea.vmem %s0, %s202
      %p204 = scmp.lt.s32.totalorder %s19, 1
      %s205 = scalar_select %p204, %s19, 1
      %s206 = smul.addr %s205, 48
      %s207 = smul.addr %s206, 8
      %s208 = scalar_lea.vmem %s1, %s207
      %p209 = scmp.lt.s32.totalorder %s19, 1
      %s210 = scalar_select %p209, %s19, 1
      %s211 = scalar_lea.vmem %s2, %s210
      %p212 = scmp.lt.s32.totalorder %s18, 1
      %s213 = scalar_select %p212, %s18, 1
      %s214 = smul.addr %s213, 2
      %s215 = smul.addr %s214, 8
      %s216 = scalar_lea.vmem %s3, %s215
      %p217 = scmp.eq.s32.totalorder %s19, 0
      // Predicated region
      $region33: #{hourglass_forward.7} parent=31 // pred_check
        %p218 = pneg %p217
      $region34: #{hourglass_forward.7} parent=31 // pred_check_branch
        %220 = sbr.rel (%p218) target = $region36
      $region35: #{hourglass_forward.7} parent=31 // pred_region
        %v221 = vld [vmem:[%s203] sm:$0xff]
        %v222 = vld [vmem:[%s203 + $0x8] sm:$0xff]
        %223 = vst [vmem:[#allocation2] sm:$0xff] %v221
        %224 = vst [vmem:[#allocation2 + $0x8] sm:$0xff] %v222
      $region36: #{hourglass_forward.7} parent=31 // pred_fallthru
        _
      %v225 = vld [vmem:[#allocation2] sm:$0xff]
      %v226 = vld [vmem:[#allocation2 + $0x8] sm:$0xff]
      %s227 = scalar_lea.vmem %s208, 128
      %v228 = vld [vmem:[%s227] sm:$0xff]
      %v229 = vld [vmem:[%s227 + $0x8] sm:$0xff]
      %v230 = vld [vmem:[%s227 + $0x10] sm:$0xff]
      %v231 = vld [vmem:[%s227 + $0x18] sm:$0xff]
      %v232 = vld [vmem:[%s227 + $0x20] sm:$0xff]
      %v233 = vld [vmem:[%s227 + $0x28] sm:$0xff]
      %v234 = vld [vmem:[%s227 + $0x30] sm:$0xff]
      %v235 = vld [vmem:[%s227 + $0x38] sm:$0xff]
      %v236 = vld [vmem:[%s227 + $0x40] sm:$0xff]
      %v237 = vld [vmem:[%s227 + $0x48] sm:$0xff]
      %v238 = vld [vmem:[%s227 + $0x50] sm:$0xff]
      %v239 = vld [vmem:[%s227 + $0x58] sm:$0xff]
      %v240 = vld [vmem:[%s227 + $0x60] sm:$0xff]
      %v241 = vld [vmem:[%s227 + $0x68] sm:$0xff]
      %v242 = vld [vmem:[%s227 + $0x70] sm:$0xff]
      %v243 = vld [vmem:[%s227 + $0x78] sm:$0xff]
      %v244 = vld [vmem:[%s208] sm:$0xff]
      %v245 = vld [vmem:[%s208 + $0x8] sm:$0xff]
      %v246 = vld [vmem:[%s208 + $0x10] sm:$0xff]
      %v247 = vld [vmem:[%s208 + $0x18] sm:$0xff]
      %v248 = vld [vmem:[%s208 + $0x20] sm:$0xff]
      %v249 = vld [vmem:[%s208 + $0x28] sm:$0xff]
      %v250 = vld [vmem:[%s208 + $0x30] sm:$0xff]
      %v251 = vld [vmem:[%s208 + $0x38] sm:$0xff]
      %v252 = vld [vmem:[%s208 + $0x40] sm:$0xff]
      %v253 = vld [vmem:[%s208 + $0x48] sm:$0xff]
      %v254 = vld [vmem:[%s208 + $0x50] sm:$0xff]
      %v255 = vld [vmem:[%s208 + $0x58] sm:$0xff]
      %v256 = vld [vmem:[%s208 + $0x60] sm:$0xff]
      %v257 = vld [vmem:[%s208 + $0x68] sm:$0xff]
      %v258 = vld [vmem:[%s208 + $0x70] sm:$0xff]
      %v259 = vld [vmem:[%s208 + $0x78] sm:$0xff]
      %260 = vmatprep.subr.mxu0 0.0
      %261 = vmatpush1.msra.mxu0 %v259
      %262 = vmatprep.subr.mxu0 0.0
      %263 = vmatpush1.msra.mxu0 %v258
      %264 = vmatprep.subr.mxu0 0.0
      %265 = vmatpush1.msra.mxu0 %v257
      %266 = vmatprep.subr.mxu0 0.0
      %267 = vmatpush1.msra.mxu0 %v256
      %268 = vmatprep.subr.mxu0 0.0
      %269 = vmatpush1.msra.mxu0 %v255
      %270 = vmatprep.subr.mxu0 0.0
      %271 = vmatpush1.msra.mxu0 %v254
      %272 = vmatprep.subr.mxu0 0.0
      %273 = vmatpush1.msra.mxu0 %v253
      %274 = vmatprep.subr.mxu0 0.0
      %275 = vmatpush1.msra.mxu0 %v252
      %276 = vmatprep.subr.mxu0 0.0
      %277 = vmatpush1.msra.mxu0 %v251
      %278 = vmatprep.subr.mxu0 0.0
      %279 = vmatpush1.msra.mxu0 %v250
      %280 = vmatprep.subr.mxu0 0.0
      %281 = vmatpush1.msra.mxu0 %v249
      %282 = vmatprep.subr.mxu0 0.0
      %283 = vmatpush1.msra.mxu0 %v248
      %284 = vmatprep.subr.mxu0 0.0
      %285 = vmatpush1.msra.mxu0 %v247
      %286 = vmatprep.subr.mxu0 0.0
      %287 = vmatpush1.msra.mxu0 %v246
      %288 = vmatprep.subr.mxu0 0.0
      %289 = vmatpush1.msra.mxu0 %v245
      %290 = vmatprep.subr.mxu0 0.0
      %291 = vmatpush1.msra.mxu0 %v244
      %292 = vmatprep.subr.mxu0 0.0
      %293 = vmatpush2.msra.mxu0 0.0
      %294 = vmatprep.subr.mxu0 0.0
      %295 = vmatpush2.msra.mxu0 0.0
      %296 = vmatprep.subr.mxu0 0.0
      %297 = vmatpush2.msra.mxu0 0.0
      %298 = vmatprep.subr.mxu0 0.0
      %299 = vmatpush2.msra.mxu0 0.0
      %300 = vmatprep.subr.mxu0 0.0
      %301 = vmatpush2.msra.mxu0 0.0
      %302 = vmatprep.subr.mxu0 0.0
      %303 = vmatpush2.msra.mxu0 0.0
      %304 = vmatprep.subr.mxu0 0.0
      %305 = vmatpush2.msra.mxu0 0.0
      %306 = vmatprep.subr.mxu0 0.0
      %307 = vmatpush2.msra.mxu0 0.0
      %308 = vmatprep.subr.mxu0 0.0
      %309 = vmatpush2.msra.mxu0 0.0
      %310 = vmatprep.subr.mxu0 0.0
      %311 = vmatpush2.msra.mxu0 0.0
      %312 = vmatprep.subr.mxu0 0.0
      %313 = vmatpush2.msra.mxu0 0.0
      %314 = vmatprep.subr.mxu0 0.0
      %315 = vmatpush2.msra.mxu0 0.0
      %316 = vmatprep.subr.mxu0 0.0
      %317 = vmatpush2.msra.mxu0 0.0
      %318 = vmatprep.subr.mxu0 0.0
      %319 = vmatpush2.msra.mxu0 0.0
      %320 = vmatprep.subr.mxu0 0.0
      %321 = vmatpush2.msra.mxu0 0.0
      %322 = vmatprep.subr.mxu0 0.0
      %323 = vmatpush2.msra.mxu0 0.0
      %324 = vmatprep.mubr.f32.mxu0 0.0
      %325 = vmatmul.mubr.f32.gmra.mxu0 %v225
      %v326 = vpop.f32.mrf.mxu0
      %v327 = vadd.f32 0.0, %v326
      %v328 = vpop.f32.mrf.mxu0
      %329 = vmatprep.mubr.f32.mxu0 0.0
      %330 = vmatmul.mubr.f32.gmra.mxu0 %v226
      %v331 = vpop.f32.mrf.mxu0
      %v332 = vadd.f32 0.0, %v331
      %v333 = vpop.f32.mrf.mxu0
      %334 = vdwg.mxu0
      %s335 = scalar_lea.vmem %s208, 256
      %v336 = vld [vmem:[%s335] sm:$0xff]
      %v337 = vld [vmem:[%s335 + $0x8] sm:$0xff]
      %v338 = vld [vmem:[%s335 + $0x10] sm:$0xff]
      %v339 = vld [vmem:[%s335 + $0x18] sm:$0xff]
      %v340 = vld [vmem:[%s335 + $0x20] sm:$0xff]
      %v341 = vld [vmem:[%s335 + $0x28] sm:$0xff]
      %v342 = vld [vmem:[%s335 + $0x30] sm:$0xff]
      %v343 = vld [vmem:[%s335 + $0x38] sm:$0xff]
      %v344 = vld [vmem:[%s335 + $0x40] sm:$0xff]
      %v345 = vld [vmem:[%s335 + $0x48] sm:$0xff]
      %v346 = vld [vmem:[%s335 + $0x50] sm:$0xff]
      %v347 = vld [vmem:[%s335 + $0x58] sm:$0xff]
      %v348 = vld [vmem:[%s335 + $0x60] sm:$0xff]
      %v349 = vld [vmem:[%s335 + $0x68] sm:$0xff]
      %v350 = vld [vmem:[%s335 + $0x70] sm:$0xff]
      %v351 = vld [vmem:[%s335 + $0x78] sm:$0xff]
      %352 = vmatprep.subr.mxu0 0.0
      %353 = vmatpush1.msra.mxu0 %v351
      %354 = vmatprep.subr.mxu0 0.0
      %355 = vmatpush1.msra.mxu0 %v350
      %356 = vmatprep.subr.mxu0 0.0
      %357 = vmatpush1.msra.mxu0 %v349
      %358 = vmatprep.subr.mxu0 0.0
      %359 = vmatpush1.msra.mxu0 %v348
      %360 = vmatprep.subr.mxu0 0.0
      %361 = vmatpush1.msra.mxu0 %v347
      %362 = vmatprep.subr.mxu0 0.0
      %363 = vmatpush1.msra.mxu0 %v346
      %364 = vmatprep.subr.mxu0 0.0
      %365 = vmatpush1.msra.mxu0 %v345
      %366 = vmatprep.subr.mxu0 0.0
      %367 = vmatpush1.msra.mxu0 %v344
      %368 = vmatprep.subr.mxu0 0.0
      %369 = vmatpush1.msra.mxu0 %v343
      %370 = vmatprep.subr.mxu0 0.0
      %371 = vmatpush1.msra.mxu0 %v342
      %372 = vmatprep.subr.mxu0 0.0
      %373 = vmatpush1.msra.mxu0 %v341
      %374 = vmatprep.subr.mxu0 0.0
      %375 = vmatpush1.msra.mxu0 %v340
      %376 = vmatprep.subr.mxu0 0.0
      %377 = vmatpush1.msra.mxu0 %v339
      %378 = vmatprep.subr.mxu0 0.0
      %379 = vmatpush1.msra.mxu0 %v338
      %380 = vmatprep.subr.mxu0 0.0
      %381 = vmatpush1.msra.mxu0 %v337
      %382 = vmatprep.subr.mxu0 0.0
      %383 = vmatpush1.msra.mxu0 %v336
      %384 = vmatprep.subr.mxu0 0.0
      %385 = vmatpush2.msra.mxu0 0.0
      %386 = vmatprep.subr.mxu0 0.0
      %387 = vmatpush2.msra.mxu0 0.0
      %388 = vmatprep.subr.mxu0 0.0
      %389 = vmatpush2.msra.mxu0 0.0
      %390 = vmatprep.subr.mxu0 0.0
      %391 = vmatpush2.msra.mxu0 0.0
      %392 = vmatprep.subr.mxu0 0.0
      %393 = vmatpush2.msra.mxu0 0.0
      %394 = vmatprep.subr.mxu0 0.0
      %395 = vmatpush2.msra.mxu0 0.0
      %396 = vmatprep.subr.mxu0 0.0
      %397 = vmatpush2.msra.mxu0 0.0
      %398 = vmatprep.subr.mxu0 0.0
      %399 = vmatpush2.msra.mxu0 0.0
      %400 = vmatprep.subr.mxu0 0.0
      %401 = vmatpush2.msra.mxu0 0.0
      %402 = vmatprep.subr.mxu0 0.0
      %403 = vmatpush2.msra.mxu0 0.0
      %404 = vmatprep.subr.mxu0 0.0
      %405 = vmatpush2.msra.mxu0 0.0
      %406 = vmatprep.subr.mxu0 0.0
      %407 = vmatpush2.msra.mxu0 0.0
      %408 = vmatprep.subr.mxu0 0.0
      %409 = vmatpush2.msra.mxu0 0.0
      %410 = vmatprep.subr.mxu0 0.0
      %411 = vmatpush2.msra.mxu0 0.0
      %412 = vmatprep.subr.mxu0 0.0
      %413 = vmatpush2.msra.mxu0 0.0
      %414 = vmatprep.subr.mxu0 0.0
      %415 = vmatpush2.msra.mxu0 0.0
      %416 = vmatprep.mubr.f32.mxu0 0.0
      %417 = vmatmul.mubr.f32.gmra.mxu0 %v225
      %v418 = vpop.f32.mrf.mxu0
      %v419 = vadd.f32 0.0, %v418
      %v420 = vpop.f32.mrf.mxu0
      %421 = vmatprep.mubr.f32.mxu0 0.0
      %422 = vmatmul.mubr.f32.gmra.mxu0 %v226
      %v423 = vpop.f32.mrf.mxu0
      %v424 = vadd.f32 0.0, %v423
      %v425 = vpop.f32.mrf.mxu0
      %426 = vdwg.mxu0
      %v427 = vlaneseq
      %v428 = vshrl.u32 %v427, 7
      %v429 = vadd.s32 %v428, 8
      %vm430 = vcmp.eq.s32.totalorder %v428, 0
      %vm431 = vcmp.eq.s32.totalorder %v429, 0
      %v432 = vrot.slane %v327, 7
      %v433 = vrot.slane %v332, 7
      %vm434 = vcmp.lt.s32.totalorder %v428, 1
      %v435 = vsel %vm434, %v432, %v433
      %v436 = vsel %vm434, %v433, %v432
      %v437 = vsel %vm430, 0.0, %v436
      %v438 = vsel %vm431, 0.0, %v435
      %vm439 = vcmp.eq.s32.totalorder %v428, 15
      %vm440 = vcmp.eq.s32.totalorder %v429, 15
      %v441 = vrot.slane %v419, 1
      %v442 = vrot.slane %v424, 1
      %vm443 = vcmp.lt.s32.totalorder %v428, 7
      %v444 = vsel %vm443, %v441, %v442
      %v445 = vsel %vm443, %v442, %v441
      %v446 = vsel %vm439, 0.0, %v444
      %v447 = vsel %vm440, 0.0, %v445
      %448 = vmatprep.subr.mxu0 0.0
      %449 = vmatpush1.msra.mxu0 %v243
      %450 = vmatprep.subr.mxu0 0.0
      %451 = vmatpush1.msra.mxu0 %v242
      %452 = vmatprep.subr.mxu0 0.0
      %453 = vmatpush1.msra.mxu0 %v241
      %454 = vmatprep.subr.mxu0 0.0
      %455 = vmatpush1.msra.mxu0 %v240
      %456 = vmatprep.subr.mxu0 0.0
      %457 = vmatpush1.msra.mxu0 %v239
      %458 = vmatprep.subr.mxu0 0.0
      %459 = vmatpush1.msra.mxu0 %v238
      %460 = vmatprep.subr.mxu0 0.0
      %461 = vmatpush1.msra.mxu0 %v237
      %462 = vmatprep.subr.mxu0 0.0
      %463 = vmatpush1.msra.mxu0 %v236
      %464 = vmatprep.subr.mxu0 0.0
      %465 = vmatpush1.msra.mxu0 %v235
      %466 = vmatprep.subr.mxu0 0.0
      %467 = vmatpush1.msra.mxu0 %v234
      %468 = vmatprep.subr.mxu0 0.0
      %469 = vmatpush1.msra.mxu0 %v233
      %470 = vmatprep.subr.mxu0 0.0
      %471 = vmatpush1.msra.mxu0 %v232
      %472 = vmatprep.subr.mxu0 0.0
      %473 = vmatpush1.msra.mxu0 %v231
      %474 = vmatprep.subr.mxu0 0.0
      %475 = vmatpush1.msra.mxu0 %v230
      %476 = vmatprep.subr.mxu0 0.0
      %477 = vmatpush1.msra.mxu0 %v229
      %478 = vmatprep.subr.mxu0 0.0
      %479 = vmatpush1.msra.mxu0 %v228
      %480 = vmatprep.subr.mxu0 0.0
      %481 = vmatpush2.msra.mxu0 0.0
      %482 = vmatprep.subr.mxu0 0.0
      %483 = vmatpush2.msra.mxu0 0.0
      %484 = vmatprep.subr.mxu0 0.0
      %485 = vmatpush2.msra.mxu0 0.0
      %486 = vmatprep.subr.mxu0 0.0
      %487 = vmatpush2.msra.mxu0 0.0
      %488 = vmatprep.subr.mxu0 0.0
      %489 = vmatpush2.msra.mxu0 0.0
      %490 = vmatprep.subr.mxu0 0.0
      %491 = vmatpush2.msra.mxu0 0.0
      %492 = vmatprep.subr.mxu0 0.0
      %493 = vmatpush2.msra.mxu0 0.0
      %494 = vmatprep.subr.mxu0 0.0
      %495 = vmatpush2.msra.mxu0 0.0
      %496 = vmatprep.subr.mxu0 0.0
      %497 = vmatpush2.msra.mxu0 0.0
      %498 = vmatprep.subr.mxu0 0.0
      %499 = vmatpush2.msra.mxu0 0.0
      %500 = vmatprep.subr.mxu0 0.0
      %501 = vmatpush2.msra.mxu0 0.0
      %502 = vmatprep.subr.mxu0 0.0
      %503 = vmatpush2.msra.mxu0 0.0
      %504 = vmatprep.subr.mxu0 0.0
      %505 = vmatpush2.msra.mxu0 0.0
      %506 = vmatprep.subr.mxu0 0.0
      %507 = vmatpush2.msra.mxu0 0.0
      %508 = vmatprep.subr.mxu0 0.0
      %509 = vmatpush2.msra.mxu0 0.0
      %510 = vmatprep.subr.mxu0 0.0
      %511 = vmatpush2.msra.mxu0 0.0
      %512 = vmatprep.mubr.f32.mxu0 0.0
      %513 = vmatmul.mubr.f32.gmra.mxu0 %v225
      %v514 = vpop.f32.mrf.mxu0
      %v515 = vadd.f32 %v437, %v514
      %v516 = vpop.f32.mrf.mxu0
      %517 = vmatprep.mubr.f32.mxu0 0.0
      %518 = vmatmul.mubr.f32.gmra.mxu0 %v226
      %v519 = vpop.f32.mrf.mxu0
      %v520 = vadd.f32 %v438, %v519
      %v521 = vpop.f32.mrf.mxu0
      %522 = vdwg.mxu0
      %v523 = vadd.f32 %v515, %v446
      %v524 = vadd.f32 %v520, %v447
      %v525 = vld [vmem:[%s211] sm:$0x1]
      %v527 = vlaneseq
      %v528 = vshrl.u32 %v527, 7
      %v529 = vsub.s32 0, %v528
      %v530 = vrot.slane %v525, %v529
      %v532 = vadd.f32 %v523, %v530
      %v533 = vadd.f32 %v524, %v530
      %v534 = vadd.f32 %v532, %v225
      %v535 = vadd.f32 %v533, %v226
      %v536 = vmax.f32 %v534, 0.0
      %v537 = vmax.f32 %v535, 0.0
      %538 = vst [vmem:[#allocation2] sm:$0xff] %v536
      %539 = vst [vmem:[#allocation2 + $0x8] sm:$0xff] %v537
      %p540 = scmp.eq.s32.totalorder %s19, 1
      // Predicated region
      $region37: #{hourglass_forward.7} parent=31 // pred_check
        %p541 = pneg %p540
      $region38: #{hourglass_forward.7} parent=31 // pred_check_branch
        %543 = sbr.rel (%p541) target = $region40
      $region39: #{hourglass_forward.7} parent=31 // pred_region
        %544 = vst [vmem:[%s216] sm:$0xff] %v536
        %545 = vst [vmem:[%s216 + $0x8] sm:$0xff] %v537
      $region40: #{hourglass_forward.7} parent=31 // pred_fallthru
        _
      %p546 = scmp.lt.s32.totalorder %s18, 1
      %s547 = scalar_select %p546, %s18, 1
      %s548 = smul.addr %s547, 2
      %s549 = smul.addr %s548, 8
      %s550 = scalar_lea.vmem %s3, %s549
      // Predicated region
      $region41: #{hourglass_forward.7} parent=31 // pred_check
        %p551 = pneg %p122
      $region42: #{hourglass_forward.7} parent=31 // pred_check_branch
        %553 = sbr.rel (%p551) target = $region44
      $region43: #{hourglass_forward.7} parent=31 // pred_region
        _
      $region44: #{hourglass_forward.7} parent=31 // pred_fallthru
        _
    $region32: #{hourglass_forward.7} parent=5 // pred_fallthru
      _
    %p554 = scmp.le.s32.totalorder 2, %s9
    // Predicated region
    $region45: #{hourglass_forward.7} parent=5 // pred_check
      %p555 = pneg %p554
    $region46: #{hourglass_forward.7} parent=5 // pred_check_branch
      %557 = sbr.rel (%p555) target = $region48
    $region47: #{hourglass_forward.7} parent=5 // pred_region
      %s558 = ssub.s32 %s9, 2
      // Predicated region
      $region49: #{hourglass_forward.7} parent=47 // pred_check
        %p559 = pneg %p128
      $region50: #{hourglass_forward.7} parent=47 // pred_check_branch
        %561 = sbr.rel (%p559) target = $region52
      $region51: #{hourglass_forward.7} parent=47 // pred_region
        %p562 = scmp.lt.s32.totalorder %s20, 1
        %s563 = scalar_select %p562, %s20, 1
        %s564 = smul.addr %s563, 2
        %s565 = smul.addr %s564, 8
        %s566 = scalar_lea.vmem %s3, %s565
      $region52: #{hourglass_forward.7} parent=47 // pred_fallthru
        _
    $region48: #{hourglass_forward.7} parent=5 // pred_fallthru
      _
  $region6: #{hourglass_forward.7} parent=0 // loop_footer
    %s13 = sadd.s32 1, %s9
  $region7: #{hourglass_forward.7} parent=0 // loop_footer_branch
    %8 = sbr.rel target = $region3
  $region8: #{hourglass_forward.7} parent=0 // loop_exit
    _

// kernel: hourglass_forward.12
$region0: #{hourglass_forward.12}
  #allocation0 [shape = 'u32[]', space=smem, size = 0x4, offset = 0x4, fixed_abs, tag = 'smem constant byte address 0x4 - core index']
  #allocation1 [shape = 'u32[144,128]{1,0:T(1,128)}', space=vmem, size = 0x12000, scoped, tag = 'internal scratch']
  #allocation2 [shape = 'f32[4,32]{1,0:T(4,128)}', space=vmem, size = 0x800, scoped, tag = 'scratch operand']
  %s0 = inlined_call_operand.vmem [shape: f32[2,4,32], index: 0, kind: input, shape index: {}]
  %s1 = inlined_call_operand.vmem [shape: f32[2,8,64], index: 1, kind: input, shape index: {}]
  %s2 = inlined_call_operand.vmem [shape: f32[8,4], index: 2, kind: input, shape index: {}]
  %s3 = inlined_call_operand.vmem [shape: f32[32,64], index: 3, kind: input, shape index: {}]
  %s4 = inlined_call_operand.vmem [shape: f32[2,3,32,32], index: 4, kind: input, shape index: {}]
  %s5 = inlined_call_operand.vmem [shape: f32[2,1,32], index: 5, kind: input, shape index: {}]
  %s6 = inlined_call_operand.vmem [shape: f32[2,8,64], index: 6, kind: output, shape index: {}]
  %s7 = sld [smem:[#allocation0]]
  $region65: #{hourglass_forward.12} parent=0
    _
  %s9 = ssub.s32 1, %s7
  %s10 = scalar_select 0, %s9, %s7
  loop: start=0, step=1, limit=6
  $region2: #{hourglass_forward.12} parent=0 // loop_pre_header
    _
  $region3: #{hourglass_forward.12} parent=0 // loop_header
    %s12 = sphi 0, %s16
    %p13 = scmp.ge.s32.totalorder %s12, 6
    %s19 = sphi 0, %s31
    %s20 = sphi 0, %s27
    %s21 = sphi 0, %s19
    %s22 = sphi 0, %s20
    %s23 = sphi 0, %s21
    %s24 = sphi 0, %s22
    %s34 = sphi 0, %s36
    %s37 = sphi 0, %s34
    %s38 = sphi 0, %s37
    %s54 = sphi 0, %s38
    %s60 = sphi 0, %s62
    %s63 = sphi 0, %s60
    %s64 = sphi 0, %s63
    %s80 = sphi 0, %s64
    %s84 = sphi 0, %s84
    %s86 = sphi 0, %s84
    %s87 = sphi 0, %s86
    %s101 = sphi 0, %s87
    %s105 = sphi 0, %s105
    %s107 = sphi 0, %s105
    %s108 = sphi 0, %s107
    %s122 = sphi 0, %s108
    %s128 = sphi 0, %s130
    %s131 = sphi 0, %s128
    %s132 = sphi 0, %s131
    %s148 = sphi 0, %s132
    %s154 = sphi 0, %s156
    %s157 = sphi 0, %s154
    %s158 = sphi 0, %s157
    %s174 = sphi 0, %s158
    %s180 = sphi 0, %s182
    %s183 = sphi 0, %s180
    %s184 = sphi 0, %s183
    %s200 = sphi 0, %s184
  $region4: #{hourglass_forward.12} parent=0 // loop_header_branch
    %15 = sbr.rel (%p13) target = $region8
  $region5: #{hourglass_forward.12} parent=0 // loop_body
    %s17 = ssub.s32 %s12, 1
    %s18 = ssub.s32 %s12, 2
    %s25 = sadd.s32 1, %s20
    %p26 = scmp.ge.s32.totalorder %s25, 2
    %s27 = scalar_select %p26, 0, %s25
    %s28 = sadd.s32 1, %s19
    %s29 = scalar_select %p26, %s28, %s19
    %p30 = scmp.ge.s32.totalorder %s29, 2
    %s31 = scalar_select %p30, 0, %s29
    %s32 = ssub.s32 %s19, %s31
    %p33 = scmp.eq.s32.totalorder %s32, 0
    %s35 = sadd.s32 %s34, 1
    %s36 = scalar_select %p33, %s34, %s35
    %p39 = pneg %p33
    %p40 = scmp.eq.s32.totalorder %s12, 3
    %p41 = por %p39, %p40
    %p42 = scmp.ne.s32.totalorder %s34, %s37
    %p43 = scmp.eq.s32.totalorder %s12, 0
    %p44 = por %p42, %p43
    %p45 = scmp.ne.s32.totalorder %s34, %s37
    %p46 = scmp.eq.s32.totalorder %s17, 3
    %p47 = por %p45, %p46
    %p48 = scmp.ne.s32.totalorder %s37, %s38
    %p49 = scmp.eq.s32.totalorder %s17, 0
    %p50 = por %p48, %p49
    %p51 = scmp.ne.s32.totalorder %s37, %s38
    %p52 = scmp.eq.s32.totalorder %s18, 3
    %p53 = por %p51, %p52
    %p55 = scmp.ne.s32.totalorder %s38, %s54
    %p56 = scmp.eq.s32.totalorder %s18, 0
    %p57 = por %p55, %p56
    %s58 = ssub.s32 %s19, %s31
    %p59 = scmp.eq.s32.totalorder %s58, 0
    %s61 = sadd.s32 %s60, 1
    %s62 = scalar_select %p59, %s60, %s61
    %p65 = pneg %p59
    %p66 = scmp.eq.s32.totalorder %s12, 3
    %p67 = por %p65, %p66
    %p68 = scmp.ne.s32.totalorder %s60, %s63
    %p69 = scmp.eq.s32.totalorder %s12, 0
    %p70 = por %p68, %p69
    %p71 = scmp.ne.s32.totalorder %s60, %s63
    %p72 = scmp.eq.s32.totalorder %s17, 3
    %p73 = por %p71, %p72
    %p74 = scmp.ne.s32.totalorder %s63, %s64
    %p75 = scmp.eq.s32.totalorder %s17, 0
    %p76 = por %p74, %p75
    %p77 = scmp.ne.s32.totalorder %s63, %s64
    %p78 = scmp.eq.s32.totalorder %s18, 3
    %p79 = por %p77, %p78
    %p81 = scmp.ne.s32.totalorder %s64, %s80
    %p82 = scmp.eq.s32.totalorder %s18, 0
    %p83 = por %p81, %p82
    %s85 = sadd.s32 %s84, 1
    %p88 = scmp.eq.s32.totalorder %s12, 3
    %p89 = scmp.ne.s32.totalorder %s84, %s86
    %p90 = scmp.eq.s32.totalorder %s12, 0
    %p91 = por %p89, %p90
    %p92 = scmp.ne.s32.totalorder %s84, %s86
    %p93 = scmp.eq.s32.totalorder %s17, 3
    %p94 = por %p92, %p93
    %p95 = scmp.ne.s32.totalorder %s86, %s87
    %p96 = scmp.eq.s32.totalorder %s17, 0
    %p97 = por %p95, %p96
    %p98 = scmp.ne.s32.totalorder %s86, %s87
    %p99 = scmp.eq.s32.totalorder %s18, 3
    %p100 = por %p98, %p99
    %p102 = scmp.ne.s32.totalorder %s87, %s101
    %p103 = scmp.eq.s32.totalorder %s18, 0
    %p104 = por %p102, %p103
    %s106 = sadd.s32 %s105, 1
    %p109 = scmp.eq.s32.totalorder %s12, 3
    %p110 = scmp.ne.s32.totalorder %s105, %s107
    %p111 = scmp.eq.s32.totalorder %s12, 0
    %p112 = por %p110, %p111
    %p113 = scmp.ne.s32.totalorder %s105, %s107
    %p114 = scmp.eq.s32.totalorder %s17, 3
    %p115 = por %p113, %p114
    %p116 = scmp.ne.s32.totalorder %s107, %s108
    %p117 = scmp.eq.s32.totalorder %s17, 0
    %p118 = por %p116, %p117
    %p119 = scmp.ne.s32.totalorder %s107, %s108
    %p120 = scmp.eq.s32.totalorder %s18, 3
    %p121 = por %p119, %p120
    %p123 = scmp.ne.s32.totalorder %s108, %s122
    %p124 = scmp.eq.s32.totalorder %s18, 0
    %p125 = por %p123, %p124
    %s126 = ssub.s32 %s20, %s27
    %p127 = scmp.eq.s32.totalorder %s126, 0
    %s129 = sadd.s32 %s128, 1
    %s130 = scalar_select %p127, %s128, %s129
    %p133 = pneg %p127
    %p134 = scmp.eq.s32.totalorder %s12, 3
    %p135 = por %p133, %p134
    %p136 = scmp.ne.s32.totalorder %s128, %s131
    %p137 = scmp.eq.s32.totalorder %s12, 0
    %p138 = por %p136, %p137
    %p139 = scmp.ne.s32.totalorder %s128, %s131
    %p140 = scmp.eq.s32.totalorder %s17, 3
    %p141 = por %p139, %p140
    %p142 = scmp.ne.s32.totalorder %s131, %s132
    %p143 = scmp.eq.s32.totalorder %s17, 0
    %p144 = por %p142, %p143
    %p145 = scmp.ne.s32.totalorder %s131, %s132
    %p146 = scmp.eq.s32.totalorder %s18, 3
    %p147 = por %p145, %p146
    %p149 = scmp.ne.s32.totalorder %s132, %s148
    %p150 = scmp.eq.s32.totalorder %s18, 0
    %p151 = por %p149, %p150
    %s152 = ssub.s32 %s20, %s27
    %p153 = scmp.eq.s32.totalorder %s152, 0
    %s155 = sadd.s32 %s154, 1
    %s156 = scalar_select %p153, %s154, %s155
    %p159 = pneg %p153
    %p160 = scmp.eq.s32.totalorder %s12, 3
    %p161 = por %p159, %p160
    %p162 = scmp.ne.s32.totalorder %s154, %s157
    %p163 = scmp.eq.s32.totalorder %s12, 0
    %p164 = por %p162, %p163
    %p165 = scmp.ne.s32.totalorder %s154, %s157
    %p166 = scmp.eq.s32.totalorder %s17, 3
    %p167 = por %p165, %p166
    %p168 = scmp.ne.s32.totalorder %s157, %s158
    %p169 = scmp.eq.s32.totalorder %s17, 0
    %p170 = por %p168, %p169
    %p171 = scmp.ne.s32.totalorder %s157, %s158
    %p172 = scmp.eq.s32.totalorder %s18, 3
    %p173 = por %p171, %p172
    %p175 = scmp.ne.s32.totalorder %s158, %s174
    %p176 = scmp.eq.s32.totalorder %s18, 0
    %p177 = por %p175, %p176
    %s178 = ssub.s32 %s19, %s31
    %p179 = scmp.eq.s32.totalorder %s178, 0
    %s181 = sadd.s32 %s180, 1
    %s182 = scalar_select %p179, %s180, %s181
    %p185 = pneg %p179
    %p186 = scmp.eq.s32.totalorder %s12, 3
    %p187 = por %p185, %p186
    %p188 = scmp.ne.s32.totalorder %s180, %s183
    %p189 = scmp.eq.s32.totalorder %s12, 0
    %p190 = por %p188, %p189
    %p191 = scmp.ne.s32.totalorder %s180, %s183
    %p192 = scmp.eq.s32.totalorder %s17, 3
    %p193 = por %p191, %p192
    %p194 = scmp.ne.s32.totalorder %s183, %s184
    %p195 = scmp.eq.s32.totalorder %s17, 0
    %p196 = por %p194, %p195
    %p197 = scmp.ne.s32.totalorder %s183, %s184
    %p198 = scmp.eq.s32.totalorder %s18, 3
    %p199 = por %p197, %p198
    %p201 = scmp.ne.s32.totalorder %s184, %s200
    %p202 = scmp.eq.s32.totalorder %s18, 0
    %p203 = por %p201, %p202
    %p204 = scmp.le.s32.totalorder 1, %s12
    %p205 = scmp.lt.s32.totalorder %s12, 5
    %p206 = pnand %p204, %p205
    %p207 = pneg %p206
    // Predicated region
    $region9: #{hourglass_forward.12} parent=5 // pred_check
      _
    $region10: #{hourglass_forward.12} parent=5 // pred_check_branch
      %209 = sbr.rel (%p206) target = $region12
    $region11: #{hourglass_forward.12} parent=5 // pred_region
      %s210 = ssub.s32 %s12, 1
      // Predicated region
      $region13: #{hourglass_forward.12} parent=11 // pred_check
        %p211 = pneg %p97
      $region14: #{hourglass_forward.12} parent=11 // pred_check_branch
        %213 = sbr.rel (%p211) target = $region16
      $region15: #{hourglass_forward.12} parent=11 // pred_region
        _
      $region16: #{hourglass_forward.12} parent=11 // pred_fallthru
        _
      // Predicated region
      $region17: #{hourglass_forward.12} parent=11 // pred_check
        %p214 = pneg %p118
      $region18: #{hourglass_forward.12} parent=11 // pred_check_branch
        %216 = sbr.rel (%p214) target = $region20
      $region19: #{hourglass_forward.12} parent=11 // pred_region
        _
      $region20: #{hourglass_forward.12} parent=11 // pred_fallthru
        _
    $region12: #{hourglass_forward.12} parent=5 // pred_fallthru
      _
    %p217 = scmp.lt.s32.totalorder %s12, 4
    // Predicated region
    $region21: #{hourglass_forward.12} parent=5 // pred_check
      %p218 = pneg %p217
    $region22: #{hourglass_forward.12} parent=5 // pred_check_branch
      %220 = sbr.rel (%p218) target = $region24
    $region23: #{hourglass_forward.12} parent=5 // pred_region
      // Predicated region
      $region25: #{hourglass_forward.12} parent=23 // pred_check
        %p221 = pneg %p44
      $region26: #{hourglass_forward.12} parent=23 // pred_check_branch
        %223 = sbr.rel (%p221) target = $region28
      $region27: #{hourglass_forward.12} parent=23 // pred_region
        %p224 = scmp.lt.s32.totalorder %s19, 1
        %s225 = scalar_select %p224, %s19, 1
        %s226 = smul.addr %s225, 4
        %s227 = scalar_lea.vmem %s0, %s226
      $region28: #{hourglass_forward.12} parent=23 // pred_fallthru
        _
      // Predicated region
      $region29: #{hourglass_forward.12} parent=23 // pred_check
        %p228 = pneg %p70
      $region30: #{hourglass_forward.12} parent=23 // pred_check_branch
        %230 = sbr.rel (%p228) target = $region32
      $region31: #{hourglass_forward.12} parent=23 // pred_region
        %p231 = scmp.lt.s32.totalorder %s19, 1
        %s232 = scalar_select %p231, %s19, 1
        %s233 = smul.addr %s232, 8
        %s234 = scalar_lea.vmem %s1, %s233
      $region32: #{hourglass_forward.12} parent=23 // pred_fallthru
        _
      // Predicated region
      $region33: #{hourglass_forward.12} parent=23 // pred_check
        %p235 = pneg %p138
      $region34: #{hourglass_forward.12} parent=23 // pred_check_branch
        %237 = sbr.rel (%p235) target = $region36
      $region35: #{hourglass_forward.12} parent=23 // pred_region
        %p238 = scmp.lt.s32.totalorder %s20, 1
        %s239 = scalar_select %p238, %s20, 1
        %s240 = smul.addr %s239, 12
        %s241 = smul.addr %s240, 8
        %s242 = scalar_lea.vmem %s4, %s241
      $region36: #{hourglass_forward.12} parent=23 // pred_fallthru
        _
      // Predicated region
      $region37: #{hourglass_forward.12} parent=23 // pred_check
        %p243 = pneg %p164
      $region38: #{hourglass_forward.12} parent=23 // pred_check_branch
        %245 = sbr.rel (%p243) target = $region40
      $region39: #{hourglass_forward.12} parent=23 // pred_region
        %p246 = scmp.lt.s32.totalorder %s20, 1
        %s247 = scalar_select %p246, %s20, 1
        %s248 = scalar_lea.vmem %s5, %s247
      $region40: #{hourglass_forward.12} parent=23 // pred_fallthru
        _
    $region24: #{hourglass_forward.12} parent=5 // pred_fallthru
      _
    %p249 = scmp.le.s32.totalorder 1, %s12
    %p250 = scmp.lt.s32.totalorder %s12, 5
    %p251 = pnand %p249, %p250
    %p252 = pneg %p251
    // Predicated region
    $region41: #{hourglass_forward.12} parent=5 // pred_check
      _
    $region42: #{hourglass_forward.12} parent=5 // pred_check_branch
      %254 = sbr.rel (%p251) target = $region44
    $region43: #{hourglass_forward.12} parent=5 // pred_region
      %s255 = ssub.s32 %s12, 1
      %p256 = scmp.lt.s32.totalorder %s21, 1
      %s257 = scalar_select %p256, %s21, 1
      %s258 = smul.addr %s257, 4
      %s259 = scalar_lea.vmem %s0, %s258
      %p260 = pneg %p50
      %p261 = pneg %p47
      %p262 = scmp.lt.s32.totalorder %s21, 1
      %s263 = scalar_select %p262, %s21, 1
      %s264 = smul.addr %s263, 8
      %s265 = scalar_lea.vmem %s1, %s264
      %p266 = pneg %p76
      %p267 = pneg %p73
      %p268 = pneg %p97
      %p269 = pneg %p94
      %p270 = pneg %p118
      %p271 = pneg %p115
      %p272 = scmp.lt.s32.totalorder %s22, 1
      %s273 = scalar_select %p272, %s22, 1
      %s274 = smul.addr %s273, 12
      %s275 = smul.addr %s274, 8
      %s276 = scalar_lea.vmem %s4, %s275
      %p277 = pneg %p144
      %p278 = pneg %p141
      %p279 = scmp.lt.s32.totalorder %s22, 1
      %s280 = scalar_select %p279, %s22, 1
      %s281 = scalar_lea.vmem %s5, %s280
      %p282 = pneg %p170
      %p283 = pneg %p167
      %p284 = pneg %p196
      %p285 = pneg %p193
      %p286 = scmp.lt.s32.totalorder %s21, 1
      %s287 = scalar_select %p286, %s21, 1
      %s288 = smul.addr %s287, 8
      %s289 = scalar_lea.vmem %s6, %s288
      %p290 = scmp.lt.s32.totalorder %s21, 1
      %s291 = scalar_select %p290, %s21, 1
      %s292 = smul.addr %s291, 4
      %s293 = scalar_lea.vmem %s0, %s292
      %p294 = scmp.lt.s32.totalorder %s21, 1
      %s295 = scalar_select %p294, %s21, 1
      %s296 = smul.addr %s295, 8
      %s297 = scalar_lea.vmem %s1, %s296
      %p298 = scmp.lt.s32.totalorder %s22, 1
      %s299 = scalar_select %p298, %s22, 1
      %s300 = smul.addr %s299, 12
      %s301 = smul.addr %s300, 8
      %s302 = scalar_lea.vmem %s4, %s301
      %p303 = scmp.lt.s32.totalorder %s22, 1
      %s304 = scalar_select %p303, %s22, 1
      %s305 = scalar_lea.vmem %s5, %s304
      %p306 = scmp.lt.s32.totalorder %s21, 1
      %s307 = scalar_select %p306, %s21, 1
      %s308 = smul.addr %s307, 8
      %s309 = scalar_lea.vmem %s6, %s308
      %p310 = scmp.eq.s32.totalorder %s22, 0
      // Predicated region
      $region45: #{hourglass_forward.12} parent=43 // pred_check
        %p311 = pneg %p310
      $region46: #{hourglass_forward.12} parent=43 // pred_check_branch
        %313 = sbr.rel (%p311) target = $region48
      $region47: #{hourglass_forward.12} parent=43 // pred_region
        %v314 = vld [vmem:[%s293] sm:$0xf]
        %vm315 = vcmask 257024
        %316 = vst.msk [vmem:[#allocation2] sm:$0xf] %vm315, %v314
      $region48: #{hourglass_forward.12} parent=43 // pred_fallthru
        _
      %v317 = vld [vmem:[#allocation2] sm:$0xf]
      %s318 = scalar_lea.vmem %s302, 32
      %v319 = vld [vmem:[%s318] sm:$0xff]
      %v320 = vld [vmem:[%s318 + $0x8] sm:$0xff]
      %v321 = vld [vmem:[%s318 + $0x10] sm:$0xff]
      %v322 = vld [vmem:[%s318 + $0x18] sm:$0xff]
      %v323 = vld [vmem:[%s302] sm:$0xff]
      %v324 = vld [vmem:[%s302 + $0x8] sm:$0xff]
      %v325 = vld [vmem:[%s302 + $0x10] sm:$0xff]
      %v326 = vld [vmem:[%s302 + $0x18] sm:$0xff]
      %vm327 = vcmask 261120
      %v329 = vsel %vm327, %v317, 0
      %331 = vmatprep.subr.mxu0 0.0
      %332 = vmatpush1.msra.mxu0 0.0
      %333 = vmatprep.subr.mxu0 0.0
      %334 = vmatpush1.msra.mxu0 0.0
      %335 = vmatprep.subr.mxu0 0.0
      %336 = vmatpush1.msra.mxu0 0.0
      %337 = vmatprep.subr.mxu0 0.0
      %338 = vmatpush1.msra.mxu0 0.0
      %339 = vmatprep.subr.mxu0 0.0
      %340 = vmatpush1.msra.mxu0 0.0
      %341 = vmatprep.subr.mxu0 0.0
      %342 = vmatpush1.msra.mxu0 0.0
      %343 = vmatprep.subr.mxu0 0.0
      %344 = vmatpush1.msra.mxu0 0.0
      %345 = vmatprep.subr.mxu0 0.0
      %346 = vmatpush1.msra.mxu0 0.0
      %347 = vmatprep.subr.mxu0 0.0
      %348 = vmatpush1.msra.mxu0 0.0
      %349 = vmatprep.subr.mxu0 0.0
      %350 = vmatpush1.msra.mxu0 0.0
      %351 = vmatprep.subr.mxu0 0.0
      %352 = vmatpush1.msra.mxu0 0.0
      %353 = vmatprep.subr.mxu0 0.0
      %354 = vmatpush1.msra.mxu0 0.0
      %355 = vmatprep.subr.mxu0 0.0
      %356 = vmatpush1.msra.mxu0 %v326
      %357 = vmatprep.subr.mxu0 0.0
      %358 = vmatpush1.msra.mxu0 %v325
      %359 = vmatprep.subr.mxu0 0.0
      %360 = vmatpush1.msra.mxu0 %v324
      %361 = vmatprep.subr.mxu0 0.0
      %362 = vmatpush1.msra.mxu0 %v323
      %363 = vmatprep.subr.mxu0 0.0
      %364 = vmatpush2.msra.mxu0 0.0
      %365 = vmatprep.subr.mxu0 0.0
      %366 = vmatpush2.msra.mxu0 0.0
      %367 = vmatprep.subr.mxu0 0.0
      %368 = vmatpush2.msra.mxu0 0.0
      %369 = vmatprep.subr.mxu0 0.0
      %370 = vmatpush2.msra.mxu0 0.0
      %371 = vmatprep.subr.mxu0 0.0
      %372 = vmatpush2.msra.mxu0 0.0
      %373 = vmatprep.subr.mxu0 0.0
      %374 = vmatpush2.msra.mxu0 0.0
      %375 = vmatprep.subr.mxu0 0.0
      %376 = vmatpush2.msra.mxu0 0.0
      %377 = vmatprep.subr.mxu0 0.0
      %378 = vmatpush2.msra.mxu0 0.0
      %379 = vmatprep.subr.mxu0 0.0
      %380 = vmatpush2.msra.mxu0 0.0
      %381 = vmatprep.subr.mxu0 0.0
      %382 = vmatpush2.msra.mxu0 0.0
      %383 = vmatprep.subr.mxu0 0.0
      %384 = vmatpush2.msra.mxu0 0.0
      %385 = vmatprep.subr.mxu0 0.0
      %386 = vmatpush2.msra.mxu0 0.0
      %387 = vmatprep.subr.mxu0 0.0
      %388 = vmatpush2.msra.mxu0 0.0
      %389 = vmatprep.subr.mxu0 0.0
      %390 = vmatpush2.msra.mxu0 0.0
      %391 = vmatprep.subr.mxu0 0.0
      %392 = vmatpush2.msra.mxu0 0.0
      %393 = vmatprep.subr.mxu0 0.0
      %394 = vmatpush2.msra.mxu0 0.0
      %395 = vmatprep.mubr.f32.mxu0 0.0
      %396 = vmatmul.mubr.f32.gmra.mxu0 %v329
      %v397 = vpop.f32.mrf.mxu0
      %v398 = vadd.f32 0.0, %v397
      %v399 = vpop.f32.mrf.mxu0
      %400 = vdwg.mxu0
      %s401 = scalar_lea.vmem %s302, 64
      %v402 = vld [vmem:[%s401] sm:$0xff]
      %v403 = vld [vmem:[%s401 + $0x8] sm:$0xff]
      %v404 = vld [vmem:[%s401 + $0x10] sm:$0xff]
      %v405 = vld [vmem:[%s401 + $0x18] sm:$0xff]
      %406 = vmatprep.subr.mxu0 0.0
      %407 = vmatpush1.msra.mxu0 0.0
      %408 = vmatprep.subr.mxu0 0.0
      %409 = vmatpush1.msra.mxu0 0.0
      %410 = vmatprep.subr.mxu0 0.0
      %411 = vmatpush1.msra.mxu0 0.0
      %412 = vmatprep.subr.mxu0 0.0
      %413 = vmatpush1.msra.mxu0 0.0
      %414 = vmatprep.subr.mxu0 0.0
      %415 = vmatpush1.msra.mxu0 0.0
      %416 = vmatprep.subr.mxu0 0.0
      %417 = vmatpush1.msra.mxu0 0.0
      %418 = vmatprep.subr.mxu0 0.0
      %419 = vmatpush1.msra.mxu0 0.0
      %420 = vmatprep.subr.mxu0 0.0
      %421 = vmatpush1.msra.mxu0 0.0
      %422 = vmatprep.subr.mxu0 0.0
      %423 = vmatpush1.msra.mxu0 0.0
      %424 = vmatprep.subr.mxu0 0.0
      %425 = vmatpush1.msra.mxu0 0.0
      %426 = vmatprep.subr.mxu0 0.0
      %427 = vmatpush1.msra.mxu0 0.0
      %428 = vmatprep.subr.mxu0 0.0
      %429 = vmatpush1.msra.mxu0 0.0
      %430 = vmatprep.subr.mxu0 0.0
      %431 = vmatpush1.msra.mxu0 %v405
      %432 = vmatprep.subr.mxu0 0.0
      %433 = vmatpush1.msra.mxu0 %v404
      %434 = vmatprep.subr.mxu0 0.0
      %435 = vmatpush1.msra.mxu0 %v403
      %436 = vmatprep.subr.mxu0 0.0
      %437 = vmatpush1.msra.mxu0 %v402
      %438 = vmatprep.subr.mxu0 0.0
      %439 = vmatpush2.msra.mxu0 0.0
      %440 = vmatprep.subr.mxu0 0.0
      %441 = vmatpush2.msra.mxu0 0.0
      %442 = vmatprep.subr.mxu0 0.0
      %443 = vmatpush2.msra.mxu0 0.0
      %444 = vmatprep.subr.mxu0 0.0
      %445 = vmatpush2.msra.mxu0 0.0
      %446 = vmatprep.subr.mxu0 0.0
      %447 = vmatpush2.msra.mxu0 0.0
      %448 = vmatprep.subr.mxu0 0.0
      %449 = vmatpush2.msra.mxu0 0.0
      %450 = vmatprep.subr.mxu0 0.0
      %451 = vmatpush2.msra.mxu0 0.0
      %452 = vmatprep.subr.mxu0 0.0
      %453 = vmatpush2.msra.mxu0 0.0
      %454 = vmatprep.subr.mxu0 0.0
      %455 = vmatpush2.msra.mxu0 0.0
      %456 = vmatprep.subr.mxu0 0.0
      %457 = vmatpush2.msra.mxu0 0.0
      %458 = vmatprep.subr.mxu0 0.0
      %459 = vmatpush2.msra.mxu0 0.0
      %460 = vmatprep.subr.mxu0 0.0
      %461 = vmatpush2.msra.mxu0 0.0
      %462 = vmatprep.subr.mxu0 0.0
      %463 = vmatpush2.msra.mxu0 0.0
      %464 = vmatprep.subr.mxu0 0.0
      %465 = vmatpush2.msra.mxu0 0.0
      %466 = vmatprep.subr.mxu0 0.0
      %467 = vmatpush2.msra.mxu0 0.0
      %468 = vmatprep.subr.mxu0 0.0
      %469 = vmatpush2.msra.mxu0 0.0
      %470 = vmatprep.mubr.f32.mxu0 0.0
      %471 = vmatmul.mubr.f32.gmra.mxu0 %v329
      %v472 = vpop.f32.mrf.mxu0
      %v473 = vadd.f32 0.0, %v472
      %v474 = vpop.f32.mrf.mxu0
      %475 = vdwg.mxu0
      %v476 = vlaneseq
      %v477 = vshrl.u32 %v476, 7
      %v478 = vlaneseq
      %v479 = vand.u32 %v478, 127
      %v480 = vadd.s32 %v479, 1
      %vm481 = vcmp.eq.s32.totalorder %v477, %v480
      %v482 = vsel %vm481, 1, 0
      %v483 = vcvt.s32.f32 %v482
      %v484 = vadd.s32 %v477, 1
      %vm485 = vcmp.eq.s32.totalorder %v479, %v484
      %v486 = vsel %vm485, 1, 0
      %v487 = vcvt.s32.f32 %v486
      %vm488 = vcmask 31744
      %v490 = vsel %vm488, %v483, 0
      %vm492 = vcmask 1043456
      %v494 = vsel %vm492, %v398, 0
      %496 = vmatprep.subr.mxu0 0.0
      %497 = vmatpush1.msra.mxu0 0.0
      %498 = vmatprep.subr.mxu0 0.0
      %499 = vmatpush1.msra.mxu0 0.0
      %500 = vmatprep.subr.mxu0 0.0
      %501 = vmatpush1.msra.mxu0 0.0
      %502 = vmatprep.subr.mxu0 0.0
      %503 = vmatpush1.msra.mxu0 0.0
      %504 = vmatprep.subr.mxu0 0.0
      %505 = vmatpush1.msra.mxu0 0.0
      %506 = vmatprep.subr.mxu0 0.0
      %507 = vmatpush1.msra.mxu0 0.0
      %508 = vmatprep.subr.mxu0 0.0
      %509 = vmatpush1.msra.mxu0 0.0
      %510 = vmatprep.subr.mxu0 0.0
      %511 = vmatpush1.msra.mxu0 0.0
      %512 = vmatprep.subr.mxu0 0.0
      %513 = vmatpush1.msra.mxu0 0.0
      %514 = vmatprep.subr.mxu0 0.0
      %515 = vmatpush1.msra.mxu0 0.0
      %516 = vmatprep.subr.mxu0 0.0
      %517 = vmatpush1.msra.mxu0 0.0
      %518 = vmatprep.subr.mxu0 0.0
      %519 = vmatpush1.msra.mxu0 0.0
      %520 = vmatprep.subr.mxu0 0.0
      %521 = vmatpush1.msra.mxu0 0.0
      %522 = vmatprep.subr.mxu0 0.0
      %523 = vmatpush1.msra.mxu0 0.0
      %524 = vmatprep.subr.mxu0 0.0
      %525 = vmatpush1.msra.mxu0 0.0
      %526 = vmatprep.subr.mxu0 0.0
      %527 = vmatpush1.msra.mxu0 %v494
      %528 = vmatprep.subr.mxu0 0.0
      %529 = vmatpush2.msra.mxu0 0.0
      %530 = vmatprep.subr.mxu0 0.0
      %531 = vmatpush2.msra.mxu0 0.0
      %532 = vmatprep.subr.mxu0 0.0
      %533 = vmatpush2.msra.mxu0 0.0
      %534 = vmatprep.subr.mxu0 0.0
      %535 = vmatpush2.msra.mxu0 0.0
      %536 = vmatprep.subr.mxu0 0.0
      %537 = vmatpush2.msra.mxu0 0.0
      %538 = vmatprep.subr.mxu0 0.0
      %539 = vmatpush2.msra.mxu0 0.0
      %540 = vmatprep.subr.mxu0 0.0
      %541 = vmatpush2.msra.mxu0 0.0
      %542 = vmatprep.subr.mxu0 0.0
      %543 = vmatpush2.msra.mxu0 0.0
      %544 = vmatprep.subr.mxu0 0.0
      %545 = vmatpush2.msra.mxu0 0.0
      %546 = vmatprep.subr.mxu0 0.0
      %547 = vmatpush2.msra.mxu0 0.0
      %548 = vmatprep.subr.mxu0 0.0
      %549 = vmatpush2.msra.mxu0 0.0
      %550 = vmatprep.subr.mxu0 0.0
      %551 = vmatpush2.msra.mxu0 0.0
      %552 = vmatprep.subr.mxu0 0.0
      %553 = vmatpush2.msra.mxu0 0.0
      %554 = vmatprep.subr.mxu0 0.0
      %555 = vmatpush2.msra.mxu0 0.0
      %556 = vmatprep.subr.mxu0 0.0
      %557 = vmatpush2.msra.mxu0 0.0
      %558 = vmatprep.subr.mxu0 0.0
      %559 = vmatpush2.msra.mxu0 0.0
      %560 = vmatprep.mubr.f32.mxu0 0.0
      %561 = vmatmul.mubr.f32.gmra.mxu0 %v490
      %v562 = vpop.f32.mrf.mxu0
      %v563 = vadd.f32 0.0, %v562
      %v564 = vpop.f32.mrf.mxu0
      %565 = vdwg.mxu0
      %v567 = vsel %vm488, %v487, 0
      %v570 = vsel %vm492, %v473, 0
      %572 = vmatprep.subr.mxu0 0.0
      %573 = vmatpush1.msra.mxu0 0.0
      %574 = vmatprep.subr.mxu0 0.0
      %575 = vmatpush1.msra.mxu0 0.0
      %576 = vmatprep.subr.mxu0 0.0
      %577 = vmatpush1.msra.mxu0 0.0
      %578 = vmatprep.subr.mxu0 0.0
      %579 = vmatpush1.msra.mxu0 0.0
      %580 = vmatprep.subr.mxu0 0.0
      %581 = vmatpush1.msra.mxu0 0.0
      %582 = vmatprep.subr.mxu0 0.0
      %583 = vmatpush1.msra.mxu0 0.0
      %584 = vmatprep.subr.mxu0 0.0
      %585 = vmatpush1.msra.mxu0 0.0
      %586 = vmatprep.subr.mxu0 0.0
      %587 = vmatpush1.msra.mxu0 0.0
      %588 = vmatprep.subr.mxu0 0.0
      %589 = vmatpush1.msra.mxu0 0.0
      %590 = vmatprep.subr.mxu0 0.0
      %591 = vmatpush1.msra.mxu0 0.0
      %592 = vmatprep.subr.mxu0 0.0
      %593 = vmatpush1.msra.mxu0 0.0
      %594 = vmatprep.subr.mxu0 0.0
      %595 = vmatpush1.msra.mxu0 0.0
      %596 = vmatprep.subr.mxu0 0.0
      %597 = vmatpush1.msra.mxu0 0.0
      %598 = vmatprep.subr.mxu0 0.0
      %599 = vmatpush1.msra.mxu0 0.0
      %600 = vmatprep.subr.mxu0 0.0
      %601 = vmatpush1.msra.mxu0 0.0
      %602 = vmatprep.subr.mxu0 0.0
      %603 = vmatpush1.msra.mxu0 %v570
      %604 = vmatprep.subr.mxu0 0.0
      %605 = vmatpush2.msra.mxu0 0.0
      %606 = vmatprep.subr.mxu0 0.0
      %607 = vmatpush2.msra.mxu0 0.0
      %608 = vmatprep.subr.mxu0 0.0
      %609 = vmatpush2.msra.mxu0 0.0
      %610 = vmatprep.subr.mxu0 0.0
      %611 = vmatpush2.msra.mxu0 0.0
      %612 = vmatprep.subr.mxu0 0.0
      %613 = vmatpush2.msra.mxu0 0.0
      %614 = vmatprep.subr.mxu0 0.0
      %615 = vmatpush2.msra.mxu0 0.0
      %616 = vmatprep.subr.mxu0 0.0
      %617 = vmatpush2.msra.mxu0 0.0
      %618 = vmatprep.subr.mxu0 0.0
      %619 = vmatpush2.msra.mxu0 0.0
      %620 = vmatprep.subr.mxu0 0.0
      %621 = vmatpush2.msra.mxu0 0.0
      %622 = vmatprep.subr.mxu0 0.0
      %623 = vmatpush2.msra.mxu0 0.0
      %624 = vmatprep.subr.mxu0 0.0
      %625 = vmatpush2.msra.mxu0 0.0
      %626 = vmatprep.subr.mxu0 0.0
      %627 = vmatpush2.msra.mxu0 0.0
      %628 = vmatprep.subr.mxu0 0.0
      %629 = vmatpush2.msra.mxu0 0.0
      %630 = vmatprep.subr.mxu0 0.0
      %631 = vmatpush2.msra.mxu0 0.0
      %632 = vmatprep.subr.mxu0 0.0
      %633 = vmatpush2.msra.mxu0 0.0
      %634 = vmatprep.subr.mxu0 0.0
      %635 = vmatpush2.msra.mxu0 0.0
      %636 = vmatprep.mubr.f32.mxu0 0.0
      %637 = vmatmul.mubr.f32.gmra.mxu0 %v567
      %v638 = vpop.f32.mrf.mxu0
      %v639 = vadd.f32 0.0, %v638
      %v640 = vpop.f32.mrf.mxu0
      %641 = vdwg.mxu0
      %642 = vmatprep.subr.mxu0 0.0
      %643 = vmatpush1.msra.mxu0 0.0
      %644 = vmatprep.subr.mxu0 0.0
      %645 = vmatpush1.msra.mxu0 0.0
      %646 = vmatprep.subr.mxu0 0.0
      %647 = vmatpush1.msra.mxu0 0.0
      %648 = vmatprep.subr.mxu0 0.0
      %649 = vmatpush1.msra.mxu0 0.0
      %650 = vmatprep.subr.mxu0 0.0
      %651 = vmatpush1.msra.mxu0 0.0
      %652 = vmatprep.subr.mxu0 0.0
      %653 = vmatpush1.msra.mxu0 0.0
      %654 = vmatprep.subr.mxu0 0.0
      %655 = vmatpush1.msra.mxu0 0.0
      %656 = vmatprep.subr.mxu0 0.0
      %657 = vmatpush1.msra.mxu0 0.0
      %658 = vmatprep.subr.mxu0 0.0
      %659 = vmatpush1.msra.mxu0 0.0
      %660 = vmatprep.subr.mxu0 0.0
      %661 = vmatpush1.msra.mxu0 0.0
      %662 = vmatprep.subr.mxu0 0.0
      %663 = vmatpush1.msra.mxu0 0.0
      %664 = vmatprep.subr.mxu0 0.0
      %665 = vmatpush1.msra.mxu0 0.0
      %666 = vmatprep.subr.mxu0 0.0
      %667 = vmatpush1.msra.mxu0 %v322
      %668 = vmatprep.subr.mxu0 0.0
      %669 = vmatpush1.msra.mxu0 %v321
      %670 = vmatprep.subr.mxu0 0.0
      %671 = vmatpush1.msra.mxu0 %v320
      %672 = vmatprep.subr.mxu0 0.0
      %673 = vmatpush1.msra.mxu0 %v319
      %674 = vmatprep.subr.mxu0 0.0
      %675 = vmatpush2.msra.mxu0 0.0
      %676 = vmatprep.subr.mxu0 0.0
      %677 = vmatpush2.msra.mxu0 0.0
      %678 = vmatprep.subr.mxu0 0.0
      %679 = vmatpush2.msra.mxu0 0.0
      %680 = vmatprep.subr.mxu0 0.0
      %681 = vmatpush2.msra.mxu0 0.0
      %682 = vmatprep.subr.mxu0 0.0
      %683 = vmatpush2.msra.mxu0 0.0
      %684 = vmatprep.subr.mxu0 0.0
      %685 = vmatpush2.msra.mxu0 0.0
      %686 = vmatprep.subr.mxu0 0.0
      %687 = vmatpush2.msra.mxu0 0.0
      %688 = vmatprep.subr.mxu0 0.0
      %689 = vmatpush2.msra.mxu0 0.0
      %690 = vmatprep.subr.mxu0 0.0
      %691 = vmatpush2.msra.mxu0 0.0
      %692 = vmatprep.subr.mxu0 0.0
      %693 = vmatpush2.msra.mxu0 0.0
      %694 = vmatprep.subr.mxu0 0.0
      %695 = vmatpush2.msra.mxu0 0.0
      %696 = vmatprep.subr.mxu0 0.0
      %697 = vmatpush2.msra.mxu0 0.0
      %698 = vmatprep.subr.mxu0 0.0
      %699 = vmatpush2.msra.mxu0 0.0
      %700 = vmatprep.subr.mxu0 0.0
      %701 = vmatpush2.msra.mxu0 0.0
      %702 = vmatprep.subr.mxu0 0.0
      %703 = vmatpush2.msra.mxu0 0.0
      %704 = vmatprep.subr.mxu0 0.0
      %705 = vmatpush2.msra.mxu0 0.0
      %706 = vmatprep.mubr.f32.mxu0 0.0
      %707 = vmatmul.mubr.f32.gmra.mxu0 %v329
      %v708 = vpop.f32.mrf.mxu0
      %v709 = vadd.f32 %v563, %v708
      %v710 = vpop.f32.mrf.mxu0
      %711 = vdwg.mxu0
      %v712 = vadd.f32 %v709, %v639
      %v713 = vld [vmem:[%s305] sm:$0x1]
      %v715 = vlaneseq
      %v716 = vshrl.u32 %v715, 7
      %v717 = vsub.s32 0, %v716
      %v718 = vrot.slane %v713, %v717
      %v720 = vadd.f32 %v712, %v718
      %v721 = vadd.f32 %v720, %v317
      %v722 = vmax.f32 %v721, 0.0
      %vm723 = vcmask 257024
      %724 = vst.msk [vmem:[#allocation2] sm:$0xf] %vm723, %v722
      %p725 = scmp.eq.s32.totalorder %s22, 1
      // Predicated region
      $region49: #{hourglass_forward.12} parent=43 // pred_check
        %p726 = pneg %p725
      $region50: #{hourglass_forward.12} parent=43 // pred_check_branch
        %728 = sbr.rel (%p726) target = $region52
      $region51: #{hourglass_forward.12} parent=43 // pred_region
        %v729 = vld [vmem:[%s2] sm:$0xff]
        %v731 = vsel %vm488, %v729, 0
        %v734 = vsel %vm492, %v722, 0
        %736 = vmatprep.subr.mxu0 0.0
        %737 = vmatpush1.msra.mxu0 0.0
        %738 = vmatprep.subr.mxu0 0.0
        %739 = vmatpush1.msra.mxu0 0.0
        %740 = vmatprep.subr.mxu0 0.0
        %741 = vmatpush1.msra.mxu0 0.0
        %742 = vmatprep.subr.mxu0 0.0
        %743 = vmatpush1.msra.mxu0 0.0
        %744 = vmatprep.subr.mxu0 0.0
        %745 = vmatpush1.msra.mxu0 0.0
        %746 = vmatprep.subr.mxu0 0.0
        %747 = vmatpush1.msra.mxu0 0.0
        %748 = vmatprep.subr.mxu0 0.0
        %749 = vmatpush1.msra.mxu0 0.0
        %750 = vmatprep.subr.mxu0 0.0
        %751 = vmatpush1.msra.mxu0 0.0
        %752 = vmatprep.subr.mxu0 0.0
        %753 = vmatpush1.msra.mxu0 0.0
        %754 = vmatprep.subr.mxu0 0.0
        %755 = vmatpush1.msra.mxu0 0.0
        %756 = vmatprep.subr.mxu0 0.0
        %757 = vmatpush1.msra.mxu0 0.0
        %758 = vmatprep.subr.mxu0 0.0
        %759 = vmatpush1.msra.mxu0 0.0
        %760 = vmatprep.subr.mxu0 0.0
        %761 = vmatpush1.msra.mxu0 0.0
        %762 = vmatprep.subr.mxu0 0.0
        %763 = vmatpush1.msra.mxu0 0.0
        %764 = vmatprep.subr.mxu0 0.0
        %765 = vmatpush1.msra.mxu0 0.0
        %766 = vmatprep.subr.mxu0 0.0
        %767 = vmatpush1.msra.mxu0 %v734
        %768 = vmatprep.subr.mxu0 0.0
        %769 = vmatpush2.msra.mxu0 0.0
        %770 = vmatprep.subr.mxu0 0.0
        %771 = vmatpush2.msra.mxu0 0.0
        %772 = vmatprep.subr.mxu0 0.0
        %773 = vmatpush2.msra.mxu0 0.0
        %774 = vmatprep.subr.mxu0 0.0
        %775 = vmatpush2.msra.mxu0 0.0
        %776 = vmatprep.subr.mxu0 0.0
        %777 = vmatpush2.msra.mxu0 0.0
        %778 = vmatprep.subr.mxu0 0.0
        %779 = vmatpush2.msra.mxu0 0.0
        %780 = vmatprep.subr.mxu0 0.0
        %781 = vmatpush2.msra.mxu0 0.0
        %782 = vmatprep.subr.mxu0 0.0
        %783 = vmatpush2.msra.mxu0 0.0
        %784 = vmatprep.subr.mxu0 0.0
        %785 = vmatpush2.msra.mxu0 0.0
        %786 = vmatprep.subr.mxu0 0.0
        %787 = vmatpush2.msra.mxu0 0.0
        %788 = vmatprep.subr.mxu0 0.0
        %789 = vmatpush2.msra.mxu0 0.0
        %790 = vmatprep.subr.mxu0 0.0
        %791 = vmatpush2.msra.mxu0 0.0
        %792 = vmatprep.subr.mxu0 0.0
        %793 = vmatpush2.msra.mxu0 0.0
        %794 = vmatprep.subr.mxu0 0.0
        %795 = vmatpush2.msra.mxu0 0.0
        %796 = vmatprep.subr.mxu0 0.0
        %797 = vmatpush2.msra.mxu0 0.0
        %798 = vmatprep.subr.mxu0 0.0
        %799 = vmatpush2.msra.mxu0 0.0
        %800 = vmatprep.mubr.f32.mxu0 0.0
        %801 = vmatmul.mubr.f32.gmra.mxu0 %v731
        %v802 = vpop.f32.mrf.mxu0
        %v803 = vadd.f32 0.0, %v802
        %v804 = vpop.f32.mrf.mxu0
        %805 = vdwg.mxu0
        %v806 = vld [vmem:[%s3] sm:$0xff]
        %v807 = vld [vmem:[%s3 + $0x8] sm:$0xff]
        %v808 = vld [vmem:[%s3 + $0x10] sm:$0xff]
        %v809 = vld [vmem:[%s3 + $0x18] sm:$0xff]
        %v810 = vld [vmem:[%s297] sm:$0xff]
        %v812 = vsel %vm327, %v803, 0
        %814 = vmatprep.subr.mxu0 0.0
        %815 = vmatpush1.msra.mxu0 0.0
        %816 = vmatprep.subr.mxu0 0.0
        %817 = vmatpush1.msra.mxu0 0.0
        %818 = vmatprep.subr.mxu0 0.0
        %819 = vmatpush1.msra.mxu0 0.0
        %820 = vmatprep.subr.mxu0 0.0
        %821 = vmatpush1.msra.mxu0 0.0
        %822 = vmatprep.subr.mxu0 0.0
        %823 = vmatpush1.msra.mxu0 0.0
        %824 = vmatprep.subr.mxu0 0.0
        %825 = vmatpush1.msra.mxu0 0.0
        %826 = vmatprep.subr.mxu0 0.0
        %827 = vmatpush1.msra.mxu0 0.0
        %828 = vmatprep.subr.mxu0 0.0
        %829 = vmatpush1.msra.mxu0 0.0
        %830 = vmatprep.subr.mxu0 0.0
        %831 = vmatpush1.msra.mxu0 0.0
        %832 = vmatprep.subr.mxu0 0.0
        %833 = vmatpush1.msra.mxu0 0.0
        %834 = vmatprep.subr.mxu0 0.0
        %835 = vmatpush1.msra.mxu0 0.0
        %836 = vmatprep.subr.mxu0 0.0
        %837 = vmatpush1.msra.mxu0 0.0
        %838 = vmatprep.subr.mxu0 0.0
        %839 = vmatpush1.msra.mxu0 %v809
        %840 = vmatprep.subr.mxu0 0.0
        %841 = vmatpush1.msra.mxu0 %v808
        %842 = vmatprep.subr.mxu0 0.0
        %843 = vmatpush1.msra.mxu0 %v807
        %844 = vmatprep.subr.mxu0 0.0
        %845 = vmatpush1.msra.mxu0 %v806
        %846 = vmatprep.subr.mxu0 0.0
        %847 = vmatpush2.msra.mxu0 0.0
        %848 = vmatprep.subr.mxu0 0.0
        %849 = vmatpush2.msra.mxu0 0.0
        %850 = vmatprep.subr.mxu0 0.0
        %851 = vmatpush2.msra.mxu0 0.0
        %852 = vmatprep.subr.mxu0 0.0
        %853 = vmatpush2.msra.mxu0 0.0
        %854 = vmatprep.subr.mxu0 0.0
        %855 = vmatpush2.msra.mxu0 0.0
        %856 = vmatprep.subr.mxu0 0.0
        %857 = vmatpush2.msra.mxu0 0.0
        %858 = vmatprep.subr.mxu0 0.0
        %859 = vmatpush2.msra.mxu0 0.0
        %860 = vmatprep.subr.mxu0 0.0
        %861 = vmatpush2.msra.mxu0 0.0
        %862 = vmatprep.subr.mxu0 0.0
        %863 = vmatpush2.msra.mxu0 0.0
        %864 = vmatprep.subr.mxu0 0.0
        %865 = vmatpush2.msra.mxu0 0.0
        %866 = vmatprep.subr.mxu0 0.0
        %867 = vmatpush2.msra.mxu0 0.0
        %868 = vmatprep.subr.mxu0 0.0
        %869 = vmatpush2.msra.mxu0 0.0
        %870 = vmatprep.subr.mxu0 0.0
        %871 = vmatpush2.msra.mxu0 0.0
        %872 = vmatprep.subr.mxu0 0.0
        %873 = vmatpush2.msra.mxu0 0.0
        %874 = vmatprep.subr.mxu0 0.0
        %875 = vmatpush2.msra.mxu0 0.0
        %876 = vmatprep.subr.mxu0 0.0
        %877 = vmatpush2.msra.mxu0 0.0
        %878 = vmatprep.mubr.f32.mxu0 0.0
        %879 = vmatmul.mubr.f32.gmra.mxu0 %v812
        %v880 = vpop.f32.mrf.mxu0
        %v881 = vadd.f32 %v810, %v880
        %v882 = vpop.f32.mrf.mxu0
        %883 = vdwg.mxu0
        %vm884 = vcmask 523264
        %885 = vst.msk [vmem:[%s309] sm:$0xff] %vm884, %v881
      $region52: #{hourglass_forward.12} parent=43 // pred_fallthru
        _
      %p886 = scmp.lt.s32.totalorder %s21, 1
      %s887 = scalar_select %p886, %s21, 1
      %s888 = smul.addr %s887, 8
      %s889 = scalar_lea.vmem %s6, %s888
      // Predicated region
      $region53: #{hourglass_forward.12} parent=43 // pred_check
        %p890 = pneg %p193
      $region54: #{hourglass_forward.12} parent=43 // pred_check_branch
        %892 = sbr.rel (%p890) target = $region56
      $region55: #{hourglass_forward.12} parent=43 // pred_region
        _
      $region56: #{hourglass_forward.12} parent=43 // pred_fallthru
        _
    $region44: #{hourglass_forward.12} parent=5 // pred_fallthru
      _
    %p893 = scmp.le.s32.totalorder 2, %s12
    // Predicated region
    $region57: #{hourglass_forward.12} parent=5 // pred_check
      %p894 = pneg %p893
    $region58: #{hourglass_forward.12} parent=5 // pred_check_branch
      %896 = sbr.rel (%p894) target = $region60
    $region59: #{hourglass_forward.12} parent=5 // pred_region
      %s897 = ssub.s32 %s12, 2
      // Predicated region
      $region61: #{hourglass_forward.12} parent=59 // pred_check
        %p898 = pneg %p199
      $region62: #{hourglass_forward.12} parent=59 // pred_check_branch
        %900 = sbr.rel (%p898) target = $region64
      $region63: #{hourglass_forward.12} parent=59 // pred_region
        %p901 = scmp.lt.s32.totalorder %s23, 1
        %s902 = scalar_select %p901, %s23, 1
        %s903 = smul.addr %s902, 8
        %s904 = scalar_lea.vmem %s6, %s903
      $region64: #{hourglass_forward.12} parent=59 // pred_fallthru
        _
    $region60: #{hourglass_forward.12} parent=5 // pred_fallthru
      _
  $region6: #{hourglass_forward.12} parent=0 // loop_footer
    %s16 = sadd.s32 1, %s12
  $region7: #{hourglass_forward.12} parent=0 // loop_footer_branch
    %11 = sbr.rel target = $region3
  $region8: #{hourglass_forward.12} parent=0 // loop_exit
    _

// kernel: hourglass_forward.13
$region0: #{hourglass_forward.13}
  #allocation0 [shape = 'u32[]', space=smem, size = 0x4, offset = 0x4, fixed_abs, tag = 'smem constant byte address 0x4 - core index']
  #allocation1 [shape = 'u32[144,128]{1,0:T(1,128)}', space=vmem, size = 0x12000, scoped, tag = 'internal scratch']
  #allocation2 [shape = 'f32[8,64]{1,0:T(8,128)}', space=vmem, size = 0x1000, scoped, tag = 'scratch operand']
  %s0 = inlined_call_operand.vmem [shape: f32[2,8,64], index: 0, kind: input, shape index: {}]
  %s1 = inlined_call_operand.vmem [shape: f32[2,16,128], index: 1, kind: input, shape index: {}]
  %s2 = inlined_call_operand.vmem [shape: f32[16,8], index: 2, kind: input, shape index: {}]
  %s3 = inlined_call_operand.vmem [shape: f32[64,128], index: 3, kind: input, shape index: {}]
  %s4 = inlined_call_operand.vmem [shape: f32[2,3,64,64], index: 4, kind: input, shape index: {}]
  %s5 = inlined_call_operand.vmem [shape: f32[2,1,64], index: 5, kind: input, shape index: {}]
  %s6 = inlined_call_operand.vmem [shape: f32[2,16,128], index: 6, kind: output, shape index: {}]
  %s7 = sld [smem:[#allocation0]]
  $region65: #{hourglass_forward.13} parent=0
    _
  %s9 = ssub.s32 1, %s7
  %s10 = scalar_select 0, %s9, %s7
  loop: start=0, step=1, limit=6
  $region2: #{hourglass_forward.13} parent=0 // loop_pre_header
    _
  $region3: #{hourglass_forward.13} parent=0 // loop_header
    %s12 = sphi 0, %s16
    %p13 = scmp.ge.s32.totalorder %s12, 6
    %s19 = sphi 0, %s31
    %s20 = sphi 0, %s27
    %s21 = sphi 0, %s19
    %s22 = sphi 0, %s20
    %s23 = sphi 0, %s21
    %s24 = sphi 0, %s22
    %s34 = sphi 0, %s36
    %s37 = sphi 0, %s34
    %s38 = sphi 0, %s37
    %s54 = sphi 0, %s38
    %s60 = sphi 0, %s62
    %s63 = sphi 0, %s60
    %s64 = sphi 0, %s63
    %s80 = sphi 0, %s64
    %s84 = sphi 0, %s84
    %s86 = sphi 0, %s84
    %s87 = sphi 0, %s86
    %s101 = sphi 0, %s87
    %s105 = sphi 0, %s105
    %s107 = sphi 0, %s105
    %s108 = sphi 0, %s107
    %s122 = sphi 0, %s108
    %s128 = sphi 0, %s130
    %s131 = sphi 0, %s128
    %s132 = sphi 0, %s131
    %s148 = sphi 0, %s132
    %s154 = sphi 0, %s156
    %s157 = sphi 0, %s154
    %s158 = sphi 0, %s157
    %s174 = sphi 0, %s158
    %s180 = sphi 0, %s182
    %s183 = sphi 0, %s180
    %s184 = sphi 0, %s183
    %s200 = sphi 0, %s184
  $region4: #{hourglass_forward.13} parent=0 // loop_header_branch
    %15 = sbr.rel (%p13) target = $region8
  $region5: #{hourglass_forward.13} parent=0 // loop_body
    %s17 = ssub.s32 %s12, 1
    %s18 = ssub.s32 %s12, 2
    %s25 = sadd.s32 1, %s20
    %p26 = scmp.ge.s32.totalorder %s25, 2
    %s27 = scalar_select %p26, 0, %s25
    %s28 = sadd.s32 1, %s19
    %s29 = scalar_select %p26, %s28, %s19
    %p30 = scmp.ge.s32.totalorder %s29, 2
    %s31 = scalar_select %p30, 0, %s29
    %s32 = ssub.s32 %s19, %s31
    %p33 = scmp.eq.s32.totalorder %s32, 0
    %s35 = sadd.s32 %s34, 1
    %s36 = scalar_select %p33, %s34, %s35
    %p39 = pneg %p33
    %p40 = scmp.eq.s32.totalorder %s12, 3
    %p41 = por %p39, %p40
    %p42 = scmp.ne.s32.totalorder %s34, %s37
    %p43 = scmp.eq.s32.totalorder %s12, 0
    %p44 = por %p42, %p43
    %p45 = scmp.ne.s32.totalorder %s34, %s37
    %p46 = scmp.eq.s32.totalorder %s17, 3
    %p47 = por %p45, %p46
    %p48 = scmp.ne.s32.totalorder %s37, %s38
    %p49 = scmp.eq.s32.totalorder %s17, 0
    %p50 = por %p48, %p49
    %p51 = scmp.ne.s32.totalorder %s37, %s38
    %p52 = scmp.eq.s32.totalorder %s18, 3
    %p53 = por %p51, %p52
    %p55 = scmp.ne.s32.totalorder %s38, %s54
    %p56 = scmp.eq.s32.totalorder %s18, 0
    %p57 = por %p55, %p56
    %s58 = ssub.s32 %s19, %s31
    %p59 = scmp.eq.s32.totalorder %s58, 0
    %s61 = sadd.s32 %s60, 1
    %s62 = scalar_select %p59, %s60, %s61
    %p65 = pneg %p59
    %p66 = scmp.eq.s32.totalorder %s12, 3
    %p67 = por %p65, %p66
    %p68 = scmp.ne.s32.totalorder %s60, %s63
    %p69 = scmp.eq.s32.totalorder %s12, 0
    %p70 = por %p68, %p69
    %p71 = scmp.ne.s32.totalorder %s60, %s63
    %p72 = scmp.eq.s32.totalorder %s17, 3
    %p73 = por %p71, %p72
    %p74 = scmp.ne.s32.totalorder %s63, %s64
    %p75 = scmp.eq.s32.totalorder %s17, 0
    %p76 = por %p74, %p75
    %p77 = scmp.ne.s32.totalorder %s63, %s64
    %p78 = scmp.eq.s32.totalorder %s18, 3
    %p79 = por %p77, %p78
    %p81 = scmp.ne.s32.totalorder %s64, %s80
    %p82 = scmp.eq.s32.totalorder %s18, 0
    %p83 = por %p81, %p82
    %s85 = sadd.s32 %s84, 1
    %p88 = scmp.eq.s32.totalorder %s12, 3
    %p89 = scmp.ne.s32.totalorder %s84, %s86
    %p90 = scmp.eq.s32.totalorder %s12, 0
    %p91 = por %p89, %p90
    %p92 = scmp.ne.s32.totalorder %s84, %s86
    %p93 = scmp.eq.s32.totalorder %s17, 3
    %p94 = por %p92, %p93
    %p95 = scmp.ne.s32.totalorder %s86, %s87
    %p96 = scmp.eq.s32.totalorder %s17, 0
    %p97 = por %p95, %p96
    %p98 = scmp.ne.s32.totalorder %s86, %s87
    %p99 = scmp.eq.s32.totalorder %s18, 3
    %p100 = por %p98, %p99
    %p102 = scmp.ne.s32.totalorder %s87, %s101
    %p103 = scmp.eq.s32.totalorder %s18, 0
    %p104 = por %p102, %p103
    %s106 = sadd.s32 %s105, 1
    %p109 = scmp.eq.s32.totalorder %s12, 3
    %p110 = scmp.ne.s32.totalorder %s105, %s107
    %p111 = scmp.eq.s32.totalorder %s12, 0
    %p112 = por %p110, %p111
    %p113 = scmp.ne.s32.totalorder %s105, %s107
    %p114 = scmp.eq.s32.totalorder %s17, 3
    %p115 = por %p113, %p114
    %p116 = scmp.ne.s32.totalorder %s107, %s108
    %p117 = scmp.eq.s32.totalorder %s17, 0
    %p118 = por %p116, %p117
    %p119 = scmp.ne.s32.totalorder %s107, %s108
    %p120 = scmp.eq.s32.totalorder %s18, 3
    %p121 = por %p119, %p120
    %p123 = scmp.ne.s32.totalorder %s108, %s122
    %p124 = scmp.eq.s32.totalorder %s18, 0
    %p125 = por %p123, %p124
    %s126 = ssub.s32 %s20, %s27
    %p127 = scmp.eq.s32.totalorder %s126, 0
    %s129 = sadd.s32 %s128, 1
    %s130 = scalar_select %p127, %s128, %s129
    %p133 = pneg %p127
    %p134 = scmp.eq.s32.totalorder %s12, 3
    %p135 = por %p133, %p134
    %p136 = scmp.ne.s32.totalorder %s128, %s131
    %p137 = scmp.eq.s32.totalorder %s12, 0
    %p138 = por %p136, %p137
    %p139 = scmp.ne.s32.totalorder %s128, %s131
    %p140 = scmp.eq.s32.totalorder %s17, 3
    %p141 = por %p139, %p140
    %p142 = scmp.ne.s32.totalorder %s131, %s132
    %p143 = scmp.eq.s32.totalorder %s17, 0
    %p144 = por %p142, %p143
    %p145 = scmp.ne.s32.totalorder %s131, %s132
    %p146 = scmp.eq.s32.totalorder %s18, 3
    %p147 = por %p145, %p146
    %p149 = scmp.ne.s32.totalorder %s132, %s148
    %p150 = scmp.eq.s32.totalorder %s18, 0
    %p151 = por %p149, %p150
    %s152 = ssub.s32 %s20, %s27
    %p153 = scmp.eq.s32.totalorder %s152, 0
    %s155 = sadd.s32 %s154, 1
    %s156 = scalar_select %p153, %s154, %s155
    %p159 = pneg %p153
    %p160 = scmp.eq.s32.totalorder %s12, 3
    %p161 = por %p159, %p160
    %p162 = scmp.ne.s32.totalorder %s154, %s157
    %p163 = scmp.eq.s32.totalorder %s12, 0
    %p164 = por %p162, %p163
    %p165 = scmp.ne.s32.totalorder %s154, %s157
    %p166 = scmp.eq.s32.totalorder %s17, 3
    %p167 = por %p165, %p166
    %p168 = scmp.ne.s32.totalorder %s157, %s158
    %p169 = scmp.eq.s32.totalorder %s17, 0
    %p170 = por %p168, %p169
    %p171 = scmp.ne.s32.totalorder %s157, %s158
    %p172 = scmp.eq.s32.totalorder %s18, 3
    %p173 = por %p171, %p172
    %p175 = scmp.ne.s32.totalorder %s158, %s174
    %p176 = scmp.eq.s32.totalorder %s18, 0
    %p177 = por %p175, %p176
    %s178 = ssub.s32 %s19, %s31
    %p179 = scmp.eq.s32.totalorder %s178, 0
    %s181 = sadd.s32 %s180, 1
    %s182 = scalar_select %p179, %s180, %s181
    %p185 = pneg %p179
    %p186 = scmp.eq.s32.totalorder %s12, 3
    %p187 = por %p185, %p186
    %p188 = scmp.ne.s32.totalorder %s180, %s183
    %p189 = scmp.eq.s32.totalorder %s12, 0
    %p190 = por %p188, %p189
    %p191 = scmp.ne.s32.totalorder %s180, %s183
    %p192 = scmp.eq.s32.totalorder %s17, 3
    %p193 = por %p191, %p192
    %p194 = scmp.ne.s32.totalorder %s183, %s184
    %p195 = scmp.eq.s32.totalorder %s17, 0
    %p196 = por %p194, %p195
    %p197 = scmp.ne.s32.totalorder %s183, %s184
    %p198 = scmp.eq.s32.totalorder %s18, 3
    %p199 = por %p197, %p198
    %p201 = scmp.ne.s32.totalorder %s184, %s200
    %p202 = scmp.eq.s32.totalorder %s18, 0
    %p203 = por %p201, %p202
    %p204 = scmp.le.s32.totalorder 1, %s12
    %p205 = scmp.lt.s32.totalorder %s12, 5
    %p206 = pnand %p204, %p205
    %p207 = pneg %p206
    // Predicated region
    $region9: #{hourglass_forward.13} parent=5 // pred_check
      _
    $region10: #{hourglass_forward.13} parent=5 // pred_check_branch
      %209 = sbr.rel (%p206) target = $region12
    $region11: #{hourglass_forward.13} parent=5 // pred_region
      %s210 = ssub.s32 %s12, 1
      // Predicated region
      $region13: #{hourglass_forward.13} parent=11 // pred_check
        %p211 = pneg %p97
      $region14: #{hourglass_forward.13} parent=11 // pred_check_branch
        %213 = sbr.rel (%p211) target = $region16
      $region15: #{hourglass_forward.13} parent=11 // pred_region
        _
      $region16: #{hourglass_forward.13} parent=11 // pred_fallthru
        _
      // Predicated region
      $region17: #{hourglass_forward.13} parent=11 // pred_check
        %p214 = pneg %p118
      $region18: #{hourglass_forward.13} parent=11 // pred_check_branch
        %216 = sbr.rel (%p214) target = $region20
      $region19: #{hourglass_forward.13} parent=11 // pred_region
        _
      $region20: #{hourglass_forward.13} parent=11 // pred_fallthru
        _
    $region12: #{hourglass_forward.13} parent=5 // pred_fallthru
      _
    %p217 = scmp.lt.s32.totalorder %s12, 4
    // Predicated region
    $region21: #{hourglass_forward.13} parent=5 // pred_check
      %p218 = pneg %p217
    $region22: #{hourglass_forward.13} parent=5 // pred_check_branch
      %220 = sbr.rel (%p218) target = $region24
    $region23: #{hourglass_forward.13} parent=5 // pred_region
      // Predicated region
      $region25: #{hourglass_forward.13} parent=23 // pred_check
        %p221 = pneg %p44
      $region26: #{hourglass_forward.13} parent=23 // pred_check_branch
        %223 = sbr.rel (%p221) target = $region28
      $region27: #{hourglass_forward.13} parent=23 // pred_region
        %p224 = scmp.lt.s32.totalorder %s19, 1
        %s225 = scalar_select %p224, %s19, 1
        %s226 = smul.addr %s225, 8
        %s227 = scalar_lea.vmem %s0, %s226
      $region28: #{hourglass_forward.13} parent=23 // pred_fallthru
        _
      // Predicated region
      $region29: #{hourglass_forward.13} parent=23 // pred_check
        %p228 = pneg %p70
      $region30: #{hourglass_forward.13} parent=23 // pred_check_branch
        %230 = sbr.rel (%p228) target = $region32
      $region31: #{hourglass_forward.13} parent=23 // pred_region
        %p231 = scmp.lt.s32.totalorder %s19, 1
        %s232 = scalar_select %p231, %s19, 1
        %s233 = smul.addr %s232, 2
        %s234 = smul.addr %s233, 8
        %s235 = scalar_lea.vmem %s1, %s234
      $region32: #{hourglass_forward.13} parent=23 // pred_fallthru
        _
      // Predicated region
      $region33: #{hourglass_forward.13} parent=23 // pred_check
        %p236 = pneg %p138
      $region34: #{hourglass_forward.13} parent=23 // pred_check_branch
        %238 = sbr.rel (%p236) target = $region36
      $region35: #{hourglass_forward.13} parent=23 // pred_region
        %p239 = scmp.lt.s32.totalorder %s20, 1
        %s240 = scalar_select %p239, %s20, 1
        %s241 = smul.addr %s240, 24
        %s242 = smul.addr %s241, 8
        %s243 = scalar_lea.vmem %s4, %s242
      $region36: #{hourglass_forward.13} parent=23 // pred_fallthru
        _
      // Predicated region
      $region37: #{hourglass_forward.13} parent=23 // pred_check
        %p244 = pneg %p164
      $region38: #{hourglass_forward.13} parent=23 // pred_check_branch
        %246 = sbr.rel (%p244) target = $region40
      $region39: #{hourglass_forward.13} parent=23 // pred_region
        %p247 = scmp.lt.s32.totalorder %s20, 1
        %s248 = scalar_select %p247, %s20, 1
        %s249 = scalar_lea.vmem %s5, %s248
      $region40: #{hourglass_forward.13} parent=23 // pred_fallthru
        _
    $region24: #{hourglass_forward.13} parent=5 // pred_fallthru
      _
    %p250 = scmp.le.s32.totalorder 1, %s12
    %p251 = scmp.lt.s32.totalorder %s12, 5
    %p252 = pnand %p250, %p251
    %p253 = pneg %p252
    // Predicated region
    $region41: #{hourglass_forward.13} parent=5 // pred_check
      _
    $region42: #{hourglass_forward.13} parent=5 // pred_check_branch
      %255 = sbr.rel (%p252) target = $region44
    $region43: #{hourglass_forward.13} parent=5 // pred_region
      %s256 = ssub.s32 %s12, 1
      %p257 = scmp.lt.s32.totalorder %s21, 1
      %s258 = scalar_select %p257, %s21, 1
      %s259 = smul.addr %s258, 8
      %s260 = scalar_lea.vmem %s0, %s259
      %p261 = pneg %p50
      %p262 = pneg %p47
      %p263 = scmp.lt.s32.totalorder %s21, 1
      %s264 = scalar_select %p263, %s21, 1
      %s265 = smul.addr %s264, 2
      %s266 = smul.addr %s265, 8
      %s267 = scalar_lea.vmem %s1, %s266
      %p268 = pneg %p76
      %p269 = pneg %p73
      %p270 = pneg %p97
      %p271 = pneg %p94
      %p272 = pneg %p118
      %p273 = pneg %p115
      %p274 = scmp.lt.s32.totalorder %s22, 1
      %s275 = scalar_select %p274, %s22, 1
      %s276 = smul.addr %s275, 24
      %s277 = smul.addr %s276, 8
      %s278 = scalar_lea.vmem %s4, %s277
      %p279 = pneg %p144
      %p280 = pneg %p141
      %p281 = scmp.lt.s32.totalorder %s22, 1
      %s282 = scalar_select %p281, %s22, 1
      %s283 = scalar_lea.vmem %s5, %s282
      %p284 = pneg %p170
      %p285 = pneg %p167
      %p286 = pneg %p196
      %p287 = pneg %p193
      %p288 = scmp.lt.s32.totalorder %s21, 1
      %s289 = scalar_select %p288, %s21, 1
      %s290 = smul.addr %s289, 2
      %s291 = smul.addr %s290, 8
      %s292 = scalar_lea.vmem %s6, %s291
      %p293 = scmp.lt.s32.totalorder %s21, 1
      %s294 = scalar_select %p293, %s21, 1
      %s295 = smul.addr %s294, 8
      %s296 = scalar_lea.vmem %s0, %s295
      %p297 = scmp.lt.s32.totalorder %s21, 1
      %s298 = scalar_select %p297, %s21, 1
      %s299 = smul.addr %s298, 2
      %s300 = smul.addr %s299, 8
      %s301 = scalar_lea.vmem %s1, %s300
      %p302 = scmp.lt.s32.totalorder %s22, 1
      %s303 = scalar_select %p302, %s22, 1
      %s304 = smul.addr %s303, 24
      %s305 = smul.addr %s304, 8
      %s306 = scalar_lea.vmem %s4, %s305
      %p307 = scmp.lt.s32.totalorder %s22, 1
      %s308 = scalar_select %p307, %s22, 1
      %s309 = scalar_lea.vmem %s5, %s308
      %p310 = scmp.lt.s32.totalorder %s21, 1
      %s311 = scalar_select %p310, %s21, 1
      %s312 = smul.addr %s311, 2
      %s313 = smul.addr %s312, 8
      %s314 = scalar_lea.vmem %s6, %s313
      %p315 = scmp.eq.s32.totalorder %s22, 0
      // Predicated region
      $region45: #{hourglass_forward.13} parent=43 // pred_check
        %p316 = pneg %p315
      $region46: #{hourglass_forward.13} parent=43 // pred_check_branch
        %318 = sbr.rel (%p316) target = $region48
      $region47: #{hourglass_forward.13} parent=43 // pred_region
        %v319 = vld [vmem:[%s296] sm:$0xff]
        %vm320 = vcmask 523264
        %321 = vst.msk [vmem:[#allocation2] sm:$0xff] %vm320, %v319
      $region48: #{hourglass_forward.13} parent=43 // pred_fallthru
        _
      %v322 = vld [vmem:[#allocation2] sm:$0xff]
      %s323 = scalar_lea.vmem %s306, 64
      %v324 = vld [vmem:[%s323] sm:$0xff]
      %v325 = vld [vmem:[%s323 + $0x8] sm:$0xff]
      %v326 = vld [vmem:[%s323 + $0x10] sm:$0xff]
      %v327 = vld [vmem:[%s323 + $0x18] sm:$0xff]
      %v328 = vld [vmem:[%s323 + $0x20] sm:$0xff]
      %v329 = vld [vmem:[%s323 + $0x28] sm:$0xff]
      %v330 = vld [vmem:[%s323 + $0x30] sm:$0xff]
      %v331 = vld [vmem:[%s323 + $0x38] sm:$0xff]
      %v332 = vld [vmem:[%s306] sm:$0xff]
      %v333 = vld [vmem:[%s306 + $0x8] sm:$0xff]
      %v334 = vld [vmem:[%s306 + $0x10] sm:$0xff]
      %v335 = vld [vmem:[%s306 + $0x18] sm:$0xff]
      %v336 = vld [vmem:[%s306 + $0x20] sm:$0xff]
      %v337 = vld [vmem:[%s306 + $0x28] sm:$0xff]
      %v338 = vld [vmem:[%s306 + $0x30] sm:$0xff]
      %v339 = vld [vmem:[%s306 + $0x38] sm:$0xff]
      %vm340 = vcmask 523264
      %v342 = vsel %vm340, %v322, 0
      %344 = vmatprep.subr.mxu0 0.0
      %345 = vmatpush1.msra.mxu0 0.0
      %346 = vmatprep.subr.mxu0 0.0
      %347 = vmatpush1.msra.mxu0 0.0
      %348 = vmatprep.subr.mxu0 0.0
      %349 = vmatpush1.msra.mxu0 0.0
      %350 = vmatprep.subr.mxu0 0.0
      %351 = vmatpush1.msra.mxu0 0.0
      %352 = vmatprep.subr.mxu0 0.0
      %353 = vmatpush1.msra.mxu0 0.0
      %354 = vmatprep.subr.mxu0 0.0
      %355 = vmatpush1.msra.mxu0 0.0
      %356 = vmatprep.subr.mxu0 0.0
      %357 = vmatpush1.msra.mxu0 0.0
      %358 = vmatprep.subr.mxu0 0.0
      %359 = vmatpush1.msra.mxu0 0.0
      %360 = vmatprep.subr.mxu0 0.0
      %361 = vmatpush1.msra.mxu0 %v339
      %362 = vmatprep.subr.mxu0 0.0
      %363 = vmatpush1.msra.mxu0 %v338
      %364 = vmatprep.subr.mxu0 0.0
      %365 = vmatpush1.msra.mxu0 %v337
      %366 = vmatprep.subr.mxu0 0.0
      %367 = vmatpush1.msra.mxu0 %v336
      %368 = vmatprep.subr.mxu0 0.0
      %369 = vmatpush1.msra.mxu0 %v335
      %370 = vmatprep.subr.mxu0 0.0
      %371 = vmatpush1.msra.mxu0 %v334
      %372 = vmatprep.subr.mxu0 0.0
      %373 = vmatpush1.msra.mxu0 %v333
      %374 = vmatprep.subr.mxu0 0.0
      %375 = vmatpush1.msra.mxu0 %v332
      %376 = vmatprep.subr.mxu0 0.0
      %377 = vmatpush2.msra.mxu0 0.0
      %378 = vmatprep.subr.mxu0 0.0
      %379 = vmatpush2.msra.mxu0 0.0
      %380 = vmatprep.subr.mxu0 0.0
      %381 = vmatpush2.msra.mxu0 0.0
      %382 = vmatprep.subr.mxu0 0.0
      %383 = vmatpush2.msra.mxu0 0.0
      %384 = vmatprep.subr.mxu0 0.0
      %385 = vmatpush2.msra.mxu0 0.0
      %386 = vmatprep.subr.mxu0 0.0
      %387 = vmatpush2.msra.mxu0 0.0
      %388 = vmatprep.subr.mxu0 0.0
      %389 = vmatpush2.msra.mxu0 0.0
      %390 = vmatprep.subr.mxu0 0.0
      %391 = vmatpush2.msra.mxu0 0.0
      %392 = vmatprep.subr.mxu0 0.0
      %393 = vmatpush2.msra.mxu0 0.0
      %394 = vmatprep.subr.mxu0 0.0
      %395 = vmatpush2.msra.mxu0 0.0
      %396 = vmatprep.subr.mxu0 0.0
      %397 = vmatpush2.msra.mxu0 0.0
      %398 = vmatprep.subr.mxu0 0.0
      %399 = vmatpush2.msra.mxu0 0.0
      %400 = vmatprep.subr.mxu0 0.0
      %401 = vmatpush2.msra.mxu0 0.0
      %402 = vmatprep.subr.mxu0 0.0
      %403 = vmatpush2.msra.mxu0 0.0
      %404 = vmatprep.subr.mxu0 0.0
      %405 = vmatpush2.msra.mxu0 0.0
      %406 = vmatprep.subr.mxu0 0.0
      %407 = vmatpush2.msra.mxu0 0.0
      %408 = vmatprep.mubr.f32.mxu0 0.0
      %409 = vmatmul.mubr.f32.gmra.mxu0 %v342
      %v410 = vpop.f32.mrf.mxu0
      %v411 = vadd.f32 0.0, %v410
      %v412 = vpop.f32.mrf.mxu0
      %413 = vdwg.mxu0
      %s414 = scalar_lea.vmem %s306, 128
      %v415 = vld [vmem:[%s414] sm:$0xff]
      %v416 = vld [vmem:[%s414 + $0x8] sm:$0xff]
      %v417 = vld [vmem:[%s414 + $0x10] sm:$0xff]
      %v418 = vld [vmem:[%s414 + $0x18] sm:$0xff]
      %v419 = vld [vmem:[%s414 + $0x20] sm:$0xff]
      %v420 = vld [vmem:[%s414 + $0x28] sm:$0xff]
      %v421 = vld [vmem:[%s414 + $0x30] sm:$0xff]
      %v422 = vld [vmem:[%s414 + $0x38] sm:$0xff]
      %423 = vmatprep.subr.mxu0 0.0
      %424 = vmatpush1.msra.mxu0 0.0
      %425 = vmatprep.subr.mxu0 0.0
      %426 = vmatpush1.msra.mxu0 0.0
      %427 = vmatprep.subr.mxu0 0.0
      %428 = vmatpush1.msra.mxu0 0.0
      %429 = vmatprep.subr.mxu0 0.0
      %430 = vmatpush1.msra.mxu0 0.0
      %431 = vmatprep.subr.mxu0 0.0
      %432 = vmatpush1.msra.mxu0 0.0
      %433 = vmatprep.subr.mxu0 0.0
      %434 = vmatpush1.msra.mxu0 0.0
      %435 = vmatprep.subr.mxu0 0.0
      %436 = vmatpush1.msra.mxu0 0.0
      %437 = vmatprep.subr.mxu0 0.0
      %438 = vmatpush1.msra.mxu0 0.0
      %439 = vmatprep.subr.mxu0 0.0
      %440 = vmatpush1.msra.mxu0 %v422
      %441 = vmatprep.subr.mxu0 0.0
      %442 = vmatpush1.msra.mxu0 %v421
      %443 = vmatprep.subr.mxu0 0.0
      %444 = vmatpush1.msra.mxu0 %v420
      %445 = vmatprep.subr.mxu0 0.0
      %446 = vmatpush1.msra.mxu0 %v419
      %447 = vmatprep.subr.mxu0 0.0
      %448 = vmatpush1.msra.mxu0 %v418
      %449 = vmatprep.subr.mxu0 0.0
      %450 = vmatpush1.msra.mxu0 %v417
      %451 = vmatprep.subr.mxu0 0.0
      %452 = vmatpush1.msra.mxu0 %v416
      %453 = vmatprep.subr.mxu0 0.0
      %454 = vmatpush1.msra.mxu0 %v415
      %455 = vmatprep.subr.mxu0 0.0
      %456 = vmatpush2.msra.mxu0 0.0
      %457 = vmatprep.subr.mxu0 0.0
      %458 = vmatpush2.msra.mxu0 0.0
      %459 = vmatprep.subr.mxu0 0.0
      %460 = vmatpush2.msra.mxu0 0.0
      %461 = vmatprep.subr.mxu0 0.0
      %462 = vmatpush2.msra.mxu0 0.0
      %463 = vmatprep.subr.mxu0 0.0
      %464 = vmatpush2.msra.mxu0 0.0
      %465 = vmatprep.subr.mxu0 0.0
      %466 = vmatpush2.msra.mxu0 0.0
      %467 = vmatprep.subr.mxu0 0.0
      %468 = vmatpush2.msra.mxu0 0.0
      %469 = vmatprep.subr.mxu0 0.0
      %470 = vmatpush2.msra.mxu0 0.0
      %471 = vmatprep.subr.mxu0 0.0
      %472 = vmatpush2.msra.mxu0 0.0
      %473 = vmatprep.subr.mxu0 0.0
      %474 = vmatpush2.msra.mxu0 0.0
      %475 = vmatprep.subr.mxu0 0.0
      %476 = vmatpush2.msra.mxu0 0.0
      %477 = vmatprep.subr.mxu0 0.0
      %478 = vmatpush2.msra.mxu0 0.0
      %479 = vmatprep.subr.mxu0 0.0
      %480 = vmatpush2.msra.mxu0 0.0
      %481 = vmatprep.subr.mxu0 0.0
      %482 = vmatpush2.msra.mxu0 0.0
      %483 = vmatprep.subr.mxu0 0.0
      %484 = vmatpush2.msra.mxu0 0.0
      %485 = vmatprep.subr.mxu0 0.0
      %486 = vmatpush2.msra.mxu0 0.0
      %487 = vmatprep.mubr.f32.mxu0 0.0
      %488 = vmatmul.mubr.f32.gmra.mxu0 %v342
      %v489 = vpop.f32.mrf.mxu0
      %v490 = vadd.f32 0.0, %v489
      %v491 = vpop.f32.mrf.mxu0
      %492 = vdwg.mxu0
      %v493 = vlaneseq
      %v494 = vshrl.u32 %v493, 7
      %vm495 = vcmp.eq.s32.totalorder %v494, 0
      %v496 = vrot.slane %v411, 7
      %v497 = vsel %vm495, 0.0, %v496
      %vm498 = vcmp.eq.s32.totalorder %v494, 7
      %v499 = vrot.slane %v490, 1
      %v500 = vsel %vm498, 0.0, %v499
      %501 = vmatprep.subr.mxu0 0.0
      %502 = vmatpush1.msra.mxu0 0.0
      %503 = vmatprep.subr.mxu0 0.0
      %504 = vmatpush1.msra.mxu0 0.0
      %505 = vmatprep.subr.mxu0 0.0
      %506 = vmatpush1.msra.mxu0 0.0
      %507 = vmatprep.subr.mxu0 0.0
      %508 = vmatpush1.msra.mxu0 0.0
      %509 = vmatprep.subr.mxu0 0.0
      %510 = vmatpush1.msra.mxu0 0.0
      %511 = vmatprep.subr.mxu0 0.0
      %512 = vmatpush1.msra.mxu0 0.0
      %513 = vmatprep.subr.mxu0 0.0
      %514 = vmatpush1.msra.mxu0 0.0
      %515 = vmatprep.subr.mxu0 0.0
      %516 = vmatpush1.msra.mxu0 0.0
      %517 = vmatprep.subr.mxu0 0.0
      %518 = vmatpush1.msra.mxu0 %v331
      %519 = vmatprep.subr.mxu0 0.0
      %520 = vmatpush1.msra.mxu0 %v330
      %521 = vmatprep.subr.mxu0 0.0
      %522 = vmatpush1.msra.mxu0 %v329
      %523 = vmatprep.subr.mxu0 0.0
      %524 = vmatpush1.msra.mxu0 %v328
      %525 = vmatprep.subr.mxu0 0.0
      %526 = vmatpush1.msra.mxu0 %v327
      %527 = vmatprep.subr.mxu0 0.0
      %528 = vmatpush1.msra.mxu0 %v326
      %529 = vmatprep.subr.mxu0 0.0
      %530 = vmatpush1.msra.mxu0 %v325
      %531 = vmatprep.subr.mxu0 0.0
      %532 = vmatpush1.msra.mxu0 %v324
      %533 = vmatprep.subr.mxu0 0.0
      %534 = vmatpush2.msra.mxu0 0.0
      %535 = vmatprep.subr.mxu0 0.0
      %536 = vmatpush2.msra.mxu0 0.0
      %537 = vmatprep.subr.mxu0 0.0
      %538 = vmatpush2.msra.mxu0 0.0
      %539 = vmatprep.subr.mxu0 0.0
      %540 = vmatpush2.msra.mxu0 0.0
      %541 = vmatprep.subr.mxu0 0.0
      %542 = vmatpush2.msra.mxu0 0.0
      %543 = vmatprep.subr.mxu0 0.0
      %544 = vmatpush2.msra.mxu0 0.0
      %545 = vmatprep.subr.mxu0 0.0
      %546 = vmatpush2.msra.mxu0 0.0
      %547 = vmatprep.subr.mxu0 0.0
      %548 = vmatpush2.msra.mxu0 0.0
      %549 = vmatprep.subr.mxu0 0.0
      %550 = vmatpush2.msra.mxu0 0.0
      %551 = vmatprep.subr.mxu0 0.0
      %552 = vmatpush2.msra.mxu0 0.0
      %553 = vmatprep.subr.mxu0 0.0
      %554 = vmatpush2.msra.mxu0 0.0
      %555 = vmatprep.subr.mxu0 0.0
      %556 = vmatpush2.msra.mxu0 0.0
      %557 = vmatprep.subr.mxu0 0.0
      %558 = vmatpush2.msra.mxu0 0.0
      %559 = vmatprep.subr.mxu0 0.0
      %560 = vmatpush2.msra.mxu0 0.0
      %561 = vmatprep.subr.mxu0 0.0
      %562 = vmatpush2.msra.mxu0 0.0
      %563 = vmatprep.subr.mxu0 0.0
      %564 = vmatpush2.msra.mxu0 0.0
      %565 = vmatprep.mubr.f32.mxu0 0.0
      %566 = vmatmul.mubr.f32.gmra.mxu0 %v342
      %v567 = vpop.f32.mrf.mxu0
      %v568 = vadd.f32 %v497, %v567
      %v569 = vpop.f32.mrf.mxu0
      %570 = vdwg.mxu0
      %v571 = vadd.f32 %v568, %v500
      %v572 = vld [vmem:[%s309] sm:$0x1]
      %v574 = vlaneseq
      %v575 = vshrl.u32 %v574, 7
      %v576 = vsub.s32 0, %v575
      %v577 = vrot.slane %v572, %v576
      %v579 = vadd.f32 %v571, %v577
      %v580 = vadd.f32 %v579, %v322
      %v581 = vmax.f32 %v580, 0.0
      %582 = vst.msk [vmem:[#allocation2] sm:$0xff] %vm340, %v581
      %p583 = scmp.eq.s32.totalorder %s22, 1
      // Predicated region
      $region49: #{hourglass_forward.13} parent=43 // pred_check
        %p584 = pneg %p583
      $region50: #{hourglass_forward.13} parent=43 // pred_check_branch
        %586 = sbr.rel (%p584) target = $region52
      $region51: #{hourglass_forward.13} parent=43 // pred_region
        %v587 = vld [vmem:[%s2] sm:$0xff]
        %v588 = vld [vmem:[%s2 + $0x8] sm:$0xff]
        %vm589 = vcmask 64512
        %v591 = vsel %vm589, %v587, 0
        %v594 = vsel %vm589, %v588, 0
        %596 = vmatprep.subr.mxu0 0.0
        %597 = vmatpush1.msra.mxu0 0.0
        %598 = vmatprep.subr.mxu0 0.0
        %599 = vmatpush1.msra.mxu0 0.0
        %600 = vmatprep.subr.mxu0 0.0
        %601 = vmatpush1.msra.mxu0 0.0
        %602 = vmatprep.subr.mxu0 0.0
        %603 = vmatpush1.msra.mxu0 0.0
        %604 = vmatprep.subr.mxu0 0.0
        %605 = vmatpush1.msra.mxu0 0.0
        %606 = vmatprep.subr.mxu0 0.0
        %607 = vmatpush1.msra.mxu0 0.0
        %608 = vmatprep.subr.mxu0 0.0
        %609 = vmatpush1.msra.mxu0 0.0
        %610 = vmatprep.subr.mxu0 0.0
        %611 = vmatpush1.msra.mxu0 0.0
        %612 = vmatprep.subr.mxu0 0.0
        %613 = vmatpush1.msra.mxu0 0.0
        %614 = vmatprep.subr.mxu0 0.0
        %615 = vmatpush1.msra.mxu0 0.0
        %616 = vmatprep.subr.mxu0 0.0
        %617 = vmatpush1.msra.mxu0 0.0
        %618 = vmatprep.subr.mxu0 0.0
        %619 = vmatpush1.msra.mxu0 0.0
        %620 = vmatprep.subr.mxu0 0.0
        %621 = vmatpush1.msra.mxu0 0.0
        %622 = vmatprep.subr.mxu0 0.0
        %623 = vmatpush1.msra.mxu0 0.0
        %624 = vmatprep.subr.mxu0 0.0
        %625 = vmatpush1.msra.mxu0 0.0
        %626 = vmatprep.subr.mxu0 0.0
        %627 = vmatpush1.msra.mxu0 %v581
        %628 = vmatprep.subr.mxu0 0.0
        %629 = vmatpush2.msra.mxu0 0.0
        %630 = vmatprep.subr.mxu0 0.0
        %631 = vmatpush2.msra.mxu0 0.0
        %632 = vmatprep.subr.mxu0 0.0
        %633 = vmatpush2.msra.mxu0 0.0
        %634 = vmatprep.subr.mxu0 0.0
        %635 = vmatpush2.msra.mxu0 0.0
        %636 = vmatprep.subr.mxu0 0.0
        %637 = vmatpush2.msra.mxu0 0.0
        %638 = vmatprep.subr.mxu0 0.0
        %639 = vmatpush2.msra.mxu0 0.0
        %640 = vmatprep.subr.mxu0 0.0
        %641 = vmatpush2.msra.mxu0 0.0
        %642 = vmatprep.subr.mxu0 0.0
        %643 = vmatpush2.msra.mxu0 0.0
        %644 = vmatprep.subr.mxu0 0.0
        %645 = vmatpush2.msra.mxu0 0.0
        %646 = vmatprep.subr.mxu0 0.0
        %647 = vmatpush2.msra.mxu0 0.0
        %648 = vmatprep.subr.mxu0 0.0
        %649 = vmatpush2.msra.mxu0 0.0
        %650 = vmatprep.subr.mxu0 0.0
        %651 = vmatpush2.msra.mxu0 0.0
        %652 = vmatprep.subr.mxu0 0.0
        %653 = vmatpush2.msra.mxu0 0.0
        %654 = vmatprep.subr.mxu0 0.0
        %655 = vmatpush2.msra.mxu0 0.0
        %656 = vmatprep.subr.mxu0 0.0
        %657 = vmatpush2.msra.mxu0 0.0
        %658 = vmatprep.subr.mxu0 0.0
        %659 = vmatpush2.msra.mxu0 0.0
        %660 = vmatprep.mubr.f32.mxu0 0.0
        %661 = vmatmul.mubr.f32.gmra.mxu0 %v591
        %v662 = vpop.f32.mrf.mxu0
        %v663 = vadd.f32 0.0, %v662
        %v664 = vpop.f32.mrf.mxu0
        %665 = vmatprep.mubr.f32.mxu0 0.0
        %666 = vmatmul.mubr.f32.gmra.mxu0 %v594
        %v667 = vpop.f32.mrf.mxu0
        %v668 = vadd.f32 0.0, %v667
        %v669 = vpop.f32.mrf.mxu0
        %670 = vdwg.mxu0
        %v671 = vld [vmem:[%s3] sm:$0xff]
        %v672 = vld [vmem:[%s3 + $0x8] sm:$0xff]
        %v673 = vld [vmem:[%s3 + $0x10] sm:$0xff]
        %v674 = vld [vmem:[%s3 + $0x18] sm:$0xff]
        %v675 = vld [vmem:[%s3 + $0x20] sm:$0xff]
        %v676 = vld [vmem:[%s3 + $0x28] sm:$0xff]
        %v677 = vld [vmem:[%s3 + $0x30] sm:$0xff]
        %v678 = vld [vmem:[%s3 + $0x38] sm:$0xff]
        %v679 = vld [vmem:[%s301] sm:$0xff]
        %v680 = vld [vmem:[%s301 + $0x8] sm:$0xff]
        %v682 = vsel %vm340, %v663, 0
        %v685 = vsel %vm340, %v668, 0
        %687 = vmatprep.subr.mxu0 0.0
        %688 = vmatpush1.msra.mxu0 0.0
        %689 = vmatprep.subr.mxu0 0.0
        %690 = vmatpush1.msra.mxu0 0.0
        %691 = vmatprep.subr.mxu0 0.0
        %692 = vmatpush1.msra.mxu0 0.0
        %693 = vmatprep.subr.mxu0 0.0
        %694 = vmatpush1.msra.mxu0 0.0
        %695 = vmatprep.subr.mxu0 0.0
        %696 = vmatpush1.msra.mxu0 0.0
        %697 = vmatprep.subr.mxu0 0.0
        %698 = vmatpush1.msra.mxu0 0.0
        %699 = vmatprep.subr.mxu0 0.0
        %700 = vmatpush1.msra.mxu0 0.0
        %701 = vmatprep.subr.mxu0 0.0
        %702 = vmatpush1.msra.mxu0 0.0
        %703 = vmatprep.subr.mxu0 0.0
        %704 = vmatpush1.msra.mxu0 %v678
        %705 = vmatprep.subr.mxu0 0.0
        %706 = vmatpush1.msra.mxu0 %v677
        %707 = vmatprep.subr.mxu0 0.0
        %708 = vmatpush1.msra.mxu0 %v676
        %709 = vmatprep.subr.mxu0 0.0
        %710 = vmatpush1.msra.mxu0 %v675
        %711 = vmatprep.subr.mxu0 0.0
        %712 = vmatpush1.msra.mxu0 %v674
        %713 = vmatprep.subr.mxu0 0.0
        %714 = vmatpush1.msra.mxu0 %v673
        %715 = vmatprep.subr.mxu0 0.0
        %716 = vmatpush1.msra.mxu0 %v672
        %717 = vmatprep.subr.mxu0 0.0
        %718 = vmatpush1.msra.mxu0 %v671
        %719 = vmatprep.subr.mxu0 0.0
        %720 = vmatpush2.msra.mxu0 0.0
        %721 = vmatprep.subr.mxu0 0.0
        %722 = vmatpush2.msra.mxu0 0.0
        %723 = vmatprep.subr.mxu0 0.0
        %724 = vmatpush2.msra.mxu0 0.0
        %725 = vmatprep.subr.mxu0 0.0
        %726 = vmatpush2.msra.mxu0 0.0
        %727 = vmatprep.subr.mxu0 0.0
        %728 = vmatpush2.msra.mxu0 0.0
        %729 = vmatprep.subr.mxu0 0.0
        %730 = vmatpush2.msra.mxu0 0.0
        %731 = vmatprep.subr.mxu0 0.0
        %732 = vmatpush2.msra.mxu0 0.0
        %733 = vmatprep.subr.mxu0 0.0
        %734 = vmatpush2.msra.mxu0 0.0
        %735 = vmatprep.subr.mxu0 0.0
        %736 = vmatpush2.msra.mxu0 0.0
        %737 = vmatprep.subr.mxu0 0.0
        %738 = vmatpush2.msra.mxu0 0.0
        %739 = vmatprep.subr.mxu0 0.0
        %740 = vmatpush2.msra.mxu0 0.0
        %741 = vmatprep.subr.mxu0 0.0
        %742 = vmatpush2.msra.mxu0 0.0
        %743 = vmatprep.subr.mxu0 0.0
        %744 = vmatpush2.msra.mxu0 0.0
        %745 = vmatprep.subr.mxu0 0.0
        %746 = vmatpush2.msra.mxu0 0.0
        %747 = vmatprep.subr.mxu0 0.0
        %748 = vmatpush2.msra.mxu0 0.0
        %749 = vmatprep.subr.mxu0 0.0
        %750 = vmatpush2.msra.mxu0 0.0
        %751 = vmatprep.mubr.f32.mxu0 0.0
        %752 = vmatmul.mubr.f32.gmra.mxu0 %v682
        %v753 = vpop.f32.mrf.mxu0
        %v754 = vadd.f32 %v679, %v753
        %v755 = vpop.f32.mrf.mxu0
        %756 = vmatprep.mubr.f32.mxu0 0.0
        %757 = vmatmul.mubr.f32.gmra.mxu0 %v685
        %v758 = vpop.f32.mrf.mxu0
        %v759 = vadd.f32 %v680, %v758
        %v760 = vpop.f32.mrf.mxu0
        %761 = vdwg.mxu0
        %762 = vst [vmem:[%s314] sm:$0xff] %v754
        %763 = vst [vmem:[%s314 + $0x8] sm:$0xff] %v759
      $region52: #{hourglass_forward.13} parent=43 // pred_fallthru
        _
      %p764 = scmp.lt.s32.totalorder %s21, 1
      %s765 = scalar_select %p764, %s21, 1
      %s766 = smul.addr %s765, 2
      %s767 = smul.addr %s766, 8
      %s768 = scalar_lea.vmem %s6, %s767
      // Predicated region
      $region53: #{hourglass_forward.13} parent=43 // pred_check
        %p769 = pneg %p193
      $region54: #{hourglass_forward.13} parent=43 // pred_check_branch
        %771 = sbr.rel (%p769) target = $region56
      $region55: #{hourglass_forward.13} parent=43 // pred_region
        _
      $region56: #{hourglass_forward.13} parent=43 // pred_fallthru
        _
    $region44: #{hourglass_forward.13} parent=5 // pred_fallthru
      _
    %p772 = scmp.le.s32.totalorder 2, %s12
    // Predicated region
    $region57: #{hourglass_forward.13} parent=5 // pred_check
      %p773 = pneg %p772
    $region58: #{hourglass_forward.13} parent=5 // pred_check_branch
      %775 = sbr.rel (%p773) target = $region60
    $region59: #{hourglass_forward.13} parent=5 // pred_region
      %s776 = ssub.s32 %s12, 2
      // Predicated region
      $region61: #{hourglass_forward.13} parent=59 // pred_check
        %p777 = pneg %p199
      $region62: #{hourglass_forward.13} parent=59 // pred_check_branch
        %779 = sbr.rel (%p777) target = $region64
      $region63: #{hourglass_forward.13} parent=59 // pred_region
        %p780 = scmp.lt.s32.totalorder %s23, 1
        %s781 = scalar_select %p780, %s23, 1
        %s782 = smul.addr %s781, 2
        %s783 = smul.addr %s782, 8
        %s784 = scalar_lea.vmem %s6, %s783
      $region64: #{hourglass_forward.13} parent=59 // pred_fallthru
        _
    $region60: #{hourglass_forward.13} parent=5 // pred_fallthru
      _
  $region6: #{hourglass_forward.13} parent=0 // loop_footer
    %s16 = sadd.s32 1, %s12
  $region7: #{hourglass_forward.13} parent=0 // loop_footer_branch
    %11 = sbr.rel target = $region3
  $region8: #{hourglass_forward.13} parent=0 // loop_exit
    _

</llo_original>
